<compile_context>
chip_gen: v7x
topology: tpu7x:2x2x1
jax: 0.10.0
libtpu: 0.0.40
codegen_flags: <defaults>
</compile_context>

<pallas_src>
import functools
import math

import jax
import jax.numpy as jnp
from jax.experimental import pallas as pl
from jax.experimental.pallas import tpu as pltpu


def _round_up(x, m):
    return ((x + m - 1) // m) * m


# ----------------------------- fused stage kernel ----------------------------

def _fused_stage_kernel(p_ref, dw_ref, w_ref, b_ref, o_ref, acc_ref,
                        *, stride, Ho, Wo):
    """One full FPEM stage for one batch element.

    stride == 1:
        p_ref : (Ho+2, Wo+2, C)     padded (upsample(x) + y)
    stride == 2:
        p_ref : (4, Ho+1, Wo+1, C)  space-to-depth quarters of the padded sum,
                                    p_ref[2*r+c, i, j] == padded[2*i+r, 2*j+c]
    dw_ref  : (9, C)    depthwise 3x3 weights, row 3*kh + kw
    w_ref   : (C, C)    1x1 conv weight [in, out] with BN scale folded in
    b_ref   : (1, C)    folded BN bias
    o_ref   : (Ho*Wo, C) output (flattened spatial -> lane-dense store)
    acc_ref : (Mp, C)   f32 VMEM scratch, Mp = Ho*Wo rounded up to a multiple of 8
    """
    C = o_ref.shape[-1]
    M = Ho * Wo
    Mp = acc_ref.shape[0]

    # Hoist the 9 depthwise tap weights (each a (1, C) lane vector).
    dwt = [dw_ref[k:k + 1, :] for k in range(9)]

    # Depthwise 3x3 conv, one output row at a time (keeps register pressure
    # low; the stride-2 path reads only the pixels it needs -> no 4x waste).
    for h in range(Ho):
        acc = jnp.zeros((Wo, C), jnp.float32)
        for kh in range(3):
            if stride == 1:
                row = p_ref[h + kh, :, :]                       # (Wo+2, C)
                acc = acc + row[0:Wo, :] * dwt[3 * kh + 0]
                acc = acc + row[1:Wo + 1, :] * dwt[3 * kh + 1]
                acc = acc + row[2:Wo + 2, :] * dwt[3 * kh + 2]
            else:
                r, di = kh % 2, kh // 2
                row_e = p_ref[2 * r + 0, h + di, :, :]          # even cols (Wo+1, C)
                row_o = p_ref[2 * r + 1, h + di, :, :]          # odd  cols (Wo+1, C)
                acc = acc + row_e[0:Wo, :] * dwt[3 * kh + 0]
                acc = acc + row_o[0:Wo, :] * dwt[3 * kh + 1]
                acc = acc + row_e[1:Wo + 1, :] * dwt[3 * kh + 2]
        acc_ref[h * Wo:(h + 1) * Wo, :] = acc

    if Mp > M:  # zero pad rows so the padded matmul result is well defined
        acc_ref[M:, :] = jnp.zeros((Mp - M, C), jnp.float32)

    # Fused 1x1 conv (+ folded BN) + ReLU: one MXU matmul per image.
    y = jnp.dot(acc_ref[...], w_ref[...], preferred_element_type=jnp.float32)
    y = jnp.maximum(y + b_ref[...], 0.0)
    o_ref[...] = y[0:M, :]


# ----------------------------- JAX glue --------------------------------------

def _bilinear_indices(out_size, in_size):
    scale = in_size / out_size
    src = (jnp.arange(out_size, dtype=jnp.float32) + 0.5) * scale - 0.5
    src = jnp.maximum(src, 0.0)                 # PyTorch clamps negative src to 0
    i0 = jnp.floor(src).astype(jnp.int32)
    i0 = jnp.minimum(i0, in_size - 1)
    i1 = jnp.minimum(i0 + 1, in_size - 1)
    w1 = src - i0.astype(jnp.float32)
    w0 = 1.0 - w1
    return i0, i1, w0, w1


# TODO(synk): bilinear upsample + add + pad stays as (XLA-fused) glue feeding
# the kernel; at production map sizes this (and 1-row-halo row tiling of H)
# should move into the kernel to drop the padded-sum HBM pass and to fit the
# v5e/v7x scoped-VMEM limits.
def bilinear_upsample(x, Hout, Wout):
    """Matches F.upsample(..., mode='bilinear'), i.e. align_corners=False."""
    h0, h1, wh0, wh1 = _bilinear_indices(Hout, x.shape[1])
    w0, w1, ww0, ww1 = _bilinear_indices(Wout, x.shape[2])
    rows = (x[:, h0] * wh0[None, :, None, None]
            + x[:, h1] * wh1[None, :, None, None])
    out = (rows[:, :, w0] * ww0[None, None, :, None]
           + rows[:, :, w1] * ww1[None, None, :, None])
    return out


# ----------------------------- stage wrapper ----------------------------------

def fpem_stage(x_hi, y, dw, sm, stride):
    """_upsample_add -> dwconv3x3(stride) -> 1x1 conv + BN + ReLU (one pallas_call)."""
    w_pw, bias = sm
    N, H, W, C = y.shape

    # upsample to y's size, add, and pad ONCE (single fused XLA producer pass).
    s = bilinear_upsample(x_hi, H, W) + y
    p = jnp.pad(s, ((0, 0), (1, 1), (1, 1), (0, 0)))          # (N, H+2, W+2, C)

    if stride == 1:
        Ho, Wo = H, W
        p_in = p
        in_spec = pl.BlockSpec((None, H + 2, W + 2, C), lambda n: (n, 0, 0, 0))
    else:
        assert H % 2 == 0 and W % 2 == 0
        Ho, Wo = H // 2, W // 2
        Hq, Wq = Ho + 1, Wo + 1
        # space-to-depth quarters: q[n, 2*r+c, i, j] = p[n, 2*i+r, 2*j+c]
        p_in = (p.reshape(N, Hq, 2, Wq, 2, C)
                 .transpose(0, 2, 4, 1, 3, 5)
                 .reshape(N, 4, Hq, Wq, C))
        in_spec = pl.BlockSpec((None, 4, Hq, Wq, C), lambda n: (n, 0, 0, 0, 0))

    M = Ho * Wo
    Mp = _round_up(M, 8)
    kernel = functools.partial(_fused_stage_kernel, stride=stride, Ho=Ho, Wo=Wo)

    out = pl.pallas_call(
        kernel,
        out_shape=jax.ShapeDtypeStruct((N, M, C), jnp.float32),
        grid=(N,),
        in_specs=[
            in_spec,
            pl.BlockSpec((9, C), lambda n: (0, 0)),
            pl.BlockSpec((C, C), lambda n: (0, 0)),
            pl.BlockSpec((1, C), lambda n: (0, 0)),
        ],
        out_specs=pl.BlockSpec((None, M, C), lambda n: (n, 0, 0)),
        scratch_shapes=[pltpu.VMEM((Mp, C), jnp.float32)],
        compiler_params=pltpu.CompilerParams(
            dimension_semantics=("parallel",),       # batch axis feeds both v7x TCs
            vmem_limit_bytes=32 * 1024 * 1024,
        ),
    )(p_in, dw, w_pw, bias)
    return out.reshape(N, Ho, Wo, C)                 # free row-major reshape


# ----------------------------- FPEM_v1 forward -------------------------------

def fpem_v1_forward(f1, f2, f3, f4, params):
    # up path (stride 1)
    f3 = fpem_stage(f4, f3, params["dw3_1"], params["sm3_1"], 1)
    f2 = fpem_stage(f3, f2, params["dw2_1"], params["sm2_1"], 1)
    f1 = fpem_stage(f2, f1, params["dw1_1"], params["sm1_1"], 1)
    # down path (stride 2)
    f2 = fpem_stage(f2, f1, params["dw2_2"], params["sm2_2"], 2)
    f3 = fpem_stage(f3, f2, params["dw3_2"], params["sm3_2"], 2)
    f4 = fpem_stage(f4, f3, params["dw4_2"], params["sm4_2"], 2)
    return f1, f2, f3, f4


# ----------------------------- plain-XLA reference ---------------------------

def _reference_forward(f1, f2, f3, f4, params):
    hi = jax.lax.Precision.HIGHEST

    def dwconv(x, dw_flat, stride):
        C = x.shape[-1]
        w = dw_flat.reshape(3, 3, 1, C)
        return jax.lax.conv_general_dilated(
            x, w, window_strides=(stride, stride), padding=((1, 1), (1, 1)),
            dimension_numbers=("NHWC", "HWIO", "NHWC"),
            feature_group_count=C, precision=hi)

    def smooth(x, w_pw, bias):
        y = jnp.einsum("nhwc,co->nhwo", x, w_pw, precision=hi)
        return jnp.maximum(y + bias.reshape(1, 1, 1, -1), 0.0)

    def stage(x_hi, y, dw_flat, sm, stride):
        _, H, W, _ = y.shape
        s = bilinear_upsample(x_hi, H, W) + y
        return smooth(dwconv(s, dw_flat, stride), *sm)

    f3 = stage(f4, f3, params["dw3_1"], params["sm3_1"], 1)
    f2 = stage(f3, f2, params["dw2_1"], params["sm2_1"], 1)
    f1 = stage(f2, f1, params["dw1_1"], params["sm1_1"], 1)
    f2 = stage(f2, f1, params["dw2_2"], params["sm2_2"], 2)
    f3 = stage(f3, f2, params["dw3_2"], params["sm3_2"], 2)
    f4 = stage(f4, f3, params["dw4_2"], params["sm4_2"], 2)
    return f1, f2, f3, f4


# ----------------------------- parameter init --------------------------------

def init_params(key, C):
    # TODO(synk): BatchNorm is eval/inference mode (running stats folded into
    # the 1x1 weight and bias); train-mode batch statistics are not modeled.
    keys = jax.random.split(key, 12)

    def dw(k):
        # torch depthwise weight (C, 1, 3, 3) -> (9, C), row = 3*kh + kw
        w_t = jax.random.normal(k, (C, 1, 3, 3), jnp.float32) * 0.2
        return jnp.transpose(w_t[:, 0], (1, 2, 0)).reshape(9, C)

    def smooth(k):
        k1, k2, k3 = jax.random.split(k, 3)
        # torch 1x1 conv weight (out, in, 1, 1) -> (in, out) for x @ W
        w_t = jax.random.normal(k1, (C, C, 1, 1), jnp.float32) * (1.0 / math.sqrt(C))
        w = jnp.transpose(w_t[:, :, 0, 0], (1, 0))
        gamma = 1.0 + 0.1 * jax.random.normal(k2, (C,), jnp.float32)
        beta = 0.1 * jax.random.normal(k3, (C,), jnp.float32)
        rmean = jnp.zeros((C,), jnp.float32)
        rvar = jnp.ones((C,), jnp.float32)
        eps = 1e-5
        scale = gamma / jnp.sqrt(rvar + eps)
        bias = beta - rmean * scale
        w_folded = w * scale[None, :]     # fold the BN scale into the 1x1 weight
        return (w_folded, bias.reshape(1, C))

    return {
        "dw3_1": dw(keys[0]),  "sm3_1": smooth(keys[1]),
        "dw2_1": dw(keys[2]),  "sm2_1": smooth(keys[3]),
        "dw1_1": dw(keys[4]),  "sm1_1": smooth(keys[5]),
        "dw2_2": dw(keys[6]),  "sm2_2": smooth(keys[7]),
        "dw3_2": dw(keys[8]),  "sm3_2": smooth(keys[9]),
        "dw4_2": dw(keys[10]), "sm4_2": smooth(keys[11]),
    }


# ----------------------------- main -------------------------------------------

if __name__ == "__main__":
    # planes = out_channels = 128 (the real FPEM width -> lane-dense channels)
    N, C, H, W = 2, 128, 16, 16
    key = jax.random.PRNGKey(0)
    kin, kpar = jax.random.split(key)
    k1, k2, k3, k4 = jax.random.split(kin, 4)

    # PyTorch-convention NCHW inputs (FPN pyramid: each level half the size)
    f1_nchw = jax.random.normal(k1, (N, C, H, W), jnp.float32)
    f2_nchw = jax.random.normal(k2, (N, C, H // 2, W // 2), jnp.float32)
    f3_nchw = jax.random.normal(k3, (N, C, H // 4, W // 4), jnp.float32)
    f4_nchw = jax.random.normal(k4, (N, C, H // 8, W // 8), jnp.float32)

    to_nhwc = lambda t: jnp.transpose(t, (0, 2, 3, 1))
    x1, x2, x3, x4 = map(to_nhwc, (f1_nchw, f2_nchw, f3_nchw, f4_nchw))
    params = init_params(kpar, C)

    outs = jax.block_until_ready(jax.jit(fpem_v1_forward)(x1, x2, x3, x4, params))

    # output pyramid shapes (NHWC)
    assert outs[0].shape == (N, H, W, C)
    assert outs[1].shape == (N, H // 2, W // 2, C)
    assert outs[2].shape == (N, H // 4, W // 4, C)
    assert outs[3].shape == (N, H // 8, W // 8, C)

    # numerical check against a plain-XLA reference of the same module
    refs = jax.block_until_ready(jax.jit(_reference_forward)(x1, x2, x3, x4, params))
    for o, r in zip(outs, refs):
        assert o.shape == r.shape
        max_err = float(jnp.max(jnp.abs(o - r)))
        assert max_err < 1e-2, f"mismatch vs XLA reference: {max_err}"

    print("KERNEL_OK")
</pallas_src>

<mosaic_0001>
module attributes {stable_mosaic.version = 11 : i64} {
  func.func @_fused_stage_kernel(%arg0: i32, %arg1: memref<1x6x6x128xf32, #tpu.memory_space<vmem>>, %arg2: memref<9x128xf32, #tpu.memory_space<vmem>>, %arg3: memref<128x128xf32, #tpu.memory_space<vmem>>, %arg4: memref<1x128xf32, #tpu.memory_space<vmem>>, %arg5: memref<1x16x128xf32, #tpu.memory_space<vmem>>, %arg6: memref<16x128xf32, #tpu.memory_space<vmem>>) attributes {dimension_semantics = [#tpu.dimension_semantics<parallel>], iteration_bounds = array<i64: 2>, scalar_prefetch = 0 : i64, scratch_operands = 1 : i64, tpu.core_type = #tpu.core_type<tc>, window_params = [{transform_indices = @transform_0, window_bounds = array<i64: 1, 6, 6, 128>}, {pipeline_mode = #tpu.pipeline_mode<synchronous>, transform_indices = @transform_1, window_bounds = array<i64: 9, 128>}, {pipeline_mode = #tpu.pipeline_mode<synchronous>, transform_indices = @transform_2, window_bounds = array<i64: 128, 128>}, {pipeline_mode = #tpu.pipeline_mode<synchronous>, transform_indices = @transform_3, window_bounds = array<i64: 1, 128>}, {transform_indices = @transform_4, window_bounds = array<i64: 1, 16, 128>}]} {
    %c0 = arith.constant 0 : index
    %c0_0 = arith.constant 0 : index
    %0 = vector.load %arg2[%c0, %c0_0] : memref<9x128xf32, #tpu.memory_space<vmem>>, vector<1x128xf32>
    %c1 = arith.constant 1 : index
    %c0_1 = arith.constant 0 : index
    %1 = vector.load %arg2[%c1, %c0_1] : memref<9x128xf32, #tpu.memory_space<vmem>>, vector<1x128xf32>
    %c2 = arith.constant 2 : index
    %c0_2 = arith.constant 0 : index
    %2 = vector.load %arg2[%c2, %c0_2] : memref<9x128xf32, #tpu.memory_space<vmem>>, vector<1x128xf32>
    %c3 = arith.constant 3 : index
    %c0_3 = arith.constant 0 : index
    %3 = vector.load %arg2[%c3, %c0_3] : memref<9x128xf32, #tpu.memory_space<vmem>>, vector<1x128xf32>
    %c4 = arith.constant 4 : index
    %c0_4 = arith.constant 0 : index
    %4 = vector.load %arg2[%c4, %c0_4] : memref<9x128xf32, #tpu.memory_space<vmem>>, vector<1x128xf32>
    %c5 = arith.constant 5 : index
    %c0_5 = arith.constant 0 : index
    %5 = vector.load %arg2[%c5, %c0_5] : memref<9x128xf32, #tpu.memory_space<vmem>>, vector<1x128xf32>
    %c6 = arith.constant 6 : index
    %c0_6 = arith.constant 0 : index
    %6 = vector.load %arg2[%c6, %c0_6] : memref<9x128xf32, #tpu.memory_space<vmem>>, vector<1x128xf32>
    %c7 = arith.constant 7 : index
    %c0_7 = arith.constant 0 : index
    %7 = vector.load %arg2[%c7, %c0_7] : memref<9x128xf32, #tpu.memory_space<vmem>>, vector<1x128xf32>
    %c8 = arith.constant 8 : index
    %c0_8 = arith.constant 0 : index
    %8 = vector.load %arg2[%c8, %c0_8] : memref<9x128xf32, #tpu.memory_space<vmem>>, vector<1x128xf32>
    %cst = arith.constant 0.000000e+00 : f32
    %9 = vector.broadcast %cst : f32 to vector<4x128xf32>
    %c0_9 = arith.constant 0 : index
    %c0_10 = arith.constant 0 : index
    %c0_11 = arith.constant 0 : index
    %c0_12 = arith.constant 0 : index
    %10 = vector.load %arg1[%c0_9, %c0_10, %c0_11, %c0_12] : memref<1x6x6x128xf32, #tpu.memory_space<vmem>>, vector<1x1x6x128xf32>
    %11 = vector.shape_cast %10 : vector<1x1x6x128xf32> to vector<6x128xf32>
    %12 = vector.extract_strided_slice %11 {offsets = [0, 0], sizes = [4, 128], strides = [1, 1]} : vector<6x128xf32> to vector<4x128xf32>
    %13 = vector.broadcast %0 : vector<1x128xf32> to vector<4x128xf32>
    %14 = arith.mulf %12, %13 : vector<4x128xf32>
    %15 = arith.addf %9, %14 : vector<4x128xf32>
    %16 = vector.extract_strided_slice %11 {offsets = [1, 0], sizes = [4, 128], strides = [1, 1]} : vector<6x128xf32> to vector<4x128xf32>
    %17 = vector.broadcast %1 : vector<1x128xf32> to vector<4x128xf32>
    %18 = arith.mulf %16, %17 : vector<4x128xf32>
    %19 = arith.addf %15, %18 : vector<4x128xf32>
    %20 = vector.extract_strided_slice %11 {offsets = [2, 0], sizes = [4, 128], strides = [1, 1]} : vector<6x128xf32> to vector<4x128xf32>
    %21 = vector.broadcast %2 : vector<1x128xf32> to vector<4x128xf32>
    %22 = arith.mulf %20, %21 : vector<4x128xf32>
    %23 = arith.addf %19, %22 : vector<4x128xf32>
    %c0_13 = arith.constant 0 : index
    %c1_14 = arith.constant 1 : index
    %c0_15 = arith.constant 0 : index
    %c0_16 = arith.constant 0 : index
    %24 = vector.load %arg1[%c0_13, %c1_14, %c0_15, %c0_16] : memref<1x6x6x128xf32, #tpu.memory_space<vmem>>, vector<1x1x6x128xf32>
    %25 = vector.shape_cast %24 : vector<1x1x6x128xf32> to vector<6x128xf32>
    %26 = vector.extract_strided_slice %25 {offsets = [0, 0], sizes = [4, 128], strides = [1, 1]} : vector<6x128xf32> to vector<4x128xf32>
    %27 = vector.broadcast %3 : vector<1x128xf32> to vector<4x128xf32>
    %28 = arith.mulf %26, %27 : vector<4x128xf32>
    %29 = arith.addf %23, %28 : vector<4x128xf32>
    %30 = vector.extract_strided_slice %25 {offsets = [1, 0], sizes = [4, 128], strides = [1, 1]} : vector<6x128xf32> to vector<4x128xf32>
    %31 = vector.broadcast %4 : vector<1x128xf32> to vector<4x128xf32>
    %32 = arith.mulf %30, %31 : vector<4x128xf32>
    %33 = arith.addf %29, %32 : vector<4x128xf32>
    %34 = vector.extract_strided_slice %25 {offsets = [2, 0], sizes = [4, 128], strides = [1, 1]} : vector<6x128xf32> to vector<4x128xf32>
    %35 = vector.broadcast %5 : vector<1x128xf32> to vector<4x128xf32>
    %36 = arith.mulf %34, %35 : vector<4x128xf32>
    %37 = arith.addf %33, %36 : vector<4x128xf32>
    %c0_17 = arith.constant 0 : index
    %c2_18 = arith.constant 2 : index
    %c0_19 = arith.constant 0 : index
    %c0_20 = arith.constant 0 : index
    %38 = vector.load %arg1[%c0_17, %c2_18, %c0_19, %c0_20] : memref<1x6x6x128xf32, #tpu.memory_space<vmem>>, vector<1x1x6x128xf32>
    %39 = vector.shape_cast %38 : vector<1x1x6x128xf32> to vector<6x128xf32>
    %40 = vector.extract_strided_slice %39 {offsets = [0, 0], sizes = [4, 128], strides = [1, 1]} : vector<6x128xf32> to vector<4x128xf32>
    %41 = vector.broadcast %6 : vector<1x128xf32> to vector<4x128xf32>
    %42 = arith.mulf %40, %41 : vector<4x128xf32>
    %43 = arith.addf %37, %42 : vector<4x128xf32>
    %44 = vector.extract_strided_slice %39 {offsets = [1, 0], sizes = [4, 128], strides = [1, 1]} : vector<6x128xf32> to vector<4x128xf32>
    %45 = vector.broadcast %7 : vector<1x128xf32> to vector<4x128xf32>
    %46 = arith.mulf %44, %45 : vector<4x128xf32>
    %47 = arith.addf %43, %46 : vector<4x128xf32>
    %48 = vector.extract_strided_slice %39 {offsets = [2, 0], sizes = [4, 128], strides = [1, 1]} : vector<6x128xf32> to vector<4x128xf32>
    %49 = vector.broadcast %8 : vector<1x128xf32> to vector<4x128xf32>
    %50 = arith.mulf %48, %49 : vector<4x128xf32>
    %51 = arith.addf %47, %50 : vector<4x128xf32>
    %c0_21 = arith.constant 0 : index
    %c0_22 = arith.constant 0 : index
    %52 = vector.load %arg6[%c0_21, %c0_22] : memref<16x128xf32, #tpu.memory_space<vmem>>, vector<4x128xf32>
    tpu.vector_store %arg6[%c0_21, %c0_22], %51 {strides = array<i32>} : memref<16x128xf32, #tpu.memory_space<vmem>>, vector<4x128xf32>,
    %cst_23 = arith.constant 0.000000e+00 : f32
    %53 = vector.broadcast %cst_23 : f32 to vector<4x128xf32>
    %c0_24 = arith.constant 0 : index
    %c1_25 = arith.constant 1 : index
    %c0_26 = arith.constant 0 : index
    %c0_27 = arith.constant 0 : index
    %54 = vector.load %arg1[%c0_24, %c1_25, %c0_26, %c0_27] : memref<1x6x6x128xf32, #tpu.memory_space<vmem>>, vector<1x1x6x128xf32>
    %55 = vector.shape_cast %54 : vector<1x1x6x128xf32> to vector<6x128xf32>
    %56 = vector.extract_strided_slice %55 {offsets = [0, 0], sizes = [4, 128], strides = [1, 1]} : vector<6x128xf32> to vector<4x128xf32>
    %57 = vector.broadcast %0 : vector<1x128xf32> to vector<4x128xf32>
    %58 = arith.mulf %56, %57 : vector<4x128xf32>
    %59 = arith.addf %53, %58 : vector<4x128xf32>
    %60 = vector.extract_strided_slice %55 {offsets = [1, 0], sizes = [4, 128], strides = [1, 1]} : vector<6x128xf32> to vector<4x128xf32>
    %61 = vector.broadcast %1 : vector<1x128xf32> to vector<4x128xf32>
    %62 = arith.mulf %60, %61 : vector<4x128xf32>
    %63 = arith.addf %59, %62 : vector<4x128xf32>
    %64 = vector.extract_strided_slice %55 {offsets = [2, 0], sizes = [4, 128], strides = [1, 1]} : vector<6x128xf32> to vector<4x128xf32>
    %65 = vector.broadcast %2 : vector<1x128xf32> to vector<4x128xf32>
    %66 = arith.mulf %64, %65 : vector<4x128xf32>
    %67 = arith.addf %63, %66 : vector<4x128xf32>
    %c0_28 = arith.constant 0 : index
    %c2_29 = arith.constant 2 : index
    %c0_30 = arith.constant 0 : index
    %c0_31 = arith.constant 0 : index
    %68 = vector.load %arg1[%c0_28, %c2_29, %c0_30, %c0_31] : memref<1x6x6x128xf32, #tpu.memory_space<vmem>>, vector<1x1x6x128xf32>
    %69 = vector.shape_cast %68 : vector<1x1x6x128xf32> to vector<6x128xf32>
    %70 = vector.extract_strided_slice %69 {offsets = [0, 0], sizes = [4, 128], strides = [1, 1]} : vector<6x128xf32> to vector<4x128xf32>
    %71 = vector.broadcast %3 : vector<1x128xf32> to vector<4x128xf32>
    %72 = arith.mulf %70, %71 : vector<4x128xf32>
    %73 = arith.addf %67, %72 : vector<4x128xf32>
    %74 = vector.extract_strided_slice %69 {offsets = [1, 0], sizes = [4, 128], strides = [1, 1]} : vector<6x128xf32> to vector<4x128xf32>
    %75 = vector.broadcast %4 : vector<1x128xf32> to vector<4x128xf32>
    %76 = arith.mulf %74, %75 : vector<4x128xf32>
    %77 = arith.addf %73, %76 : vector<4x128xf32>
    %78 = vector.extract_strided_slice %69 {offsets = [2, 0], sizes = [4, 128], strides = [1, 1]} : vector<6x128xf32> to vector<4x128xf32>
    %79 = vector.broadcast %5 : vector<1x128xf32> to vector<4x128xf32>
    %80 = arith.mulf %78, %79 : vector<4x128xf32>
    %81 = arith.addf %77, %80 : vector<4x128xf32>
    %c0_32 = arith.constant 0 : index
    %c3_33 = arith.constant 3 : index
    %c0_34 = arith.constant 0 : index
    %c0_35 = arith.constant 0 : index
    %82 = vector.load %arg1[%c0_32, %c3_33, %c0_34, %c0_35] : memref<1x6x6x128xf32, #tpu.memory_space<vmem>>, vector<1x1x6x128xf32>
    %83 = vector.shape_cast %82 : vector<1x1x6x128xf32> to vector<6x128xf32>
    %84 = vector.extract_strided_slice %83 {offsets = [0, 0], sizes = [4, 128], strides = [1, 1]} : vector<6x128xf32> to vector<4x128xf32>
    %85 = vector.broadcast %6 : vector<1x128xf32> to vector<4x128xf32>
    %86 = arith.mulf %84, %85 : vector<4x128xf32>
    %87 = arith.addf %81, %86 : vector<4x128xf32>
    %88 = vector.extract_strided_slice %83 {offsets = [1, 0], sizes = [4, 128], strides = [1, 1]} : vector<6x128xf32> to vector<4x128xf32>
    %89 = vector.broadcast %7 : vector<1x128xf32> to vector<4x128xf32>
    %90 = arith.mulf %88, %89 : vector<4x128xf32>
    %91 = arith.addf %87, %90 : vector<4x128xf32>
    %92 = vector.extract_strided_slice %83 {offsets = [2, 0], sizes = [4, 128], strides = [1, 1]} : vector<6x128xf32> to vector<4x128xf32>
    %93 = vector.broadcast %8 : vector<1x128xf32> to vector<4x128xf32>
    %94 = arith.mulf %92, %93 : vector<4x128xf32>
    %95 = arith.addf %91, %94 : vector<4x128xf32>
    %c4_36 = arith.constant 4 : index
    %c0_37 = arith.constant 0 : index
    %96 = vector.load %arg6[%c4_36, %c0_37] : memref<16x128xf32, #tpu.memory_space<vmem>>, vector<4x128xf32>
    tpu.vector_store %arg6[%c4_36, %c0_37], %95 {strides = array<i32>} : memref<16x128xf32, #tpu.memory_space<vmem>>, vector<4x128xf32>,
    %cst_38 = arith.constant 0.000000e+00 : f32
    %97 = vector.broadcast %cst_38 : f32 to vector<4x128xf32>
    %c0_39 = arith.constant 0 : index
    %c2_40 = arith.constant 2 : index
    %c0_41 = arith.constant 0 : index
    %c0_42 = arith.constant 0 : index
    %98 = vector.load %arg1[%c0_39, %c2_40, %c0_41, %c0_42] : memref<1x6x6x128xf32, #tpu.memory_space<vmem>>, vector<1x1x6x128xf32>
    %99 = vector.shape_cast %98 : vector<1x1x6x128xf32> to vector<6x128xf32>
    %100 = vector.extract_strided_slice %99 {offsets = [0, 0], sizes = [4, 128], strides = [1, 1]} : vector<6x128xf32> to vector<4x128xf32>
    %101 = vector.broadcast %0 : vector<1x128xf32> to vector<4x128xf32>
    %102 = arith.mulf %100, %101 : vector<4x128xf32>
    %103 = arith.addf %97, %102 : vector<4x128xf32>
    %104 = vector.extract_strided_slice %99 {offsets = [1, 0], sizes = [4, 128], strides = [1, 1]} : vector<6x128xf32> to vector<4x128xf32>
    %105 = vector.broadcast %1 : vector<1x128xf32> to vector<4x128xf32>
    %106 = arith.mulf %104, %105 : vector<4x128xf32>
    %107 = arith.addf %103, %106 : vector<4x128xf32>
    %108 = vector.extract_strided_slice %99 {offsets = [2, 0], sizes = [4, 128], strides = [1, 1]} : vector<6x128xf32> to vector<4x128xf32>
    %109 = vector.broadcast %2 : vector<1x128xf32> to vector<4x128xf32>
    %110 = arith.mulf %108, %109 : vector<4x128xf32>
    %111 = arith.addf %107, %110 : vector<4x128xf32>
    %c0_43 = arith.constant 0 : index
    %c3_44 = arith.constant 3 : index
    %c0_45 = arith.constant 0 : index
    %c0_46 = arith.constant 0 : index
    %112 = vector.load %arg1[%c0_43, %c3_44, %c0_45, %c0_46] : memref<1x6x6x128xf32, #tpu.memory_space<vmem>>, vector<1x1x6x128xf32>
    %113 = vector.shape_cast %112 : vector<1x1x6x128xf32> to vector<6x128xf32>
    %114 = vector.extract_strided_slice %113 {offsets = [0, 0], sizes = [4, 128], strides = [1, 1]} : vector<6x128xf32> to vector<4x128xf32>
    %115 = vector.broadcast %3 : vector<1x128xf32> to vector<4x128xf32>
    %116 = arith.mulf %114, %115 : vector<4x128xf32>
    %117 = arith.addf %111, %116 : vector<4x128xf32>
    %118 = vector.extract_strided_slice %113 {offsets = [1, 0], sizes = [4, 128], strides = [1, 1]} : vector<6x128xf32> to vector<4x128xf32>
    %119 = vector.broadcast %4 : vector<1x128xf32> to vector<4x128xf32>
    %120 = arith.mulf %118, %119 : vector<4x128xf32>
    %121 = arith.addf %117, %120 : vector<4x128xf32>
    %122 = vector.extract_strided_slice %113 {offsets = [2, 0], sizes = [4, 128], strides = [1, 1]} : vector<6x128xf32> to vector<4x128xf32>
    %123 = vector.broadcast %5 : vector<1x128xf32> to vector<4x128xf32>
    %124 = arith.mulf %122, %123 : vector<4x128xf32>
    %125 = arith.addf %121, %124 : vector<4x128xf32>
    %c0_47 = arith.constant 0 : index
    %c4_48 = arith.constant 4 : index
    %c0_49 = arith.constant 0 : index
    %c0_50 = arith.constant 0 : index
    %126 = vector.load %arg1[%c0_47, %c4_48, %c0_49, %c0_50] : memref<1x6x6x128xf32, #tpu.memory_space<vmem>>, vector<1x1x6x128xf32>
    %127 = vector.shape_cast %126 : vector<1x1x6x128xf32> to vector<6x128xf32>
    %128 = vector.extract_strided_slice %127 {offsets = [0, 0], sizes = [4, 128], strides = [1, 1]} : vector<6x128xf32> to vector<4x128xf32>
    %129 = vector.broadcast %6 : vector<1x128xf32> to vector<4x128xf32>
    %130 = arith.mulf %128, %129 : vector<4x128xf32>
    %131 = arith.addf %125, %130 : vector<4x128xf32>
    %132 = vector.extract_strided_slice %127 {offsets = [1, 0], sizes = [4, 128], strides = [1, 1]} : vector<6x128xf32> to vector<4x128xf32>
    %133 = vector.broadcast %7 : vector<1x128xf32> to vector<4x128xf32>
    %134 = arith.mulf %132, %133 : vector<4x128xf32>
    %135 = arith.addf %131, %134 : vector<4x128xf32>
    %136 = vector.extract_strided_slice %127 {offsets = [2, 0], sizes = [4, 128], strides = [1, 1]} : vector<6x128xf32> to vector<4x128xf32>
    %137 = vector.broadcast %8 : vector<1x128xf32> to vector<4x128xf32>
    %138 = arith.mulf %136, %137 : vector<4x128xf32>
    %139 = arith.addf %135, %138 : vector<4x128xf32>
    %c8_51 = arith.constant 8 : index
    %c0_52 = arith.constant 0 : index
    %140 = vector.load %arg6[%c8_51, %c0_52] : memref<16x128xf32, #tpu.memory_space<vmem>>, vector<4x128xf32>
    tpu.vector_store %arg6[%c8_51, %c0_52], %139 {strides = array<i32>} : memref<16x128xf32, #tpu.memory_space<vmem>>, vector<4x128xf32>,
    %cst_53 = arith.constant 0.000000e+00 : f32
    %141 = vector.broadcast %cst_53 : f32 to vector<4x128xf32>
    %c0_54 = arith.constant 0 : index
    %c3_55 = arith.constant 3 : index
    %c0_56 = arith.constant 0 : index
    %c0_57 = arith.constant 0 : index
    %142 = vector.load %arg1[%c0_54, %c3_55, %c0_56, %c0_57] : memref<1x6x6x128xf32, #tpu.memory_space<vmem>>, vector<1x1x6x128xf32>
    %143 = vector.shape_cast %142 : vector<1x1x6x128xf32> to vector<6x128xf32>
    %144 = vector.extract_strided_slice %143 {offsets = [0, 0], sizes = [4, 128], strides = [1, 1]} : vector<6x128xf32> to vector<4x128xf32>
    %145 = vector.broadcast %0 : vector<1x128xf32> to vector<4x128xf32>
    %146 = arith.mulf %144, %145 : vector<4x128xf32>
    %147 = arith.addf %141, %146 : vector<4x128xf32>
    %148 = vector.extract_strided_slice %143 {offsets = [1, 0], sizes = [4, 128], strides = [1, 1]} : vector<6x128xf32> to vector<4x128xf32>
    %149 = vector.broadcast %1 : vector<1x128xf32> to vector<4x128xf32>
    %150 = arith.mulf %148, %149 : vector<4x128xf32>
    %151 = arith.addf %147, %150 : vector<4x128xf32>
    %152 = vector.extract_strided_slice %143 {offsets = [2, 0], sizes = [4, 128], strides = [1, 1]} : vector<6x128xf32> to vector<4x128xf32>
    %153 = vector.broadcast %2 : vector<1x128xf32> to vector<4x128xf32>
    %154 = arith.mulf %152, %153 : vector<4x128xf32>
    %155 = arith.addf %151, %154 : vector<4x128xf32>
    %c0_58 = arith.constant 0 : index
    %c4_59 = arith.constant 4 : index
    %c0_60 = arith.constant 0 : index
    %c0_61 = arith.constant 0 : index
    %156 = vector.load %arg1[%c0_58, %c4_59, %c0_60, %c0_61] : memref<1x6x6x128xf32, #tpu.memory_space<vmem>>, vector<1x1x6x128xf32>
    %157 = vector.shape_cast %156 : vector<1x1x6x128xf32> to vector<6x128xf32>
    %158 = vector.extract_strided_slice %157 {offsets = [0, 0], sizes = [4, 128], strides = [1, 1]} : vector<6x128xf32> to vector<4x128xf32>
    %159 = vector.broadcast %3 : vector<1x128xf32> to vector<4x128xf32>
    %160 = arith.mulf %158, %159 : vector<4x128xf32>
    %161 = arith.addf %155, %160 : vector<4x128xf32>
    %162 = vector.extract_strided_slice %157 {offsets = [1, 0], sizes = [4, 128], strides = [1, 1]} : vector<6x128xf32> to vector<4x128xf32>
    %163 = vector.broadcast %4 : vector<1x128xf32> to vector<4x128xf32>
    %164 = arith.mulf %162, %163 : vector<4x128xf32>
    %165 = arith.addf %161, %164 : vector<4x128xf32>
    %166 = vector.extract_strided_slice %157 {offsets = [2, 0], sizes = [4, 128], strides = [1, 1]} : vector<6x128xf32> to vector<4x128xf32>
    %167 = vector.broadcast %5 : vector<1x128xf32> to vector<4x128xf32>
    %168 = arith.mulf %166, %167 : vector<4x128xf32>
    %169 = arith.addf %165, %168 : vector<4x128xf32>
    %c0_62 = arith.constant 0 : index
    %c5_63 = arith.constant 5 : index
    %c0_64 = arith.constant 0 : index
    %c0_65 = arith.constant 0 : index
    %170 = vector.load %arg1[%c0_62, %c5_63, %c0_64, %c0_65] : memref<1x6x6x128xf32, #tpu.memory_space<vmem>>, vector<1x1x6x128xf32>
    %171 = vector.shape_cast %170 : vector<1x1x6x128xf32> to vector<6x128xf32>
    %172 = vector.extract_strided_slice %171 {offsets = [0, 0], sizes = [4, 128], strides = [1, 1]} : vector<6x128xf32> to vector<4x128xf32>
    %173 = vector.broadcast %6 : vector<1x128xf32> to vector<4x128xf32>
    %174 = arith.mulf %172, %173 : vector<4x128xf32>
    %175 = arith.addf %169, %174 : vector<4x128xf32>
    %176 = vector.extract_strided_slice %171 {offsets = [1, 0], sizes = [4, 128], strides = [1, 1]} : vector<6x128xf32> to vector<4x128xf32>
    %177 = vector.broadcast %7 : vector<1x128xf32> to vector<4x128xf32>
    %178 = arith.mulf %176, %177 : vector<4x128xf32>
    %179 = arith.addf %175, %178 : vector<4x128xf32>
    %180 = vector.extract_strided_slice %171 {offsets = [2, 0], sizes = [4, 128], strides = [1, 1]} : vector<6x128xf32> to vector<4x128xf32>
    %181 = vector.broadcast %8 : vector<1x128xf32> to vector<4x128xf32>
    %182 = arith.mulf %180, %181 : vector<4x128xf32>
    %183 = arith.addf %179, %182 : vector<4x128xf32>
    %c12 = arith.constant 12 : index
    %c0_66 = arith.constant 0 : index
    %184 = vector.load %arg6[%c12, %c0_66] : memref<16x128xf32, #tpu.memory_space<vmem>>, vector<4x128xf32>
    tpu.vector_store %arg6[%c12, %c0_66], %183 {strides = array<i32>} : memref<16x128xf32, #tpu.memory_space<vmem>>, vector<4x128xf32>,
    %c0_67 = arith.constant 0 : index
    %c0_68 = arith.constant 0 : index
    %185 = vector.load %arg6[%c0_67, %c0_68] : memref<16x128xf32, #tpu.memory_space<vmem>>, vector<16x128xf32>
    %c0_69 = arith.constant 0 : index
    %c0_70 = arith.constant 0 : index
    %186 = vector.load %arg3[%c0_69, %c0_70] : memref<128x128xf32, #tpu.memory_space<vmem>>, vector<128x128xf32>
    %cst_71 = arith.constant dense<0.000000e+00> : vector<16x128xf32>
    %187 = tpu.matmul %185, %186, %cst_71 {dimension_numbers = #tpu.dot_dimension_numbers<[1], [0], [0], [1], [0, 0, 1, 1], [], []>} : vector<16x128xf32>, vector<128x128xf32>, vector<16x128xf32> -> vector<16x128xf32>
    %c0_72 = arith.constant 0 : index
    %c0_73 = arith.constant 0 : index
    %188 = vector.load %arg4[%c0_72, %c0_73] : memref<1x128xf32, #tpu.memory_space<vmem>>, vector<1x128xf32>
    %189 = vector.broadcast %188 : vector<1x128xf32> to vector<16x128xf32>
    %190 = arith.addf %187, %189 : vector<16x128xf32>
    %cst_74 = arith.constant 0.000000e+00 : f32
    %191 = vector.broadcast %cst_74 : f32 to vector<16x128xf32>
    %192 = arith.maximumf %190, %191 : vector<16x128xf32>
    %c0_75 = arith.constant 0 : index
    %c0_76 = arith.constant 0 : index
    %c0_77 = arith.constant 0 : index
    %193 = vector.load %arg5[%c0_75, %c0_76, %c0_77] : memref<1x16x128xf32, #tpu.memory_space<vmem>>, vector<1x16x128xf32>
    %194 = vector.shape_cast %193 : vector<1x16x128xf32> to vector<16x128xf32>
    %195 = vector.shape_cast %192 : vector<16x128xf32> to vector<1x16x128xf32>
    tpu.vector_store %arg5[%c0_75, %c0_76, %c0_77], %195 {strides = array<i32>} : memref<1x16x128xf32, #tpu.memory_space<vmem>>, vector<1x16x128xf32>,
    return
  }
  func.func @transform_0(%arg0: i32) -> (i32, i32, i32, i32) {
    %c0_i32 = arith.constant 0 : i32
    %c0_i32_0 = arith.constant 0 : i32
    %c0_i32_1 = arith.constant 0 : i32
    %c0_i32_2 = arith.constant 0 : i32
    return %arg0, %c0_i32, %c0_i32_0, %c0_i32_1 : i32, i32, i32, i32
  }
  func.func @transform_1(%arg0: i32) -> (i32, i32) {
    %c0_i32 = arith.constant 0 : i32
    %c0_i32_0 = arith.constant 0 : i32
    %c0_i32_1 = arith.constant 0 : i32
    return %c0_i32, %c0_i32_0 : i32, i32
  }
  func.func @transform_2(%arg0: i32) -> (i32, i32) {
    %c0_i32 = arith.constant 0 : i32
    %c0_i32_0 = arith.constant 0 : i32
    %c0_i32_1 = arith.constant 0 : i32
    return %c0_i32, %c0_i32_0 : i32, i32
  }
  func.func @transform_3(%arg0: i32) -> (i32, i32) {
    %c0_i32 = arith.constant 0 : i32
    %c0_i32_0 = arith.constant 0 : i32
    %c0_i32_1 = arith.constant 0 : i32
    return %c0_i32, %c0_i32_0 : i32, i32
  }
  func.func @transform_4(%arg0: i32) -> (i32, i32, i32) {
    %c0_i32 = arith.constant 0 : i32
    %c0_i32_0 = arith.constant 0 : i32
    %c0_i32_1 = arith.constant 0 : i32
    return %arg0, %c0_i32, %c0_i32_0 : i32, i32, i32
  }
}

module attributes {stable_mosaic.version = 11 : i64} {
  func.func @_fused_stage_kernel(%arg0: i32, %arg1: memref<1x10x10x128xf32, #tpu.memory_space<vmem>>, %arg2: memref<9x128xf32, #tpu.memory_space<vmem>>, %arg3: memref<128x128xf32, #tpu.memory_space<vmem>>, %arg4: memref<1x128xf32, #tpu.memory_space<vmem>>, %arg5: memref<1x64x128xf32, #tpu.memory_space<vmem>>, %arg6: memref<64x128xf32, #tpu.memory_space<vmem>>) attributes {dimension_semantics = [#tpu.dimension_semantics<parallel>], iteration_bounds = array<i64: 2>, scalar_prefetch = 0 : i64, scratch_operands = 1 : i64, tpu.core_type = #tpu.core_type<tc>, window_params = [{transform_indices = @transform_0, window_bounds = array<i64: 1, 10, 10, 128>}, {pipeline_mode = #tpu.pipeline_mode<synchronous>, transform_indices = @transform_1, window_bounds = array<i64: 9, 128>}, {pipeline_mode = #tpu.pipeline_mode<synchronous>, transform_indices = @transform_2, window_bounds = array<i64: 128, 128>}, {pipeline_mode = #tpu.pipeline_mode<synchronous>, transform_indices = @transform_3, window_bounds = array<i64: 1, 128>}, {transform_indices = @transform_4, window_bounds = array<i64: 1, 64, 128>}]} {
    %c0 = arith.constant 0 : index
    %c0_0 = arith.constant 0 : index
    %0 = vector.load %arg2[%c0, %c0_0] : memref<9x128xf32, #tpu.memory_space<vmem>>, vector<1x128xf32>
    %c1 = arith.constant 1 : index
    %c0_1 = arith.constant 0 : index
    %1 = vector.load %arg2[%c1, %c0_1] : memref<9x128xf32, #tpu.memory_space<vmem>>, vector<1x128xf32>
    %c2 = arith.constant 2 : index
    %c0_2 = arith.constant 0 : index
    %2 = vector.load %arg2[%c2, %c0_2] : memref<9x128xf32, #tpu.memory_space<vmem>>, vector<1x128xf32>
    %c3 = arith.constant 3 : index
    %c0_3 = arith.constant 0 : index
    %3 = vector.load %arg2[%c3, %c0_3] : memref<9x128xf32, #tpu.memory_space<vmem>>, vector<1x128xf32>
    %c4 = arith.constant 4 : index
    %c0_4 = arith.constant 0 : index
    %4 = vector.load %arg2[%c4, %c0_4] : memref<9x128xf32, #tpu.memory_space<vmem>>, vector<1x128xf32>
    %c5 = arith.constant 5 : index
    %c0_5 = arith.constant 0 : index
    %5 = vector.load %arg2[%c5, %c0_5] : memref<9x128xf32, #tpu.memory_space<vmem>>, vector<1x128xf32>
    %c6 = arith.constant 6 : index
    %c0_6 = arith.constant 0 : index
    %6 = vector.load %arg2[%c6, %c0_6] : memref<9x128xf32, #tpu.memory_space<vmem>>, vector<1x128xf32>
    %c7 = arith.constant 7 : index
    %c0_7 = arith.constant 0 : index
    %7 = vector.load %arg2[%c7, %c0_7] : memref<9x128xf32, #tpu.memory_space<vmem>>, vector<1x128xf32>
    %c8 = arith.constant 8 : index
    %c0_8 = arith.constant 0 : index
    %8 = vector.load %arg2[%c8, %c0_8] : memref<9x128xf32, #tpu.memory_space<vmem>>, vector<1x128xf32>
    %cst = arith.constant 0.000000e+00 : f32
    %9 = vector.broadcast %cst : f32 to vector<8x128xf32>
    %c0_9 = arith.constant 0 : index
    %c0_10 = arith.constant 0 : index
    %c0_11 = arith.constant 0 : index
    %c0_12 = arith.constant 0 : index
    %10 = vector.load %arg1[%c0_9, %c0_10, %c0_11, %c0_12] : memref<1x10x10x128xf32, #tpu.memory_space<vmem>>, vector<1x1x10x128xf32>
    %11 = vector.shape_cast %10 : vector<1x1x10x128xf32> to vector<10x128xf32>
    %12 = vector.extract_strided_slice %11 {offsets = [0, 0], sizes = [8, 128], strides = [1, 1]} : vector<10x128xf32> to vector<8x128xf32>
    %13 = vector.broadcast %0 : vector<1x128xf32> to vector<8x128xf32>
    %14 = arith.mulf %12, %13 : vector<8x128xf32>
    %15 = arith.addf %9, %14 : vector<8x128xf32>
    %16 = vector.extract_strided_slice %11 {offsets = [1, 0], sizes = [8, 128], strides = [1, 1]} : vector<10x128xf32> to vector<8x128xf32>
    %17 = vector.broadcast %1 : vector<1x128xf32> to vector<8x128xf32>
    %18 = arith.mulf %16, %17 : vector<8x128xf32>
    %19 = arith.addf %15, %18 : vector<8x128xf32>
    %20 = vector.extract_strided_slice %11 {offsets = [2, 0], sizes = [8, 128], strides = [1, 1]} : vector<10x128xf32> to vector<8x128xf32>
    %21 = vector.broadcast %2 : vector<1x128xf32> to vector<8x128xf32>
    %22 = arith.mulf %20, %21 : vector<8x128xf32>
    %23 = arith.addf %19, %22 : vector<8x128xf32>
    %c0_13 = arith.constant 0 : index
    %c1_14 = arith.constant 1 : index
    %c0_15 = arith.constant 0 : index
    %c0_16 = arith.constant 0 : index
    %24 = vector.load %arg1[%c0_13, %c1_14, %c0_15, %c0_16] : memref<1x10x10x128xf32, #tpu.memory_space<vmem>>, vector<1x1x10x128xf32>
    %25 = vector.shape_cast %24 : vector<1x1x10x128xf32> to vector<10x128xf32>
    %26 = vector.extract_strided_slice %25 {offsets = [0, 0], sizes = [8, 128], strides = [1, 1]} : vector<10x128xf32> to vector<8x128xf32>
    %27 = vector.broadcast %3 : vector<1x128xf32> to vector<8x128xf32>
    %28 = arith.mulf %26, %27 : vector<8x128xf32>
    %29 = arith.addf %23, %28 : vector<8x128xf32>
    %30 = vector.extract_strided_slice %25 {offsets = [1, 0], sizes = [8, 128], strides = [1, 1]} : vector<10x128xf32> to vector<8x128xf32>
    %31 = vector.broadcast %4 : vector<1x128xf32> to vector<8x128xf32>
    %32 = arith.mulf %30, %31 : vector<8x128xf32>
    %33 = arith.addf %29, %32 : vector<8x128xf32>
    %34 = vector.extract_strided_slice %25 {offsets = [2, 0], sizes = [8, 128], strides = [1, 1]} : vector<10x128xf32> to vector<8x128xf32>
    %35 = vector.broadcast %5 : vector<1x128xf32> to vector<8x128xf32>
    %36 = arith.mulf %34, %35 : vector<8x128xf32>
    %37 = arith.addf %33, %36 : vector<8x128xf32>
    %c0_17 = arith.constant 0 : index
    %c2_18 = arith.constant 2 : index
    %c0_19 = arith.constant 0 : index
    %c0_20 = arith.constant 0 : index
    %38 = vector.load %arg1[%c0_17, %c2_18, %c0_19, %c0_20] : memref<1x10x10x128xf32, #tpu.memory_space<vmem>>, vector<1x1x10x128xf32>
    %39 = vector.shape_cast %38 : vector<1x1x10x128xf32> to vector<10x128xf32>
    %40 = vector.extract_strided_slice %39 {offsets = [0, 0], sizes = [8, 128], strides = [1, 1]} : vector<10x128xf32> to vector<8x128xf32>
    %41 = vector.broadcast %6 : vector<1x128xf32> to vector<8x128xf32>
    %42 = arith.mulf %40, %41 : vector<8x128xf32>
    %43 = arith.addf %37, %42 : vector<8x128xf32>
    %44 = vector.extract_strided_slice %39 {offsets = [1, 0], sizes = [8, 128], strides = [1, 1]} : vector<10x128xf32> to vector<8x128xf32>
    %45 = vector.broadcast %7 : vector<1x128xf32> to vector<8x128xf32>
    %46 = arith.mulf %44, %45 : vector<8x128xf32>
    %47 = arith.addf %43, %46 : vector<8x128xf32>
    %48 = vector.extract_strided_slice %39 {offsets = [2, 0], sizes = [8, 128], strides = [1, 1]} : vector<10x128xf32> to vector<8x128xf32>
    %49 = vector.broadcast %8 : vector<1x128xf32> to vector<8x128xf32>
    %50 = arith.mulf %48, %49 : vector<8x128xf32>
    %51 = arith.addf %47, %50 : vector<8x128xf32>
    %c0_21 = arith.constant 0 : index
    %c0_22 = arith.constant 0 : index
    %52 = vector.load %arg6[%c0_21, %c0_22] : memref<64x128xf32, #tpu.memory_space<vmem>>, vector<8x128xf32>
    tpu.vector_store %arg6[%c0_21, %c0_22], %51 {strides = array<i32>} : memref<64x128xf32, #tpu.memory_space<vmem>>, vector<8x128xf32>,
    %cst_23 = arith.constant 0.000000e+00 : f32
    %53 = vector.broadcast %cst_23 : f32 to vector<8x128xf32>
    %c0_24 = arith.constant 0 : index
    %c1_25 = arith.constant 1 : index
    %c0_26 = arith.constant 0 : index
    %c0_27 = arith.constant 0 : index
    %54 = vector.load %arg1[%c0_24, %c1_25, %c0_26, %c0_27] : memref<1x10x10x128xf32, #tpu.memory_space<vmem>>, vector<1x1x10x128xf32>
    %55 = vector.shape_cast %54 : vector<1x1x10x128xf32> to vector<10x128xf32>
    %56 = vector.extract_strided_slice %55 {offsets = [0, 0], sizes = [8, 128], strides = [1, 1]} : vector<10x128xf32> to vector<8x128xf32>
    %57 = vector.broadcast %0 : vector<1x128xf32> to vector<8x128xf32>
    %58 = arith.mulf %56, %57 : vector<8x128xf32>
    %59 = arith.addf %53, %58 : vector<8x128xf32>
    %60 = vector.extract_strided_slice %55 {offsets = [1, 0], sizes = [8, 128], strides = [1, 1]} : vector<10x128xf32> to vector<8x128xf32>
    %61 = vector.broadcast %1 : vector<1x128xf32> to vector<8x128xf32>
    %62 = arith.mulf %60, %61 : vector<8x128xf32>
    %63 = arith.addf %59, %62 : vector<8x128xf32>
    %64 = vector.extract_strided_slice %55 {offsets = [2, 0], sizes = [8, 128], strides = [1, 1]} : vector<10x128xf32> to vector<8x128xf32>
    %65 = vector.broadcast %2 : vector<1x128xf32> to vector<8x128xf32>
    %66 = arith.mulf %64, %65 : vector<8x128xf32>
    %67 = arith.addf %63, %66 : vector<8x128xf32>
    %c0_28 = arith.constant 0 : index
    %c2_29 = arith.constant 2 : index
    %c0_30 = arith.constant 0 : index
    %c0_31 = arith.constant 0 : index
    %68 = vector.load %arg1[%c0_28, %c2_29, %c0_30, %c0_31] : memref<1x10x10x128xf32, #tpu.memory_space<vmem>>, vector<1x1x10x128xf32>
    %69 = vector.shape_cast %68 : vector<1x1x10x128xf32> to vector<10x128xf32>
    %70 = vector.extract_strided_slice %69 {offsets = [0, 0], sizes = [8, 128], strides = [1, 1]} : vector<10x128xf32> to vector<8x128xf32>
    %71 = vector.broadcast %3 : vector<1x128xf32> to vector<8x128xf32>
    %72 = arith.mulf %70, %71 : vector<8x128xf32>
    %73 = arith.addf %67, %72 : vector<8x128xf32>
    %74 = vector.extract_strided_slice %69 {offsets = [1, 0], sizes = [8, 128], strides = [1, 1]} : vector<10x128xf32> to vector<8x128xf32>
    %75 = vector.broadcast %4 : vector<1x128xf32> to vector<8x128xf32>
    %76 = arith.mulf %74, %75 : vector<8x128xf32>
    %77 = arith.addf %73, %76 : vector<8x128xf32>
    %78 = vector.extract_strided_slice %69 {offsets = [2, 0], sizes = [8, 128], strides = [1, 1]} : vector<10x128xf32> to vector<8x128xf32>
    %79 = vector.broadcast %5 : vector<1x128xf32> to vector<8x128xf32>
    %80 = arith.mulf %78, %79 : vector<8x128xf32>
    %81 = arith.addf %77, %80 : vector<8x128xf32>
    %c0_32 = arith.constant 0 : index
    %c3_33 = arith.constant 3 : index
    %c0_34 = arith.constant 0 : index
    %c0_35 = arith.constant 0 : index
    %82 = vector.load %arg1[%c0_32, %c3_33, %c0_34, %c0_35] : memref<1x10x10x128xf32, #tpu.memory_space<vmem>>, vector<1x1x10x128xf32>
    %83 = vector.shape_cast %82 : vector<1x1x10x128xf32> to vector<10x128xf32>
    %84 = vector.extract_strided_slice %83 {offsets = [0, 0], sizes = [8, 128], strides = [1, 1]} : vector<10x128xf32> to vector<8x128xf32>
    %85 = vector.broadcast %6 : vector<1x128xf32> to vector<8x128xf32>
    %86 = arith.mulf %84, %85 : vector<8x128xf32>
    %87 = arith.addf %81, %86 : vector<8x128xf32>
    %88 = vector.extract_strided_slice %83 {offsets = [1, 0], sizes = [8, 128], strides = [1, 1]} : vector<10x128xf32> to vector<8x128xf32>
    %89 = vector.broadcast %7 : vector<1x128xf32> to vector<8x128xf32>
    %90 = arith.mulf %88, %89 : vector<8x128xf32>
    %91 = arith.addf %87, %90 : vector<8x128xf32>
    %92 = vector.extract_strided_slice %83 {offsets = [2, 0], sizes = [8, 128], strides = [1, 1]} : vector<10x128xf32> to vector<8x128xf32>
    %93 = vector.broadcast %8 : vector<1x128xf32> to vector<8x128xf32>
    %94 = arith.mulf %92, %93 : vector<8x128xf32>
    %95 = arith.addf %91, %94 : vector<8x128xf32>
    %c8_36 = arith.constant 8 : index
    %c0_37 = arith.constant 0 : index
    %96 = vector.load %arg6[%c8_36, %c0_37] : memref<64x128xf32, #tpu.memory_space<vmem>>, vector<8x128xf32>
    tpu.vector_store %arg6[%c8_36, %c0_37], %95 {strides = array<i32>} : memref<64x128xf32, #tpu.memory_space<vmem>>, vector<8x128xf32>,
    %cst_38 = arith.constant 0.000000e+00 : f32
    %97 = vector.broadcast %cst_38 : f32 to vector<8x128xf32>
    %c0_39 = arith.constant 0 : index
    %c2_40 = arith.constant 2 : index
    %c0_41 = arith.constant 0 : index
    %c0_42 = arith.constant 0 : index
    %98 = vector.load %arg1[%c0_39, %c2_40, %c0_41, %c0_42] : memref<1x10x10x128xf32, #tpu.memory_space<vmem>>, vector<1x1x10x128xf32>
    %99 = vector.shape_cast %98 : vector<1x1x10x128xf32> to vector<10x128xf32>
    %100 = vector.extract_strided_slice %99 {offsets = [0, 0], sizes = [8, 128], strides = [1, 1]} : vector<10x128xf32> to vector<8x128xf32>
    %101 = vector.broadcast %0 : vector<1x128xf32> to vector<8x128xf32>
    %102 = arith.mulf %100, %101 : vector<8x128xf32>
    %103 = arith.addf %97, %102 : vector<8x128xf32>
    %104 = vector.extract_strided_slice %99 {offsets = [1, 0], sizes = [8, 128], strides = [1, 1]} : vector<10x128xf32> to vector<8x128xf32>
    %105 = vector.broadcast %1 : vector<1x128xf32> to vector<8x128xf32>
    %106 = arith.mulf %104, %105 : vector<8x128xf32>
    %107 = arith.addf %103, %106 : vector<8x128xf32>
    %108 = vector.extract_strided_slice %99 {offsets = [2, 0], sizes = [8, 128], strides = [1, 1]} : vector<10x128xf32> to vector<8x128xf32>
    %109 = vector.broadcast %2 : vector<1x128xf32> to vector<8x128xf32>
    %110 = arith.mulf %108, %109 : vector<8x128xf32>
    %111 = arith.addf %107, %110 : vector<8x128xf32>
    %c0_43 = arith.constant 0 : index
    %c3_44 = arith.constant 3 : index
    %c0_45 = arith.constant 0 : index
    %c0_46 = arith.constant 0 : index
    %112 = vector.load %arg1[%c0_43, %c3_44, %c0_45, %c0_46] : memref<1x10x10x128xf32, #tpu.memory_space<vmem>>, vector<1x1x10x128xf32>
    %113 = vector.shape_cast %112 : vector<1x1x10x128xf32> to vector<10x128xf32>
    %114 = vector.extract_strided_slice %113 {offsets = [0, 0], sizes = [8, 128], strides = [1, 1]} : vector<10x128xf32> to vector<8x128xf32>
    %115 = vector.broadcast %3 : vector<1x128xf32> to vector<8x128xf32>
    %116 = arith.mulf %114, %115 : vector<8x128xf32>
    %117 = arith.addf %111, %116 : vector<8x128xf32>
    %118 = vector.extract_strided_slice %113 {offsets = [1, 0], sizes = [8, 128], strides = [1, 1]} : vector<10x128xf32> to vector<8x128xf32>
    %119 = vector.broadcast %4 : vector<1x128xf32> to vector<8x128xf32>
    %120 = arith.mulf %118, %119 : vector<8x128xf32>
    %121 = arith.addf %117, %120 : vector<8x128xf32>
    %122 = vector.extract_strided_slice %113 {offsets = [2, 0], sizes = [8, 128], strides = [1, 1]} : vector<10x128xf32> to vector<8x128xf32>
    %123 = vector.broadcast %5 : vector<1x128xf32> to vector<8x128xf32>
    %124 = arith.mulf %122, %123 : vector<8x128xf32>
    %125 = arith.addf %121, %124 : vector<8x128xf32>
    %c0_47 = arith.constant 0 : index
    %c4_48 = arith.constant 4 : index
    %c0_49 = arith.constant 0 : index
    %c0_50 = arith.constant 0 : index
    %126 = vector.load %arg1[%c0_47, %c4_48, %c0_49, %c0_50] : memref<1x10x10x128xf32, #tpu.memory_space<vmem>>, vector<1x1x10x128xf32>
    %127 = vector.shape_cast %126 : vector<1x1x10x128xf32> to vector<10x128xf32>
    %128 = vector.extract_strided_slice %127 {offsets = [0, 0], sizes = [8, 128], strides = [1, 1]} : vector<10x128xf32> to vector<8x128xf32>
    %129 = vector.broadcast %6 : vector<1x128xf32> to vector<8x128xf32>
    %130 = arith.mulf %128, %129 : vector<8x128xf32>
    %131 = arith.addf %125, %130 : vector<8x128xf32>
    %132 = vector.extract_strided_slice %127 {offsets = [1, 0], sizes = [8, 128], strides = [1, 1]} : vector<10x128xf32> to vector<8x128xf32>
    %133 = vector.broadcast %7 : vector<1x128xf32> to vector<8x128xf32>
    %134 = arith.mulf %132, %133 : vector<8x128xf32>
    %135 = arith.addf %131, %134 : vector<8x128xf32>
    %136 = vector.extract_strided_slice %127 {offsets = [2, 0], sizes = [8, 128], strides = [1, 1]} : vector<10x128xf32> to vector<8x128xf32>
    %137 = vector.broadcast %8 : vector<1x128xf32> to vector<8x128xf32>
    %138 = arith.mulf %136, %137 : vector<8x128xf32>
    %139 = arith.addf %135, %138 : vector<8x128xf32>
    %c16 = arith.constant 16 : index
    %c0_51 = arith.constant 0 : index
    %140 = vector.load %arg6[%c16, %c0_51] : memref<64x128xf32, #tpu.memory_space<vmem>>, vector<8x128xf32>
    tpu.vector_store %arg6[%c16, %c0_51], %139 {strides = array<i32>} : memref<64x128xf32, #tpu.memory_space<vmem>>, vector<8x128xf32>,
    %cst_52 = arith.constant 0.000000e+00 : f32
    %141 = vector.broadcast %cst_52 : f32 to vector<8x128xf32>
    %c0_53 = arith.constant 0 : index
    %c3_54 = arith.constant 3 : index
    %c0_55 = arith.constant 0 : index
    %c0_56 = arith.constant 0 : index
    %142 = vector.load %arg1[%c0_53, %c3_54, %c0_55, %c0_56] : memref<1x10x10x128xf32, #tpu.memory_space<vmem>>, vector<1x1x10x128xf32>
    %143 = vector.shape_cast %142 : vector<1x1x10x128xf32> to vector<10x128xf32>
    %144 = vector.extract_strided_slice %143 {offsets = [0, 0], sizes = [8, 128], strides = [1, 1]} : vector<10x128xf32> to vector<8x128xf32>
    %145 = vector.broadcast %0 : vector<1x128xf32> to vector<8x128xf32>
    %146 = arith.mulf %144, %145 : vector<8x128xf32>
    %147 = arith.addf %141, %146 : vector<8x128xf32>
    %148 = vector.extract_strided_slice %143 {offsets = [1, 0], sizes = [8, 128], strides = [1, 1]} : vector<10x128xf32> to vector<8x128xf32>
    %149 = vector.broadcast %1 : vector<1x128xf32> to vector<8x128xf32>
    %150 = arith.mulf %148, %149 : vector<8x128xf32>
    %151 = arith.addf %147, %150 : vector<8x128xf32>
    %152 = vector.extract_strided_slice %143 {offsets = [2, 0], sizes = [8, 128], strides = [1, 1]} : vector<10x128xf32> to vector<8x128xf32>
    %153 = vector.broadcast %2 : vector<1x128xf32> to vector<8x128xf32>
    %154 = arith.mulf %152, %153 : vector<8x128xf32>
    %155 = arith.addf %151, %154 : vector<8x128xf32>
    %c0_57 = arith.constant 0 : index
    %c4_58 = arith.constant 4 : index
    %c0_59 = arith.constant 0 : index
    %c0_60 = arith.constant 0 : index
    %156 = vector.load %arg1[%c0_57, %c4_58, %c0_59, %c0_60] : memref<1x10x10x128xf32, #tpu.memory_space<vmem>>, vector<1x1x10x128xf32>
    %157 = vector.shape_cast %156 : vector<1x1x10x128xf32> to vector<10x128xf32>
    %158 = vector.extract_strided_slice %157 {offsets = [0, 0], sizes = [8, 128], strides = [1, 1]} : vector<10x128xf32> to vector<8x128xf32>
    %159 = vector.broadcast %3 : vector<1x128xf32> to vector<8x128xf32>
    %160 = arith.mulf %158, %159 : vector<8x128xf32>
    %161 = arith.addf %155, %160 : vector<8x128xf32>
    %162 = vector.extract_strided_slice %157 {offsets = [1, 0], sizes = [8, 128], strides = [1, 1]} : vector<10x128xf32> to vector<8x128xf32>
    %163 = vector.broadcast %4 : vector<1x128xf32> to vector<8x128xf32>
    %164 = arith.mulf %162, %163 : vector<8x128xf32>
    %165 = arith.addf %161, %164 : vector<8x128xf32>
    %166 = vector.extract_strided_slice %157 {offsets = [2, 0], sizes = [8, 128], strides = [1, 1]} : vector<10x128xf32> to vector<8x128xf32>
    %167 = vector.broadcast %5 : vector<1x128xf32> to vector<8x128xf32>
    %168 = arith.mulf %166, %167 : vector<8x128xf32>
    %169 = arith.addf %165, %168 : vector<8x128xf32>
    %c0_61 = arith.constant 0 : index
    %c5_62 = arith.constant 5 : index
    %c0_63 = arith.constant 0 : index
    %c0_64 = arith.constant 0 : index
    %170 = vector.load %arg1[%c0_61, %c5_62, %c0_63, %c0_64] : memref<1x10x10x128xf32, #tpu.memory_space<vmem>>, vector<1x1x10x128xf32>
    %171 = vector.shape_cast %170 : vector<1x1x10x128xf32> to vector<10x128xf32>
    %172 = vector.extract_strided_slice %171 {offsets = [0, 0], sizes = [8, 128], strides = [1, 1]} : vector<10x128xf32> to vector<8x128xf32>
    %173 = vector.broadcast %6 : vector<1x128xf32> to vector<8x128xf32>
    %174 = arith.mulf %172, %173 : vector<8x128xf32>
    %175 = arith.addf %169, %174 : vector<8x128xf32>
    %176 = vector.extract_strided_slice %171 {offsets = [1, 0], sizes = [8, 128], strides = [1, 1]} : vector<10x128xf32> to vector<8x128xf32>
    %177 = vector.broadcast %7 : vector<1x128xf32> to vector<8x128xf32>
    %178 = arith.mulf %176, %177 : vector<8x128xf32>
    %179 = arith.addf %175, %178 : vector<8x128xf32>
    %180 = vector.extract_strided_slice %171 {offsets = [2, 0], sizes = [8, 128], strides = [1, 1]} : vector<10x128xf32> to vector<8x128xf32>
    %181 = vector.broadcast %8 : vector<1x128xf32> to vector<8x128xf32>
    %182 = arith.mulf %180, %181 : vector<8x128xf32>
    %183 = arith.addf %179, %182 : vector<8x128xf32>
    %c24 = arith.constant 24 : index
    %c0_65 = arith.constant 0 : index
    %184 = vector.load %arg6[%c24, %c0_65] : memref<64x128xf32, #tpu.memory_space<vmem>>, vector<8x128xf32>
    tpu.vector_store %arg6[%c24, %c0_65], %183 {strides = array<i32>} : memref<64x128xf32, #tpu.memory_space<vmem>>, vector<8x128xf32>,
    %cst_66 = arith.constant 0.000000e+00 : f32
    %185 = vector.broadcast %cst_66 : f32 to vector<8x128xf32>
    %c0_67 = arith.constant 0 : index
    %c4_68 = arith.constant 4 : index
    %c0_69 = arith.constant 0 : index
    %c0_70 = arith.constant 0 : index
    %186 = vector.load %arg1[%c0_67, %c4_68, %c0_69, %c0_70] : memref<1x10x10x128xf32, #tpu.memory_space<vmem>>, vector<1x1x10x128xf32>
    %187 = vector.shape_cast %186 : vector<1x1x10x128xf32> to vector<10x128xf32>
    %188 = vector.extract_strided_slice %187 {offsets = [0, 0], sizes = [8, 128], strides = [1, 1]} : vector<10x128xf32> to vector<8x128xf32>
    %189 = vector.broadcast %0 : vector<1x128xf32> to vector<8x128xf32>
    %190 = arith.mulf %188, %189 : vector<8x128xf32>
    %191 = arith.addf %185, %190 : vector<8x128xf32>
    %192 = vector.extract_strided_slice %187 {offsets = [1, 0], sizes = [8, 128], strides = [1, 1]} : vector<10x128xf32> to vector<8x128xf32>
    %193 = vector.broadcast %1 : vector<1x128xf32> to vector<8x128xf32>
    %194 = arith.mulf %192, %193 : vector<8x128xf32>
    %195 = arith.addf %191, %194 : vector<8x128xf32>
    %196 = vector.extract_strided_slice %187 {offsets = [2, 0], sizes = [8, 128], strides = [1, 1]} : vector<10x128xf32> to vector<8x128xf32>
    %197 = vector.broadcast %2 : vector<1x128xf32> to vector<8x128xf32>
    %198 = arith.mulf %196, %197 : vector<8x128xf32>
    %199 = arith.addf %195, %198 : vector<8x128xf32>
    %c0_71 = arith.constant 0 : index
    %c5_72 = arith.constant 5 : index
    %c0_73 = arith.constant 0 : index
    %c0_74 = arith.constant 0 : index
    %200 = vector.load %arg1[%c0_71, %c5_72, %c0_73, %c0_74] : memref<1x10x10x128xf32, #tpu.memory_space<vmem>>, vector<1x1x10x128xf32>
    %201 = vector.shape_cast %200 : vector<1x1x10x128xf32> to vector<10x128xf32>
    %202 = vector.extract_strided_slice %201 {offsets = [0, 0], sizes = [8, 128], strides = [1, 1]} : vector<10x128xf32> to vector<8x128xf32>
    %203 = vector.broadcast %3 : vector<1x128xf32> to vector<8x128xf32>
    %204 = arith.mulf %202, %203 : vector<8x128xf32>
    %205 = arith.addf %199, %204 : vector<8x128xf32>
    %206 = vector.extract_strided_slice %201 {offsets = [1, 0], sizes = [8, 128], strides = [1, 1]} : vector<10x128xf32> to vector<8x128xf32>
    %207 = vector.broadcast %4 : vector<1x128xf32> to vector<8x128xf32>
    %208 = arith.mulf %206, %207 : vector<8x128xf32>
    %209 = arith.addf %205, %208 : vector<8x128xf32>
    %210 = vector.extract_strided_slice %201 {offsets = [2, 0], sizes = [8, 128], strides = [1, 1]} : vector<10x128xf32> to vector<8x128xf32>
    %211 = vector.broadcast %5 : vector<1x128xf32> to vector<8x128xf32>
    %212 = arith.mulf %210, %211 : vector<8x128xf32>
    %213 = arith.addf %209, %212 : vector<8x128xf32>
    %c0_75 = arith.constant 0 : index
    %c6_76 = arith.constant 6 : index
    %c0_77 = arith.constant 0 : index
    %c0_78 = arith.constant 0 : index
    %214 = vector.load %arg1[%c0_75, %c6_76, %c0_77, %c0_78] : memref<1x10x10x128xf32, #tpu.memory_space<vmem>>, vector<1x1x10x128xf32>
    %215 = vector.shape_cast %214 : vector<1x1x10x128xf32> to vector<10x128xf32>
    %216 = vector.extract_strided_slice %215 {offsets = [0, 0], sizes = [8, 128], strides = [1, 1]} : vector<10x128xf32> to vector<8x128xf32>
    %217 = vector.broadcast %6 : vector<1x128xf32> to vector<8x128xf32>
    %218 = arith.mulf %216, %217 : vector<8x128xf32>
    %219 = arith.addf %213, %218 : vector<8x128xf32>
    %220 = vector.extract_strided_slice %215 {offsets = [1, 0], sizes = [8, 128], strides = [1, 1]} : vector<10x128xf32> to vector<8x128xf32>
    %221 = vector.broadcast %7 : vector<1x128xf32> to vector<8x128xf32>
    %222 = arith.mulf %220, %221 : vector<8x128xf32>
    %223 = arith.addf %219, %222 : vector<8x128xf32>
    %224 = vector.extract_strided_slice %215 {offsets = [2, 0], sizes = [8, 128], strides = [1, 1]} : vector<10x128xf32> to vector<8x128xf32>
    %225 = vector.broadcast %8 : vector<1x128xf32> to vector<8x128xf32>
    %226 = arith.mulf %224, %225 : vector<8x128xf32>
    %227 = arith.addf %223, %226 : vector<8x128xf32>
    %c32 = arith.constant 32 : index
    %c0_79 = arith.constant 0 : index
    %228 = vector.load %arg6[%c32, %c0_79] : memref<64x128xf32, #tpu.memory_space<vmem>>, vector<8x128xf32>
    tpu.vector_store %arg6[%c32, %c0_79], %227 {strides = array<i32>} : memref<64x128xf32, #tpu.memory_space<vmem>>, vector<8x128xf32>,
    %cst_80 = arith.constant 0.000000e+00 : f32
    %229 = vector.broadcast %cst_80 : f32 to vector<8x128xf32>
    %c0_81 = arith.constant 0 : index
    %c5_82 = arith.constant 5 : index
    %c0_83 = arith.constant 0 : index
    %c0_84 = arith.constant 0 : index
    %230 = vector.load %arg1[%c0_81, %c5_82, %c0_83, %c0_84] : memref<1x10x10x128xf32, #tpu.memory_space<vmem>>, vector<1x1x10x128xf32>
    %231 = vector.shape_cast %230 : vector<1x1x10x128xf32> to vector<10x128xf32>
    %232 = vector.extract_strided_slice %231 {offsets = [0, 0], sizes = [8, 128], strides = [1, 1]} : vector<10x128xf32> to vector<8x128xf32>
    %233 = vector.broadcast %0 : vector<1x128xf32> to vector<8x128xf32>
    %234 = arith.mulf %232, %233 : vector<8x128xf32>
    %235 = arith.addf %229, %234 : vector<8x128xf32>
    %236 = vector.extract_strided_slice %231 {offsets = [1, 0], sizes = [8, 128], strides = [1, 1]} : vector<10x128xf32> to vector<8x128xf32>
    %237 = vector.broadcast %1 : vector<1x128xf32> to vector<8x128xf32>
    %238 = arith.mulf %236, %237 : vector<8x128xf32>
    %239 = arith.addf %235, %238 : vector<8x128xf32>
    %240 = vector.extract_strided_slice %231 {offsets = [2, 0], sizes = [8, 128], strides = [1, 1]} : vector<10x128xf32> to vector<8x128xf32>
    %241 = vector.broadcast %2 : vector<1x128xf32> to vector<8x128xf32>
    %242 = arith.mulf %240, %241 : vector<8x128xf32>
    %243 = arith.addf %239, %242 : vector<8x128xf32>
    %c0_85 = arith.constant 0 : index
    %c6_86 = arith.constant 6 : index
    %c0_87 = arith.constant 0 : index
    %c0_88 = arith.constant 0 : index
    %244 = vector.load %arg1[%c0_85, %c6_86, %c0_87, %c0_88] : memref<1x10x10x128xf32, #tpu.memory_space<vmem>>, vector<1x1x10x128xf32>
    %245 = vector.shape_cast %244 : vector<1x1x10x128xf32> to vector<10x128xf32>
    %246 = vector.extract_strided_slice %245 {offsets = [0, 0], sizes = [8, 128], strides = [1, 1]} : vector<10x128xf32> to vector<8x128xf32>
    %247 = vector.broadcast %3 : vector<1x128xf32> to vector<8x128xf32>
    %248 = arith.mulf %246, %247 : vector<8x128xf32>
    %249 = arith.addf %243, %248 : vector<8x128xf32>
    %250 = vector.extract_strided_slice %245 {offsets = [1, 0], sizes = [8, 128], strides = [1, 1]} : vector<10x128xf32> to vector<8x128xf32>
    %251 = vector.broadcast %4 : vector<1x128xf32> to vector<8x128xf32>
    %252 = arith.mulf %250, %251 : vector<8x128xf32>
    %253 = arith.addf %249, %252 : vector<8x128xf32>
    %254 = vector.extract_strided_slice %245 {offsets = [2, 0], sizes = [8, 128], strides = [1, 1]} : vector<10x128xf32> to vector<8x128xf32>
    %255 = vector.broadcast %5 : vector<1x128xf32> to vector<8x128xf32>
    %256 = arith.mulf %254, %255 : vector<8x128xf32>
    %257 = arith.addf %253, %256 : vector<8x128xf32>
    %c0_89 = arith.constant 0 : index
    %c7_90 = arith.constant 7 : index
    %c0_91 = arith.constant 0 : index
    %c0_92 = arith.constant 0 : index
    %258 = vector.load %arg1[%c0_89, %c7_90, %c0_91, %c0_92] : memref<1x10x10x128xf32, #tpu.memory_space<vmem>>, vector<1x1x10x128xf32>
    %259 = vector.shape_cast %258 : vector<1x1x10x128xf32> to vector<10x128xf32>
    %260 = vector.extract_strided_slice %259 {offsets = [0, 0], sizes = [8, 128], strides = [1, 1]} : vector<10x128xf32> to vector<8x128xf32>
    %261 = vector.broadcast %6 : vector<1x128xf32> to vector<8x128xf32>
    %262 = arith.mulf %260, %261 : vector<8x128xf32>
    %263 = arith.addf %257, %262 : vector<8x128xf32>
    %264 = vector.extract_strided_slice %259 {offsets = [1, 0], sizes = [8, 128], strides = [1, 1]} : vector<10x128xf32> to vector<8x128xf32>
    %265 = vector.broadcast %7 : vector<1x128xf32> to vector<8x128xf32>
    %266 = arith.mulf %264, %265 : vector<8x128xf32>
    %267 = arith.addf %263, %266 : vector<8x128xf32>
    %268 = vector.extract_strided_slice %259 {offsets = [2, 0], sizes = [8, 128], strides = [1, 1]} : vector<10x128xf32> to vector<8x128xf32>
    %269 = vector.broadcast %8 : vector<1x128xf32> to vector<8x128xf32>
    %270 = arith.mulf %268, %269 : vector<8x128xf32>
    %271 = arith.addf %267, %270 : vector<8x128xf32>
    %c40 = arith.constant 40 : index
    %c0_93 = arith.constant 0 : index
    %272 = vector.load %arg6[%c40, %c0_93] : memref<64x128xf32, #tpu.memory_space<vmem>>, vector<8x128xf32>
    tpu.vector_store %arg6[%c40, %c0_93], %271 {strides = array<i32>} : memref<64x128xf32, #tpu.memory_space<vmem>>, vector<8x128xf32>,
    %cst_94 = arith.constant 0.000000e+00 : f32
    %273 = vector.broadcast %cst_94 : f32 to vector<8x128xf32>
    %c0_95 = arith.constant 0 : index
    %c6_96 = arith.constant 6 : index
    %c0_97 = arith.constant 0 : index
    %c0_98 = arith.constant 0 : index
    %274 = vector.load %arg1[%c0_95, %c6_96, %c0_97, %c0_98] : memref<1x10x10x128xf32, #tpu.memory_space<vmem>>, vector<1x1x10x128xf32>
    %275 = vector.shape_cast %274 : vector<1x1x10x128xf32> to vector<10x128xf32>
    %276 = vector.extract_strided_slice %275 {offsets = [0, 0], sizes = [8, 128], strides = [1, 1]} : vector<10x128xf32> to vector<8x128xf32>
    %277 = vector.broadcast %0 : vector<1x128xf32> to vector<8x128xf32>
    %278 = arith.mulf %276, %277 : vector<8x128xf32>
    %279 = arith.addf %273, %278 : vector<8x128xf32>
    %280 = vector.extract_strided_slice %275 {offsets = [1, 0], sizes = [8, 128], strides = [1, 1]} : vector<10x128xf32> to vector<8x128xf32>
    %281 = vector.broadcast %1 : vector<1x128xf32> to vector<8x128xf32>
    %282 = arith.mulf %280, %281 : vector<8x128xf32>
    %283 = arith.addf %279, %282 : vector<8x128xf32>
    %284 = vector.extract_strided_slice %275 {offsets = [2, 0], sizes = [8, 128], strides = [1, 1]} : vector<10x128xf32> to vector<8x128xf32>
    %285 = vector.broadcast %2 : vector<1x128xf32> to vector<8x128xf32>
    %286 = arith.mulf %284, %285 : vector<8x128xf32>
    %287 = arith.addf %283, %286 : vector<8x128xf32>
    %c0_99 = arith.constant 0 : index
    %c7_100 = arith.constant 7 : index
    %c0_101 = arith.constant 0 : index
    %c0_102 = arith.constant 0 : index
    %288 = vector.load %arg1[%c0_99, %c7_100, %c0_101, %c0_102] : memref<1x10x10x128xf32, #tpu.memory_space<vmem>>, vector<1x1x10x128xf32>
    %289 = vector.shape_cast %288 : vector<1x1x10x128xf32> to vector<10x128xf32>
    %290 = vector.extract_strided_slice %289 {offsets = [0, 0], sizes = [8, 128], strides = [1, 1]} : vector<10x128xf32> to vector<8x128xf32>
    %291 = vector.broadcast %3 : vector<1x128xf32> to vector<8x128xf32>
    %292 = arith.mulf %290, %291 : vector<8x128xf32>
    %293 = arith.addf %287, %292 : vector<8x128xf32>
    %294 = vector.extract_strided_slice %289 {offsets = [1, 0], sizes = [8, 128], strides = [1, 1]} : vector<10x128xf32> to vector<8x128xf32>
    %295 = vector.broadcast %4 : vector<1x128xf32> to vector<8x128xf32>
    %296 = arith.mulf %294, %295 : vector<8x128xf32>
    %297 = arith.addf %293, %296 : vector<8x128xf32>
    %298 = vector.extract_strided_slice %289 {offsets = [2, 0], sizes = [8, 128], strides = [1, 1]} : vector<10x128xf32> to vector<8x128xf32>
    %299 = vector.broadcast %5 : vector<1x128xf32> to vector<8x128xf32>
    %300 = arith.mulf %298, %299 : vector<8x128xf32>
    %301 = arith.addf %297, %300 : vector<8x128xf32>
    %c0_103 = arith.constant 0 : index
    %c8_104 = arith.constant 8 : index
    %c0_105 = arith.constant 0 : index
    %c0_106 = arith.constant 0 : index
    %302 = vector.load %arg1[%c0_103, %c8_104, %c0_105, %c0_106] : memref<1x10x10x128xf32, #tpu.memory_space<vmem>>, vector<1x1x10x128xf32>
    %303 = vector.shape_cast %302 : vector<1x1x10x128xf32> to vector<10x128xf32>
    %304 = vector.extract_strided_slice %303 {offsets = [0, 0], sizes = [8, 128], strides = [1, 1]} : vector<10x128xf32> to vector<8x128xf32>
    %305 = vector.broadcast %6 : vector<1x128xf32> to vector<8x128xf32>
    %306 = arith.mulf %304, %305 : vector<8x128xf32>
    %307 = arith.addf %301, %306 : vector<8x128xf32>
    %308 = vector.extract_strided_slice %303 {offsets = [1, 0], sizes = [8, 128], strides = [1, 1]} : vector<10x128xf32> to vector<8x128xf32>
    %309 = vector.broadcast %7 : vector<1x128xf32> to vector<8x128xf32>
    %310 = arith.mulf %308, %309 : vector<8x128xf32>
    %311 = arith.addf %307, %310 : vector<8x128xf32>
    %312 = vector.extract_strided_slice %303 {offsets = [2, 0], sizes = [8, 128], strides = [1, 1]} : vector<10x128xf32> to vector<8x128xf32>
    %313 = vector.broadcast %8 : vector<1x128xf32> to vector<8x128xf32>
    %314 = arith.mulf %312, %313 : vector<8x128xf32>
    %315 = arith.addf %311, %314 : vector<8x128xf32>
    %c48 = arith.constant 48 : index
    %c0_107 = arith.constant 0 : index
    %316 = vector.load %arg6[%c48, %c0_107] : memref<64x128xf32, #tpu.memory_space<vmem>>, vector<8x128xf32>
    tpu.vector_store %arg6[%c48, %c0_107], %315 {strides = array<i32>} : memref<64x128xf32, #tpu.memory_space<vmem>>, vector<8x128xf32>,
    %cst_108 = arith.constant 0.000000e+00 : f32
    %317 = vector.broadcast %cst_108 : f32 to vector<8x128xf32>
    %c0_109 = arith.constant 0 : index
    %c7_110 = arith.constant 7 : index
    %c0_111 = arith.constant 0 : index
    %c0_112 = arith.constant 0 : index
    %318 = vector.load %arg1[%c0_109, %c7_110, %c0_111, %c0_112] : memref<1x10x10x128xf32, #tpu.memory_space<vmem>>, vector<1x1x10x128xf32>
    %319 = vector.shape_cast %318 : vector<1x1x10x128xf32> to vector<10x128xf32>
    %320 = vector.extract_strided_slice %319 {offsets = [0, 0], sizes = [8, 128], strides = [1, 1]} : vector<10x128xf32> to vector<8x128xf32>
    %321 = vector.broadcast %0 : vector<1x128xf32> to vector<8x128xf32>
    %322 = arith.mulf %320, %321 : vector<8x128xf32>
    %323 = arith.addf %317, %322 : vector<8x128xf32>
    %324 = vector.extract_strided_slice %319 {offsets = [1, 0], sizes = [8, 128], strides = [1, 1]} : vector<10x128xf32> to vector<8x128xf32>
    %325 = vector.broadcast %1 : vector<1x128xf32> to vector<8x128xf32>
    %326 = arith.mulf %324, %325 : vector<8x128xf32>
    %327 = arith.addf %323, %326 : vector<8x128xf32>
    %328 = vector.extract_strided_slice %319 {offsets = [2, 0], sizes = [8, 128], strides = [1, 1]} : vector<10x128xf32> to vector<8x128xf32>
    %329 = vector.broadcast %2 : vector<1x128xf32> to vector<8x128xf32>
    %330 = arith.mulf %328, %329 : vector<8x128xf32>
    %331 = arith.addf %327, %330 : vector<8x128xf32>
    %c0_113 = arith.constant 0 : index
    %c8_114 = arith.constant 8 : index
    %c0_115 = arith.constant 0 : index
    %c0_116 = arith.constant 0 : index
    %332 = vector.load %arg1[%c0_113, %c8_114, %c0_115, %c0_116] : memref<1x10x10x128xf32, #tpu.memory_space<vmem>>, vector<1x1x10x128xf32>
    %333 = vector.shape_cast %332 : vector<1x1x10x128xf32> to vector<10x128xf32>
    %334 = vector.extract_strided_slice %333 {offsets = [0, 0], sizes = [8, 128], strides = [1, 1]} : vector<10x128xf32> to vector<8x128xf32>
    %335 = vector.broadcast %3 : vector<1x128xf32> to vector<8x128xf32>
    %336 = arith.mulf %334, %335 : vector<8x128xf32>
    %337 = arith.addf %331, %336 : vector<8x128xf32>
    %338 = vector.extract_strided_slice %333 {offsets = [1, 0], sizes = [8, 128], strides = [1, 1]} : vector<10x128xf32> to vector<8x128xf32>
    %339 = vector.broadcast %4 : vector<1x128xf32> to vector<8x128xf32>
    %340 = arith.mulf %338, %339 : vector<8x128xf32>
    %341 = arith.addf %337, %340 : vector<8x128xf32>
    %342 = vector.extract_strided_slice %333 {offsets = [2, 0], sizes = [8, 128], strides = [1, 1]} : vector<10x128xf32> to vector<8x128xf32>
    %343 = vector.broadcast %5 : vector<1x128xf32> to vector<8x128xf32>
    %344 = arith.mulf %342, %343 : vector<8x128xf32>
    %345 = arith.addf %341, %344 : vector<8x128xf32>
    %c0_117 = arith.constant 0 : index
    %c9 = arith.constant 9 : index
    %c0_118 = arith.constant 0 : index
    %c0_119 = arith.constant 0 : index
    %346 = vector.load %arg1[%c0_117, %c9, %c0_118, %c0_119] : memref<1x10x10x128xf32, #tpu.memory_space<vmem>>, vector<1x1x10x128xf32>
    %347 = vector.shape_cast %346 : vector<1x1x10x128xf32> to vector<10x128xf32>
    %348 = vector.extract_strided_slice %347 {offsets = [0, 0], sizes = [8, 128], strides = [1, 1]} : vector<10x128xf32> to vector<8x128xf32>
    %349 = vector.broadcast %6 : vector<1x128xf32> to vector<8x128xf32>
    %350 = arith.mulf %348, %349 : vector<8x128xf32>
    %351 = arith.addf %345, %350 : vector<8x128xf32>
    %352 = vector.extract_strided_slice %347 {offsets = [1, 0], sizes = [8, 128], strides = [1, 1]} : vector<10x128xf32> to vector<8x128xf32>
    %353 = vector.broadcast %7 : vector<1x128xf32> to vector<8x128xf32>
    %354 = arith.mulf %352, %353 : vector<8x128xf32>
    %355 = arith.addf %351, %354 : vector<8x128xf32>
    %356 = vector.extract_strided_slice %347 {offsets = [2, 0], sizes = [8, 128], strides = [1, 1]} : vector<10x128xf32> to vector<8x128xf32>
    %357 = vector.broadcast %8 : vector<1x128xf32> to vector<8x128xf32>
    %358 = arith.mulf %356, %357 : vector<8x128xf32>
    %359 = arith.addf %355, %358 : vector<8x128xf32>
    %c56 = arith.constant 56 : index
    %c0_120 = arith.constant 0 : index
    %360 = vector.load %arg6[%c56, %c0_120] : memref<64x128xf32, #tpu.memory_space<vmem>>, vector<8x128xf32>
    tpu.vector_store %arg6[%c56, %c0_120], %359 {strides = array<i32>} : memref<64x128xf32, #tpu.memory_space<vmem>>, vector<8x128xf32>,
    %c0_121 = arith.constant 0 : index
    %c0_122 = arith.constant 0 : index
    %361 = vector.load %arg6[%c0_121, %c0_122] : memref<64x128xf32, #tpu.memory_space<vmem>>, vector<64x128xf32>
    %c0_123 = arith.constant 0 : index
    %c0_124 = arith.constant 0 : index
    %362 = vector.load %arg3[%c0_123, %c0_124] : memref<128x128xf32, #tpu.memory_space<vmem>>, vector<128x128xf32>
    %cst_125 = arith.constant dense<0.000000e+00> : vector<64x128xf32>
    %363 = tpu.matmul %361, %362, %cst_125 {dimension_numbers = #tpu.dot_dimension_numbers<[1], [0], [0], [1], [0, 0, 1, 1], [], []>} : vector<64x128xf32>, vector<128x128xf32>, vector<64x128xf32> -> vector<64x128xf32>
    %c0_126 = arith.constant 0 : index
    %c0_127 = arith.constant 0 : index
    %364 = vector.load %arg4[%c0_126, %c0_127] : memref<1x128xf32, #tpu.memory_space<vmem>>, vector<1x128xf32>
    %365 = vector.broadcast %364 : vector<1x128xf32> to vector<64x128xf32>
    %366 = arith.addf %363, %365 : vector<64x128xf32>
    %cst_128 = arith.constant 0.000000e+00 : f32
    %367 = vector.broadcast %cst_128 : f32 to vector<64x128xf32>
    %368 = arith.maximumf %366, %367 : vector<64x128xf32>
    %c0_129 = arith.constant 0 : index
    %c0_130 = arith.constant 0 : index
    %c0_131 = arith.constant 0 : index
    %369 = vector.load %arg5[%c0_129, %c0_130, %c0_131] : memref<1x64x128xf32, #tpu.memory_space<vmem>>, vector<1x64x128xf32>
    %370 = vector.shape_cast %369 : vector<1x64x128xf32> to vector<64x128xf32>
    %371 = vector.shape_cast %368 : vector<64x128xf32> to vector<1x64x128xf32>
    tpu.vector_store %arg5[%c0_129, %c0_130, %c0_131], %371 {strides = array<i32>} : memref<1x64x128xf32, #tpu.memory_space<vmem>>, vector<1x64x128xf32>,
    return
  }
  func.func @transform_0(%arg0: i32) -> (i32, i32, i32, i32) {
    %c0_i32 = arith.constant 0 : i32
    %c0_i32_0 = arith.constant 0 : i32
    %c0_i32_1 = arith.constant 0 : i32
    %c0_i32_2 = arith.constant 0 : i32
    return %arg0, %c0_i32, %c0_i32_0, %c0_i32_1 : i32, i32, i32, i32
  }
  func.func @transform_1(%arg0: i32) -> (i32, i32) {
    %c0_i32 = arith.constant 0 : i32
    %c0_i32_0 = arith.constant 0 : i32
    %c0_i32_1 = arith.constant 0 : i32
    return %c0_i32, %c0_i32_0 : i32, i32
  }
  func.func @transform_2(%arg0: i32) -> (i32, i32) {
    %c0_i32 = arith.constant 0 : i32
    %c0_i32_0 = arith.constant 0 : i32
    %c0_i32_1 = arith.constant 0 : i32
    return %c0_i32, %c0_i32_0 : i32, i32
  }
  func.func @transform_3(%arg0: i32) -> (i32, i32) {
    %c0_i32 = arith.constant 0 : i32
    %c0_i32_0 = arith.constant 0 : i32
    %c0_i32_1 = arith.constant 0 : i32
    return %c0_i32, %c0_i32_0 : i32, i32
  }
  func.func @transform_4(%arg0: i32) -> (i32, i32, i32) {
    %c0_i32 = arith.constant 0 : i32
    %c0_i32_0 = arith.constant 0 : i32
    %c0_i32_1 = arith.constant 0 : i32
    return %arg0, %c0_i32, %c0_i32_0 : i32, i32, i32
  }
}

module attributes {stable_mosaic.version = 11 : i64} {
  func.func @_fused_stage_kernel(%arg0: i32, %arg1: memref<1x18x18x128xf32, #tpu.memory_space<vmem>>, %arg2: memref<9x128xf32, #tpu.memory_space<vmem>>, %arg3: memref<128x128xf32, #tpu.memory_space<vmem>>, %arg4: memref<1x128xf32, #tpu.memory_space<vmem>>, %arg5: memref<1x256x128xf32, #tpu.memory_space<vmem>>, %arg6: memref<256x128xf32, #tpu.memory_space<vmem>>) attributes {dimension_semantics = [#tpu.dimension_semantics<parallel>], iteration_bounds = array<i64: 2>, scalar_prefetch = 0 : i64, scratch_operands = 1 : i64, tpu.core_type = #tpu.core_type<tc>, window_params = [{transform_indices = @transform_0, window_bounds = array<i64: 1, 18, 18, 128>}, {pipeline_mode = #tpu.pipeline_mode<synchronous>, transform_indices = @transform_1, window_bounds = array<i64: 9, 128>}, {pipeline_mode = #tpu.pipeline_mode<synchronous>, transform_indices = @transform_2, window_bounds = array<i64: 128, 128>}, {pipeline_mode = #tpu.pipeline_mode<synchronous>, transform_indices = @transform_3, window_bounds = array<i64: 1, 128>}, {transform_indices = @transform_4, window_bounds = array<i64: 1, 256, 128>}]} {
    %c0 = arith.constant 0 : index
    %c0_0 = arith.constant 0 : index
    %0 = vector.load %arg2[%c0, %c0_0] : memref<9x128xf32, #tpu.memory_space<vmem>>, vector<1x128xf32>
    %c1 = arith.constant 1 : index
    %c0_1 = arith.constant 0 : index
    %1 = vector.load %arg2[%c1, %c0_1] : memref<9x128xf32, #tpu.memory_space<vmem>>, vector<1x128xf32>
    %c2 = arith.constant 2 : index
    %c0_2 = arith.constant 0 : index
    %2 = vector.load %arg2[%c2, %c0_2] : memref<9x128xf32, #tpu.memory_space<vmem>>, vector<1x128xf32>
    %c3 = arith.constant 3 : index
    %c0_3 = arith.constant 0 : index
    %3 = vector.load %arg2[%c3, %c0_3] : memref<9x128xf32, #tpu.memory_space<vmem>>, vector<1x128xf32>
    %c4 = arith.constant 4 : index
    %c0_4 = arith.constant 0 : index
    %4 = vector.load %arg2[%c4, %c0_4] : memref<9x128xf32, #tpu.memory_space<vmem>>, vector<1x128xf32>
    %c5 = arith.constant 5 : index
    %c0_5 = arith.constant 0 : index
    %5 = vector.load %arg2[%c5, %c0_5] : memref<9x128xf32, #tpu.memory_space<vmem>>, vector<1x128xf32>
    %c6 = arith.constant 6 : index
    %c0_6 = arith.constant 0 : index
    %6 = vector.load %arg2[%c6, %c0_6] : memref<9x128xf32, #tpu.memory_space<vmem>>, vector<1x128xf32>
    %c7 = arith.constant 7 : index
    %c0_7 = arith.constant 0 : index
    %7 = vector.load %arg2[%c7, %c0_7] : memref<9x128xf32, #tpu.memory_space<vmem>>, vector<1x128xf32>
    %c8 = arith.constant 8 : index
    %c0_8 = arith.constant 0 : index
    %8 = vector.load %arg2[%c8, %c0_8] : memref<9x128xf32, #tpu.memory_space<vmem>>, vector<1x128xf32>
    %cst = arith.constant 0.000000e+00 : f32
    %9 = vector.broadcast %cst : f32 to vector<16x128xf32>
    %c0_9 = arith.constant 0 : index
    %c0_10 = arith.constant 0 : index
    %c0_11 = arith.constant 0 : index
    %c0_12 = arith.constant 0 : index
    %10 = vector.load %arg1[%c0_9, %c0_10, %c0_11, %c0_12] : memref<1x18x18x128xf32, #tpu.memory_space<vmem>>, vector<1x1x18x128xf32>
    %11 = vector.shape_cast %10 : vector<1x1x18x128xf32> to vector<18x128xf32>
    %12 = vector.extract_strided_slice %11 {offsets = [0, 0], sizes = [16, 128], strides = [1, 1]} : vector<18x128xf32> to vector<16x128xf32>
    %13 = vector.broadcast %0 : vector<1x128xf32> to vector<16x128xf32>
    %14 = arith.mulf %12, %13 : vector<16x128xf32>
    %15 = arith.addf %9, %14 : vector<16x128xf32>
    %16 = vector.extract_strided_slice %11 {offsets = [1, 0], sizes = [16, 128], strides = [1, 1]} : vector<18x128xf32> to vector<16x128xf32>
    %17 = vector.broadcast %1 : vector<1x128xf32> to vector<16x128xf32>
    %18 = arith.mulf %16, %17 : vector<16x128xf32>
    %19 = arith.addf %15, %18 : vector<16x128xf32>
    %20 = vector.extract_strided_slice %11 {offsets = [2, 0], sizes = [16, 128], strides = [1, 1]} : vector<18x128xf32> to vector<16x128xf32>
    %21 = vector.broadcast %2 : vector<1x128xf32> to vector<16x128xf32>
    %22 = arith.mulf %20, %21 : vector<16x128xf32>
    %23 = arith.addf %19, %22 : vector<16x128xf32>
    %c0_13 = arith.constant 0 : index
    %c1_14 = arith.constant 1 : index
    %c0_15 = arith.constant 0 : index
    %c0_16 = arith.constant 0 : index
    %24 = vector.load %arg1[%c0_13, %c1_14, %c0_15, %c0_16] : memref<1x18x18x128xf32, #tpu.memory_space<vmem>>, vector<1x1x18x128xf32>
    %25 = vector.shape_cast %24 : vector<1x1x18x128xf32> to vector<18x128xf32>
    %26 = vector.extract_strided_slice %25 {offsets = [0, 0], sizes = [16, 128], strides = [1, 1]} : vector<18x128xf32> to vector<16x128xf32>
    %27 = vector.broadcast %3 : vector<1x128xf32> to vector<16x128xf32>
    %28 = arith.mulf %26, %27 : vector<16x128xf32>
    %29 = arith.addf %23, %28 : vector<16x128xf32>
    %30 = vector.extract_strided_slice %25 {offsets = [1, 0], sizes = [16, 128], strides = [1, 1]} : vector<18x128xf32> to vector<16x128xf32>
    %31 = vector.broadcast %4 : vector<1x128xf32> to vector<16x128xf32>
    %32 = arith.mulf %30, %31 : vector<16x128xf32>
    %33 = arith.addf %29, %32 : vector<16x128xf32>
    %34 = vector.extract_strided_slice %25 {offsets = [2, 0], sizes = [16, 128], strides = [1, 1]} : vector<18x128xf32> to vector<16x128xf32>
    %35 = vector.broadcast %5 : vector<1x128xf32> to vector<16x128xf32>
    %36 = arith.mulf %34, %35 : vector<16x128xf32>
    %37 = arith.addf %33, %36 : vector<16x128xf32>
    %c0_17 = arith.constant 0 : index
    %c2_18 = arith.constant 2 : index
    %c0_19 = arith.constant 0 : index
    %c0_20 = arith.constant 0 : index
    %38 = vector.load %arg1[%c0_17, %c2_18, %c0_19, %c0_20] : memref<1x18x18x128xf32, #tpu.memory_space<vmem>>, vector<1x1x18x128xf32>
    %39 = vector.shape_cast %38 : vector<1x1x18x128xf32> to vector<18x128xf32>
    %40 = vector.extract_strided_slice %39 {offsets = [0, 0], sizes = [16, 128], strides = [1, 1]} : vector<18x128xf32> to vector<16x128xf32>
    %41 = vector.broadcast %6 : vector<1x128xf32> to vector<16x128xf32>
    %42 = arith.mulf %40, %41 : vector<16x128xf32>
    %43 = arith.addf %37, %42 : vector<16x128xf32>
    %44 = vector.extract_strided_slice %39 {offsets = [1, 0], sizes = [16, 128], strides = [1, 1]} : vector<18x128xf32> to vector<16x128xf32>
    %45 = vector.broadcast %7 : vector<1x128xf32> to vector<16x128xf32>
    %46 = arith.mulf %44, %45 : vector<16x128xf32>
    %47 = arith.addf %43, %46 : vector<16x128xf32>
    %48 = vector.extract_strided_slice %39 {offsets = [2, 0], sizes = [16, 128], strides = [1, 1]} : vector<18x128xf32> to vector<16x128xf32>
    %49 = vector.broadcast %8 : vector<1x128xf32> to vector<16x128xf32>
    %50 = arith.mulf %48, %49 : vector<16x128xf32>
    %51 = arith.addf %47, %50 : vector<16x128xf32>
    %c0_21 = arith.constant 0 : index
    %c0_22 = arith.constant 0 : index
    %52 = vector.load %arg6[%c0_21, %c0_22] : memref<256x128xf32, #tpu.memory_space<vmem>>, vector<16x128xf32>
    tpu.vector_store %arg6[%c0_21, %c0_22], %51 {strides = array<i32>} : memref<256x128xf32, #tpu.memory_space<vmem>>, vector<16x128xf32>,
    %cst_23 = arith.constant 0.000000e+00 : f32
    %53 = vector.broadcast %cst_23 : f32 to vector<16x128xf32>
    %c0_24 = arith.constant 0 : index
    %c1_25 = arith.constant 1 : index
    %c0_26 = arith.constant 0 : index
    %c0_27 = arith.constant 0 : index
    %54 = vector.load %arg1[%c0_24, %c1_25, %c0_26, %c0_27] : memref<1x18x18x128xf32, #tpu.memory_space<vmem>>, vector<1x1x18x128xf32>
    %55 = vector.shape_cast %54 : vector<1x1x18x128xf32> to vector<18x128xf32>
    %56 = vector.extract_strided_slice %55 {offsets = [0, 0], sizes = [16, 128], strides = [1, 1]} : vector<18x128xf32> to vector<16x128xf32>
    %57 = vector.broadcast %0 : vector<1x128xf32> to vector<16x128xf32>
    %58 = arith.mulf %56, %57 : vector<16x128xf32>
    %59 = arith.addf %53, %58 : vector<16x128xf32>
    %60 = vector.extract_strided_slice %55 {offsets = [1, 0], sizes = [16, 128], strides = [1, 1]} : vector<18x128xf32> to vector<16x128xf32>
    %61 = vector.broadcast %1 : vector<1x128xf32> to vector<16x128xf32>
    %62 = arith.mulf %60, %61 : vector<16x128xf32>
    %63 = arith.addf %59, %62 : vector<16x128xf32>
    %64 = vector.extract_strided_slice %55 {offsets = [2, 0], sizes = [16, 128], strides = [1, 1]} : vector<18x128xf32> to vector<16x128xf32>
    %65 = vector.broadcast %2 : vector<1x128xf32> to vector<16x128xf32>
    %66 = arith.mulf %64, %65 : vector<16x128xf32>
    %67 = arith.addf %63, %66 : vector<16x128xf32>
    %c0_28 = arith.constant 0 : index
    %c2_29 = arith.constant 2 : index
    %c0_30 = arith.constant 0 : index
    %c0_31 = arith.constant 0 : index
    %68 = vector.load %arg1[%c0_28, %c2_29, %c0_30, %c0_31] : memref<1x18x18x128xf32, #tpu.memory_space<vmem>>, vector<1x1x18x128xf32>
    %69 = vector.shape_cast %68 : vector<1x1x18x128xf32> to vector<18x128xf32>
    %70 = vector.extract_strided_slice %69 {offsets = [0, 0], sizes = [16, 128], strides = [1, 1]} : vector<18x128xf32> to vector<16x128xf32>
    %71 = vector.broadcast %3 : vector<1x128xf32> to vector<16x128xf32>
    %72 = arith.mulf %70, %71 : vector<16x128xf32>
    %73 = arith.addf %67, %72 : vector<16x128xf32>
    %74 = vector.extract_strided_slice %69 {offsets = [1, 0], sizes = [16, 128], strides = [1, 1]} : vector<18x128xf32> to vector<16x128xf32>
    %75 = vector.broadcast %4 : vector<1x128xf32> to vector<16x128xf32>
    %76 = arith.mulf %74, %75 : vector<16x128xf32>
    %77 = arith.addf %73, %76 : vector<16x128xf32>
    %78 = vector.extract_strided_slice %69 {offsets = [2, 0], sizes = [16, 128], strides = [1, 1]} : vector<18x128xf32> to vector<16x128xf32>
    %79 = vector.broadcast %5 : vector<1x128xf32> to vector<16x128xf32>
    %80 = arith.mulf %78, %79 : vector<16x128xf32>
    %81 = arith.addf %77, %80 : vector<16x128xf32>
    %c0_32 = arith.constant 0 : index
    %c3_33 = arith.constant 3 : index
    %c0_34 = arith.constant 0 : index
    %c0_35 = arith.constant 0 : index
    %82 = vector.load %arg1[%c0_32, %c3_33, %c0_34, %c0_35] : memref<1x18x18x128xf32, #tpu.memory_space<vmem>>, vector<1x1x18x128xf32>
    %83 = vector.shape_cast %82 : vector<1x1x18x128xf32> to vector<18x128xf32>
    %84 = vector.extract_strided_slice %83 {offsets = [0, 0], sizes = [16, 128], strides = [1, 1]} : vector<18x128xf32> to vector<16x128xf32>
    %85 = vector.broadcast %6 : vector<1x128xf32> to vector<16x128xf32>
    %86 = arith.mulf %84, %85 : vector<16x128xf32>
    %87 = arith.addf %81, %86 : vector<16x128xf32>
    %88 = vector.extract_strided_slice %83 {offsets = [1, 0], sizes = [16, 128], strides = [1, 1]} : vector<18x128xf32> to vector<16x128xf32>
    %89 = vector.broadcast %7 : vector<1x128xf32> to vector<16x128xf32>
    %90 = arith.mulf %88, %89 : vector<16x128xf32>
    %91 = arith.addf %87, %90 : vector<16x128xf32>
    %92 = vector.extract_strided_slice %83 {offsets = [2, 0], sizes = [16, 128], strides = [1, 1]} : vector<18x128xf32> to vector<16x128xf32>
    %93 = vector.broadcast %8 : vector<1x128xf32> to vector<16x128xf32>
    %94 = arith.mulf %92, %93 : vector<16x128xf32>
    %95 = arith.addf %91, %94 : vector<16x128xf32>
    %c16 = arith.constant 16 : index
    %c0_36 = arith.constant 0 : index
    %96 = vector.load %arg6[%c16, %c0_36] : memref<256x128xf32, #tpu.memory_space<vmem>>, vector<16x128xf32>
    tpu.vector_store %arg6[%c16, %c0_36], %95 {strides = array<i32>} : memref<256x128xf32, #tpu.memory_space<vmem>>, vector<16x128xf32>,
    %cst_37 = arith.constant 0.000000e+00 : f32
    %97 = vector.broadcast %cst_37 : f32 to vector<16x128xf32>
    %c0_38 = arith.constant 0 : index
    %c2_39 = arith.constant 2 : index
    %c0_40 = arith.constant 0 : index
    %c0_41 = arith.constant 0 : index
    %98 = vector.load %arg1[%c0_38, %c2_39, %c0_40, %c0_41] : memref<1x18x18x128xf32, #tpu.memory_space<vmem>>, vector<1x1x18x128xf32>
    %99 = vector.shape_cast %98 : vector<1x1x18x128xf32> to vector<18x128xf32>
    %100 = vector.extract_strided_slice %99 {offsets = [0, 0], sizes = [16, 128], strides = [1, 1]} : vector<18x128xf32> to vector<16x128xf32>
    %101 = vector.broadcast %0 : vector<1x128xf32> to vector<16x128xf32>
    %102 = arith.mulf %100, %101 : vector<16x128xf32>
    %103 = arith.addf %97, %102 : vector<16x128xf32>
    %104 = vector.extract_strided_slice %99 {offsets = [1, 0], sizes = [16, 128], strides = [1, 1]} : vector<18x128xf32> to vector<16x128xf32>
    %105 = vector.broadcast %1 : vector<1x128xf32> to vector<16x128xf32>
    %106 = arith.mulf %104, %105 : vector<16x128xf32>
    %107 = arith.addf %103, %106 : vector<16x128xf32>
    %108 = vector.extract_strided_slice %99 {offsets = [2, 0], sizes = [16, 128], strides = [1, 1]} : vector<18x128xf32> to vector<16x128xf32>
    %109 = vector.broadcast %2 : vector<1x128xf32> to vector<16x128xf32>
    %110 = arith.mulf %108, %109 : vector<16x128xf32>
    %111 = arith.addf %107, %110 : vector<16x128xf32>
    %c0_42 = arith.constant 0 : index
    %c3_43 = arith.constant 3 : index
    %c0_44 = arith.constant 0 : index
    %c0_45 = arith.constant 0 : index
    %112 = vector.load %arg1[%c0_42, %c3_43, %c0_44, %c0_45] : memref<1x18x18x128xf32, #tpu.memory_space<vmem>>, vector<1x1x18x128xf32>
    %113 = vector.shape_cast %112 : vector<1x1x18x128xf32> to vector<18x128xf32>
    %114 = vector.extract_strided_slice %113 {offsets = [0, 0], sizes = [16, 128], strides = [1, 1]} : vector<18x128xf32> to vector<16x128xf32>
    %115 = vector.broadcast %3 : vector<1x128xf32> to vector<16x128xf32>
    %116 = arith.mulf %114, %115 : vector<16x128xf32>
    %117 = arith.addf %111, %116 : vector<16x128xf32>
    %118 = vector.extract_strided_slice %113 {offsets = [1, 0], sizes = [16, 128], strides = [1, 1]} : vector<18x128xf32> to vector<16x128xf32>
    %119 = vector.broadcast %4 : vector<1x128xf32> to vector<16x128xf32>
    %120 = arith.mulf %118, %119 : vector<16x128xf32>
    %121 = arith.addf %117, %120 : vector<16x128xf32>
    %122 = vector.extract_strided_slice %113 {offsets = [2, 0], sizes = [16, 128], strides = [1, 1]} : vector<18x128xf32> to vector<16x128xf32>
    %123 = vector.broadcast %5 : vector<1x128xf32> to vector<16x128xf32>
    %124 = arith.mulf %122, %123 : vector<16x128xf32>
    %125 = arith.addf %121, %124 : vector<16x128xf32>
    %c0_46 = arith.constant 0 : index
    %c4_47 = arith.constant 4 : index
    %c0_48 = arith.constant 0 : index
    %c0_49 = arith.constant 0 : index
    %126 = vector.load %arg1[%c0_46, %c4_47, %c0_48, %c0_49] : memref<1x18x18x128xf32, #tpu.memory_space<vmem>>, vector<1x1x18x128xf32>
    %127 = vector.shape_cast %126 : vector<1x1x18x128xf32> to vector<18x128xf32>
    %128 = vector.extract_strided_slice %127 {offsets = [0, 0], sizes = [16, 128], strides = [1, 1]} : vector<18x128xf32> to vector<16x128xf32>
    %129 = vector.broadcast %6 : vector<1x128xf32> to vector<16x128xf32>
    %130 = arith.mulf %128, %129 : vector<16x128xf32>
    %131 = arith.addf %125, %130 : vector<16x128xf32>
    %132 = vector.extract_strided_slice %127 {offsets = [1, 0], sizes = [16, 128], strides = [1, 1]} : vector<18x128xf32> to vector<16x128xf32>
    %133 = vector.broadcast %7 : vector<1x128xf32> to vector<16x128xf32>
    %134 = arith.mulf %132, %133 : vector<16x128xf32>
    %135 = arith.addf %131, %134 : vector<16x128xf32>
    %136 = vector.extract_strided_slice %127 {offsets = [2, 0], sizes = [16, 128], strides = [1, 1]} : vector<18x128xf32> to vector<16x128xf32>
    %137 = vector.broadcast %8 : vector<1x128xf32> to vector<16x128xf32>
    %138 = arith.mulf %136, %137 : vector<16x128xf32>
    %139 = arith.addf %135, %138 : vector<16x128xf32>
    %c32 = arith.constant 32 : index
    %c0_50 = arith.constant 0 : index
    %140 = vector.load %arg6[%c32, %c0_50] : memref<256x128xf32, #tpu.memory_space<vmem>>, vector<16x128xf32>
    tpu.vector_store %arg6[%c32, %c0_50], %139 {strides = array<i32>} : memref<256x128xf32, #tpu.memory_space<vmem>>, vector<16x128xf32>,
    %cst_51 = arith.constant 0.000000e+00 : f32
    %141 = vector.broadcast %cst_51 : f32 to vector<16x128xf32>
    %c0_52 = arith.constant 0 : index
    %c3_53 = arith.constant 3 : index
    %c0_54 = arith.constant 0 : index
    %c0_55 = arith.constant 0 : index
    %142 = vector.load %arg1[%c0_52, %c3_53, %c0_54, %c0_55] : memref<1x18x18x128xf32, #tpu.memory_space<vmem>>, vector<1x1x18x128xf32>
    %143 = vector.shape_cast %142 : vector<1x1x18x128xf32> to vector<18x128xf32>
    %144 = vector.extract_strided_slice %143 {offsets = [0, 0], sizes = [16, 128], strides = [1, 1]} : vector<18x128xf32> to vector<16x128xf32>
    %145 = vector.broadcast %0 : vector<1x128xf32> to vector<16x128xf32>
    %146 = arith.mulf %144, %145 : vector<16x128xf32>
    %147 = arith.addf %141, %146 : vector<16x128xf32>
    %148 = vector.extract_strided_slice %143 {offsets = [1, 0], sizes = [16, 128], strides = [1, 1]} : vector<18x128xf32> to vector<16x128xf32>
    %149 = vector.broadcast %1 : vector<1x128xf32> to vector<16x128xf32>
    %150 = arith.mulf %148, %149 : vector<16x128xf32>
    %151 = arith.addf %147, %150 : vector<16x128xf32>
    %152 = vector.extract_strided_slice %143 {offsets = [2, 0], sizes = [16, 128], strides = [1, 1]} : vector<18x128xf32> to vector<16x128xf32>
    %153 = vector.broadcast %2 : vector<1x128xf32> to vector<16x128xf32>
    %154 = arith.mulf %152, %153 : vector<16x128xf32>
    %155 = arith.addf %151, %154 : vector<16x128xf32>
    %c0_56 = arith.constant 0 : index
    %c4_57 = arith.constant 4 : index
    %c0_58 = arith.constant 0 : index
    %c0_59 = arith.constant 0 : index
    %156 = vector.load %arg1[%c0_56, %c4_57, %c0_58, %c0_59] : memref<1x18x18x128xf32, #tpu.memory_space<vmem>>, vector<1x1x18x128xf32>
    %157 = vector.shape_cast %156 : vector<1x1x18x128xf32> to vector<18x128xf32>
    %158 = vector.extract_strided_slice %157 {offsets = [0, 0], sizes = [16, 128], strides = [1, 1]} : vector<18x128xf32> to vector<16x128xf32>
    %159 = vector.broadcast %3 : vector<1x128xf32> to vector<16x128xf32>
    %160 = arith.mulf %158, %159 : vector<16x128xf32>
    %161 = arith.addf %155, %160 : vector<16x128xf32>
    %162 = vector.extract_strided_slice %157 {offsets = [1, 0], sizes = [16, 128], strides = [1, 1]} : vector<18x128xf32> to vector<16x128xf32>
    %163 = vector.broadcast %4 : vector<1x128xf32> to vector<16x128xf32>
    %164 = arith.mulf %162, %163 : vector<16x128xf32>
    %165 = arith.addf %161, %164 : vector<16x128xf32>
    %166 = vector.extract_strided_slice %157 {offsets = [2, 0], sizes = [16, 128], strides = [1, 1]} : vector<18x128xf32> to vector<16x128xf32>
    %167 = vector.broadcast %5 : vector<1x128xf32> to vector<16x128xf32>
    %168 = arith.mulf %166, %167 : vector<16x128xf32>
    %169 = arith.addf %165, %168 : vector<16x128xf32>
    %c0_60 = arith.constant 0 : index
    %c5_61 = arith.constant 5 : index
    %c0_62 = arith.constant 0 : index
    %c0_63 = arith.constant 0 : index
    %170 = vector.load %arg1[%c0_60, %c5_61, %c0_62, %c0_63] : memref<1x18x18x128xf32, #tpu.memory_space<vmem>>, vector<1x1x18x128xf32>
    %171 = vector.shape_cast %170 : vector<1x1x18x128xf32> to vector<18x128xf32>
    %172 = vector.extract_strided_slice %171 {offsets = [0, 0], sizes = [16, 128], strides = [1, 1]} : vector<18x128xf32> to vector<16x128xf32>
    %173 = vector.broadcast %6 : vector<1x128xf32> to vector<16x128xf32>
    %174 = arith.mulf %172, %173 : vector<16x128xf32>
    %175 = arith.addf %169, %174 : vector<16x128xf32>
    %176 = vector.extract_strided_slice %171 {offsets = [1, 0], sizes = [16, 128], strides = [1, 1]} : vector<18x128xf32> to vector<16x128xf32>
    %177 = vector.broadcast %7 : vector<1x128xf32> to vector<16x128xf32>
    %178 = arith.mulf %176, %177 : vector<16x128xf32>
    %179 = arith.addf %175, %178 : vector<16x128xf32>
    %180 = vector.extract_strided_slice %171 {offsets = [2, 0], sizes = [16, 128], strides = [1, 1]} : vector<18x128xf32> to vector<16x128xf32>
    %181 = vector.broadcast %8 : vector<1x128xf32> to vector<16x128xf32>
    %182 = arith.mulf %180, %181 : vector<16x128xf32>
    %183 = arith.addf %179, %182 : vector<16x128xf32>
    %c48 = arith.constant 48 : index
    %c0_64 = arith.constant 0 : index
    %184 = vector.load %arg6[%c48, %c0_64] : memref<256x128xf32, #tpu.memory_space<vmem>>, vector<16x128xf32>
    tpu.vector_store %arg6[%c48, %c0_64], %183 {strides = array<i32>} : memref<256x128xf32, #tpu.memory_space<vmem>>, vector<16x128xf32>,
    %cst_65 = arith.constant 0.000000e+00 : f32
    %185 = vector.broadcast %cst_65 : f32 to vector<16x128xf32>
    %c0_66 = arith.constant 0 : index
    %c4_67 = arith.constant 4 : index
    %c0_68 = arith.constant 0 : index
    %c0_69 = arith.constant 0 : index
    %186 = vector.load %arg1[%c0_66, %c4_67, %c0_68, %c0_69] : memref<1x18x18x128xf32, #tpu.memory_space<vmem>>, vector<1x1x18x128xf32>
    %187 = vector.shape_cast %186 : vector<1x1x18x128xf32> to vector<18x128xf32>
    %188 = vector.extract_strided_slice %187 {offsets = [0, 0], sizes = [16, 128], strides = [1, 1]} : vector<18x128xf32> to vector<16x128xf32>
    %189 = vector.broadcast %0 : vector<1x128xf32> to vector<16x128xf32>
    %190 = arith.mulf %188, %189 : vector<16x128xf32>
    %191 = arith.addf %185, %190 : vector<16x128xf32>
    %192 = vector.extract_strided_slice %187 {offsets = [1, 0], sizes = [16, 128], strides = [1, 1]} : vector<18x128xf32> to vector<16x128xf32>
    %193 = vector.broadcast %1 : vector<1x128xf32> to vector<16x128xf32>
    %194 = arith.mulf %192, %193 : vector<16x128xf32>
    %195 = arith.addf %191, %194 : vector<16x128xf32>
    %196 = vector.extract_strided_slice %187 {offsets = [2, 0], sizes = [16, 128], strides = [1, 1]} : vector<18x128xf32> to vector<16x128xf32>
    %197 = vector.broadcast %2 : vector<1x128xf32> to vector<16x128xf32>
    %198 = arith.mulf %196, %197 : vector<16x128xf32>
    %199 = arith.addf %195, %198 : vector<16x128xf32>
    %c0_70 = arith.constant 0 : index
    %c5_71 = arith.constant 5 : index
    %c0_72 = arith.constant 0 : index
    %c0_73 = arith.constant 0 : index
    %200 = vector.load %arg1[%c0_70, %c5_71, %c0_72, %c0_73] : memref<1x18x18x128xf32, #tpu.memory_space<vmem>>, vector<1x1x18x128xf32>
    %201 = vector.shape_cast %200 : vector<1x1x18x128xf32> to vector<18x128xf32>
    %202 = vector.extract_strided_slice %201 {offsets = [0, 0], sizes = [16, 128], strides = [1, 1]} : vector<18x128xf32> to vector<16x128xf32>
    %203 = vector.broadcast %3 : vector<1x128xf32> to vector<16x128xf32>
    %204 = arith.mulf %202, %203 : vector<16x128xf32>
    %205 = arith.addf %199, %204 : vector<16x128xf32>
    %206 = vector.extract_strided_slice %201 {offsets = [1, 0], sizes = [16, 128], strides = [1, 1]} : vector<18x128xf32> to vector<16x128xf32>
    %207 = vector.broadcast %4 : vector<1x128xf32> to vector<16x128xf32>
    %208 = arith.mulf %206, %207 : vector<16x128xf32>
    %209 = arith.addf %205, %208 : vector<16x128xf32>
    %210 = vector.extract_strided_slice %201 {offsets = [2, 0], sizes = [16, 128], strides = [1, 1]} : vector<18x128xf32> to vector<16x128xf32>
    %211 = vector.broadcast %5 : vector<1x128xf32> to vector<16x128xf32>
    %212 = arith.mulf %210, %211 : vector<16x128xf32>
    %213 = arith.addf %209, %212 : vector<16x128xf32>
    %c0_74 = arith.constant 0 : index
    %c6_75 = arith.constant 6 : index
    %c0_76 = arith.constant 0 : index
    %c0_77 = arith.constant 0 : index
    %214 = vector.load %arg1[%c0_74, %c6_75, %c0_76, %c0_77] : memref<1x18x18x128xf32, #tpu.memory_space<vmem>>, vector<1x1x18x128xf32>
    %215 = vector.shape_cast %214 : vector<1x1x18x128xf32> to vector<18x128xf32>
    %216 = vector.extract_strided_slice %215 {offsets = [0, 0], sizes = [16, 128], strides = [1, 1]} : vector<18x128xf32> to vector<16x128xf32>
    %217 = vector.broadcast %6 : vector<1x128xf32> to vector<16x128xf32>
    %218 = arith.mulf %216, %217 : vector<16x128xf32>
    %219 = arith.addf %213, %218 : vector<16x128xf32>
    %220 = vector.extract_strided_slice %215 {offsets = [1, 0], sizes = [16, 128], strides = [1, 1]} : vector<18x128xf32> to vector<16x128xf32>
    %221 = vector.broadcast %7 : vector<1x128xf32> to vector<16x128xf32>
    %222 = arith.mulf %220, %221 : vector<16x128xf32>
    %223 = arith.addf %219, %222 : vector<16x128xf32>
    %224 = vector.extract_strided_slice %215 {offsets = [2, 0], sizes = [16, 128], strides = [1, 1]} : vector<18x128xf32> to vector<16x128xf32>
    %225 = vector.broadcast %8 : vector<1x128xf32> to vector<16x128xf32>
    %226 = arith.mulf %224, %225 : vector<16x128xf32>
    %227 = arith.addf %223, %226 : vector<16x128xf32>
    %c64 = arith.constant 64 : index
    %c0_78 = arith.constant 0 : index
    %228 = vector.load %arg6[%c64, %c0_78] : memref<256x128xf32, #tpu.memory_space<vmem>>, vector<16x128xf32>
    tpu.vector_store %arg6[%c64, %c0_78], %227 {strides = array<i32>} : memref<256x128xf32, #tpu.memory_space<vmem>>, vector<16x128xf32>,
    %cst_79 = arith.constant 0.000000e+00 : f32
    %229 = vector.broadcast %cst_79 : f32 to vector<16x128xf32>
    %c0_80 = arith.constant 0 : index
    %c5_81 = arith.constant 5 : index
    %c0_82 = arith.constant 0 : index
    %c0_83 = arith.constant 0 : index
    %230 = vector.load %arg1[%c0_80, %c5_81, %c0_82, %c0_83] : memref<1x18x18x128xf32, #tpu.memory_space<vmem>>, vector<1x1x18x128xf32>
    %231 = vector.shape_cast %230 : vector<1x1x18x128xf32> to vector<18x128xf32>
    %232 = vector.extract_strided_slice %231 {offsets = [0, 0], sizes = [16, 128], strides = [1, 1]} : vector<18x128xf32> to vector<16x128xf32>
    %233 = vector.broadcast %0 : vector<1x128xf32> to vector<16x128xf32>
    %234 = arith.mulf %232, %233 : vector<16x128xf32>
    %235 = arith.addf %229, %234 : vector<16x128xf32>
    %236 = vector.extract_strided_slice %231 {offsets = [1, 0], sizes = [16, 128], strides = [1, 1]} : vector<18x128xf32> to vector<16x128xf32>
    %237 = vector.broadcast %1 : vector<1x128xf32> to vector<16x128xf32>
    %238 = arith.mulf %236, %237 : vector<16x128xf32>
    %239 = arith.addf %235, %238 : vector<16x128xf32>
    %240 = vector.extract_strided_slice %231 {offsets = [2, 0], sizes = [16, 128], strides = [1, 1]} : vector<18x128xf32> to vector<16x128xf32>
    %241 = vector.broadcast %2 : vector<1x128xf32> to vector<16x128xf32>
    %242 = arith.mulf %240, %241 : vector<16x128xf32>
    %243 = arith.addf %239, %242 : vector<16x128xf32>
    %c0_84 = arith.constant 0 : index
    %c6_85 = arith.constant 6 : index
    %c0_86 = arith.constant 0 : index
    %c0_87 = arith.constant 0 : index
    %244 = vector.load %arg1[%c0_84, %c6_85, %c0_86, %c0_87] : memref<1x18x18x128xf32, #tpu.memory_space<vmem>>, vector<1x1x18x128xf32>
    %245 = vector.shape_cast %244 : vector<1x1x18x128xf32> to vector<18x128xf32>
    %246 = vector.extract_strided_slice %245 {offsets = [0, 0], sizes = [16, 128], strides = [1, 1]} : vector<18x128xf32> to vector<16x128xf32>
    %247 = vector.broadcast %3 : vector<1x128xf32> to vector<16x128xf32>
    %248 = arith.mulf %246, %247 : vector<16x128xf32>
    %249 = arith.addf %243, %248 : vector<16x128xf32>
    %250 = vector.extract_strided_slice %245 {offsets = [1, 0], sizes = [16, 128], strides = [1, 1]} : vector<18x128xf32> to vector<16x128xf32>
    %251 = vector.broadcast %4 : vector<1x128xf32> to vector<16x128xf32>
    %252 = arith.mulf %250, %251 : vector<16x128xf32>
    %253 = arith.addf %249, %252 : vector<16x128xf32>
    %254 = vector.extract_strided_slice %245 {offsets = [2, 0], sizes = [16, 128], strides = [1, 1]} : vector<18x128xf32> to vector<16x128xf32>
    %255 = vector.broadcast %5 : vector<1x128xf32> to vector<16x128xf32>
    %256 = arith.mulf %254, %255 : vector<16x128xf32>
    %257 = arith.addf %253, %256 : vector<16x128xf32>
    %c0_88 = arith.constant 0 : index
    %c7_89 = arith.constant 7 : index
    %c0_90 = arith.constant 0 : index
    %c0_91 = arith.constant 0 : index
    %258 = vector.load %arg1[%c0_88, %c7_89, %c0_90, %c0_91] : memref<1x18x18x128xf32, #tpu.memory_space<vmem>>, vector<1x1x18x128xf32>
    %259 = vector.shape_cast %258 : vector<1x1x18x128xf32> to vector<18x128xf32>
    %260 = vector.extract_strided_slice %259 {offsets = [0, 0], sizes = [16, 128], strides = [1, 1]} : vector<18x128xf32> to vector<16x128xf32>
    %261 = vector.broadcast %6 : vector<1x128xf32> to vector<16x128xf32>
    %262 = arith.mulf %260, %261 : vector<16x128xf32>
    %263 = arith.addf %257, %262 : vector<16x128xf32>
    %264 = vector.extract_strided_slice %259 {offsets = [1, 0], sizes = [16, 128], strides = [1, 1]} : vector<18x128xf32> to vector<16x128xf32>
    %265 = vector.broadcast %7 : vector<1x128xf32> to vector<16x128xf32>
    %266 = arith.mulf %264, %265 : vector<16x128xf32>
    %267 = arith.addf %263, %266 : vector<16x128xf32>
    %268 = vector.extract_strided_slice %259 {offsets = [2, 0], sizes = [16, 128], strides = [1, 1]} : vector<18x128xf32> to vector<16x128xf32>
    %269 = vector.broadcast %8 : vector<1x128xf32> to vector<16x128xf32>
    %270 = arith.mulf %268, %269 : vector<16x128xf32>
    %271 = arith.addf %267, %270 : vector<16x128xf32>
    %c80 = arith.constant 80 : index
    %c0_92 = arith.constant 0 : index
    %272 = vector.load %arg6[%c80, %c0_92] : memref<256x128xf32, #tpu.memory_space<vmem>>, vector<16x128xf32>
    tpu.vector_store %arg6[%c80, %c0_92], %271 {strides = array<i32>} : memref<256x128xf32, #tpu.memory_space<vmem>>, vector<16x128xf32>,
    %cst_93 = arith.constant 0.000000e+00 : f32
    %273 = vector.broadcast %cst_93 : f32 to vector<16x128xf32>
    %c0_94 = arith.constant 0 : index
    %c6_95 = arith.constant 6 : index
    %c0_96 = arith.constant 0 : index
    %c0_97 = arith.constant 0 : index
    %274 = vector.load %arg1[%c0_94, %c6_95, %c0_96, %c0_97] : memref<1x18x18x128xf32, #tpu.memory_space<vmem>>, vector<1x1x18x128xf32>
    %275 = vector.shape_cast %274 : vector<1x1x18x128xf32> to vector<18x128xf32>
    %276 = vector.extract_strided_slice %275 {offsets = [0, 0], sizes = [16, 128], strides = [1, 1]} : vector<18x128xf32> to vector<16x128xf32>
    %277 = vector.broadcast %0 : vector<1x128xf32> to vector<16x128xf32>
    %278 = arith.mulf %276, %277 : vector<16x128xf32>
    %279 = arith.addf %273, %278 : vector<16x128xf32>
    %280 = vector.extract_strided_slice %275 {offsets = [1, 0], sizes = [16, 128], strides = [1, 1]} : vector<18x128xf32> to vector<16x128xf32>
    %281 = vector.broadcast %1 : vector<1x128xf32> to vector<16x128xf32>
    %282 = arith.mulf %280, %281 : vector<16x128xf32>
    %283 = arith.addf %279, %282 : vector<16x128xf32>
    %284 = vector.extract_strided_slice %275 {offsets = [2, 0], sizes = [16, 128], strides = [1, 1]} : vector<18x128xf32> to vector<16x128xf32>
    %285 = vector.broadcast %2 : vector<1x128xf32> to vector<16x128xf32>
    %286 = arith.mulf %284, %285 : vector<16x128xf32>
    %287 = arith.addf %283, %286 : vector<16x128xf32>
    %c0_98 = arith.constant 0 : index
    %c7_99 = arith.constant 7 : index
    %c0_100 = arith.constant 0 : index
    %c0_101 = arith.constant 0 : index
    %288 = vector.load %arg1[%c0_98, %c7_99, %c0_100, %c0_101] : memref<1x18x18x128xf32, #tpu.memory_space<vmem>>, vector<1x1x18x128xf32>
    %289 = vector.shape_cast %288 : vector<1x1x18x128xf32> to vector<18x128xf32>
    %290 = vector.extract_strided_slice %289 {offsets = [0, 0], sizes = [16, 128], strides = [1, 1]} : vector<18x128xf32> to vector<16x128xf32>
    %291 = vector.broadcast %3 : vector<1x128xf32> to vector<16x128xf32>
    %292 = arith.mulf %290, %291 : vector<16x128xf32>
    %293 = arith.addf %287, %292 : vector<16x128xf32>
    %294 = vector.extract_strided_slice %289 {offsets = [1, 0], sizes = [16, 128], strides = [1, 1]} : vector<18x128xf32> to vector<16x128xf32>
    %295 = vector.broadcast %4 : vector<1x128xf32> to vector<16x128xf32>
    %296 = arith.mulf %294, %295 : vector<16x128xf32>
    %297 = arith.addf %293, %296 : vector<16x128xf32>
    %298 = vector.extract_strided_slice %289 {offsets = [2, 0], sizes = [16, 128], strides = [1, 1]} : vector<18x128xf32> to vector<16x128xf32>
    %299 = vector.broadcast %5 : vector<1x128xf32> to vector<16x128xf32>
    %300 = arith.mulf %298, %299 : vector<16x128xf32>
    %301 = arith.addf %297, %300 : vector<16x128xf32>
    %c0_102 = arith.constant 0 : index
    %c8_103 = arith.constant 8 : index
    %c0_104 = arith.constant 0 : index
    %c0_105 = arith.constant 0 : index
    %302 = vector.load %arg1[%c0_102, %c8_103, %c0_104, %c0_105] : memref<1x18x18x128xf32, #tpu.memory_space<vmem>>, vector<1x1x18x128xf32>
    %303 = vector.shape_cast %302 : vector<1x1x18x128xf32> to vector<18x128xf32>
    %304 = vector.extract_strided_slice %303 {offsets = [0, 0], sizes = [16, 128], strides = [1, 1]} : vector<18x128xf32> to vector<16x128xf32>
    %305 = vector.broadcast %6 : vector<1x128xf32> to vector<16x128xf32>
    %306 = arith.mulf %304, %305 : vector<16x128xf32>
    %307 = arith.addf %301, %306 : vector<16x128xf32>
    %308 = vector.extract_strided_slice %303 {offsets = [1, 0], sizes = [16, 128], strides = [1, 1]} : vector<18x128xf32> to vector<16x128xf32>
    %309 = vector.broadcast %7 : vector<1x128xf32> to vector<16x128xf32>
    %310 = arith.mulf %308, %309 : vector<16x128xf32>
    %311 = arith.addf %307, %310 : vector<16x128xf32>
    %312 = vector.extract_strided_slice %303 {offsets = [2, 0], sizes = [16, 128], strides = [1, 1]} : vector<18x128xf32> to vector<16x128xf32>
    %313 = vector.broadcast %8 : vector<1x128xf32> to vector<16x128xf32>
    %314 = arith.mulf %312, %313 : vector<16x128xf32>
    %315 = arith.addf %311, %314 : vector<16x128xf32>
    %c96 = arith.constant 96 : index
    %c0_106 = arith.constant 0 : index
    %316 = vector.load %arg6[%c96, %c0_106] : memref<256x128xf32, #tpu.memory_space<vmem>>, vector<16x128xf32>
    tpu.vector_store %arg6[%c96, %c0_106], %315 {strides = array<i32>} : memref<256x128xf32, #tpu.memory_space<vmem>>, vector<16x128xf32>,
    %cst_107 = arith.constant 0.000000e+00 : f32
    %317 = vector.broadcast %cst_107 : f32 to vector<16x128xf32>
    %c0_108 = arith.constant 0 : index
    %c7_109 = arith.constant 7 : index
    %c0_110 = arith.constant 0 : index
    %c0_111 = arith.constant 0 : index
    %318 = vector.load %arg1[%c0_108, %c7_109, %c0_110, %c0_111] : memref<1x18x18x128xf32, #tpu.memory_space<vmem>>, vector<1x1x18x128xf32>
    %319 = vector.shape_cast %318 : vector<1x1x18x128xf32> to vector<18x128xf32>
    %320 = vector.extract_strided_slice %319 {offsets = [0, 0], sizes = [16, 128], strides = [1, 1]} : vector<18x128xf32> to vector<16x128xf32>
    %321 = vector.broadcast %0 : vector<1x128xf32> to vector<16x128xf32>
    %322 = arith.mulf %320, %321 : vector<16x128xf32>
    %323 = arith.addf %317, %322 : vector<16x128xf32>
    %324 = vector.extract_strided_slice %319 {offsets = [1, 0], sizes = [16, 128], strides = [1, 1]} : vector<18x128xf32> to vector<16x128xf32>
    %325 = vector.broadcast %1 : vector<1x128xf32> to vector<16x128xf32>
    %326 = arith.mulf %324, %325 : vector<16x128xf32>
    %327 = arith.addf %323, %326 : vector<16x128xf32>
    %328 = vector.extract_strided_slice %319 {offsets = [2, 0], sizes = [16, 128], strides = [1, 1]} : vector<18x128xf32> to vector<16x128xf32>
    %329 = vector.broadcast %2 : vector<1x128xf32> to vector<16x128xf32>
    %330 = arith.mulf %328, %329 : vector<16x128xf32>
    %331 = arith.addf %327, %330 : vector<16x128xf32>
    %c0_112 = arith.constant 0 : index
    %c8_113 = arith.constant 8 : index
    %c0_114 = arith.constant 0 : index
    %c0_115 = arith.constant 0 : index
    %332 = vector.load %arg1[%c0_112, %c8_113, %c0_114, %c0_115] : memref<1x18x18x128xf32, #tpu.memory_space<vmem>>, vector<1x1x18x128xf32>
    %333 = vector.shape_cast %332 : vector<1x1x18x128xf32> to vector<18x128xf32>
    %334 = vector.extract_strided_slice %333 {offsets = [0, 0], sizes = [16, 128], strides = [1, 1]} : vector<18x128xf32> to vector<16x128xf32>
    %335 = vector.broadcast %3 : vector<1x128xf32> to vector<16x128xf32>
    %336 = arith.mulf %334, %335 : vector<16x128xf32>
    %337 = arith.addf %331, %336 : vector<16x128xf32>
    %338 = vector.extract_strided_slice %333 {offsets = [1, 0], sizes = [16, 128], strides = [1, 1]} : vector<18x128xf32> to vector<16x128xf32>
    %339 = vector.broadcast %4 : vector<1x128xf32> to vector<16x128xf32>
    %340 = arith.mulf %338, %339 : vector<16x128xf32>
    %341 = arith.addf %337, %340 : vector<16x128xf32>
    %342 = vector.extract_strided_slice %333 {offsets = [2, 0], sizes = [16, 128], strides = [1, 1]} : vector<18x128xf32> to vector<16x128xf32>
    %343 = vector.broadcast %5 : vector<1x128xf32> to vector<16x128xf32>
    %344 = arith.mulf %342, %343 : vector<16x128xf32>
    %345 = arith.addf %341, %344 : vector<16x128xf32>
    %c0_116 = arith.constant 0 : index
    %c9 = arith.constant 9 : index
    %c0_117 = arith.constant 0 : index
    %c0_118 = arith.constant 0 : index
    %346 = vector.load %arg1[%c0_116, %c9, %c0_117, %c0_118] : memref<1x18x18x128xf32, #tpu.memory_space<vmem>>, vector<1x1x18x128xf32>
    %347 = vector.shape_cast %346 : vector<1x1x18x128xf32> to vector<18x128xf32>
    %348 = vector.extract_strided_slice %347 {offsets = [0, 0], sizes = [16, 128], strides = [1, 1]} : vector<18x128xf32> to vector<16x128xf32>
    %349 = vector.broadcast %6 : vector<1x128xf32> to vector<16x128xf32>
    %350 = arith.mulf %348, %349 : vector<16x128xf32>
    %351 = arith.addf %345, %350 : vector<16x128xf32>
    %352 = vector.extract_strided_slice %347 {offsets = [1, 0], sizes = [16, 128], strides = [1, 1]} : vector<18x128xf32> to vector<16x128xf32>
    %353 = vector.broadcast %7 : vector<1x128xf32> to vector<16x128xf32>
    %354 = arith.mulf %352, %353 : vector<16x128xf32>
    %355 = arith.addf %351, %354 : vector<16x128xf32>
    %356 = vector.extract_strided_slice %347 {offsets = [2, 0], sizes = [16, 128], strides = [1, 1]} : vector<18x128xf32> to vector<16x128xf32>
    %357 = vector.broadcast %8 : vector<1x128xf32> to vector<16x128xf32>
    %358 = arith.mulf %356, %357 : vector<16x128xf32>
    %359 = arith.addf %355, %358 : vector<16x128xf32>
    %c112 = arith.constant 112 : index
    %c0_119 = arith.constant 0 : index
    %360 = vector.load %arg6[%c112, %c0_119] : memref<256x128xf32, #tpu.memory_space<vmem>>, vector<16x128xf32>
    tpu.vector_store %arg6[%c112, %c0_119], %359 {strides = array<i32>} : memref<256x128xf32, #tpu.memory_space<vmem>>, vector<16x128xf32>,
    %cst_120 = arith.constant 0.000000e+00 : f32
    %361 = vector.broadcast %cst_120 : f32 to vector<16x128xf32>
    %c0_121 = arith.constant 0 : index
    %c8_122 = arith.constant 8 : index
    %c0_123 = arith.constant 0 : index
    %c0_124 = arith.constant 0 : index
    %362 = vector.load %arg1[%c0_121, %c8_122, %c0_123, %c0_124] : memref<1x18x18x128xf32, #tpu.memory_space<vmem>>, vector<1x1x18x128xf32>
    %363 = vector.shape_cast %362 : vector<1x1x18x128xf32> to vector<18x128xf32>
    %364 = vector.extract_strided_slice %363 {offsets = [0, 0], sizes = [16, 128], strides = [1, 1]} : vector<18x128xf32> to vector<16x128xf32>
    %365 = vector.broadcast %0 : vector<1x128xf32> to vector<16x128xf32>
    %366 = arith.mulf %364, %365 : vector<16x128xf32>
    %367 = arith.addf %361, %366 : vector<16x128xf32>
    %368 = vector.extract_strided_slice %363 {offsets = [1, 0], sizes = [16, 128], strides = [1, 1]} : vector<18x128xf32> to vector<16x128xf32>
    %369 = vector.broadcast %1 : vector<1x128xf32> to vector<16x128xf32>
    %370 = arith.mulf %368, %369 : vector<16x128xf32>
    %371 = arith.addf %367, %370 : vector<16x128xf32>
    %372 = vector.extract_strided_slice %363 {offsets = [2, 0], sizes = [16, 128], strides = [1, 1]} : vector<18x128xf32> to vector<16x128xf32>
    %373 = vector.broadcast %2 : vector<1x128xf32> to vector<16x128xf32>
    %374 = arith.mulf %372, %373 : vector<16x128xf32>
    %375 = arith.addf %371, %374 : vector<16x128xf32>
    %c0_125 = arith.constant 0 : index
    %c9_126 = arith.constant 9 : index
    %c0_127 = arith.constant 0 : index
    %c0_128 = arith.constant 0 : index
    %376 = vector.load %arg1[%c0_125, %c9_126, %c0_127, %c0_128] : memref<1x18x18x128xf32, #tpu.memory_space<vmem>>, vector<1x1x18x128xf32>
    %377 = vector.shape_cast %376 : vector<1x1x18x128xf32> to vector<18x128xf32>
    %378 = vector.extract_strided_slice %377 {offsets = [0, 0], sizes = [16, 128], strides = [1, 1]} : vector<18x128xf32> to vector<16x128xf32>
    %379 = vector.broadcast %3 : vector<1x128xf32> to vector<16x128xf32>
    %380 = arith.mulf %378, %379 : vector<16x128xf32>
    %381 = arith.addf %375, %380 : vector<16x128xf32>
    %382 = vector.extract_strided_slice %377 {offsets = [1, 0], sizes = [16, 128], strides = [1, 1]} : vector<18x128xf32> to vector<16x128xf32>
    %383 = vector.broadcast %4 : vector<1x128xf32> to vector<16x128xf32>
    %384 = arith.mulf %382, %383 : vector<16x128xf32>
    %385 = arith.addf %381, %384 : vector<16x128xf32>
    %386 = vector.extract_strided_slice %377 {offsets = [2, 0], sizes = [16, 128], strides = [1, 1]} : vector<18x128xf32> to vector<16x128xf32>
    %387 = vector.broadcast %5 : vector<1x128xf32> to vector<16x128xf32>
    %388 = arith.mulf %386, %387 : vector<16x128xf32>
    %389 = arith.addf %385, %388 : vector<16x128xf32>
    %c0_129 = arith.constant 0 : index
    %c10 = arith.constant 10 : index
    %c0_130 = arith.constant 0 : index
    %c0_131 = arith.constant 0 : index
    %390 = vector.load %arg1[%c0_129, %c10, %c0_130, %c0_131] : memref<1x18x18x128xf32, #tpu.memory_space<vmem>>, vector<1x1x18x128xf32>
    %391 = vector.shape_cast %390 : vector<1x1x18x128xf32> to vector<18x128xf32>
    %392 = vector.extract_strided_slice %391 {offsets = [0, 0], sizes = [16, 128], strides = [1, 1]} : vector<18x128xf32> to vector<16x128xf32>
    %393 = vector.broadcast %6 : vector<1x128xf32> to vector<16x128xf32>
    %394 = arith.mulf %392, %393 : vector<16x128xf32>
    %395 = arith.addf %389, %394 : vector<16x128xf32>
    %396 = vector.extract_strided_slice %391 {offsets = [1, 0], sizes = [16, 128], strides = [1, 1]} : vector<18x128xf32> to vector<16x128xf32>
    %397 = vector.broadcast %7 : vector<1x128xf32> to vector<16x128xf32>
    %398 = arith.mulf %396, %397 : vector<16x128xf32>
    %399 = arith.addf %395, %398 : vector<16x128xf32>
    %400 = vector.extract_strided_slice %391 {offsets = [2, 0], sizes = [16, 128], strides = [1, 1]} : vector<18x128xf32> to vector<16x128xf32>
    %401 = vector.broadcast %8 : vector<1x128xf32> to vector<16x128xf32>
    %402 = arith.mulf %400, %401 : vector<16x128xf32>
    %403 = arith.addf %399, %402 : vector<16x128xf32>
    %c128 = arith.constant 128 : index
    %c0_132 = arith.constant 0 : index
    %404 = vector.load %arg6[%c128, %c0_132] : memref<256x128xf32, #tpu.memory_space<vmem>>, vector<16x128xf32>
    tpu.vector_store %arg6[%c128, %c0_132], %403 {strides = array<i32>} : memref<256x128xf32, #tpu.memory_space<vmem>>, vector<16x128xf32>,
    %cst_133 = arith.constant 0.000000e+00 : f32
    %405 = vector.broadcast %cst_133 : f32 to vector<16x128xf32>
    %c0_134 = arith.constant 0 : index
    %c9_135 = arith.constant 9 : index
    %c0_136 = arith.constant 0 : index
    %c0_137 = arith.constant 0 : index
    %406 = vector.load %arg1[%c0_134, %c9_135, %c0_136, %c0_137] : memref<1x18x18x128xf32, #tpu.memory_space<vmem>>, vector<1x1x18x128xf32>
    %407 = vector.shape_cast %406 : vector<1x1x18x128xf32> to vector<18x128xf32>
    %408 = vector.extract_strided_slice %407 {offsets = [0, 0], sizes = [16, 128], strides = [1, 1]} : vector<18x128xf32> to vector<16x128xf32>
    %409 = vector.broadcast %0 : vector<1x128xf32> to vector<16x128xf32>
    %410 = arith.mulf %408, %409 : vector<16x128xf32>
    %411 = arith.addf %405, %410 : vector<16x128xf32>
    %412 = vector.extract_strided_slice %407 {offsets = [1, 0], sizes = [16, 128], strides = [1, 1]} : vector<18x128xf32> to vector<16x128xf32>
    %413 = vector.broadcast %1 : vector<1x128xf32> to vector<16x128xf32>
    %414 = arith.mulf %412, %413 : vector<16x128xf32>
    %415 = arith.addf %411, %414 : vector<16x128xf32>
    %416 = vector.extract_strided_slice %407 {offsets = [2, 0], sizes = [16, 128], strides = [1, 1]} : vector<18x128xf32> to vector<16x128xf32>
    %417 = vector.broadcast %2 : vector<1x128xf32> to vector<16x128xf32>
    %418 = arith.mulf %416, %417 : vector<16x128xf32>
    %419 = arith.addf %415, %418 : vector<16x128xf32>
    %c0_138 = arith.constant 0 : index
    %c10_139 = arith.constant 10 : index
    %c0_140 = arith.constant 0 : index
    %c0_141 = arith.constant 0 : index
    %420 = vector.load %arg1[%c0_138, %c10_139, %c0_140, %c0_141] : memref<1x18x18x128xf32, #tpu.memory_space<vmem>>, vector<1x1x18x128xf32>
    %421 = vector.shape_cast %420 : vector<1x1x18x128xf32> to vector<18x128xf32>
    %422 = vector.extract_strided_slice %421 {offsets = [0, 0], sizes = [16, 128], strides = [1, 1]} : vector<18x128xf32> to vector<16x128xf32>
    %423 = vector.broadcast %3 : vector<1x128xf32> to vector<16x128xf32>
    %424 = arith.mulf %422, %423 : vector<16x128xf32>
    %425 = arith.addf %419, %424 : vector<16x128xf32>
    %426 = vector.extract_strided_slice %421 {offsets = [1, 0], sizes = [16, 128], strides = [1, 1]} : vector<18x128xf32> to vector<16x128xf32>
    %427 = vector.broadcast %4 : vector<1x128xf32> to vector<16x128xf32>
    %428 = arith.mulf %426, %427 : vector<16x128xf32>
    %429 = arith.addf %425, %428 : vector<16x128xf32>
    %430 = vector.extract_strided_slice %421 {offsets = [2, 0], sizes = [16, 128], strides = [1, 1]} : vector<18x128xf32> to vector<16x128xf32>
    %431 = vector.broadcast %5 : vector<1x128xf32> to vector<16x128xf32>
    %432 = arith.mulf %430, %431 : vector<16x128xf32>
    %433 = arith.addf %429, %432 : vector<16x128xf32>
    %c0_142 = arith.constant 0 : index
    %c11 = arith.constant 11 : index
    %c0_143 = arith.constant 0 : index
    %c0_144 = arith.constant 0 : index
    %434 = vector.load %arg1[%c0_142, %c11, %c0_143, %c0_144] : memref<1x18x18x128xf32, #tpu.memory_space<vmem>>, vector<1x1x18x128xf32>
    %435 = vector.shape_cast %434 : vector<1x1x18x128xf32> to vector<18x128xf32>
    %436 = vector.extract_strided_slice %435 {offsets = [0, 0], sizes = [16, 128], strides = [1, 1]} : vector<18x128xf32> to vector<16x128xf32>
    %437 = vector.broadcast %6 : vector<1x128xf32> to vector<16x128xf32>
    %438 = arith.mulf %436, %437 : vector<16x128xf32>
    %439 = arith.addf %433, %438 : vector<16x128xf32>
    %440 = vector.extract_strided_slice %435 {offsets = [1, 0], sizes = [16, 128], strides = [1, 1]} : vector<18x128xf32> to vector<16x128xf32>
    %441 = vector.broadcast %7 : vector<1x128xf32> to vector<16x128xf32>
    %442 = arith.mulf %440, %441 : vector<16x128xf32>
    %443 = arith.addf %439, %442 : vector<16x128xf32>
    %444 = vector.extract_strided_slice %435 {offsets = [2, 0], sizes = [16, 128], strides = [1, 1]} : vector<18x128xf32> to vector<16x128xf32>
    %445 = vector.broadcast %8 : vector<1x128xf32> to vector<16x128xf32>
    %446 = arith.mulf %444, %445 : vector<16x128xf32>
    %447 = arith.addf %443, %446 : vector<16x128xf32>
    %c144 = arith.constant 144 : index
    %c0_145 = arith.constant 0 : index
    %448 = vector.load %arg6[%c144, %c0_145] : memref<256x128xf32, #tpu.memory_space<vmem>>, vector<16x128xf32>
    tpu.vector_store %arg6[%c144, %c0_145], %447 {strides = array<i32>} : memref<256x128xf32, #tpu.memory_space<vmem>>, vector<16x128xf32>,
    %cst_146 = arith.constant 0.000000e+00 : f32
    %449 = vector.broadcast %cst_146 : f32 to vector<16x128xf32>
    %c0_147 = arith.constant 0 : index
    %c10_148 = arith.constant 10 : index
    %c0_149 = arith.constant 0 : index
    %c0_150 = arith.constant 0 : index
    %450 = vector.load %arg1[%c0_147, %c10_148, %c0_149, %c0_150] : memref<1x18x18x128xf32, #tpu.memory_space<vmem>>, vector<1x1x18x128xf32>
    %451 = vector.shape_cast %450 : vector<1x1x18x128xf32> to vector<18x128xf32>
    %452 = vector.extract_strided_slice %451 {offsets = [0, 0], sizes = [16, 128], strides = [1, 1]} : vector<18x128xf32> to vector<16x128xf32>
    %453 = vector.broadcast %0 : vector<1x128xf32> to vector<16x128xf32>
    %454 = arith.mulf %452, %453 : vector<16x128xf32>
    %455 = arith.addf %449, %454 : vector<16x128xf32>
    %456 = vector.extract_strided_slice %451 {offsets = [1, 0], sizes = [16, 128], strides = [1, 1]} : vector<18x128xf32> to vector<16x128xf32>
    %457 = vector.broadcast %1 : vector<1x128xf32> to vector<16x128xf32>
    %458 = arith.mulf %456, %457 : vector<16x128xf32>
    %459 = arith.addf %455, %458 : vector<16x128xf32>
    %460 = vector.extract_strided_slice %451 {offsets = [2, 0], sizes = [16, 128], strides = [1, 1]} : vector<18x128xf32> to vector<16x128xf32>
    %461 = vector.broadcast %2 : vector<1x128xf32> to vector<16x128xf32>
    %462 = arith.mulf %460, %461 : vector<16x128xf32>
    %463 = arith.addf %459, %462 : vector<16x128xf32>
    %c0_151 = arith.constant 0 : index
    %c11_152 = arith.constant 11 : index
    %c0_153 = arith.constant 0 : index
    %c0_154 = arith.constant 0 : index
    %464 = vector.load %arg1[%c0_151, %c11_152, %c0_153, %c0_154] : memref<1x18x18x128xf32, #tpu.memory_space<vmem>>, vector<1x1x18x128xf32>
    %465 = vector.shape_cast %464 : vector<1x1x18x128xf32> to vector<18x128xf32>
    %466 = vector.extract_strided_slice %465 {offsets = [0, 0], sizes = [16, 128], strides = [1, 1]} : vector<18x128xf32> to vector<16x128xf32>
    %467 = vector.broadcast %3 : vector<1x128xf32> to vector<16x128xf32>
    %468 = arith.mulf %466, %467 : vector<16x128xf32>
    %469 = arith.addf %463, %468 : vector<16x128xf32>
    %470 = vector.extract_strided_slice %465 {offsets = [1, 0], sizes = [16, 128], strides = [1, 1]} : vector<18x128xf32> to vector<16x128xf32>
    %471 = vector.broadcast %4 : vector<1x128xf32> to vector<16x128xf32>
    %472 = arith.mulf %470, %471 : vector<16x128xf32>
    %473 = arith.addf %469, %472 : vector<16x128xf32>
    %474 = vector.extract_strided_slice %465 {offsets = [2, 0], sizes = [16, 128], strides = [1, 1]} : vector<18x128xf32> to vector<16x128xf32>
    %475 = vector.broadcast %5 : vector<1x128xf32> to vector<16x128xf32>
    %476 = arith.mulf %474, %475 : vector<16x128xf32>
    %477 = arith.addf %473, %476 : vector<16x128xf32>
    %c0_155 = arith.constant 0 : index
    %c12 = arith.constant 12 : index
    %c0_156 = arith.constant 0 : index
    %c0_157 = arith.constant 0 : index
    %478 = vector.load %arg1[%c0_155, %c12, %c0_156, %c0_157] : memref<1x18x18x128xf32, #tpu.memory_space<vmem>>, vector<1x1x18x128xf32>
    %479 = vector.shape_cast %478 : vector<1x1x18x128xf32> to vector<18x128xf32>
    %480 = vector.extract_strided_slice %479 {offsets = [0, 0], sizes = [16, 128], strides = [1, 1]} : vector<18x128xf32> to vector<16x128xf32>
    %481 = vector.broadcast %6 : vector<1x128xf32> to vector<16x128xf32>
    %482 = arith.mulf %480, %481 : vector<16x128xf32>
    %483 = arith.addf %477, %482 : vector<16x128xf32>
    %484 = vector.extract_strided_slice %479 {offsets = [1, 0], sizes = [16, 128], strides = [1, 1]} : vector<18x128xf32> to vector<16x128xf32>
    %485 = vector.broadcast %7 : vector<1x128xf32> to vector<16x128xf32>
    %486 = arith.mulf %484, %485 : vector<16x128xf32>
    %487 = arith.addf %483, %486 : vector<16x128xf32>
    %488 = vector.extract_strided_slice %479 {offsets = [2, 0], sizes = [16, 128], strides = [1, 1]} : vector<18x128xf32> to vector<16x128xf32>
    %489 = vector.broadcast %8 : vector<1x128xf32> to vector<16x128xf32>
    %490 = arith.mulf %488, %489 : vector<16x128xf32>
    %491 = arith.addf %487, %490 : vector<16x128xf32>
    %c160 = arith.constant 160 : index
    %c0_158 = arith.constant 0 : index
    %492 = vector.load %arg6[%c160, %c0_158] : memref<256x128xf32, #tpu.memory_space<vmem>>, vector<16x128xf32>
    tpu.vector_store %arg6[%c160, %c0_158], %491 {strides = array<i32>} : memref<256x128xf32, #tpu.memory_space<vmem>>, vector<16x128xf32>,
    %cst_159 = arith.constant 0.000000e+00 : f32
    %493 = vector.broadcast %cst_159 : f32 to vector<16x128xf32>
    %c0_160 = arith.constant 0 : index
    %c11_161 = arith.constant 11 : index
    %c0_162 = arith.constant 0 : index
    %c0_163 = arith.constant 0 : index
    %494 = vector.load %arg1[%c0_160, %c11_161, %c0_162, %c0_163] : memref<1x18x18x128xf32, #tpu.memory_space<vmem>>, vector<1x1x18x128xf32>
    %495 = vector.shape_cast %494 : vector<1x1x18x128xf32> to vector<18x128xf32>
    %496 = vector.extract_strided_slice %495 {offsets = [0, 0], sizes = [16, 128], strides = [1, 1]} : vector<18x128xf32> to vector<16x128xf32>
    %497 = vector.broadcast %0 : vector<1x128xf32> to vector<16x128xf32>
    %498 = arith.mulf %496, %497 : vector<16x128xf32>
    %499 = arith.addf %493, %498 : vector<16x128xf32>
    %500 = vector.extract_strided_slice %495 {offsets = [1, 0], sizes = [16, 128], strides = [1, 1]} : vector<18x128xf32> to vector<16x128xf32>
    %501 = vector.broadcast %1 : vector<1x128xf32> to vector<16x128xf32>
    %502 = arith.mulf %500, %501 : vector<16x128xf32>
    %503 = arith.addf %499, %502 : vector<16x128xf32>
    %504 = vector.extract_strided_slice %495 {offsets = [2, 0], sizes = [16, 128], strides = [1, 1]} : vector<18x128xf32> to vector<16x128xf32>
    %505 = vector.broadcast %2 : vector<1x128xf32> to vector<16x128xf32>
    %506 = arith.mulf %504, %505 : vector<16x128xf32>
    %507 = arith.addf %503, %506 : vector<16x128xf32>
    %c0_164 = arith.constant 0 : index
    %c12_165 = arith.constant 12 : index
    %c0_166 = arith.constant 0 : index
    %c0_167 = arith.constant 0 : index
    %508 = vector.load %arg1[%c0_164, %c12_165, %c0_166, %c0_167] : memref<1x18x18x128xf32, #tpu.memory_space<vmem>>, vector<1x1x18x128xf32>
    %509 = vector.shape_cast %508 : vector<1x1x18x128xf32> to vector<18x128xf32>
    %510 = vector.extract_strided_slice %509 {offsets = [0, 0], sizes = [16, 128], strides = [1, 1]} : vector<18x128xf32> to vector<16x128xf32>
    %511 = vector.broadcast %3 : vector<1x128xf32> to vector<16x128xf32>
    %512 = arith.mulf %510, %511 : vector<16x128xf32>
    %513 = arith.addf %507, %512 : vector<16x128xf32>
    %514 = vector.extract_strided_slice %509 {offsets = [1, 0], sizes = [16, 128], strides = [1, 1]} : vector<18x128xf32> to vector<16x128xf32>
    %515 = vector.broadcast %4 : vector<1x128xf32> to vector<16x128xf32>
    %516 = arith.mulf %514, %515 : vector<16x128xf32>
    %517 = arith.addf %513, %516 : vector<16x128xf32>
    %518 = vector.extract_strided_slice %509 {offsets = [2, 0], sizes = [16, 128], strides = [1, 1]} : vector<18x128xf32> to vector<16x128xf32>
    %519 = vector.broadcast %5 : vector<1x128xf32> to vector<16x128xf32>
    %520 = arith.mulf %518, %519 : vector<16x128xf32>
    %521 = arith.addf %517, %520 : vector<16x128xf32>
    %c0_168 = arith.constant 0 : index
    %c13 = arith.constant 13 : index
    %c0_169 = arith.constant 0 : index
    %c0_170 = arith.constant 0 : index
    %522 = vector.load %arg1[%c0_168, %c13, %c0_169, %c0_170] : memref<1x18x18x128xf32, #tpu.memory_space<vmem>>, vector<1x1x18x128xf32>
    %523 = vector.shape_cast %522 : vector<1x1x18x128xf32> to vector<18x128xf32>
    %524 = vector.extract_strided_slice %523 {offsets = [0, 0], sizes = [16, 128], strides = [1, 1]} : vector<18x128xf32> to vector<16x128xf32>
    %525 = vector.broadcast %6 : vector<1x128xf32> to vector<16x128xf32>
    %526 = arith.mulf %524, %525 : vector<16x128xf32>
    %527 = arith.addf %521, %526 : vector<16x128xf32>
    %528 = vector.extract_strided_slice %523 {offsets = [1, 0], sizes = [16, 128], strides = [1, 1]} : vector<18x128xf32> to vector<16x128xf32>
    %529 = vector.broadcast %7 : vector<1x128xf32> to vector<16x128xf32>
    %530 = arith.mulf %528, %529 : vector<16x128xf32>
    %531 = arith.addf %527, %530 : vector<16x128xf32>
    %532 = vector.extract_strided_slice %523 {offsets = [2, 0], sizes = [16, 128], strides = [1, 1]} : vector<18x128xf32> to vector<16x128xf32>
    %533 = vector.broadcast %8 : vector<1x128xf32> to vector<16x128xf32>
    %534 = arith.mulf %532, %533 : vector<16x128xf32>
    %535 = arith.addf %531, %534 : vector<16x128xf32>
    %c176 = arith.constant 176 : index
    %c0_171 = arith.constant 0 : index
    %536 = vector.load %arg6[%c176, %c0_171] : memref<256x128xf32, #tpu.memory_space<vmem>>, vector<16x128xf32>
    tpu.vector_store %arg6[%c176, %c0_171], %535 {strides = array<i32>} : memref<256x128xf32, #tpu.memory_space<vmem>>, vector<16x128xf32>,
    %cst_172 = arith.constant 0.000000e+00 : f32
    %537 = vector.broadcast %cst_172 : f32 to vector<16x128xf32>
    %c0_173 = arith.constant 0 : index
    %c12_174 = arith.constant 12 : index
    %c0_175 = arith.constant 0 : index
    %c0_176 = arith.constant 0 : index
    %538 = vector.load %arg1[%c0_173, %c12_174, %c0_175, %c0_176] : memref<1x18x18x128xf32, #tpu.memory_space<vmem>>, vector<1x1x18x128xf32>
    %539 = vector.shape_cast %538 : vector<1x1x18x128xf32> to vector<18x128xf32>
    %540 = vector.extract_strided_slice %539 {offsets = [0, 0], sizes = [16, 128], strides = [1, 1]} : vector<18x128xf32> to vector<16x128xf32>
    %541 = vector.broadcast %0 : vector<1x128xf32> to vector<16x128xf32>
    %542 = arith.mulf %540, %541 : vector<16x128xf32>
    %543 = arith.addf %537, %542 : vector<16x128xf32>
    %544 = vector.extract_strided_slice %539 {offsets = [1, 0], sizes = [16, 128], strides = [1, 1]} : vector<18x128xf32> to vector<16x128xf32>
    %545 = vector.broadcast %1 : vector<1x128xf32> to vector<16x128xf32>
    %546 = arith.mulf %544, %545 : vector<16x128xf32>
    %547 = arith.addf %543, %546 : vector<16x128xf32>
    %548 = vector.extract_strided_slice %539 {offsets = [2, 0], sizes = [16, 128], strides = [1, 1]} : vector<18x128xf32> to vector<16x128xf32>
    %549 = vector.broadcast %2 : vector<1x128xf32> to vector<16x128xf32>
    %550 = arith.mulf %548, %549 : vector<16x128xf32>
    %551 = arith.addf %547, %550 : vector<16x128xf32>
    %c0_177 = arith.constant 0 : index
    %c13_178 = arith.constant 13 : index
    %c0_179 = arith.constant 0 : index
    %c0_180 = arith.constant 0 : index
    %552 = vector.load %arg1[%c0_177, %c13_178, %c0_179, %c0_180] : memref<1x18x18x128xf32, #tpu.memory_space<vmem>>, vector<1x1x18x128xf32>
    %553 = vector.shape_cast %552 : vector<1x1x18x128xf32> to vector<18x128xf32>
    %554 = vector.extract_strided_slice %553 {offsets = [0, 0], sizes = [16, 128], strides = [1, 1]} : vector<18x128xf32> to vector<16x128xf32>
    %555 = vector.broadcast %3 : vector<1x128xf32> to vector<16x128xf32>
    %556 = arith.mulf %554, %555 : vector<16x128xf32>
    %557 = arith.addf %551, %556 : vector<16x128xf32>
    %558 = vector.extract_strided_slice %553 {offsets = [1, 0], sizes = [16, 128], strides = [1, 1]} : vector<18x128xf32> to vector<16x128xf32>
    %559 = vector.broadcast %4 : vector<1x128xf32> to vector<16x128xf32>
    %560 = arith.mulf %558, %559 : vector<16x128xf32>
    %561 = arith.addf %557, %560 : vector<16x128xf32>
    %562 = vector.extract_strided_slice %553 {offsets = [2, 0], sizes = [16, 128], strides = [1, 1]} : vector<18x128xf32> to vector<16x128xf32>
    %563 = vector.broadcast %5 : vector<1x128xf32> to vector<16x128xf32>
    %564 = arith.mulf %562, %563 : vector<16x128xf32>
    %565 = arith.addf %561, %564 : vector<16x128xf32>
    %c0_181 = arith.constant 0 : index
    %c14 = arith.constant 14 : index
    %c0_182 = arith.constant 0 : index
    %c0_183 = arith.constant 0 : index
    %566 = vector.load %arg1[%c0_181, %c14, %c0_182, %c0_183] : memref<1x18x18x128xf32, #tpu.memory_space<vmem>>, vector<1x1x18x128xf32>
    %567 = vector.shape_cast %566 : vector<1x1x18x128xf32> to vector<18x128xf32>
    %568 = vector.extract_strided_slice %567 {offsets = [0, 0], sizes = [16, 128], strides = [1, 1]} : vector<18x128xf32> to vector<16x128xf32>
    %569 = vector.broadcast %6 : vector<1x128xf32> to vector<16x128xf32>
    %570 = arith.mulf %568, %569 : vector<16x128xf32>
    %571 = arith.addf %565, %570 : vector<16x128xf32>
    %572 = vector.extract_strided_slice %567 {offsets = [1, 0], sizes = [16, 128], strides = [1, 1]} : vector<18x128xf32> to vector<16x128xf32>
    %573 = vector.broadcast %7 : vector<1x128xf32> to vector<16x128xf32>
    %574 = arith.mulf %572, %573 : vector<16x128xf32>
    %575 = arith.addf %571, %574 : vector<16x128xf32>
    %576 = vector.extract_strided_slice %567 {offsets = [2, 0], sizes = [16, 128], strides = [1, 1]} : vector<18x128xf32> to vector<16x128xf32>
    %577 = vector.broadcast %8 : vector<1x128xf32> to vector<16x128xf32>
    %578 = arith.mulf %576, %577 : vector<16x128xf32>
    %579 = arith.addf %575, %578 : vector<16x128xf32>
    %c192 = arith.constant 192 : index
    %c0_184 = arith.constant 0 : index
    %580 = vector.load %arg6[%c192, %c0_184] : memref<256x128xf32, #tpu.memory_space<vmem>>, vector<16x128xf32>
    tpu.vector_store %arg6[%c192, %c0_184], %579 {strides = array<i32>} : memref<256x128xf32, #tpu.memory_space<vmem>>, vector<16x128xf32>,
    %cst_185 = arith.constant 0.000000e+00 : f32
    %581 = vector.broadcast %cst_185 : f32 to vector<16x128xf32>
    %c0_186 = arith.constant 0 : index
    %c13_187 = arith.constant 13 : index
    %c0_188 = arith.constant 0 : index
    %c0_189 = arith.constant 0 : index
    %582 = vector.load %arg1[%c0_186, %c13_187, %c0_188, %c0_189] : memref<1x18x18x128xf32, #tpu.memory_space<vmem>>, vector<1x1x18x128xf32>
    %583 = vector.shape_cast %582 : vector<1x1x18x128xf32> to vector<18x128xf32>
    %584 = vector.extract_strided_slice %583 {offsets = [0, 0], sizes = [16, 128], strides = [1, 1]} : vector<18x128xf32> to vector<16x128xf32>
    %585 = vector.broadcast %0 : vector<1x128xf32> to vector<16x128xf32>
    %586 = arith.mulf %584, %585 : vector<16x128xf32>
    %587 = arith.addf %581, %586 : vector<16x128xf32>
    %588 = vector.extract_strided_slice %583 {offsets = [1, 0], sizes = [16, 128], strides = [1, 1]} : vector<18x128xf32> to vector<16x128xf32>
    %589 = vector.broadcast %1 : vector<1x128xf32> to vector<16x128xf32>
    %590 = arith.mulf %588, %589 : vector<16x128xf32>
    %591 = arith.addf %587, %590 : vector<16x128xf32>
    %592 = vector.extract_strided_slice %583 {offsets = [2, 0], sizes = [16, 128], strides = [1, 1]} : vector<18x128xf32> to vector<16x128xf32>
    %593 = vector.broadcast %2 : vector<1x128xf32> to vector<16x128xf32>
    %594 = arith.mulf %592, %593 : vector<16x128xf32>
    %595 = arith.addf %591, %594 : vector<16x128xf32>
    %c0_190 = arith.constant 0 : index
    %c14_191 = arith.constant 14 : index
    %c0_192 = arith.constant 0 : index
    %c0_193 = arith.constant 0 : index
    %596 = vector.load %arg1[%c0_190, %c14_191, %c0_192, %c0_193] : memref<1x18x18x128xf32, #tpu.memory_space<vmem>>, vector<1x1x18x128xf32>
    %597 = vector.shape_cast %596 : vector<1x1x18x128xf32> to vector<18x128xf32>
    %598 = vector.extract_strided_slice %597 {offsets = [0, 0], sizes = [16, 128], strides = [1, 1]} : vector<18x128xf32> to vector<16x128xf32>
    %599 = vector.broadcast %3 : vector<1x128xf32> to vector<16x128xf32>
    %600 = arith.mulf %598, %599 : vector<16x128xf32>
    %601 = arith.addf %595, %600 : vector<16x128xf32>
    %602 = vector.extract_strided_slice %597 {offsets = [1, 0], sizes = [16, 128], strides = [1, 1]} : vector<18x128xf32> to vector<16x128xf32>
    %603 = vector.broadcast %4 : vector<1x128xf32> to vector<16x128xf32>
    %604 = arith.mulf %602, %603 : vector<16x128xf32>
    %605 = arith.addf %601, %604 : vector<16x128xf32>
    %606 = vector.extract_strided_slice %597 {offsets = [2, 0], sizes = [16, 128], strides = [1, 1]} : vector<18x128xf32> to vector<16x128xf32>
    %607 = vector.broadcast %5 : vector<1x128xf32> to vector<16x128xf32>
    %608 = arith.mulf %606, %607 : vector<16x128xf32>
    %609 = arith.addf %605, %608 : vector<16x128xf32>
    %c0_194 = arith.constant 0 : index
    %c15 = arith.constant 15 : index
    %c0_195 = arith.constant 0 : index
    %c0_196 = arith.constant 0 : index
    %610 = vector.load %arg1[%c0_194, %c15, %c0_195, %c0_196] : memref<1x18x18x128xf32, #tpu.memory_space<vmem>>, vector<1x1x18x128xf32>
    %611 = vector.shape_cast %610 : vector<1x1x18x128xf32> to vector<18x128xf32>
    %612 = vector.extract_strided_slice %611 {offsets = [0, 0], sizes = [16, 128], strides = [1, 1]} : vector<18x128xf32> to vector<16x128xf32>
    %613 = vector.broadcast %6 : vector<1x128xf32> to vector<16x128xf32>
    %614 = arith.mulf %612, %613 : vector<16x128xf32>
    %615 = arith.addf %609, %614 : vector<16x128xf32>
    %616 = vector.extract_strided_slice %611 {offsets = [1, 0], sizes = [16, 128], strides = [1, 1]} : vector<18x128xf32> to vector<16x128xf32>
    %617 = vector.broadcast %7 : vector<1x128xf32> to vector<16x128xf32>
    %618 = arith.mulf %616, %617 : vector<16x128xf32>
    %619 = arith.addf %615, %618 : vector<16x128xf32>
    %620 = vector.extract_strided_slice %611 {offsets = [2, 0], sizes = [16, 128], strides = [1, 1]} : vector<18x128xf32> to vector<16x128xf32>
    %621 = vector.broadcast %8 : vector<1x128xf32> to vector<16x128xf32>
    %622 = arith.mulf %620, %621 : vector<16x128xf32>
    %623 = arith.addf %619, %622 : vector<16x128xf32>
    %c208 = arith.constant 208 : index
    %c0_197 = arith.constant 0 : index
    %624 = vector.load %arg6[%c208, %c0_197] : memref<256x128xf32, #tpu.memory_space<vmem>>, vector<16x128xf32>
    tpu.vector_store %arg6[%c208, %c0_197], %623 {strides = array<i32>} : memref<256x128xf32, #tpu.memory_space<vmem>>, vector<16x128xf32>,
    %cst_198 = arith.constant 0.000000e+00 : f32
    %625 = vector.broadcast %cst_198 : f32 to vector<16x128xf32>
    %c0_199 = arith.constant 0 : index
    %c14_200 = arith.constant 14 : index
    %c0_201 = arith.constant 0 : index
    %c0_202 = arith.constant 0 : index
    %626 = vector.load %arg1[%c0_199, %c14_200, %c0_201, %c0_202] : memref<1x18x18x128xf32, #tpu.memory_space<vmem>>, vector<1x1x18x128xf32>
    %627 = vector.shape_cast %626 : vector<1x1x18x128xf32> to vector<18x128xf32>
    %628 = vector.extract_strided_slice %627 {offsets = [0, 0], sizes = [16, 128], strides = [1, 1]} : vector<18x128xf32> to vector<16x128xf32>
    %629 = vector.broadcast %0 : vector<1x128xf32> to vector<16x128xf32>
    %630 = arith.mulf %628, %629 : vector<16x128xf32>
    %631 = arith.addf %625, %630 : vector<16x128xf32>
    %632 = vector.extract_strided_slice %627 {offsets = [1, 0], sizes = [16, 128], strides = [1, 1]} : vector<18x128xf32> to vector<16x128xf32>
    %633 = vector.broadcast %1 : vector<1x128xf32> to vector<16x128xf32>
    %634 = arith.mulf %632, %633 : vector<16x128xf32>
    %635 = arith.addf %631, %634 : vector<16x128xf32>
    %636 = vector.extract_strided_slice %627 {offsets = [2, 0], sizes = [16, 128], strides = [1, 1]} : vector<18x128xf32> to vector<16x128xf32>
    %637 = vector.broadcast %2 : vector<1x128xf32> to vector<16x128xf32>
    %638 = arith.mulf %636, %637 : vector<16x128xf32>
    %639 = arith.addf %635, %638 : vector<16x128xf32>
    %c0_203 = arith.constant 0 : index
    %c15_204 = arith.constant 15 : index
    %c0_205 = arith.constant 0 : index
    %c0_206 = arith.constant 0 : index
    %640 = vector.load %arg1[%c0_203, %c15_204, %c0_205, %c0_206] : memref<1x18x18x128xf32, #tpu.memory_space<vmem>>, vector<1x1x18x128xf32>
    %641 = vector.shape_cast %640 : vector<1x1x18x128xf32> to vector<18x128xf32>
    %642 = vector.extract_strided_slice %641 {offsets = [0, 0], sizes = [16, 128], strides = [1, 1]} : vector<18x128xf32> to vector<16x128xf32>
    %643 = vector.broadcast %3 : vector<1x128xf32> to vector<16x128xf32>
    %644 = arith.mulf %642, %643 : vector<16x128xf32>
    %645 = arith.addf %639, %644 : vector<16x128xf32>
    %646 = vector.extract_strided_slice %641 {offsets = [1, 0], sizes = [16, 128], strides = [1, 1]} : vector<18x128xf32> to vector<16x128xf32>
    %647 = vector.broadcast %4 : vector<1x128xf32> to vector<16x128xf32>
    %648 = arith.mulf %646, %647 : vector<16x128xf32>
    %649 = arith.addf %645, %648 : vector<16x128xf32>
    %650 = vector.extract_strided_slice %641 {offsets = [2, 0], sizes = [16, 128], strides = [1, 1]} : vector<18x128xf32> to vector<16x128xf32>
    %651 = vector.broadcast %5 : vector<1x128xf32> to vector<16x128xf32>
    %652 = arith.mulf %650, %651 : vector<16x128xf32>
    %653 = arith.addf %649, %652 : vector<16x128xf32>
    %c0_207 = arith.constant 0 : index
    %c16_208 = arith.constant 16 : index
    %c0_209 = arith.constant 0 : index
    %c0_210 = arith.constant 0 : index
    %654 = vector.load %arg1[%c0_207, %c16_208, %c0_209, %c0_210] : memref<1x18x18x128xf32, #tpu.memory_space<vmem>>, vector<1x1x18x128xf32>
    %655 = vector.shape_cast %654 : vector<1x1x18x128xf32> to vector<18x128xf32>
    %656 = vector.extract_strided_slice %655 {offsets = [0, 0], sizes = [16, 128], strides = [1, 1]} : vector<18x128xf32> to vector<16x128xf32>
    %657 = vector.broadcast %6 : vector<1x128xf32> to vector<16x128xf32>
    %658 = arith.mulf %656, %657 : vector<16x128xf32>
    %659 = arith.addf %653, %658 : vector<16x128xf32>
    %660 = vector.extract_strided_slice %655 {offsets = [1, 0], sizes = [16, 128], strides = [1, 1]} : vector<18x128xf32> to vector<16x128xf32>
    %661 = vector.broadcast %7 : vector<1x128xf32> to vector<16x128xf32>
    %662 = arith.mulf %660, %661 : vector<16x128xf32>
    %663 = arith.addf %659, %662 : vector<16x128xf32>
    %664 = vector.extract_strided_slice %655 {offsets = [2, 0], sizes = [16, 128], strides = [1, 1]} : vector<18x128xf32> to vector<16x128xf32>
    %665 = vector.broadcast %8 : vector<1x128xf32> to vector<16x128xf32>
    %666 = arith.mulf %664, %665 : vector<16x128xf32>
    %667 = arith.addf %663, %666 : vector<16x128xf32>
    %c224 = arith.constant 224 : index
    %c0_211 = arith.constant 0 : index
    %668 = vector.load %arg6[%c224, %c0_211] : memref<256x128xf32, #tpu.memory_space<vmem>>, vector<16x128xf32>
    tpu.vector_store %arg6[%c224, %c0_211], %667 {strides = array<i32>} : memref<256x128xf32, #tpu.memory_space<vmem>>, vector<16x128xf32>,
    %cst_212 = arith.constant 0.000000e+00 : f32
    %669 = vector.broadcast %cst_212 : f32 to vector<16x128xf32>
    %c0_213 = arith.constant 0 : index
    %c15_214 = arith.constant 15 : index
    %c0_215 = arith.constant 0 : index
    %c0_216 = arith.constant 0 : index
    %670 = vector.load %arg1[%c0_213, %c15_214, %c0_215, %c0_216] : memref<1x18x18x128xf32, #tpu.memory_space<vmem>>, vector<1x1x18x128xf32>
    %671 = vector.shape_cast %670 : vector<1x1x18x128xf32> to vector<18x128xf32>
    %672 = vector.extract_strided_slice %671 {offsets = [0, 0], sizes = [16, 128], strides = [1, 1]} : vector<18x128xf32> to vector<16x128xf32>
    %673 = vector.broadcast %0 : vector<1x128xf32> to vector<16x128xf32>
    %674 = arith.mulf %672, %673 : vector<16x128xf32>
    %675 = arith.addf %669, %674 : vector<16x128xf32>
    %676 = vector.extract_strided_slice %671 {offsets = [1, 0], sizes = [16, 128], strides = [1, 1]} : vector<18x128xf32> to vector<16x128xf32>
    %677 = vector.broadcast %1 : vector<1x128xf32> to vector<16x128xf32>
    %678 = arith.mulf %676, %677 : vector<16x128xf32>
    %679 = arith.addf %675, %678 : vector<16x128xf32>
    %680 = vector.extract_strided_slice %671 {offsets = [2, 0], sizes = [16, 128], strides = [1, 1]} : vector<18x128xf32> to vector<16x128xf32>
    %681 = vector.broadcast %2 : vector<1x128xf32> to vector<16x128xf32>
    %682 = arith.mulf %680, %681 : vector<16x128xf32>
    %683 = arith.addf %679, %682 : vector<16x128xf32>
    %c0_217 = arith.constant 0 : index
    %c16_218 = arith.constant 16 : index
    %c0_219 = arith.constant 0 : index
    %c0_220 = arith.constant 0 : index
    %684 = vector.load %arg1[%c0_217, %c16_218, %c0_219, %c0_220] : memref<1x18x18x128xf32, #tpu.memory_space<vmem>>, vector<1x1x18x128xf32>
    %685 = vector.shape_cast %684 : vector<1x1x18x128xf32> to vector<18x128xf32>
    %686 = vector.extract_strided_slice %685 {offsets = [0, 0], sizes = [16, 128], strides = [1, 1]} : vector<18x128xf32> to vector<16x128xf32>
    %687 = vector.broadcast %3 : vector<1x128xf32> to vector<16x128xf32>
    %688 = arith.mulf %686, %687 : vector<16x128xf32>
    %689 = arith.addf %683, %688 : vector<16x128xf32>
    %690 = vector.extract_strided_slice %685 {offsets = [1, 0], sizes = [16, 128], strides = [1, 1]} : vector<18x128xf32> to vector<16x128xf32>
    %691 = vector.broadcast %4 : vector<1x128xf32> to vector<16x128xf32>
    %692 = arith.mulf %690, %691 : vector<16x128xf32>
    %693 = arith.addf %689, %692 : vector<16x128xf32>
    %694 = vector.extract_strided_slice %685 {offsets = [2, 0], sizes = [16, 128], strides = [1, 1]} : vector<18x128xf32> to vector<16x128xf32>
    %695 = vector.broadcast %5 : vector<1x128xf32> to vector<16x128xf32>
    %696 = arith.mulf %694, %695 : vector<16x128xf32>
    %697 = arith.addf %693, %696 : vector<16x128xf32>
    %c0_221 = arith.constant 0 : index
    %c17 = arith.constant 17 : index
    %c0_222 = arith.constant 0 : index
    %c0_223 = arith.constant 0 : index
    %698 = vector.load %arg1[%c0_221, %c17, %c0_222, %c0_223] : memref<1x18x18x128xf32, #tpu.memory_space<vmem>>, vector<1x1x18x128xf32>
    %699 = vector.shape_cast %698 : vector<1x1x18x128xf32> to vector<18x128xf32>
    %700 = vector.extract_strided_slice %699 {offsets = [0, 0], sizes = [16, 128], strides = [1, 1]} : vector<18x128xf32> to vector<16x128xf32>
    %701 = vector.broadcast %6 : vector<1x128xf32> to vector<16x128xf32>
    %702 = arith.mulf %700, %701 : vector<16x128xf32>
    %703 = arith.addf %697, %702 : vector<16x128xf32>
    %704 = vector.extract_strided_slice %699 {offsets = [1, 0], sizes = [16, 128], strides = [1, 1]} : vector<18x128xf32> to vector<16x128xf32>
    %705 = vector.broadcast %7 : vector<1x128xf32> to vector<16x128xf32>
    %706 = arith.mulf %704, %705 : vector<16x128xf32>
    %707 = arith.addf %703, %706 : vector<16x128xf32>
    %708 = vector.extract_strided_slice %699 {offsets = [2, 0], sizes = [16, 128], strides = [1, 1]} : vector<18x128xf32> to vector<16x128xf32>
    %709 = vector.broadcast %8 : vector<1x128xf32> to vector<16x128xf32>
    %710 = arith.mulf %708, %709 : vector<16x128xf32>
    %711 = arith.addf %707, %710 : vector<16x128xf32>
    %c240 = arith.constant 240 : index
    %c0_224 = arith.constant 0 : index
    %712 = vector.load %arg6[%c240, %c0_224] : memref<256x128xf32, #tpu.memory_space<vmem>>, vector<16x128xf32>
    tpu.vector_store %arg6[%c240, %c0_224], %711 {strides = array<i32>} : memref<256x128xf32, #tpu.memory_space<vmem>>, vector<16x128xf32>,
    %c0_225 = arith.constant 0 : index
    %c0_226 = arith.constant 0 : index
    %713 = vector.load %arg6[%c0_225, %c0_226] : memref<256x128xf32, #tpu.memory_space<vmem>>, vector<256x128xf32>
    %c0_227 = arith.constant 0 : index
    %c0_228 = arith.constant 0 : index
    %714 = vector.load %arg3[%c0_227, %c0_228] : memref<128x128xf32, #tpu.memory_space<vmem>>, vector<128x128xf32>
    %cst_229 = arith.constant dense<0.000000e+00> : vector<256x128xf32>
    %715 = tpu.matmul %713, %714, %cst_229 {dimension_numbers = #tpu.dot_dimension_numbers<[1], [0], [0], [1], [0, 0, 1, 1], [], []>} : vector<256x128xf32>, vector<128x128xf32>, vector<256x128xf32> -> vector<256x128xf32>
    %c0_230 = arith.constant 0 : index
    %c0_231 = arith.constant 0 : index
    %716 = vector.load %arg4[%c0_230, %c0_231] : memref<1x128xf32, #tpu.memory_space<vmem>>, vector<1x128xf32>
    %717 = vector.broadcast %716 : vector<1x128xf32> to vector<256x128xf32>
    %718 = arith.addf %715, %717 : vector<256x128xf32>
    %cst_232 = arith.constant 0.000000e+00 : f32
    %719 = vector.broadcast %cst_232 : f32 to vector<256x128xf32>
    %720 = arith.maximumf %718, %719 : vector<256x128xf32>
    %c0_233 = arith.constant 0 : index
    %c0_234 = arith.constant 0 : index
    %c0_235 = arith.constant 0 : index
    %721 = vector.load %arg5[%c0_233, %c0_234, %c0_235] : memref<1x256x128xf32, #tpu.memory_space<vmem>>, vector<1x256x128xf32>
    %722 = vector.shape_cast %721 : vector<1x256x128xf32> to vector<256x128xf32>
    %723 = vector.shape_cast %720 : vector<256x128xf32> to vector<1x256x128xf32>
    tpu.vector_store %arg5[%c0_233, %c0_234, %c0_235], %723 {strides = array<i32>} : memref<1x256x128xf32, #tpu.memory_space<vmem>>, vector<1x256x128xf32>,
    return
  }
  func.func @transform_0(%arg0: i32) -> (i32, i32, i32, i32) {
    %c0_i32 = arith.constant 0 : i32
    %c0_i32_0 = arith.constant 0 : i32
    %c0_i32_1 = arith.constant 0 : i32
    %c0_i32_2 = arith.constant 0 : i32
    return %arg0, %c0_i32, %c0_i32_0, %c0_i32_1 : i32, i32, i32, i32
  }
  func.func @transform_1(%arg0: i32) -> (i32, i32) {
    %c0_i32 = arith.constant 0 : i32
    %c0_i32_0 = arith.constant 0 : i32
    %c0_i32_1 = arith.constant 0 : i32
    return %c0_i32, %c0_i32_0 : i32, i32
  }
  func.func @transform_2(%arg0: i32) -> (i32, i32) {
    %c0_i32 = arith.constant 0 : i32
    %c0_i32_0 = arith.constant 0 : i32
    %c0_i32_1 = arith.constant 0 : i32
    return %c0_i32, %c0_i32_0 : i32, i32
  }
  func.func @transform_3(%arg0: i32) -> (i32, i32) {
    %c0_i32 = arith.constant 0 : i32
    %c0_i32_0 = arith.constant 0 : i32
    %c0_i32_1 = arith.constant 0 : i32
    return %c0_i32, %c0_i32_0 : i32, i32
  }
  func.func @transform_4(%arg0: i32) -> (i32, i32, i32) {
    %c0_i32 = arith.constant 0 : i32
    %c0_i32_0 = arith.constant 0 : i32
    %c0_i32_1 = arith.constant 0 : i32
    return %arg0, %c0_i32, %c0_i32_0 : i32, i32, i32
  }
}

module attributes {stable_mosaic.version = 11 : i64} {
  func.func @_fused_stage_kernel(%arg0: i32, %arg1: memref<1x4x9x9x128xf32, #tpu.memory_space<vmem>>, %arg2: memref<9x128xf32, #tpu.memory_space<vmem>>, %arg3: memref<128x128xf32, #tpu.memory_space<vmem>>, %arg4: memref<1x128xf32, #tpu.memory_space<vmem>>, %arg5: memref<1x64x128xf32, #tpu.memory_space<vmem>>, %arg6: memref<64x128xf32, #tpu.memory_space<vmem>>) attributes {dimension_semantics = [#tpu.dimension_semantics<parallel>], iteration_bounds = array<i64: 2>, scalar_prefetch = 0 : i64, scratch_operands = 1 : i64, tpu.core_type = #tpu.core_type<tc>, window_params = [{transform_indices = @transform_0, window_bounds = array<i64: 1, 4, 9, 9, 128>}, {pipeline_mode = #tpu.pipeline_mode<synchronous>, transform_indices = @transform_1, window_bounds = array<i64: 9, 128>}, {pipeline_mode = #tpu.pipeline_mode<synchronous>, transform_indices = @transform_2, window_bounds = array<i64: 128, 128>}, {pipeline_mode = #tpu.pipeline_mode<synchronous>, transform_indices = @transform_3, window_bounds = array<i64: 1, 128>}, {transform_indices = @transform_4, window_bounds = array<i64: 1, 64, 128>}]} {
    %c0 = arith.constant 0 : index
    %c0_0 = arith.constant 0 : index
    %0 = vector.load %arg2[%c0, %c0_0] : memref<9x128xf32, #tpu.memory_space<vmem>>, vector<1x128xf32>
    %c1 = arith.constant 1 : index
    %c0_1 = arith.constant 0 : index
    %1 = vector.load %arg2[%c1, %c0_1] : memref<9x128xf32, #tpu.memory_space<vmem>>, vector<1x128xf32>
    %c2 = arith.constant 2 : index
    %c0_2 = arith.constant 0 : index
    %2 = vector.load %arg2[%c2, %c0_2] : memref<9x128xf32, #tpu.memory_space<vmem>>, vector<1x128xf32>
    %c3 = arith.constant 3 : index
    %c0_3 = arith.constant 0 : index
    %3 = vector.load %arg2[%c3, %c0_3] : memref<9x128xf32, #tpu.memory_space<vmem>>, vector<1x128xf32>
    %c4 = arith.constant 4 : index
    %c0_4 = arith.constant 0 : index
    %4 = vector.load %arg2[%c4, %c0_4] : memref<9x128xf32, #tpu.memory_space<vmem>>, vector<1x128xf32>
    %c5 = arith.constant 5 : index
    %c0_5 = arith.constant 0 : index
    %5 = vector.load %arg2[%c5, %c0_5] : memref<9x128xf32, #tpu.memory_space<vmem>>, vector<1x128xf32>
    %c6 = arith.constant 6 : index
    %c0_6 = arith.constant 0 : index
    %6 = vector.load %arg2[%c6, %c0_6] : memref<9x128xf32, #tpu.memory_space<vmem>>, vector<1x128xf32>
    %c7 = arith.constant 7 : index
    %c0_7 = arith.constant 0 : index
    %7 = vector.load %arg2[%c7, %c0_7] : memref<9x128xf32, #tpu.memory_space<vmem>>, vector<1x128xf32>
    %c8 = arith.constant 8 : index
    %c0_8 = arith.constant 0 : index
    %8 = vector.load %arg2[%c8, %c0_8] : memref<9x128xf32, #tpu.memory_space<vmem>>, vector<1x128xf32>
    %cst = arith.constant 0.000000e+00 : f32
    %9 = vector.broadcast %cst : f32 to vector<8x128xf32>
    %c0_9 = arith.constant 0 : index
    %c0_10 = arith.constant 0 : index
    %c0_11 = arith.constant 0 : index
    %c0_12 = arith.constant 0 : index
    %c0_13 = arith.constant 0 : index
    %10 = vector.load %arg1[%c0_9, %c0_10, %c0_11, %c0_12, %c0_13] : memref<1x4x9x9x128xf32, #tpu.memory_space<vmem>>, vector<1x1x1x9x128xf32>
    %11 = vector.shape_cast %10 : vector<1x1x1x9x128xf32> to vector<9x128xf32>
    %c0_14 = arith.constant 0 : index
    %c1_15 = arith.constant 1 : index
    %c0_16 = arith.constant 0 : index
    %c0_17 = arith.constant 0 : index
    %c0_18 = arith.constant 0 : index
    %12 = vector.load %arg1[%c0_14, %c1_15, %c0_16, %c0_17, %c0_18] : memref<1x4x9x9x128xf32, #tpu.memory_space<vmem>>, vector<1x1x1x9x128xf32>
    %13 = vector.shape_cast %12 : vector<1x1x1x9x128xf32> to vector<9x128xf32>
    %14 = vector.extract_strided_slice %11 {offsets = [0, 0], sizes = [8, 128], strides = [1, 1]} : vector<9x128xf32> to vector<8x128xf32>
    %15 = vector.broadcast %0 : vector<1x128xf32> to vector<8x128xf32>
    %16 = arith.mulf %14, %15 : vector<8x128xf32>
    %17 = arith.addf %9, %16 : vector<8x128xf32>
    %18 = vector.extract_strided_slice %13 {offsets = [0, 0], sizes = [8, 128], strides = [1, 1]} : vector<9x128xf32> to vector<8x128xf32>
    %19 = vector.broadcast %1 : vector<1x128xf32> to vector<8x128xf32>
    %20 = arith.mulf %18, %19 : vector<8x128xf32>
    %21 = arith.addf %17, %20 : vector<8x128xf32>
    %22 = vector.extract_strided_slice %11 {offsets = [1, 0], sizes = [8, 128], strides = [1, 1]} : vector<9x128xf32> to vector<8x128xf32>
    %23 = vector.broadcast %2 : vector<1x128xf32> to vector<8x128xf32>
    %24 = arith.mulf %22, %23 : vector<8x128xf32>
    %25 = arith.addf %21, %24 : vector<8x128xf32>
    %c0_19 = arith.constant 0 : index
    %c2_20 = arith.constant 2 : index
    %c0_21 = arith.constant 0 : index
    %c0_22 = arith.constant 0 : index
    %c0_23 = arith.constant 0 : index
    %26 = vector.load %arg1[%c0_19, %c2_20, %c0_21, %c0_22, %c0_23] : memref<1x4x9x9x128xf32, #tpu.memory_space<vmem>>, vector<1x1x1x9x128xf32>
    %27 = vector.shape_cast %26 : vector<1x1x1x9x128xf32> to vector<9x128xf32>
    %c0_24 = arith.constant 0 : index
    %c3_25 = arith.constant 3 : index
    %c0_26 = arith.constant 0 : index
    %c0_27 = arith.constant 0 : index
    %c0_28 = arith.constant 0 : index
    %28 = vector.load %arg1[%c0_24, %c3_25, %c0_26, %c0_27, %c0_28] : memref<1x4x9x9x128xf32, #tpu.memory_space<vmem>>, vector<1x1x1x9x128xf32>
    %29 = vector.shape_cast %28 : vector<1x1x1x9x128xf32> to vector<9x128xf32>
    %30 = vector.extract_strided_slice %27 {offsets = [0, 0], sizes = [8, 128], strides = [1, 1]} : vector<9x128xf32> to vector<8x128xf32>
    %31 = vector.broadcast %3 : vector<1x128xf32> to vector<8x128xf32>
    %32 = arith.mulf %30, %31 : vector<8x128xf32>
    %33 = arith.addf %25, %32 : vector<8x128xf32>
    %34 = vector.extract_strided_slice %29 {offsets = [0, 0], sizes = [8, 128], strides = [1, 1]} : vector<9x128xf32> to vector<8x128xf32>
    %35 = vector.broadcast %4 : vector<1x128xf32> to vector<8x128xf32>
    %36 = arith.mulf %34, %35 : vector<8x128xf32>
    %37 = arith.addf %33, %36 : vector<8x128xf32>
    %38 = vector.extract_strided_slice %27 {offsets = [1, 0], sizes = [8, 128], strides = [1, 1]} : vector<9x128xf32> to vector<8x128xf32>
    %39 = vector.broadcast %5 : vector<1x128xf32> to vector<8x128xf32>
    %40 = arith.mulf %38, %39 : vector<8x128xf32>
    %41 = arith.addf %37, %40 : vector<8x128xf32>
    %c0_29 = arith.constant 0 : index
    %c0_30 = arith.constant 0 : index
    %c1_31 = arith.constant 1 : index
    %c0_32 = arith.constant 0 : index
    %c0_33 = arith.constant 0 : index
    %42 = vector.load %arg1[%c0_29, %c0_30, %c1_31, %c0_32, %c0_33] : memref<1x4x9x9x128xf32, #tpu.memory_space<vmem>>, vector<1x1x1x9x128xf32>
    %43 = vector.shape_cast %42 : vector<1x1x1x9x128xf32> to vector<9x128xf32>
    %c0_34 = arith.constant 0 : index
    %c1_35 = arith.constant 1 : index
    %c1_36 = arith.constant 1 : index
    %c0_37 = arith.constant 0 : index
    %c0_38 = arith.constant 0 : index
    %44 = vector.load %arg1[%c0_34, %c1_35, %c1_36, %c0_37, %c0_38] : memref<1x4x9x9x128xf32, #tpu.memory_space<vmem>>, vector<1x1x1x9x128xf32>
    %45 = vector.shape_cast %44 : vector<1x1x1x9x128xf32> to vector<9x128xf32>
    %46 = vector.extract_strided_slice %43 {offsets = [0, 0], sizes = [8, 128], strides = [1, 1]} : vector<9x128xf32> to vector<8x128xf32>
    %47 = vector.broadcast %6 : vector<1x128xf32> to vector<8x128xf32>
    %48 = arith.mulf %46, %47 : vector<8x128xf32>
    %49 = arith.addf %41, %48 : vector<8x128xf32>
    %50 = vector.extract_strided_slice %45 {offsets = [0, 0], sizes = [8, 128], strides = [1, 1]} : vector<9x128xf32> to vector<8x128xf32>
    %51 = vector.broadcast %7 : vector<1x128xf32> to vector<8x128xf32>
    %52 = arith.mulf %50, %51 : vector<8x128xf32>
    %53 = arith.addf %49, %52 : vector<8x128xf32>
    %54 = vector.extract_strided_slice %43 {offsets = [1, 0], sizes = [8, 128], strides = [1, 1]} : vector<9x128xf32> to vector<8x128xf32>
    %55 = vector.broadcast %8 : vector<1x128xf32> to vector<8x128xf32>
    %56 = arith.mulf %54, %55 : vector<8x128xf32>
    %57 = arith.addf %53, %56 : vector<8x128xf32>
    %c0_39 = arith.constant 0 : index
    %c0_40 = arith.constant 0 : index
    %58 = vector.load %arg6[%c0_39, %c0_40] : memref<64x128xf32, #tpu.memory_space<vmem>>, vector<8x128xf32>
    tpu.vector_store %arg6[%c0_39, %c0_40], %57 {strides = array<i32>} : memref<64x128xf32, #tpu.memory_space<vmem>>, vector<8x128xf32>,
    %cst_41 = arith.constant 0.000000e+00 : f32
    %59 = vector.broadcast %cst_41 : f32 to vector<8x128xf32>
    %c0_42 = arith.constant 0 : index
    %c0_43 = arith.constant 0 : index
    %c1_44 = arith.constant 1 : index
    %c0_45 = arith.constant 0 : index
    %c0_46 = arith.constant 0 : index
    %60 = vector.load %arg1[%c0_42, %c0_43, %c1_44, %c0_45, %c0_46] : memref<1x4x9x9x128xf32, #tpu.memory_space<vmem>>, vector<1x1x1x9x128xf32>
    %61 = vector.shape_cast %60 : vector<1x1x1x9x128xf32> to vector<9x128xf32>
    %c0_47 = arith.constant 0 : index
    %c1_48 = arith.constant 1 : index
    %c1_49 = arith.constant 1 : index
    %c0_50 = arith.constant 0 : index
    %c0_51 = arith.constant 0 : index
    %62 = vector.load %arg1[%c0_47, %c1_48, %c1_49, %c0_50, %c0_51] : memref<1x4x9x9x128xf32, #tpu.memory_space<vmem>>, vector<1x1x1x9x128xf32>
    %63 = vector.shape_cast %62 : vector<1x1x1x9x128xf32> to vector<9x128xf32>
    %64 = vector.extract_strided_slice %61 {offsets = [0, 0], sizes = [8, 128], strides = [1, 1]} : vector<9x128xf32> to vector<8x128xf32>
    %65 = vector.broadcast %0 : vector<1x128xf32> to vector<8x128xf32>
    %66 = arith.mulf %64, %65 : vector<8x128xf32>
    %67 = arith.addf %59, %66 : vector<8x128xf32>
    %68 = vector.extract_strided_slice %63 {offsets = [0, 0], sizes = [8, 128], strides = [1, 1]} : vector<9x128xf32> to vector<8x128xf32>
    %69 = vector.broadcast %1 : vector<1x128xf32> to vector<8x128xf32>
    %70 = arith.mulf %68, %69 : vector<8x128xf32>
    %71 = arith.addf %67, %70 : vector<8x128xf32>
    %72 = vector.extract_strided_slice %61 {offsets = [1, 0], sizes = [8, 128], strides = [1, 1]} : vector<9x128xf32> to vector<8x128xf32>
    %73 = vector.broadcast %2 : vector<1x128xf32> to vector<8x128xf32>
    %74 = arith.mulf %72, %73 : vector<8x128xf32>
    %75 = arith.addf %71, %74 : vector<8x128xf32>
    %c0_52 = arith.constant 0 : index
    %c2_53 = arith.constant 2 : index
    %c1_54 = arith.constant 1 : index
    %c0_55 = arith.constant 0 : index
    %c0_56 = arith.constant 0 : index
    %76 = vector.load %arg1[%c0_52, %c2_53, %c1_54, %c0_55, %c0_56] : memref<1x4x9x9x128xf32, #tpu.memory_space<vmem>>, vector<1x1x1x9x128xf32>
    %77 = vector.shape_cast %76 : vector<1x1x1x9x128xf32> to vector<9x128xf32>
    %c0_57 = arith.constant 0 : index
    %c3_58 = arith.constant 3 : index
    %c1_59 = arith.constant 1 : index
    %c0_60 = arith.constant 0 : index
    %c0_61 = arith.constant 0 : index
    %78 = vector.load %arg1[%c0_57, %c3_58, %c1_59, %c0_60, %c0_61] : memref<1x4x9x9x128xf32, #tpu.memory_space<vmem>>, vector<1x1x1x9x128xf32>
    %79 = vector.shape_cast %78 : vector<1x1x1x9x128xf32> to vector<9x128xf32>
    %80 = vector.extract_strided_slice %77 {offsets = [0, 0], sizes = [8, 128], strides = [1, 1]} : vector<9x128xf32> to vector<8x128xf32>
    %81 = vector.broadcast %3 : vector<1x128xf32> to vector<8x128xf32>
    %82 = arith.mulf %80, %81 : vector<8x128xf32>
    %83 = arith.addf %75, %82 : vector<8x128xf32>
    %84 = vector.extract_strided_slice %79 {offsets = [0, 0], sizes = [8, 128], strides = [1, 1]} : vector<9x128xf32> to vector<8x128xf32>
    %85 = vector.broadcast %4 : vector<1x128xf32> to vector<8x128xf32>
    %86 = arith.mulf %84, %85 : vector<8x128xf32>
    %87 = arith.addf %83, %86 : vector<8x128xf32>
    %88 = vector.extract_strided_slice %77 {offsets = [1, 0], sizes = [8, 128], strides = [1, 1]} : vector<9x128xf32> to vector<8x128xf32>
    %89 = vector.broadcast %5 : vector<1x128xf32> to vector<8x128xf32>
    %90 = arith.mulf %88, %89 : vector<8x128xf32>
    %91 = arith.addf %87, %90 : vector<8x128xf32>
    %c0_62 = arith.constant 0 : index
    %c0_63 = arith.constant 0 : index
    %c2_64 = arith.constant 2 : index
    %c0_65 = arith.constant 0 : index
    %c0_66 = arith.constant 0 : index
    %92 = vector.load %arg1[%c0_62, %c0_63, %c2_64, %c0_65, %c0_66] : memref<1x4x9x9x128xf32, #tpu.memory_space<vmem>>, vector<1x1x1x9x128xf32>
    %93 = vector.shape_cast %92 : vector<1x1x1x9x128xf32> to vector<9x128xf32>
    %c0_67 = arith.constant 0 : index
    %c1_68 = arith.constant 1 : index
    %c2_69 = arith.constant 2 : index
    %c0_70 = arith.constant 0 : index
    %c0_71 = arith.constant 0 : index
    %94 = vector.load %arg1[%c0_67, %c1_68, %c2_69, %c0_70, %c0_71] : memref<1x4x9x9x128xf32, #tpu.memory_space<vmem>>, vector<1x1x1x9x128xf32>
    %95 = vector.shape_cast %94 : vector<1x1x1x9x128xf32> to vector<9x128xf32>
    %96 = vector.extract_strided_slice %93 {offsets = [0, 0], sizes = [8, 128], strides = [1, 1]} : vector<9x128xf32> to vector<8x128xf32>
    %97 = vector.broadcast %6 : vector<1x128xf32> to vector<8x128xf32>
    %98 = arith.mulf %96, %97 : vector<8x128xf32>
    %99 = arith.addf %91, %98 : vector<8x128xf32>
    %100 = vector.extract_strided_slice %95 {offsets = [0, 0], sizes = [8, 128], strides = [1, 1]} : vector<9x128xf32> to vector<8x128xf32>
    %101 = vector.broadcast %7 : vector<1x128xf32> to vector<8x128xf32>
    %102 = arith.mulf %100, %101 : vector<8x128xf32>
    %103 = arith.addf %99, %102 : vector<8x128xf32>
    %104 = vector.extract_strided_slice %93 {offsets = [1, 0], sizes = [8, 128], strides = [1, 1]} : vector<9x128xf32> to vector<8x128xf32>
    %105 = vector.broadcast %8 : vector<1x128xf32> to vector<8x128xf32>
    %106 = arith.mulf %104, %105 : vector<8x128xf32>
    %107 = arith.addf %103, %106 : vector<8x128xf32>
    %c8_72 = arith.constant 8 : index
    %c0_73 = arith.constant 0 : index
    %108 = vector.load %arg6[%c8_72, %c0_73] : memref<64x128xf32, #tpu.memory_space<vmem>>, vector<8x128xf32>
    tpu.vector_store %arg6[%c8_72, %c0_73], %107 {strides = array<i32>} : memref<64x128xf32, #tpu.memory_space<vmem>>, vector<8x128xf32>,
    %cst_74 = arith.constant 0.000000e+00 : f32
    %109 = vector.broadcast %cst_74 : f32 to vector<8x128xf32>
    %c0_75 = arith.constant 0 : index
    %c0_76 = arith.constant 0 : index
    %c2_77 = arith.constant 2 : index
    %c0_78 = arith.constant 0 : index
    %c0_79 = arith.constant 0 : index
    %110 = vector.load %arg1[%c0_75, %c0_76, %c2_77, %c0_78, %c0_79] : memref<1x4x9x9x128xf32, #tpu.memory_space<vmem>>, vector<1x1x1x9x128xf32>
    %111 = vector.shape_cast %110 : vector<1x1x1x9x128xf32> to vector<9x128xf32>
    %c0_80 = arith.constant 0 : index
    %c1_81 = arith.constant 1 : index
    %c2_82 = arith.constant 2 : index
    %c0_83 = arith.constant 0 : index
    %c0_84 = arith.constant 0 : index
    %112 = vector.load %arg1[%c0_80, %c1_81, %c2_82, %c0_83, %c0_84] : memref<1x4x9x9x128xf32, #tpu.memory_space<vmem>>, vector<1x1x1x9x128xf32>
    %113 = vector.shape_cast %112 : vector<1x1x1x9x128xf32> to vector<9x128xf32>
    %114 = vector.extract_strided_slice %111 {offsets = [0, 0], sizes = [8, 128], strides = [1, 1]} : vector<9x128xf32> to vector<8x128xf32>
    %115 = vector.broadcast %0 : vector<1x128xf32> to vector<8x128xf32>
    %116 = arith.mulf %114, %115 : vector<8x128xf32>
    %117 = arith.addf %109, %116 : vector<8x128xf32>
    %118 = vector.extract_strided_slice %113 {offsets = [0, 0], sizes = [8, 128], strides = [1, 1]} : vector<9x128xf32> to vector<8x128xf32>
    %119 = vector.broadcast %1 : vector<1x128xf32> to vector<8x128xf32>
    %120 = arith.mulf %118, %119 : vector<8x128xf32>
    %121 = arith.addf %117, %120 : vector<8x128xf32>
    %122 = vector.extract_strided_slice %111 {offsets = [1, 0], sizes = [8, 128], strides = [1, 1]} : vector<9x128xf32> to vector<8x128xf32>
    %123 = vector.broadcast %2 : vector<1x128xf32> to vector<8x128xf32>
    %124 = arith.mulf %122, %123 : vector<8x128xf32>
    %125 = arith.addf %121, %124 : vector<8x128xf32>
    %c0_85 = arith.constant 0 : index
    %c2_86 = arith.constant 2 : index
    %c2_87 = arith.constant 2 : index
    %c0_88 = arith.constant 0 : index
    %c0_89 = arith.constant 0 : index
    %126 = vector.load %arg1[%c0_85, %c2_86, %c2_87, %c0_88, %c0_89] : memref<1x4x9x9x128xf32, #tpu.memory_space<vmem>>, vector<1x1x1x9x128xf32>
    %127 = vector.shape_cast %126 : vector<1x1x1x9x128xf32> to vector<9x128xf32>
    %c0_90 = arith.constant 0 : index
    %c3_91 = arith.constant 3 : index
    %c2_92 = arith.constant 2 : index
    %c0_93 = arith.constant 0 : index
    %c0_94 = arith.constant 0 : index
    %128 = vector.load %arg1[%c0_90, %c3_91, %c2_92, %c0_93, %c0_94] : memref<1x4x9x9x128xf32, #tpu.memory_space<vmem>>, vector<1x1x1x9x128xf32>
    %129 = vector.shape_cast %128 : vector<1x1x1x9x128xf32> to vector<9x128xf32>
    %130 = vector.extract_strided_slice %127 {offsets = [0, 0], sizes = [8, 128], strides = [1, 1]} : vector<9x128xf32> to vector<8x128xf32>
    %131 = vector.broadcast %3 : vector<1x128xf32> to vector<8x128xf32>
    %132 = arith.mulf %130, %131 : vector<8x128xf32>
    %133 = arith.addf %125, %132 : vector<8x128xf32>
    %134 = vector.extract_strided_slice %129 {offsets = [0, 0], sizes = [8, 128], strides = [1, 1]} : vector<9x128xf32> to vector<8x128xf32>
    %135 = vector.broadcast %4 : vector<1x128xf32> to vector<8x128xf32>
    %136 = arith.mulf %134, %135 : vector<8x128xf32>
    %137 = arith.addf %133, %136 : vector<8x128xf32>
    %138 = vector.extract_strided_slice %127 {offsets = [1, 0], sizes = [8, 128], strides = [1, 1]} : vector<9x128xf32> to vector<8x128xf32>
    %139 = vector.broadcast %5 : vector<1x128xf32> to vector<8x128xf32>
    %140 = arith.mulf %138, %139 : vector<8x128xf32>
    %141 = arith.addf %137, %140 : vector<8x128xf32>
    %c0_95 = arith.constant 0 : index
    %c0_96 = arith.constant 0 : index
    %c3_97 = arith.constant 3 : index
    %c0_98 = arith.constant 0 : index
    %c0_99 = arith.constant 0 : index
    %142 = vector.load %arg1[%c0_95, %c0_96, %c3_97, %c0_98, %c0_99] : memref<1x4x9x9x128xf32, #tpu.memory_space<vmem>>, vector<1x1x1x9x128xf32>
    %143 = vector.shape_cast %142 : vector<1x1x1x9x128xf32> to vector<9x128xf32>
    %c0_100 = arith.constant 0 : index
    %c1_101 = arith.constant 1 : index
    %c3_102 = arith.constant 3 : index
    %c0_103 = arith.constant 0 : index
    %c0_104 = arith.constant 0 : index
    %144 = vector.load %arg1[%c0_100, %c1_101, %c3_102, %c0_103, %c0_104] : memref<1x4x9x9x128xf32, #tpu.memory_space<vmem>>, vector<1x1x1x9x128xf32>
    %145 = vector.shape_cast %144 : vector<1x1x1x9x128xf32> to vector<9x128xf32>
    %146 = vector.extract_strided_slice %143 {offsets = [0, 0], sizes = [8, 128], strides = [1, 1]} : vector<9x128xf32> to vector<8x128xf32>
    %147 = vector.broadcast %6 : vector<1x128xf32> to vector<8x128xf32>
    %148 = arith.mulf %146, %147 : vector<8x128xf32>
    %149 = arith.addf %141, %148 : vector<8x128xf32>
    %150 = vector.extract_strided_slice %145 {offsets = [0, 0], sizes = [8, 128], strides = [1, 1]} : vector<9x128xf32> to vector<8x128xf32>
    %151 = vector.broadcast %7 : vector<1x128xf32> to vector<8x128xf32>
    %152 = arith.mulf %150, %151 : vector<8x128xf32>
    %153 = arith.addf %149, %152 : vector<8x128xf32>
    %154 = vector.extract_strided_slice %143 {offsets = [1, 0], sizes = [8, 128], strides = [1, 1]} : vector<9x128xf32> to vector<8x128xf32>
    %155 = vector.broadcast %8 : vector<1x128xf32> to vector<8x128xf32>
    %156 = arith.mulf %154, %155 : vector<8x128xf32>
    %157 = arith.addf %153, %156 : vector<8x128xf32>
    %c16 = arith.constant 16 : index
    %c0_105 = arith.constant 0 : index
    %158 = vector.load %arg6[%c16, %c0_105] : memref<64x128xf32, #tpu.memory_space<vmem>>, vector<8x128xf32>
    tpu.vector_store %arg6[%c16, %c0_105], %157 {strides = array<i32>} : memref<64x128xf32, #tpu.memory_space<vmem>>, vector<8x128xf32>,
    %cst_106 = arith.constant 0.000000e+00 : f32
    %159 = vector.broadcast %cst_106 : f32 to vector<8x128xf32>
    %c0_107 = arith.constant 0 : index
    %c0_108 = arith.constant 0 : index
    %c3_109 = arith.constant 3 : index
    %c0_110 = arith.constant 0 : index
    %c0_111 = arith.constant 0 : index
    %160 = vector.load %arg1[%c0_107, %c0_108, %c3_109, %c0_110, %c0_111] : memref<1x4x9x9x128xf32, #tpu.memory_space<vmem>>, vector<1x1x1x9x128xf32>
    %161 = vector.shape_cast %160 : vector<1x1x1x9x128xf32> to vector<9x128xf32>
    %c0_112 = arith.constant 0 : index
    %c1_113 = arith.constant 1 : index
    %c3_114 = arith.constant 3 : index
    %c0_115 = arith.constant 0 : index
    %c0_116 = arith.constant 0 : index
    %162 = vector.load %arg1[%c0_112, %c1_113, %c3_114, %c0_115, %c0_116] : memref<1x4x9x9x128xf32, #tpu.memory_space<vmem>>, vector<1x1x1x9x128xf32>
    %163 = vector.shape_cast %162 : vector<1x1x1x9x128xf32> to vector<9x128xf32>
    %164 = vector.extract_strided_slice %161 {offsets = [0, 0], sizes = [8, 128], strides = [1, 1]} : vector<9x128xf32> to vector<8x128xf32>
    %165 = vector.broadcast %0 : vector<1x128xf32> to vector<8x128xf32>
    %166 = arith.mulf %164, %165 : vector<8x128xf32>
    %167 = arith.addf %159, %166 : vector<8x128xf32>
    %168 = vector.extract_strided_slice %163 {offsets = [0, 0], sizes = [8, 128], strides = [1, 1]} : vector<9x128xf32> to vector<8x128xf32>
    %169 = vector.broadcast %1 : vector<1x128xf32> to vector<8x128xf32>
    %170 = arith.mulf %168, %169 : vector<8x128xf32>
    %171 = arith.addf %167, %170 : vector<8x128xf32>
    %172 = vector.extract_strided_slice %161 {offsets = [1, 0], sizes = [8, 128], strides = [1, 1]} : vector<9x128xf32> to vector<8x128xf32>
    %173 = vector.broadcast %2 : vector<1x128xf32> to vector<8x128xf32>
    %174 = arith.mulf %172, %173 : vector<8x128xf32>
    %175 = arith.addf %171, %174 : vector<8x128xf32>
    %c0_117 = arith.constant 0 : index
    %c2_118 = arith.constant 2 : index
    %c3_119 = arith.constant 3 : index
    %c0_120 = arith.constant 0 : index
    %c0_121 = arith.constant 0 : index
    %176 = vector.load %arg1[%c0_117, %c2_118, %c3_119, %c0_120, %c0_121] : memref<1x4x9x9x128xf32, #tpu.memory_space<vmem>>, vector<1x1x1x9x128xf32>
    %177 = vector.shape_cast %176 : vector<1x1x1x9x128xf32> to vector<9x128xf32>
    %c0_122 = arith.constant 0 : index
    %c3_123 = arith.constant 3 : index
    %c3_124 = arith.constant 3 : index
    %c0_125 = arith.constant 0 : index
    %c0_126 = arith.constant 0 : index
    %178 = vector.load %arg1[%c0_122, %c3_123, %c3_124, %c0_125, %c0_126] : memref<1x4x9x9x128xf32, #tpu.memory_space<vmem>>, vector<1x1x1x9x128xf32>
    %179 = vector.shape_cast %178 : vector<1x1x1x9x128xf32> to vector<9x128xf32>
    %180 = vector.extract_strided_slice %177 {offsets = [0, 0], sizes = [8, 128], strides = [1, 1]} : vector<9x128xf32> to vector<8x128xf32>
    %181 = vector.broadcast %3 : vector<1x128xf32> to vector<8x128xf32>
    %182 = arith.mulf %180, %181 : vector<8x128xf32>
    %183 = arith.addf %175, %182 : vector<8x128xf32>
    %184 = vector.extract_strided_slice %179 {offsets = [0, 0], sizes = [8, 128], strides = [1, 1]} : vector<9x128xf32> to vector<8x128xf32>
    %185 = vector.broadcast %4 : vector<1x128xf32> to vector<8x128xf32>
    %186 = arith.mulf %184, %185 : vector<8x128xf32>
    %187 = arith.addf %183, %186 : vector<8x128xf32>
    %188 = vector.extract_strided_slice %177 {offsets = [1, 0], sizes = [8, 128], strides = [1, 1]} : vector<9x128xf32> to vector<8x128xf32>
    %189 = vector.broadcast %5 : vector<1x128xf32> to vector<8x128xf32>
    %190 = arith.mulf %188, %189 : vector<8x128xf32>
    %191 = arith.addf %187, %190 : vector<8x128xf32>
    %c0_127 = arith.constant 0 : index
    %c0_128 = arith.constant 0 : index
    %c4_129 = arith.constant 4 : index
    %c0_130 = arith.constant 0 : index
    %c0_131 = arith.constant 0 : index
    %192 = vector.load %arg1[%c0_127, %c0_128, %c4_129, %c0_130, %c0_131] : memref<1x4x9x9x128xf32, #tpu.memory_space<vmem>>, vector<1x1x1x9x128xf32>
    %193 = vector.shape_cast %192 : vector<1x1x1x9x128xf32> to vector<9x128xf32>
    %c0_132 = arith.constant 0 : index
    %c1_133 = arith.constant 1 : index
    %c4_134 = arith.constant 4 : index
    %c0_135 = arith.constant 0 : index
    %c0_136 = arith.constant 0 : index
    %194 = vector.load %arg1[%c0_132, %c1_133, %c4_134, %c0_135, %c0_136] : memref<1x4x9x9x128xf32, #tpu.memory_space<vmem>>, vector<1x1x1x9x128xf32>
    %195 = vector.shape_cast %194 : vector<1x1x1x9x128xf32> to vector<9x128xf32>
    %196 = vector.extract_strided_slice %193 {offsets = [0, 0], sizes = [8, 128], strides = [1, 1]} : vector<9x128xf32> to vector<8x128xf32>
    %197 = vector.broadcast %6 : vector<1x128xf32> to vector<8x128xf32>
    %198 = arith.mulf %196, %197 : vector<8x128xf32>
    %199 = arith.addf %191, %198 : vector<8x128xf32>
    %200 = vector.extract_strided_slice %195 {offsets = [0, 0], sizes = [8, 128], strides = [1, 1]} : vector<9x128xf32> to vector<8x128xf32>
    %201 = vector.broadcast %7 : vector<1x128xf32> to vector<8x128xf32>
    %202 = arith.mulf %200, %201 : vector<8x128xf32>
    %203 = arith.addf %199, %202 : vector<8x128xf32>
    %204 = vector.extract_strided_slice %193 {offsets = [1, 0], sizes = [8, 128], strides = [1, 1]} : vector<9x128xf32> to vector<8x128xf32>
    %205 = vector.broadcast %8 : vector<1x128xf32> to vector<8x128xf32>
    %206 = arith.mulf %204, %205 : vector<8x128xf32>
    %207 = arith.addf %203, %206 : vector<8x128xf32>
    %c24 = arith.constant 24 : index
    %c0_137 = arith.constant 0 : index
    %208 = vector.load %arg6[%c24, %c0_137] : memref<64x128xf32, #tpu.memory_space<vmem>>, vector<8x128xf32>
    tpu.vector_store %arg6[%c24, %c0_137], %207 {strides = array<i32>} : memref<64x128xf32, #tpu.memory_space<vmem>>, vector<8x128xf32>,
    %cst_138 = arith.constant 0.000000e+00 : f32
    %209 = vector.broadcast %cst_138 : f32 to vector<8x128xf32>
    %c0_139 = arith.constant 0 : index
    %c0_140 = arith.constant 0 : index
    %c4_141 = arith.constant 4 : index
    %c0_142 = arith.constant 0 : index
    %c0_143 = arith.constant 0 : index
    %210 = vector.load %arg1[%c0_139, %c0_140, %c4_141, %c0_142, %c0_143] : memref<1x4x9x9x128xf32, #tpu.memory_space<vmem>>, vector<1x1x1x9x128xf32>
    %211 = vector.shape_cast %210 : vector<1x1x1x9x128xf32> to vector<9x128xf32>
    %c0_144 = arith.constant 0 : index
    %c1_145 = arith.constant 1 : index
    %c4_146 = arith.constant 4 : index
    %c0_147 = arith.constant 0 : index
    %c0_148 = arith.constant 0 : index
    %212 = vector.load %arg1[%c0_144, %c1_145, %c4_146, %c0_147, %c0_148] : memref<1x4x9x9x128xf32, #tpu.memory_space<vmem>>, vector<1x1x1x9x128xf32>
    %213 = vector.shape_cast %212 : vector<1x1x1x9x128xf32> to vector<9x128xf32>
    %214 = vector.extract_strided_slice %211 {offsets = [0, 0], sizes = [8, 128], strides = [1, 1]} : vector<9x128xf32> to vector<8x128xf32>
    %215 = vector.broadcast %0 : vector<1x128xf32> to vector<8x128xf32>
    %216 = arith.mulf %214, %215 : vector<8x128xf32>
    %217 = arith.addf %209, %216 : vector<8x128xf32>
    %218 = vector.extract_strided_slice %213 {offsets = [0, 0], sizes = [8, 128], strides = [1, 1]} : vector<9x128xf32> to vector<8x128xf32>
    %219 = vector.broadcast %1 : vector<1x128xf32> to vector<8x128xf32>
    %220 = arith.mulf %218, %219 : vector<8x128xf32>
    %221 = arith.addf %217, %220 : vector<8x128xf32>
    %222 = vector.extract_strided_slice %211 {offsets = [1, 0], sizes = [8, 128], strides = [1, 1]} : vector<9x128xf32> to vector<8x128xf32>
    %223 = vector.broadcast %2 : vector<1x128xf32> to vector<8x128xf32>
    %224 = arith.mulf %222, %223 : vector<8x128xf32>
    %225 = arith.addf %221, %224 : vector<8x128xf32>
    %c0_149 = arith.constant 0 : index
    %c2_150 = arith.constant 2 : index
    %c4_151 = arith.constant 4 : index
    %c0_152 = arith.constant 0 : index
    %c0_153 = arith.constant 0 : index
    %226 = vector.load %arg1[%c0_149, %c2_150, %c4_151, %c0_152, %c0_153] : memref<1x4x9x9x128xf32, #tpu.memory_space<vmem>>, vector<1x1x1x9x128xf32>
    %227 = vector.shape_cast %226 : vector<1x1x1x9x128xf32> to vector<9x128xf32>
    %c0_154 = arith.constant 0 : index
    %c3_155 = arith.constant 3 : index
    %c4_156 = arith.constant 4 : index
    %c0_157 = arith.constant 0 : index
    %c0_158 = arith.constant 0 : index
    %228 = vector.load %arg1[%c0_154, %c3_155, %c4_156, %c0_157, %c0_158] : memref<1x4x9x9x128xf32, #tpu.memory_space<vmem>>, vector<1x1x1x9x128xf32>
    %229 = vector.shape_cast %228 : vector<1x1x1x9x128xf32> to vector<9x128xf32>
    %230 = vector.extract_strided_slice %227 {offsets = [0, 0], sizes = [8, 128], strides = [1, 1]} : vector<9x128xf32> to vector<8x128xf32>
    %231 = vector.broadcast %3 : vector<1x128xf32> to vector<8x128xf32>
    %232 = arith.mulf %230, %231 : vector<8x128xf32>
    %233 = arith.addf %225, %232 : vector<8x128xf32>
    %234 = vector.extract_strided_slice %229 {offsets = [0, 0], sizes = [8, 128], strides = [1, 1]} : vector<9x128xf32> to vector<8x128xf32>
    %235 = vector.broadcast %4 : vector<1x128xf32> to vector<8x128xf32>
    %236 = arith.mulf %234, %235 : vector<8x128xf32>
    %237 = arith.addf %233, %236 : vector<8x128xf32>
    %238 = vector.extract_strided_slice %227 {offsets = [1, 0], sizes = [8, 128], strides = [1, 1]} : vector<9x128xf32> to vector<8x128xf32>
    %239 = vector.broadcast %5 : vector<1x128xf32> to vector<8x128xf32>
    %240 = arith.mulf %238, %239 : vector<8x128xf32>
    %241 = arith.addf %237, %240 : vector<8x128xf32>
    %c0_159 = arith.constant 0 : index
    %c0_160 = arith.constant 0 : index
    %c5_161 = arith.constant 5 : index
    %c0_162 = arith.constant 0 : index
    %c0_163 = arith.constant 0 : index
    %242 = vector.load %arg1[%c0_159, %c0_160, %c5_161, %c0_162, %c0_163] : memref<1x4x9x9x128xf32, #tpu.memory_space<vmem>>, vector<1x1x1x9x128xf32>
    %243 = vector.shape_cast %242 : vector<1x1x1x9x128xf32> to vector<9x128xf32>
    %c0_164 = arith.constant 0 : index
    %c1_165 = arith.constant 1 : index
    %c5_166 = arith.constant 5 : index
    %c0_167 = arith.constant 0 : index
    %c0_168 = arith.constant 0 : index
    %244 = vector.load %arg1[%c0_164, %c1_165, %c5_166, %c0_167, %c0_168] : memref<1x4x9x9x128xf32, #tpu.memory_space<vmem>>, vector<1x1x1x9x128xf32>
    %245 = vector.shape_cast %244 : vector<1x1x1x9x128xf32> to vector<9x128xf32>
    %246 = vector.extract_strided_slice %243 {offsets = [0, 0], sizes = [8, 128], strides = [1, 1]} : vector<9x128xf32> to vector<8x128xf32>
    %247 = vector.broadcast %6 : vector<1x128xf32> to vector<8x128xf32>
    %248 = arith.mulf %246, %247 : vector<8x128xf32>
    %249 = arith.addf %241, %248 : vector<8x128xf32>
    %250 = vector.extract_strided_slice %245 {offsets = [0, 0], sizes = [8, 128], strides = [1, 1]} : vector<9x128xf32> to vector<8x128xf32>
    %251 = vector.broadcast %7 : vector<1x128xf32> to vector<8x128xf32>
    %252 = arith.mulf %250, %251 : vector<8x128xf32>
    %253 = arith.addf %249, %252 : vector<8x128xf32>
    %254 = vector.extract_strided_slice %243 {offsets = [1, 0], sizes = [8, 128], strides = [1, 1]} : vector<9x128xf32> to vector<8x128xf32>
    %255 = vector.broadcast %8 : vector<1x128xf32> to vector<8x128xf32>
    %256 = arith.mulf %254, %255 : vector<8x128xf32>
    %257 = arith.addf %253, %256 : vector<8x128xf32>
    %c32 = arith.constant 32 : index
    %c0_169 = arith.constant 0 : index
    %258 = vector.load %arg6[%c32, %c0_169] : memref<64x128xf32, #tpu.memory_space<vmem>>, vector<8x128xf32>
    tpu.vector_store %arg6[%c32, %c0_169], %257 {strides = array<i32>} : memref<64x128xf32, #tpu.memory_space<vmem>>, vector<8x128xf32>,
    %cst_170 = arith.constant 0.000000e+00 : f32
    %259 = vector.broadcast %cst_170 : f32 to vector<8x128xf32>
    %c0_171 = arith.constant 0 : index
    %c0_172 = arith.constant 0 : index
    %c5_173 = arith.constant 5 : index
    %c0_174 = arith.constant 0 : index
    %c0_175 = arith.constant 0 : index
    %260 = vector.load %arg1[%c0_171, %c0_172, %c5_173, %c0_174, %c0_175] : memref<1x4x9x9x128xf32, #tpu.memory_space<vmem>>, vector<1x1x1x9x128xf32>
    %261 = vector.shape_cast %260 : vector<1x1x1x9x128xf32> to vector<9x128xf32>
    %c0_176 = arith.constant 0 : index
    %c1_177 = arith.constant 1 : index
    %c5_178 = arith.constant 5 : index
    %c0_179 = arith.constant 0 : index
    %c0_180 = arith.constant 0 : index
    %262 = vector.load %arg1[%c0_176, %c1_177, %c5_178, %c0_179, %c0_180] : memref<1x4x9x9x128xf32, #tpu.memory_space<vmem>>, vector<1x1x1x9x128xf32>
    %263 = vector.shape_cast %262 : vector<1x1x1x9x128xf32> to vector<9x128xf32>
    %264 = vector.extract_strided_slice %261 {offsets = [0, 0], sizes = [8, 128], strides = [1, 1]} : vector<9x128xf32> to vector<8x128xf32>
    %265 = vector.broadcast %0 : vector<1x128xf32> to vector<8x128xf32>
    %266 = arith.mulf %264, %265 : vector<8x128xf32>
    %267 = arith.addf %259, %266 : vector<8x128xf32>
    %268 = vector.extract_strided_slice %263 {offsets = [0, 0], sizes = [8, 128], strides = [1, 1]} : vector<9x128xf32> to vector<8x128xf32>
    %269 = vector.broadcast %1 : vector<1x128xf32> to vector<8x128xf32>
    %270 = arith.mulf %268, %269 : vector<8x128xf32>
    %271 = arith.addf %267, %270 : vector<8x128xf32>
    %272 = vector.extract_strided_slice %261 {offsets = [1, 0], sizes = [8, 128], strides = [1, 1]} : vector<9x128xf32> to vector<8x128xf32>
    %273 = vector.broadcast %2 : vector<1x128xf32> to vector<8x128xf32>
    %274 = arith.mulf %272, %273 : vector<8x128xf32>
    %275 = arith.addf %271, %274 : vector<8x128xf32>
    %c0_181 = arith.constant 0 : index
    %c2_182 = arith.constant 2 : index
    %c5_183 = arith.constant 5 : index
    %c0_184 = arith.constant 0 : index
    %c0_185 = arith.constant 0 : index
    %276 = vector.load %arg1[%c0_181, %c2_182, %c5_183, %c0_184, %c0_185] : memref<1x4x9x9x128xf32, #tpu.memory_space<vmem>>, vector<1x1x1x9x128xf32>
    %277 = vector.shape_cast %276 : vector<1x1x1x9x128xf32> to vector<9x128xf32>
    %c0_186 = arith.constant 0 : index
    %c3_187 = arith.constant 3 : index
    %c5_188 = arith.constant 5 : index
    %c0_189 = arith.constant 0 : index
    %c0_190 = arith.constant 0 : index
    %278 = vector.load %arg1[%c0_186, %c3_187, %c5_188, %c0_189, %c0_190] : memref<1x4x9x9x128xf32, #tpu.memory_space<vmem>>, vector<1x1x1x9x128xf32>
    %279 = vector.shape_cast %278 : vector<1x1x1x9x128xf32> to vector<9x128xf32>
    %280 = vector.extract_strided_slice %277 {offsets = [0, 0], sizes = [8, 128], strides = [1, 1]} : vector<9x128xf32> to vector<8x128xf32>
    %281 = vector.broadcast %3 : vector<1x128xf32> to vector<8x128xf32>
    %282 = arith.mulf %280, %281 : vector<8x128xf32>
    %283 = arith.addf %275, %282 : vector<8x128xf32>
    %284 = vector.extract_strided_slice %279 {offsets = [0, 0], sizes = [8, 128], strides = [1, 1]} : vector<9x128xf32> to vector<8x128xf32>
    %285 = vector.broadcast %4 : vector<1x128xf32> to vector<8x128xf32>
    %286 = arith.mulf %284, %285 : vector<8x128xf32>
    %287 = arith.addf %283, %286 : vector<8x128xf32>
    %288 = vector.extract_strided_slice %277 {offsets = [1, 0], sizes = [8, 128], strides = [1, 1]} : vector<9x128xf32> to vector<8x128xf32>
    %289 = vector.broadcast %5 : vector<1x128xf32> to vector<8x128xf32>
    %290 = arith.mulf %288, %289 : vector<8x128xf32>
    %291 = arith.addf %287, %290 : vector<8x128xf32>
    %c0_191 = arith.constant 0 : index
    %c0_192 = arith.constant 0 : index
    %c6_193 = arith.constant 6 : index
    %c0_194 = arith.constant 0 : index
    %c0_195 = arith.constant 0 : index
    %292 = vector.load %arg1[%c0_191, %c0_192, %c6_193, %c0_194, %c0_195] : memref<1x4x9x9x128xf32, #tpu.memory_space<vmem>>, vector<1x1x1x9x128xf32>
    %293 = vector.shape_cast %292 : vector<1x1x1x9x128xf32> to vector<9x128xf32>
    %c0_196 = arith.constant 0 : index
    %c1_197 = arith.constant 1 : index
    %c6_198 = arith.constant 6 : index
    %c0_199 = arith.constant 0 : index
    %c0_200 = arith.constant 0 : index
    %294 = vector.load %arg1[%c0_196, %c1_197, %c6_198, %c0_199, %c0_200] : memref<1x4x9x9x128xf32, #tpu.memory_space<vmem>>, vector<1x1x1x9x128xf32>
    %295 = vector.shape_cast %294 : vector<1x1x1x9x128xf32> to vector<9x128xf32>
    %296 = vector.extract_strided_slice %293 {offsets = [0, 0], sizes = [8, 128], strides = [1, 1]} : vector<9x128xf32> to vector<8x128xf32>
    %297 = vector.broadcast %6 : vector<1x128xf32> to vector<8x128xf32>
    %298 = arith.mulf %296, %297 : vector<8x128xf32>
    %299 = arith.addf %291, %298 : vector<8x128xf32>
    %300 = vector.extract_strided_slice %295 {offsets = [0, 0], sizes = [8, 128], strides = [1, 1]} : vector<9x128xf32> to vector<8x128xf32>
    %301 = vector.broadcast %7 : vector<1x128xf32> to vector<8x128xf32>
    %302 = arith.mulf %300, %301 : vector<8x128xf32>
    %303 = arith.addf %299, %302 : vector<8x128xf32>
    %304 = vector.extract_strided_slice %293 {offsets = [1, 0], sizes = [8, 128], strides = [1, 1]} : vector<9x128xf32> to vector<8x128xf32>
    %305 = vector.broadcast %8 : vector<1x128xf32> to vector<8x128xf32>
    %306 = arith.mulf %304, %305 : vector<8x128xf32>
    %307 = arith.addf %303, %306 : vector<8x128xf32>
    %c40 = arith.constant 40 : index
    %c0_201 = arith.constant 0 : index
    %308 = vector.load %arg6[%c40, %c0_201] : memref<64x128xf32, #tpu.memory_space<vmem>>, vector<8x128xf32>
    tpu.vector_store %arg6[%c40, %c0_201], %307 {strides = array<i32>} : memref<64x128xf32, #tpu.memory_space<vmem>>, vector<8x128xf32>,
    %cst_202 = arith.constant 0.000000e+00 : f32
    %309 = vector.broadcast %cst_202 : f32 to vector<8x128xf32>
    %c0_203 = arith.constant 0 : index
    %c0_204 = arith.constant 0 : index
    %c6_205 = arith.constant 6 : index
    %c0_206 = arith.constant 0 : index
    %c0_207 = arith.constant 0 : index
    %310 = vector.load %arg1[%c0_203, %c0_204, %c6_205, %c0_206, %c0_207] : memref<1x4x9x9x128xf32, #tpu.memory_space<vmem>>, vector<1x1x1x9x128xf32>
    %311 = vector.shape_cast %310 : vector<1x1x1x9x128xf32> to vector<9x128xf32>
    %c0_208 = arith.constant 0 : index
    %c1_209 = arith.constant 1 : index
    %c6_210 = arith.constant 6 : index
    %c0_211 = arith.constant 0 : index
    %c0_212 = arith.constant 0 : index
    %312 = vector.load %arg1[%c0_208, %c1_209, %c6_210, %c0_211, %c0_212] : memref<1x4x9x9x128xf32, #tpu.memory_space<vmem>>, vector<1x1x1x9x128xf32>
    %313 = vector.shape_cast %312 : vector<1x1x1x9x128xf32> to vector<9x128xf32>
    %314 = vector.extract_strided_slice %311 {offsets = [0, 0], sizes = [8, 128], strides = [1, 1]} : vector<9x128xf32> to vector<8x128xf32>
    %315 = vector.broadcast %0 : vector<1x128xf32> to vector<8x128xf32>
    %316 = arith.mulf %314, %315 : vector<8x128xf32>
    %317 = arith.addf %309, %316 : vector<8x128xf32>
    %318 = vector.extract_strided_slice %313 {offsets = [0, 0], sizes = [8, 128], strides = [1, 1]} : vector<9x128xf32> to vector<8x128xf32>
    %319 = vector.broadcast %1 : vector<1x128xf32> to vector<8x128xf32>
    %320 = arith.mulf %318, %319 : vector<8x128xf32>
    %321 = arith.addf %317, %320 : vector<8x128xf32>
    %322 = vector.extract_strided_slice %311 {offsets = [1, 0], sizes = [8, 128], strides = [1, 1]} : vector<9x128xf32> to vector<8x128xf32>
    %323 = vector.broadcast %2 : vector<1x128xf32> to vector<8x128xf32>
    %324 = arith.mulf %322, %323 : vector<8x128xf32>
    %325 = arith.addf %321, %324 : vector<8x128xf32>
    %c0_213 = arith.constant 0 : index
    %c2_214 = arith.constant 2 : index
    %c6_215 = arith.constant 6 : index
    %c0_216 = arith.constant 0 : index
    %c0_217 = arith.constant 0 : index
    %326 = vector.load %arg1[%c0_213, %c2_214, %c6_215, %c0_216, %c0_217] : memref<1x4x9x9x128xf32, #tpu.memory_space<vmem>>, vector<1x1x1x9x128xf32>
    %327 = vector.shape_cast %326 : vector<1x1x1x9x128xf32> to vector<9x128xf32>
    %c0_218 = arith.constant 0 : index
    %c3_219 = arith.constant 3 : index
    %c6_220 = arith.constant 6 : index
    %c0_221 = arith.constant 0 : index
    %c0_222 = arith.constant 0 : index
    %328 = vector.load %arg1[%c0_218, %c3_219, %c6_220, %c0_221, %c0_222] : memref<1x4x9x9x128xf32, #tpu.memory_space<vmem>>, vector<1x1x1x9x128xf32>
    %329 = vector.shape_cast %328 : vector<1x1x1x9x128xf32> to vector<9x128xf32>
    %330 = vector.extract_strided_slice %327 {offsets = [0, 0], sizes = [8, 128], strides = [1, 1]} : vector<9x128xf32> to vector<8x128xf32>
    %331 = vector.broadcast %3 : vector<1x128xf32> to vector<8x128xf32>
    %332 = arith.mulf %330, %331 : vector<8x128xf32>
    %333 = arith.addf %325, %332 : vector<8x128xf32>
    %334 = vector.extract_strided_slice %329 {offsets = [0, 0], sizes = [8, 128], strides = [1, 1]} : vector<9x128xf32> to vector<8x128xf32>
    %335 = vector.broadcast %4 : vector<1x128xf32> to vector<8x128xf32>
    %336 = arith.mulf %334, %335 : vector<8x128xf32>
    %337 = arith.addf %333, %336 : vector<8x128xf32>
    %338 = vector.extract_strided_slice %327 {offsets = [1, 0], sizes = [8, 128], strides = [1, 1]} : vector<9x128xf32> to vector<8x128xf32>
    %339 = vector.broadcast %5 : vector<1x128xf32> to vector<8x128xf32>
    %340 = arith.mulf %338, %339 : vector<8x128xf32>
    %341 = arith.addf %337, %340 : vector<8x128xf32>
    %c0_223 = arith.constant 0 : index
    %c0_224 = arith.constant 0 : index
    %c7_225 = arith.constant 7 : index
    %c0_226 = arith.constant 0 : index
    %c0_227 = arith.constant 0 : index
    %342 = vector.load %arg1[%c0_223, %c0_224, %c7_225, %c0_226, %c0_227] : memref<1x4x9x9x128xf32, #tpu.memory_space<vmem>>, vector<1x1x1x9x128xf32>
    %343 = vector.shape_cast %342 : vector<1x1x1x9x128xf32> to vector<9x128xf32>
    %c0_228 = arith.constant 0 : index
    %c1_229 = arith.constant 1 : index
    %c7_230 = arith.constant 7 : index
    %c0_231 = arith.constant 0 : index
    %c0_232 = arith.constant 0 : index
    %344 = vector.load %arg1[%c0_228, %c1_229, %c7_230, %c0_231, %c0_232] : memref<1x4x9x9x128xf32, #tpu.memory_space<vmem>>, vector<1x1x1x9x128xf32>
    %345 = vector.shape_cast %344 : vector<1x1x1x9x128xf32> to vector<9x128xf32>
    %346 = vector.extract_strided_slice %343 {offsets = [0, 0], sizes = [8, 128], strides = [1, 1]} : vector<9x128xf32> to vector<8x128xf32>
    %347 = vector.broadcast %6 : vector<1x128xf32> to vector<8x128xf32>
    %348 = arith.mulf %346, %347 : vector<8x128xf32>
    %349 = arith.addf %341, %348 : vector<8x128xf32>
    %350 = vector.extract_strided_slice %345 {offsets = [0, 0], sizes = [8, 128], strides = [1, 1]} : vector<9x128xf32> to vector<8x128xf32>
    %351 = vector.broadcast %7 : vector<1x128xf32> to vector<8x128xf32>
    %352 = arith.mulf %350, %351 : vector<8x128xf32>
    %353 = arith.addf %349, %352 : vector<8x128xf32>
    %354 = vector.extract_strided_slice %343 {offsets = [1, 0], sizes = [8, 128], strides = [1, 1]} : vector<9x128xf32> to vector<8x128xf32>
    %355 = vector.broadcast %8 : vector<1x128xf32> to vector<8x128xf32>
    %356 = arith.mulf %354, %355 : vector<8x128xf32>
    %357 = arith.addf %353, %356 : vector<8x128xf32>
    %c48 = arith.constant 48 : index
    %c0_233 = arith.constant 0 : index
    %358 = vector.load %arg6[%c48, %c0_233] : memref<64x128xf32, #tpu.memory_space<vmem>>, vector<8x128xf32>
    tpu.vector_store %arg6[%c48, %c0_233], %357 {strides = array<i32>} : memref<64x128xf32, #tpu.memory_space<vmem>>, vector<8x128xf32>,
    %cst_234 = arith.constant 0.000000e+00 : f32
    %359 = vector.broadcast %cst_234 : f32 to vector<8x128xf32>
    %c0_235 = arith.constant 0 : index
    %c0_236 = arith.constant 0 : index
    %c7_237 = arith.constant 7 : index
    %c0_238 = arith.constant 0 : index
    %c0_239 = arith.constant 0 : index
    %360 = vector.load %arg1[%c0_235, %c0_236, %c7_237, %c0_238, %c0_239] : memref<1x4x9x9x128xf32, #tpu.memory_space<vmem>>, vector<1x1x1x9x128xf32>
    %361 = vector.shape_cast %360 : vector<1x1x1x9x128xf32> to vector<9x128xf32>
    %c0_240 = arith.constant 0 : index
    %c1_241 = arith.constant 1 : index
    %c7_242 = arith.constant 7 : index
    %c0_243 = arith.constant 0 : index
    %c0_244 = arith.constant 0 : index
    %362 = vector.load %arg1[%c0_240, %c1_241, %c7_242, %c0_243, %c0_244] : memref<1x4x9x9x128xf32, #tpu.memory_space<vmem>>, vector<1x1x1x9x128xf32>
    %363 = vector.shape_cast %362 : vector<1x1x1x9x128xf32> to vector<9x128xf32>
    %364 = vector.extract_strided_slice %361 {offsets = [0, 0], sizes = [8, 128], strides = [1, 1]} : vector<9x128xf32> to vector<8x128xf32>
    %365 = vector.broadcast %0 : vector<1x128xf32> to vector<8x128xf32>
    %366 = arith.mulf %364, %365 : vector<8x128xf32>
    %367 = arith.addf %359, %366 : vector<8x128xf32>
    %368 = vector.extract_strided_slice %363 {offsets = [0, 0], sizes = [8, 128], strides = [1, 1]} : vector<9x128xf32> to vector<8x128xf32>
    %369 = vector.broadcast %1 : vector<1x128xf32> to vector<8x128xf32>
    %370 = arith.mulf %368, %369 : vector<8x128xf32>
    %371 = arith.addf %367, %370 : vector<8x128xf32>
    %372 = vector.extract_strided_slice %361 {offsets = [1, 0], sizes = [8, 128], strides = [1, 1]} : vector<9x128xf32> to vector<8x128xf32>
    %373 = vector.broadcast %2 : vector<1x128xf32> to vector<8x128xf32>
    %374 = arith.mulf %372, %373 : vector<8x128xf32>
    %375 = arith.addf %371, %374 : vector<8x128xf32>
    %c0_245 = arith.constant 0 : index
    %c2_246 = arith.constant 2 : index
    %c7_247 = arith.constant 7 : index
    %c0_248 = arith.constant 0 : index
    %c0_249 = arith.constant 0 : index
    %376 = vector.load %arg1[%c0_245, %c2_246, %c7_247, %c0_248, %c0_249] : memref<1x4x9x9x128xf32, #tpu.memory_space<vmem>>, vector<1x1x1x9x128xf32>
    %377 = vector.shape_cast %376 : vector<1x1x1x9x128xf32> to vector<9x128xf32>
    %c0_250 = arith.constant 0 : index
    %c3_251 = arith.constant 3 : index
    %c7_252 = arith.constant 7 : index
    %c0_253 = arith.constant 0 : index
    %c0_254 = arith.constant 0 : index
    %378 = vector.load %arg1[%c0_250, %c3_251, %c7_252, %c0_253, %c0_254] : memref<1x4x9x9x128xf32, #tpu.memory_space<vmem>>, vector<1x1x1x9x128xf32>
    %379 = vector.shape_cast %378 : vector<1x1x1x9x128xf32> to vector<9x128xf32>
    %380 = vector.extract_strided_slice %377 {offsets = [0, 0], sizes = [8, 128], strides = [1, 1]} : vector<9x128xf32> to vector<8x128xf32>
    %381 = vector.broadcast %3 : vector<1x128xf32> to vector<8x128xf32>
    %382 = arith.mulf %380, %381 : vector<8x128xf32>
    %383 = arith.addf %375, %382 : vector<8x128xf32>
    %384 = vector.extract_strided_slice %379 {offsets = [0, 0], sizes = [8, 128], strides = [1, 1]} : vector<9x128xf32> to vector<8x128xf32>
    %385 = vector.broadcast %4 : vector<1x128xf32> to vector<8x128xf32>
    %386 = arith.mulf %384, %385 : vector<8x128xf32>
    %387 = arith.addf %383, %386 : vector<8x128xf32>
    %388 = vector.extract_strided_slice %377 {offsets = [1, 0], sizes = [8, 128], strides = [1, 1]} : vector<9x128xf32> to vector<8x128xf32>
    %389 = vector.broadcast %5 : vector<1x128xf32> to vector<8x128xf32>
    %390 = arith.mulf %388, %389 : vector<8x128xf32>
    %391 = arith.addf %387, %390 : vector<8x128xf32>
    %c0_255 = arith.constant 0 : index
    %c0_256 = arith.constant 0 : index
    %c8_257 = arith.constant 8 : index
    %c0_258 = arith.constant 0 : index
    %c0_259 = arith.constant 0 : index
    %392 = vector.load %arg1[%c0_255, %c0_256, %c8_257, %c0_258, %c0_259] : memref<1x4x9x9x128xf32, #tpu.memory_space<vmem>>, vector<1x1x1x9x128xf32>
    %393 = vector.shape_cast %392 : vector<1x1x1x9x128xf32> to vector<9x128xf32>
    %c0_260 = arith.constant 0 : index
    %c1_261 = arith.constant 1 : index
    %c8_262 = arith.constant 8 : index
    %c0_263 = arith.constant 0 : index
    %c0_264 = arith.constant 0 : index
    %394 = vector.load %arg1[%c0_260, %c1_261, %c8_262, %c0_263, %c0_264] : memref<1x4x9x9x128xf32, #tpu.memory_space<vmem>>, vector<1x1x1x9x128xf32>
    %395 = vector.shape_cast %394 : vector<1x1x1x9x128xf32> to vector<9x128xf32>
    %396 = vector.extract_strided_slice %393 {offsets = [0, 0], sizes = [8, 128], strides = [1, 1]} : vector<9x128xf32> to vector<8x128xf32>
    %397 = vector.broadcast %6 : vector<1x128xf32> to vector<8x128xf32>
    %398 = arith.mulf %396, %397 : vector<8x128xf32>
    %399 = arith.addf %391, %398 : vector<8x128xf32>
    %400 = vector.extract_strided_slice %395 {offsets = [0, 0], sizes = [8, 128], strides = [1, 1]} : vector<9x128xf32> to vector<8x128xf32>
    %401 = vector.broadcast %7 : vector<1x128xf32> to vector<8x128xf32>
    %402 = arith.mulf %400, %401 : vector<8x128xf32>
    %403 = arith.addf %399, %402 : vector<8x128xf32>
    %404 = vector.extract_strided_slice %393 {offsets = [1, 0], sizes = [8, 128], strides = [1, 1]} : vector<9x128xf32> to vector<8x128xf32>
    %405 = vector.broadcast %8 : vector<1x128xf32> to vector<8x128xf32>
    %406 = arith.mulf %404, %405 : vector<8x128xf32>
    %407 = arith.addf %403, %406 : vector<8x128xf32>
    %c56 = arith.constant 56 : index
    %c0_265 = arith.constant 0 : index
    %408 = vector.load %arg6[%c56, %c0_265] : memref<64x128xf32, #tpu.memory_space<vmem>>, vector<8x128xf32>
    tpu.vector_store %arg6[%c56, %c0_265], %407 {strides = array<i32>} : memref<64x128xf32, #tpu.memory_space<vmem>>, vector<8x128xf32>,
    %c0_266 = arith.constant 0 : index
    %c0_267 = arith.constant 0 : index
    %409 = vector.load %arg6[%c0_266, %c0_267] : memref<64x128xf32, #tpu.memory_space<vmem>>, vector<64x128xf32>
    %c0_268 = arith.constant 0 : index
    %c0_269 = arith.constant 0 : index
    %410 = vector.load %arg3[%c0_268, %c0_269] : memref<128x128xf32, #tpu.memory_space<vmem>>, vector<128x128xf32>
    %cst_270 = arith.constant dense<0.000000e+00> : vector<64x128xf32>
    %411 = tpu.matmul %409, %410, %cst_270 {dimension_numbers = #tpu.dot_dimension_numbers<[1], [0], [0], [1], [0, 0, 1, 1], [], []>} : vector<64x128xf32>, vector<128x128xf32>, vector<64x128xf32> -> vector<64x128xf32>
    %c0_271 = arith.constant 0 : index
    %c0_272 = arith.constant 0 : index
    %412 = vector.load %arg4[%c0_271, %c0_272] : memref<1x128xf32, #tpu.memory_space<vmem>>, vector<1x128xf32>
    %413 = vector.broadcast %412 : vector<1x128xf32> to vector<64x128xf32>
    %414 = arith.addf %411, %413 : vector<64x128xf32>
    %cst_273 = arith.constant 0.000000e+00 : f32
    %415 = vector.broadcast %cst_273 : f32 to vector<64x128xf32>
    %416 = arith.maximumf %414, %415 : vector<64x128xf32>
    %c0_274 = arith.constant 0 : index
    %c0_275 = arith.constant 0 : index
    %c0_276 = arith.constant 0 : index
    %417 = vector.load %arg5[%c0_274, %c0_275, %c0_276] : memref<1x64x128xf32, #tpu.memory_space<vmem>>, vector<1x64x128xf32>
    %418 = vector.shape_cast %417 : vector<1x64x128xf32> to vector<64x128xf32>
    %419 = vector.shape_cast %416 : vector<64x128xf32> to vector<1x64x128xf32>
    tpu.vector_store %arg5[%c0_274, %c0_275, %c0_276], %419 {strides = array<i32>} : memref<1x64x128xf32, #tpu.memory_space<vmem>>, vector<1x64x128xf32>,
    return
  }
  func.func @transform_0(%arg0: i32) -> (i32, i32, i32, i32, i32) {
    %c0_i32 = arith.constant 0 : i32
    %c0_i32_0 = arith.constant 0 : i32
    %c0_i32_1 = arith.constant 0 : i32
    %c0_i32_2 = arith.constant 0 : i32
    %c0_i32_3 = arith.constant 0 : i32
    return %arg0, %c0_i32, %c0_i32_0, %c0_i32_1, %c0_i32_2 : i32, i32, i32, i32, i32
  }
  func.func @transform_1(%arg0: i32) -> (i32, i32) {
    %c0_i32 = arith.constant 0 : i32
    %c0_i32_0 = arith.constant 0 : i32
    %c0_i32_1 = arith.constant 0 : i32
    return %c0_i32, %c0_i32_0 : i32, i32
  }
  func.func @transform_2(%arg0: i32) -> (i32, i32) {
    %c0_i32 = arith.constant 0 : i32
    %c0_i32_0 = arith.constant 0 : i32
    %c0_i32_1 = arith.constant 0 : i32
    return %c0_i32, %c0_i32_0 : i32, i32
  }
  func.func @transform_3(%arg0: i32) -> (i32, i32) {
    %c0_i32 = arith.constant 0 : i32
    %c0_i32_0 = arith.constant 0 : i32
    %c0_i32_1 = arith.constant 0 : i32
    return %c0_i32, %c0_i32_0 : i32, i32
  }
  func.func @transform_4(%arg0: i32) -> (i32, i32, i32) {
    %c0_i32 = arith.constant 0 : i32
    %c0_i32_0 = arith.constant 0 : i32
    %c0_i32_1 = arith.constant 0 : i32
    return %arg0, %c0_i32, %c0_i32_0 : i32, i32, i32
  }
}

module attributes {stable_mosaic.version = 11 : i64} {
  func.func @_fused_stage_kernel(%arg0: i32, %arg1: memref<1x4x5x5x128xf32, #tpu.memory_space<vmem>>, %arg2: memref<9x128xf32, #tpu.memory_space<vmem>>, %arg3: memref<128x128xf32, #tpu.memory_space<vmem>>, %arg4: memref<1x128xf32, #tpu.memory_space<vmem>>, %arg5: memref<1x16x128xf32, #tpu.memory_space<vmem>>, %arg6: memref<16x128xf32, #tpu.memory_space<vmem>>) attributes {dimension_semantics = [#tpu.dimension_semantics<parallel>], iteration_bounds = array<i64: 2>, scalar_prefetch = 0 : i64, scratch_operands = 1 : i64, tpu.core_type = #tpu.core_type<tc>, window_params = [{transform_indices = @transform_0, window_bounds = array<i64: 1, 4, 5, 5, 128>}, {pipeline_mode = #tpu.pipeline_mode<synchronous>, transform_indices = @transform_1, window_bounds = array<i64: 9, 128>}, {pipeline_mode = #tpu.pipeline_mode<synchronous>, transform_indices = @transform_2, window_bounds = array<i64: 128, 128>}, {pipeline_mode = #tpu.pipeline_mode<synchronous>, transform_indices = @transform_3, window_bounds = array<i64: 1, 128>}, {transform_indices = @transform_4, window_bounds = array<i64: 1, 16, 128>}]} {
    %c0 = arith.constant 0 : index
    %c0_0 = arith.constant 0 : index
    %0 = vector.load %arg2[%c0, %c0_0] : memref<9x128xf32, #tpu.memory_space<vmem>>, vector<1x128xf32>
    %c1 = arith.constant 1 : index
    %c0_1 = arith.constant 0 : index
    %1 = vector.load %arg2[%c1, %c0_1] : memref<9x128xf32, #tpu.memory_space<vmem>>, vector<1x128xf32>
    %c2 = arith.constant 2 : index
    %c0_2 = arith.constant 0 : index
    %2 = vector.load %arg2[%c2, %c0_2] : memref<9x128xf32, #tpu.memory_space<vmem>>, vector<1x128xf32>
    %c3 = arith.constant 3 : index
    %c0_3 = arith.constant 0 : index
    %3 = vector.load %arg2[%c3, %c0_3] : memref<9x128xf32, #tpu.memory_space<vmem>>, vector<1x128xf32>
    %c4 = arith.constant 4 : index
    %c0_4 = arith.constant 0 : index
    %4 = vector.load %arg2[%c4, %c0_4] : memref<9x128xf32, #tpu.memory_space<vmem>>, vector<1x128xf32>
    %c5 = arith.constant 5 : index
    %c0_5 = arith.constant 0 : index
    %5 = vector.load %arg2[%c5, %c0_5] : memref<9x128xf32, #tpu.memory_space<vmem>>, vector<1x128xf32>
    %c6 = arith.constant 6 : index
    %c0_6 = arith.constant 0 : index
    %6 = vector.load %arg2[%c6, %c0_6] : memref<9x128xf32, #tpu.memory_space<vmem>>, vector<1x128xf32>
    %c7 = arith.constant 7 : index
    %c0_7 = arith.constant 0 : index
    %7 = vector.load %arg2[%c7, %c0_7] : memref<9x128xf32, #tpu.memory_space<vmem>>, vector<1x128xf32>
    %c8 = arith.constant 8 : index
    %c0_8 = arith.constant 0 : index
    %8 = vector.load %arg2[%c8, %c0_8] : memref<9x128xf32, #tpu.memory_space<vmem>>, vector<1x128xf32>
    %cst = arith.constant 0.000000e+00 : f32
    %9 = vector.broadcast %cst : f32 to vector<4x128xf32>
    %c0_9 = arith.constant 0 : index
    %c0_10 = arith.constant 0 : index
    %c0_11 = arith.constant 0 : index
    %c0_12 = arith.constant 0 : index
    %c0_13 = arith.constant 0 : index
    %10 = vector.load %arg1[%c0_9, %c0_10, %c0_11, %c0_12, %c0_13] : memref<1x4x5x5x128xf32, #tpu.memory_space<vmem>>, vector<1x1x1x5x128xf32>
    %11 = vector.shape_cast %10 : vector<1x1x1x5x128xf32> to vector<5x128xf32>
    %c0_14 = arith.constant 0 : index
    %c1_15 = arith.constant 1 : index
    %c0_16 = arith.constant 0 : index
    %c0_17 = arith.constant 0 : index
    %c0_18 = arith.constant 0 : index
    %12 = vector.load %arg1[%c0_14, %c1_15, %c0_16, %c0_17, %c0_18] : memref<1x4x5x5x128xf32, #tpu.memory_space<vmem>>, vector<1x1x1x5x128xf32>
    %13 = vector.shape_cast %12 : vector<1x1x1x5x128xf32> to vector<5x128xf32>
    %14 = vector.extract_strided_slice %11 {offsets = [0, 0], sizes = [4, 128], strides = [1, 1]} : vector<5x128xf32> to vector<4x128xf32>
    %15 = vector.broadcast %0 : vector<1x128xf32> to vector<4x128xf32>
    %16 = arith.mulf %14, %15 : vector<4x128xf32>
    %17 = arith.addf %9, %16 : vector<4x128xf32>
    %18 = vector.extract_strided_slice %13 {offsets = [0, 0], sizes = [4, 128], strides = [1, 1]} : vector<5x128xf32> to vector<4x128xf32>
    %19 = vector.broadcast %1 : vector<1x128xf32> to vector<4x128xf32>
    %20 = arith.mulf %18, %19 : vector<4x128xf32>
    %21 = arith.addf %17, %20 : vector<4x128xf32>
    %22 = vector.extract_strided_slice %11 {offsets = [1, 0], sizes = [4, 128], strides = [1, 1]} : vector<5x128xf32> to vector<4x128xf32>
    %23 = vector.broadcast %2 : vector<1x128xf32> to vector<4x128xf32>
    %24 = arith.mulf %22, %23 : vector<4x128xf32>
    %25 = arith.addf %21, %24 : vector<4x128xf32>
    %c0_19 = arith.constant 0 : index
    %c2_20 = arith.constant 2 : index
    %c0_21 = arith.constant 0 : index
    %c0_22 = arith.constant 0 : index
    %c0_23 = arith.constant 0 : index
    %26 = vector.load %arg1[%c0_19, %c2_20, %c0_21, %c0_22, %c0_23] : memref<1x4x5x5x128xf32, #tpu.memory_space<vmem>>, vector<1x1x1x5x128xf32>
    %27 = vector.shape_cast %26 : vector<1x1x1x5x128xf32> to vector<5x128xf32>
    %c0_24 = arith.constant 0 : index
    %c3_25 = arith.constant 3 : index
    %c0_26 = arith.constant 0 : index
    %c0_27 = arith.constant 0 : index
    %c0_28 = arith.constant 0 : index
    %28 = vector.load %arg1[%c0_24, %c3_25, %c0_26, %c0_27, %c0_28] : memref<1x4x5x5x128xf32, #tpu.memory_space<vmem>>, vector<1x1x1x5x128xf32>
    %29 = vector.shape_cast %28 : vector<1x1x1x5x128xf32> to vector<5x128xf32>
    %30 = vector.extract_strided_slice %27 {offsets = [0, 0], sizes = [4, 128], strides = [1, 1]} : vector<5x128xf32> to vector<4x128xf32>
    %31 = vector.broadcast %3 : vector<1x128xf32> to vector<4x128xf32>
    %32 = arith.mulf %30, %31 : vector<4x128xf32>
    %33 = arith.addf %25, %32 : vector<4x128xf32>
    %34 = vector.extract_strided_slice %29 {offsets = [0, 0], sizes = [4, 128], strides = [1, 1]} : vector<5x128xf32> to vector<4x128xf32>
    %35 = vector.broadcast %4 : vector<1x128xf32> to vector<4x128xf32>
    %36 = arith.mulf %34, %35 : vector<4x128xf32>
    %37 = arith.addf %33, %36 : vector<4x128xf32>
    %38 = vector.extract_strided_slice %27 {offsets = [1, 0], sizes = [4, 128], strides = [1, 1]} : vector<5x128xf32> to vector<4x128xf32>
    %39 = vector.broadcast %5 : vector<1x128xf32> to vector<4x128xf32>
    %40 = arith.mulf %38, %39 : vector<4x128xf32>
    %41 = arith.addf %37, %40 : vector<4x128xf32>
    %c0_29 = arith.constant 0 : index
    %c0_30 = arith.constant 0 : index
    %c1_31 = arith.constant 1 : index
    %c0_32 = arith.constant 0 : index
    %c0_33 = arith.constant 0 : index
    %42 = vector.load %arg1[%c0_29, %c0_30, %c1_31, %c0_32, %c0_33] : memref<1x4x5x5x128xf32, #tpu.memory_space<vmem>>, vector<1x1x1x5x128xf32>
    %43 = vector.shape_cast %42 : vector<1x1x1x5x128xf32> to vector<5x128xf32>
    %c0_34 = arith.constant 0 : index
    %c1_35 = arith.constant 1 : index
    %c1_36 = arith.constant 1 : index
    %c0_37 = arith.constant 0 : index
    %c0_38 = arith.constant 0 : index
    %44 = vector.load %arg1[%c0_34, %c1_35, %c1_36, %c0_37, %c0_38] : memref<1x4x5x5x128xf32, #tpu.memory_space<vmem>>, vector<1x1x1x5x128xf32>
    %45 = vector.shape_cast %44 : vector<1x1x1x5x128xf32> to vector<5x128xf32>
    %46 = vector.extract_strided_slice %43 {offsets = [0, 0], sizes = [4, 128], strides = [1, 1]} : vector<5x128xf32> to vector<4x128xf32>
    %47 = vector.broadcast %6 : vector<1x128xf32> to vector<4x128xf32>
    %48 = arith.mulf %46, %47 : vector<4x128xf32>
    %49 = arith.addf %41, %48 : vector<4x128xf32>
    %50 = vector.extract_strided_slice %45 {offsets = [0, 0], sizes = [4, 128], strides = [1, 1]} : vector<5x128xf32> to vector<4x128xf32>
    %51 = vector.broadcast %7 : vector<1x128xf32> to vector<4x128xf32>
    %52 = arith.mulf %50, %51 : vector<4x128xf32>
    %53 = arith.addf %49, %52 : vector<4x128xf32>
    %54 = vector.extract_strided_slice %43 {offsets = [1, 0], sizes = [4, 128], strides = [1, 1]} : vector<5x128xf32> to vector<4x128xf32>
    %55 = vector.broadcast %8 : vector<1x128xf32> to vector<4x128xf32>
    %56 = arith.mulf %54, %55 : vector<4x128xf32>
    %57 = arith.addf %53, %56 : vector<4x128xf32>
    %c0_39 = arith.constant 0 : index
    %c0_40 = arith.constant 0 : index
    %58 = vector.load %arg6[%c0_39, %c0_40] : memref<16x128xf32, #tpu.memory_space<vmem>>, vector<4x128xf32>
    tpu.vector_store %arg6[%c0_39, %c0_40], %57 {strides = array<i32>} : memref<16x128xf32, #tpu.memory_space<vmem>>, vector<4x128xf32>,
    %cst_41 = arith.constant 0.000000e+00 : f32
    %59 = vector.broadcast %cst_41 : f32 to vector<4x128xf32>
    %c0_42 = arith.constant 0 : index
    %c0_43 = arith.constant 0 : index
    %c1_44 = arith.constant 1 : index
    %c0_45 = arith.constant 0 : index
    %c0_46 = arith.constant 0 : index
    %60 = vector.load %arg1[%c0_42, %c0_43, %c1_44, %c0_45, %c0_46] : memref<1x4x5x5x128xf32, #tpu.memory_space<vmem>>, vector<1x1x1x5x128xf32>
    %61 = vector.shape_cast %60 : vector<1x1x1x5x128xf32> to vector<5x128xf32>
    %c0_47 = arith.constant 0 : index
    %c1_48 = arith.constant 1 : index
    %c1_49 = arith.constant 1 : index
    %c0_50 = arith.constant 0 : index
    %c0_51 = arith.constant 0 : index
    %62 = vector.load %arg1[%c0_47, %c1_48, %c1_49, %c0_50, %c0_51] : memref<1x4x5x5x128xf32, #tpu.memory_space<vmem>>, vector<1x1x1x5x128xf32>
    %63 = vector.shape_cast %62 : vector<1x1x1x5x128xf32> to vector<5x128xf32>
    %64 = vector.extract_strided_slice %61 {offsets = [0, 0], sizes = [4, 128], strides = [1, 1]} : vector<5x128xf32> to vector<4x128xf32>
    %65 = vector.broadcast %0 : vector<1x128xf32> to vector<4x128xf32>
    %66 = arith.mulf %64, %65 : vector<4x128xf32>
    %67 = arith.addf %59, %66 : vector<4x128xf32>
    %68 = vector.extract_strided_slice %63 {offsets = [0, 0], sizes = [4, 128], strides = [1, 1]} : vector<5x128xf32> to vector<4x128xf32>
    %69 = vector.broadcast %1 : vector<1x128xf32> to vector<4x128xf32>
    %70 = arith.mulf %68, %69 : vector<4x128xf32>
    %71 = arith.addf %67, %70 : vector<4x128xf32>
    %72 = vector.extract_strided_slice %61 {offsets = [1, 0], sizes = [4, 128], strides = [1, 1]} : vector<5x128xf32> to vector<4x128xf32>
    %73 = vector.broadcast %2 : vector<1x128xf32> to vector<4x128xf32>
    %74 = arith.mulf %72, %73 : vector<4x128xf32>
    %75 = arith.addf %71, %74 : vector<4x128xf32>
    %c0_52 = arith.constant 0 : index
    %c2_53 = arith.constant 2 : index
    %c1_54 = arith.constant 1 : index
    %c0_55 = arith.constant 0 : index
    %c0_56 = arith.constant 0 : index
    %76 = vector.load %arg1[%c0_52, %c2_53, %c1_54, %c0_55, %c0_56] : memref<1x4x5x5x128xf32, #tpu.memory_space<vmem>>, vector<1x1x1x5x128xf32>
    %77 = vector.shape_cast %76 : vector<1x1x1x5x128xf32> to vector<5x128xf32>
    %c0_57 = arith.constant 0 : index
    %c3_58 = arith.constant 3 : index
    %c1_59 = arith.constant 1 : index
    %c0_60 = arith.constant 0 : index
    %c0_61 = arith.constant 0 : index
    %78 = vector.load %arg1[%c0_57, %c3_58, %c1_59, %c0_60, %c0_61] : memref<1x4x5x5x128xf32, #tpu.memory_space<vmem>>, vector<1x1x1x5x128xf32>
    %79 = vector.shape_cast %78 : vector<1x1x1x5x128xf32> to vector<5x128xf32>
    %80 = vector.extract_strided_slice %77 {offsets = [0, 0], sizes = [4, 128], strides = [1, 1]} : vector<5x128xf32> to vector<4x128xf32>
    %81 = vector.broadcast %3 : vector<1x128xf32> to vector<4x128xf32>
    %82 = arith.mulf %80, %81 : vector<4x128xf32>
    %83 = arith.addf %75, %82 : vector<4x128xf32>
    %84 = vector.extract_strided_slice %79 {offsets = [0, 0], sizes = [4, 128], strides = [1, 1]} : vector<5x128xf32> to vector<4x128xf32>
    %85 = vector.broadcast %4 : vector<1x128xf32> to vector<4x128xf32>
    %86 = arith.mulf %84, %85 : vector<4x128xf32>
    %87 = arith.addf %83, %86 : vector<4x128xf32>
    %88 = vector.extract_strided_slice %77 {offsets = [1, 0], sizes = [4, 128], strides = [1, 1]} : vector<5x128xf32> to vector<4x128xf32>
    %89 = vector.broadcast %5 : vector<1x128xf32> to vector<4x128xf32>
    %90 = arith.mulf %88, %89 : vector<4x128xf32>
    %91 = arith.addf %87, %90 : vector<4x128xf32>
    %c0_62 = arith.constant 0 : index
    %c0_63 = arith.constant 0 : index
    %c2_64 = arith.constant 2 : index
    %c0_65 = arith.constant 0 : index
    %c0_66 = arith.constant 0 : index
    %92 = vector.load %arg1[%c0_62, %c0_63, %c2_64, %c0_65, %c0_66] : memref<1x4x5x5x128xf32, #tpu.memory_space<vmem>>, vector<1x1x1x5x128xf32>
    %93 = vector.shape_cast %92 : vector<1x1x1x5x128xf32> to vector<5x128xf32>
    %c0_67 = arith.constant 0 : index
    %c1_68 = arith.constant 1 : index
    %c2_69 = arith.constant 2 : index
    %c0_70 = arith.constant 0 : index
    %c0_71 = arith.constant 0 : index
    %94 = vector.load %arg1[%c0_67, %c1_68, %c2_69, %c0_70, %c0_71] : memref<1x4x5x5x128xf32, #tpu.memory_space<vmem>>, vector<1x1x1x5x128xf32>
    %95 = vector.shape_cast %94 : vector<1x1x1x5x128xf32> to vector<5x128xf32>
    %96 = vector.extract_strided_slice %93 {offsets = [0, 0], sizes = [4, 128], strides = [1, 1]} : vector<5x128xf32> to vector<4x128xf32>
    %97 = vector.broadcast %6 : vector<1x128xf32> to vector<4x128xf32>
    %98 = arith.mulf %96, %97 : vector<4x128xf32>
    %99 = arith.addf %91, %98 : vector<4x128xf32>
    %100 = vector.extract_strided_slice %95 {offsets = [0, 0], sizes = [4, 128], strides = [1, 1]} : vector<5x128xf32> to vector<4x128xf32>
    %101 = vector.broadcast %7 : vector<1x128xf32> to vector<4x128xf32>
    %102 = arith.mulf %100, %101 : vector<4x128xf32>
    %103 = arith.addf %99, %102 : vector<4x128xf32>
    %104 = vector.extract_strided_slice %93 {offsets = [1, 0], sizes = [4, 128], strides = [1, 1]} : vector<5x128xf32> to vector<4x128xf32>
    %105 = vector.broadcast %8 : vector<1x128xf32> to vector<4x128xf32>
    %106 = arith.mulf %104, %105 : vector<4x128xf32>
    %107 = arith.addf %103, %106 : vector<4x128xf32>
    %c4_72 = arith.constant 4 : index
    %c0_73 = arith.constant 0 : index
    %108 = vector.load %arg6[%c4_72, %c0_73] : memref<16x128xf32, #tpu.memory_space<vmem>>, vector<4x128xf32>
    tpu.vector_store %arg6[%c4_72, %c0_73], %107 {strides = array<i32>} : memref<16x128xf32, #tpu.memory_space<vmem>>, vector<4x128xf32>,
    %cst_74 = arith.constant 0.000000e+00 : f32
    %109 = vector.broadcast %cst_74 : f32 to vector<4x128xf32>
    %c0_75 = arith.constant 0 : index
    %c0_76 = arith.constant 0 : index
    %c2_77 = arith.constant 2 : index
    %c0_78 = arith.constant 0 : index
    %c0_79 = arith.constant 0 : index
    %110 = vector.load %arg1[%c0_75, %c0_76, %c2_77, %c0_78, %c0_79] : memref<1x4x5x5x128xf32, #tpu.memory_space<vmem>>, vector<1x1x1x5x128xf32>
    %111 = vector.shape_cast %110 : vector<1x1x1x5x128xf32> to vector<5x128xf32>
    %c0_80 = arith.constant 0 : index
    %c1_81 = arith.constant 1 : index
    %c2_82 = arith.constant 2 : index
    %c0_83 = arith.constant 0 : index
    %c0_84 = arith.constant 0 : index
    %112 = vector.load %arg1[%c0_80, %c1_81, %c2_82, %c0_83, %c0_84] : memref<1x4x5x5x128xf32, #tpu.memory_space<vmem>>, vector<1x1x1x5x128xf32>
    %113 = vector.shape_cast %112 : vector<1x1x1x5x128xf32> to vector<5x128xf32>
    %114 = vector.extract_strided_slice %111 {offsets = [0, 0], sizes = [4, 128], strides = [1, 1]} : vector<5x128xf32> to vector<4x128xf32>
    %115 = vector.broadcast %0 : vector<1x128xf32> to vector<4x128xf32>
    %116 = arith.mulf %114, %115 : vector<4x128xf32>
    %117 = arith.addf %109, %116 : vector<4x128xf32>
    %118 = vector.extract_strided_slice %113 {offsets = [0, 0], sizes = [4, 128], strides = [1, 1]} : vector<5x128xf32> to vector<4x128xf32>
    %119 = vector.broadcast %1 : vector<1x128xf32> to vector<4x128xf32>
    %120 = arith.mulf %118, %119 : vector<4x128xf32>
    %121 = arith.addf %117, %120 : vector<4x128xf32>
    %122 = vector.extract_strided_slice %111 {offsets = [1, 0], sizes = [4, 128], strides = [1, 1]} : vector<5x128xf32> to vector<4x128xf32>
    %123 = vector.broadcast %2 : vector<1x128xf32> to vector<4x128xf32>
    %124 = arith.mulf %122, %123 : vector<4x128xf32>
    %125 = arith.addf %121, %124 : vector<4x128xf32>
    %c0_85 = arith.constant 0 : index
    %c2_86 = arith.constant 2 : index
    %c2_87 = arith.constant 2 : index
    %c0_88 = arith.constant 0 : index
    %c0_89 = arith.constant 0 : index
    %126 = vector.load %arg1[%c0_85, %c2_86, %c2_87, %c0_88, %c0_89] : memref<1x4x5x5x128xf32, #tpu.memory_space<vmem>>, vector<1x1x1x5x128xf32>
    %127 = vector.shape_cast %126 : vector<1x1x1x5x128xf32> to vector<5x128xf32>
    %c0_90 = arith.constant 0 : index
    %c3_91 = arith.constant 3 : index
    %c2_92 = arith.constant 2 : index
    %c0_93 = arith.constant 0 : index
    %c0_94 = arith.constant 0 : index
    %128 = vector.load %arg1[%c0_90, %c3_91, %c2_92, %c0_93, %c0_94] : memref<1x4x5x5x128xf32, #tpu.memory_space<vmem>>, vector<1x1x1x5x128xf32>
    %129 = vector.shape_cast %128 : vector<1x1x1x5x128xf32> to vector<5x128xf32>
    %130 = vector.extract_strided_slice %127 {offsets = [0, 0], sizes = [4, 128], strides = [1, 1]} : vector<5x128xf32> to vector<4x128xf32>
    %131 = vector.broadcast %3 : vector<1x128xf32> to vector<4x128xf32>
    %132 = arith.mulf %130, %131 : vector<4x128xf32>
    %133 = arith.addf %125, %132 : vector<4x128xf32>
    %134 = vector.extract_strided_slice %129 {offsets = [0, 0], sizes = [4, 128], strides = [1, 1]} : vector<5x128xf32> to vector<4x128xf32>
    %135 = vector.broadcast %4 : vector<1x128xf32> to vector<4x128xf32>
    %136 = arith.mulf %134, %135 : vector<4x128xf32>
    %137 = arith.addf %133, %136 : vector<4x128xf32>
    %138 = vector.extract_strided_slice %127 {offsets = [1, 0], sizes = [4, 128], strides = [1, 1]} : vector<5x128xf32> to vector<4x128xf32>
    %139 = vector.broadcast %5 : vector<1x128xf32> to vector<4x128xf32>
    %140 = arith.mulf %138, %139 : vector<4x128xf32>
    %141 = arith.addf %137, %140 : vector<4x128xf32>
    %c0_95 = arith.constant 0 : index
    %c0_96 = arith.constant 0 : index
    %c3_97 = arith.constant 3 : index
    %c0_98 = arith.constant 0 : index
    %c0_99 = arith.constant 0 : index
    %142 = vector.load %arg1[%c0_95, %c0_96, %c3_97, %c0_98, %c0_99] : memref<1x4x5x5x128xf32, #tpu.memory_space<vmem>>, vector<1x1x1x5x128xf32>
    %143 = vector.shape_cast %142 : vector<1x1x1x5x128xf32> to vector<5x128xf32>
    %c0_100 = arith.constant 0 : index
    %c1_101 = arith.constant 1 : index
    %c3_102 = arith.constant 3 : index
    %c0_103 = arith.constant 0 : index
    %c0_104 = arith.constant 0 : index
    %144 = vector.load %arg1[%c0_100, %c1_101, %c3_102, %c0_103, %c0_104] : memref<1x4x5x5x128xf32, #tpu.memory_space<vmem>>, vector<1x1x1x5x128xf32>
    %145 = vector.shape_cast %144 : vector<1x1x1x5x128xf32> to vector<5x128xf32>
    %146 = vector.extract_strided_slice %143 {offsets = [0, 0], sizes = [4, 128], strides = [1, 1]} : vector<5x128xf32> to vector<4x128xf32>
    %147 = vector.broadcast %6 : vector<1x128xf32> to vector<4x128xf32>
    %148 = arith.mulf %146, %147 : vector<4x128xf32>
    %149 = arith.addf %141, %148 : vector<4x128xf32>
    %150 = vector.extract_strided_slice %145 {offsets = [0, 0], sizes = [4, 128], strides = [1, 1]} : vector<5x128xf32> to vector<4x128xf32>
    %151 = vector.broadcast %7 : vector<1x128xf32> to vector<4x128xf32>
    %152 = arith.mulf %150, %151 : vector<4x128xf32>
    %153 = arith.addf %149, %152 : vector<4x128xf32>
    %154 = vector.extract_strided_slice %143 {offsets = [1, 0], sizes = [4, 128], strides = [1, 1]} : vector<5x128xf32> to vector<4x128xf32>
    %155 = vector.broadcast %8 : vector<1x128xf32> to vector<4x128xf32>
    %156 = arith.mulf %154, %155 : vector<4x128xf32>
    %157 = arith.addf %153, %156 : vector<4x128xf32>
    %c8_105 = arith.constant 8 : index
    %c0_106 = arith.constant 0 : index
    %158 = vector.load %arg6[%c8_105, %c0_106] : memref<16x128xf32, #tpu.memory_space<vmem>>, vector<4x128xf32>
    tpu.vector_store %arg6[%c8_105, %c0_106], %157 {strides = array<i32>} : memref<16x128xf32, #tpu.memory_space<vmem>>, vector<4x128xf32>,
    %cst_107 = arith.constant 0.000000e+00 : f32
    %159 = vector.broadcast %cst_107 : f32 to vector<4x128xf32>
    %c0_108 = arith.constant 0 : index
    %c0_109 = arith.constant 0 : index
    %c3_110 = arith.constant 3 : index
    %c0_111 = arith.constant 0 : index
    %c0_112 = arith.constant 0 : index
    %160 = vector.load %arg1[%c0_108, %c0_109, %c3_110, %c0_111, %c0_112] : memref<1x4x5x5x128xf32, #tpu.memory_space<vmem>>, vector<1x1x1x5x128xf32>
    %161 = vector.shape_cast %160 : vector<1x1x1x5x128xf32> to vector<5x128xf32>
    %c0_113 = arith.constant 0 : index
    %c1_114 = arith.constant 1 : index
    %c3_115 = arith.constant 3 : index
    %c0_116 = arith.constant 0 : index
    %c0_117 = arith.constant 0 : index
    %162 = vector.load %arg1[%c0_113, %c1_114, %c3_115, %c0_116, %c0_117] : memref<1x4x5x5x128xf32, #tpu.memory_space<vmem>>, vector<1x1x1x5x128xf32>
    %163 = vector.shape_cast %162 : vector<1x1x1x5x128xf32> to vector<5x128xf32>
    %164 = vector.extract_strided_slice %161 {offsets = [0, 0], sizes = [4, 128], strides = [1, 1]} : vector<5x128xf32> to vector<4x128xf32>
    %165 = vector.broadcast %0 : vector<1x128xf32> to vector<4x128xf32>
    %166 = arith.mulf %164, %165 : vector<4x128xf32>
    %167 = arith.addf %159, %166 : vector<4x128xf32>
    %168 = vector.extract_strided_slice %163 {offsets = [0, 0], sizes = [4, 128], strides = [1, 1]} : vector<5x128xf32> to vector<4x128xf32>
    %169 = vector.broadcast %1 : vector<1x128xf32> to vector<4x128xf32>
    %170 = arith.mulf %168, %169 : vector<4x128xf32>
    %171 = arith.addf %167, %170 : vector<4x128xf32>
    %172 = vector.extract_strided_slice %161 {offsets = [1, 0], sizes = [4, 128], strides = [1, 1]} : vector<5x128xf32> to vector<4x128xf32>
    %173 = vector.broadcast %2 : vector<1x128xf32> to vector<4x128xf32>
    %174 = arith.mulf %172, %173 : vector<4x128xf32>
    %175 = arith.addf %171, %174 : vector<4x128xf32>
    %c0_118 = arith.constant 0 : index
    %c2_119 = arith.constant 2 : index
    %c3_120 = arith.constant 3 : index
    %c0_121 = arith.constant 0 : index
    %c0_122 = arith.constant 0 : index
    %176 = vector.load %arg1[%c0_118, %c2_119, %c3_120, %c0_121, %c0_122] : memref<1x4x5x5x128xf32, #tpu.memory_space<vmem>>, vector<1x1x1x5x128xf32>
    %177 = vector.shape_cast %176 : vector<1x1x1x5x128xf32> to vector<5x128xf32>
    %c0_123 = arith.constant 0 : index
    %c3_124 = arith.constant 3 : index
    %c3_125 = arith.constant 3 : index
    %c0_126 = arith.constant 0 : index
    %c0_127 = arith.constant 0 : index
    %178 = vector.load %arg1[%c0_123, %c3_124, %c3_125, %c0_126, %c0_127] : memref<1x4x5x5x128xf32, #tpu.memory_space<vmem>>, vector<1x1x1x5x128xf32>
    %179 = vector.shape_cast %178 : vector<1x1x1x5x128xf32> to vector<5x128xf32>
    %180 = vector.extract_strided_slice %177 {offsets = [0, 0], sizes = [4, 128], strides = [1, 1]} : vector<5x128xf32> to vector<4x128xf32>
    %181 = vector.broadcast %3 : vector<1x128xf32> to vector<4x128xf32>
    %182 = arith.mulf %180, %181 : vector<4x128xf32>
    %183 = arith.addf %175, %182 : vector<4x128xf32>
    %184 = vector.extract_strided_slice %179 {offsets = [0, 0], sizes = [4, 128], strides = [1, 1]} : vector<5x128xf32> to vector<4x128xf32>
    %185 = vector.broadcast %4 : vector<1x128xf32> to vector<4x128xf32>
    %186 = arith.mulf %184, %185 : vector<4x128xf32>
    %187 = arith.addf %183, %186 : vector<4x128xf32>
    %188 = vector.extract_strided_slice %177 {offsets = [1, 0], sizes = [4, 128], strides = [1, 1]} : vector<5x128xf32> to vector<4x128xf32>
    %189 = vector.broadcast %5 : vector<1x128xf32> to vector<4x128xf32>
    %190 = arith.mulf %188, %189 : vector<4x128xf32>
    %191 = arith.addf %187, %190 : vector<4x128xf32>
    %c0_128 = arith.constant 0 : index
    %c0_129 = arith.constant 0 : index
    %c4_130 = arith.constant 4 : index
    %c0_131 = arith.constant 0 : index
    %c0_132 = arith.constant 0 : index
    %192 = vector.load %arg1[%c0_128, %c0_129, %c4_130, %c0_131, %c0_132] : memref<1x4x5x5x128xf32, #tpu.memory_space<vmem>>, vector<1x1x1x5x128xf32>
    %193 = vector.shape_cast %192 : vector<1x1x1x5x128xf32> to vector<5x128xf32>
    %c0_133 = arith.constant 0 : index
    %c1_134 = arith.constant 1 : index
    %c4_135 = arith.constant 4 : index
    %c0_136 = arith.constant 0 : index
    %c0_137 = arith.constant 0 : index
    %194 = vector.load %arg1[%c0_133, %c1_134, %c4_135, %c0_136, %c0_137] : memref<1x4x5x5x128xf32, #tpu.memory_space<vmem>>, vector<1x1x1x5x128xf32>
    %195 = vector.shape_cast %194 : vector<1x1x1x5x128xf32> to vector<5x128xf32>
    %196 = vector.extract_strided_slice %193 {offsets = [0, 0], sizes = [4, 128], strides = [1, 1]} : vector<5x128xf32> to vector<4x128xf32>
    %197 = vector.broadcast %6 : vector<1x128xf32> to vector<4x128xf32>
    %198 = arith.mulf %196, %197 : vector<4x128xf32>
    %199 = arith.addf %191, %198 : vector<4x128xf32>
    %200 = vector.extract_strided_slice %195 {offsets = [0, 0], sizes = [4, 128], strides = [1, 1]} : vector<5x128xf32> to vector<4x128xf32>
    %201 = vector.broadcast %7 : vector<1x128xf32> to vector<4x128xf32>
    %202 = arith.mulf %200, %201 : vector<4x128xf32>
    %203 = arith.addf %199, %202 : vector<4x128xf32>
    %204 = vector.extract_strided_slice %193 {offsets = [1, 0], sizes = [4, 128], strides = [1, 1]} : vector<5x128xf32> to vector<4x128xf32>
    %205 = vector.broadcast %8 : vector<1x128xf32> to vector<4x128xf32>
    %206 = arith.mulf %204, %205 : vector<4x128xf32>
    %207 = arith.addf %203, %206 : vector<4x128xf32>
    %c12 = arith.constant 12 : index
    %c0_138 = arith.constant 0 : index
    %208 = vector.load %arg6[%c12, %c0_138] : memref<16x128xf32, #tpu.memory_space<vmem>>, vector<4x128xf32>
    tpu.vector_store %arg6[%c12, %c0_138], %207 {strides = array<i32>} : memref<16x128xf32, #tpu.memory_space<vmem>>, vector<4x128xf32>,
    %c0_139 = arith.constant 0 : index
    %c0_140 = arith.constant 0 : index
    %209 = vector.load %arg6[%c0_139, %c0_140] : memref<16x128xf32, #tpu.memory_space<vmem>>, vector<16x128xf32>
    %c0_141 = arith.constant 0 : index
    %c0_142 = arith.constant 0 : index
    %210 = vector.load %arg3[%c0_141, %c0_142] : memref<128x128xf32, #tpu.memory_space<vmem>>, vector<128x128xf32>
    %cst_143 = arith.constant dense<0.000000e+00> : vector<16x128xf32>
    %211 = tpu.matmul %209, %210, %cst_143 {dimension_numbers = #tpu.dot_dimension_numbers<[1], [0], [0], [1], [0, 0, 1, 1], [], []>} : vector<16x128xf32>, vector<128x128xf32>, vector<16x128xf32> -> vector<16x128xf32>
    %c0_144 = arith.constant 0 : index
    %c0_145 = arith.constant 0 : index
    %212 = vector.load %arg4[%c0_144, %c0_145] : memref<1x128xf32, #tpu.memory_space<vmem>>, vector<1x128xf32>
    %213 = vector.broadcast %212 : vector<1x128xf32> to vector<16x128xf32>
    %214 = arith.addf %211, %213 : vector<16x128xf32>
    %cst_146 = arith.constant 0.000000e+00 : f32
    %215 = vector.broadcast %cst_146 : f32 to vector<16x128xf32>
    %216 = arith.maximumf %214, %215 : vector<16x128xf32>
    %c0_147 = arith.constant 0 : index
    %c0_148 = arith.constant 0 : index
    %c0_149 = arith.constant 0 : index
    %217 = vector.load %arg5[%c0_147, %c0_148, %c0_149] : memref<1x16x128xf32, #tpu.memory_space<vmem>>, vector<1x16x128xf32>
    %218 = vector.shape_cast %217 : vector<1x16x128xf32> to vector<16x128xf32>
    %219 = vector.shape_cast %216 : vector<16x128xf32> to vector<1x16x128xf32>
    tpu.vector_store %arg5[%c0_147, %c0_148, %c0_149], %219 {strides = array<i32>} : memref<1x16x128xf32, #tpu.memory_space<vmem>>, vector<1x16x128xf32>,
    return
  }
  func.func @transform_0(%arg0: i32) -> (i32, i32, i32, i32, i32) {
    %c0_i32 = arith.constant 0 : i32
    %c0_i32_0 = arith.constant 0 : i32
    %c0_i32_1 = arith.constant 0 : i32
    %c0_i32_2 = arith.constant 0 : i32
    %c0_i32_3 = arith.constant 0 : i32
    return %arg0, %c0_i32, %c0_i32_0, %c0_i32_1, %c0_i32_2 : i32, i32, i32, i32, i32
  }
  func.func @transform_1(%arg0: i32) -> (i32, i32) {
    %c0_i32 = arith.constant 0 : i32
    %c0_i32_0 = arith.constant 0 : i32
    %c0_i32_1 = arith.constant 0 : i32
    return %c0_i32, %c0_i32_0 : i32, i32
  }
  func.func @transform_2(%arg0: i32) -> (i32, i32) {
    %c0_i32 = arith.constant 0 : i32
    %c0_i32_0 = arith.constant 0 : i32
    %c0_i32_1 = arith.constant 0 : i32
    return %c0_i32, %c0_i32_0 : i32, i32
  }
  func.func @transform_3(%arg0: i32) -> (i32, i32) {
    %c0_i32 = arith.constant 0 : i32
    %c0_i32_0 = arith.constant 0 : i32
    %c0_i32_1 = arith.constant 0 : i32
    return %c0_i32, %c0_i32_0 : i32, i32
  }
  func.func @transform_4(%arg0: i32) -> (i32, i32, i32) {
    %c0_i32 = arith.constant 0 : i32
    %c0_i32_0 = arith.constant 0 : i32
    %c0_i32_1 = arith.constant 0 : i32
    return %arg0, %c0_i32, %c0_i32_0 : i32, i32, i32
  }
}

module attributes {stable_mosaic.version = 11 : i64} {
  func.func @_fused_stage_kernel(%arg0: i32, %arg1: memref<1x4x3x3x128xf32, #tpu.memory_space<vmem>>, %arg2: memref<9x128xf32, #tpu.memory_space<vmem>>, %arg3: memref<128x128xf32, #tpu.memory_space<vmem>>, %arg4: memref<1x128xf32, #tpu.memory_space<vmem>>, %arg5: memref<1x4x128xf32, #tpu.memory_space<vmem>>, %arg6: memref<8x128xf32, #tpu.memory_space<vmem>>) attributes {dimension_semantics = [#tpu.dimension_semantics<parallel>], iteration_bounds = array<i64: 2>, scalar_prefetch = 0 : i64, scratch_operands = 1 : i64, tpu.core_type = #tpu.core_type<tc>, window_params = [{transform_indices = @transform_0, window_bounds = array<i64: 1, 4, 3, 3, 128>}, {pipeline_mode = #tpu.pipeline_mode<synchronous>, transform_indices = @transform_1, window_bounds = array<i64: 9, 128>}, {pipeline_mode = #tpu.pipeline_mode<synchronous>, transform_indices = @transform_2, window_bounds = array<i64: 128, 128>}, {pipeline_mode = #tpu.pipeline_mode<synchronous>, transform_indices = @transform_3, window_bounds = array<i64: 1, 128>}, {transform_indices = @transform_4, window_bounds = array<i64: 1, 4, 128>}]} {
    %c0 = arith.constant 0 : index
    %c0_0 = arith.constant 0 : index
    %0 = vector.load %arg2[%c0, %c0_0] : memref<9x128xf32, #tpu.memory_space<vmem>>, vector<1x128xf32>
    %c1 = arith.constant 1 : index
    %c0_1 = arith.constant 0 : index
    %1 = vector.load %arg2[%c1, %c0_1] : memref<9x128xf32, #tpu.memory_space<vmem>>, vector<1x128xf32>
    %c2 = arith.constant 2 : index
    %c0_2 = arith.constant 0 : index
    %2 = vector.load %arg2[%c2, %c0_2] : memref<9x128xf32, #tpu.memory_space<vmem>>, vector<1x128xf32>
    %c3 = arith.constant 3 : index
    %c0_3 = arith.constant 0 : index
    %3 = vector.load %arg2[%c3, %c0_3] : memref<9x128xf32, #tpu.memory_space<vmem>>, vector<1x128xf32>
    %c4 = arith.constant 4 : index
    %c0_4 = arith.constant 0 : index
    %4 = vector.load %arg2[%c4, %c0_4] : memref<9x128xf32, #tpu.memory_space<vmem>>, vector<1x128xf32>
    %c5 = arith.constant 5 : index
    %c0_5 = arith.constant 0 : index
    %5 = vector.load %arg2[%c5, %c0_5] : memref<9x128xf32, #tpu.memory_space<vmem>>, vector<1x128xf32>
    %c6 = arith.constant 6 : index
    %c0_6 = arith.constant 0 : index
    %6 = vector.load %arg2[%c6, %c0_6] : memref<9x128xf32, #tpu.memory_space<vmem>>, vector<1x128xf32>
    %c7 = arith.constant 7 : index
    %c0_7 = arith.constant 0 : index
    %7 = vector.load %arg2[%c7, %c0_7] : memref<9x128xf32, #tpu.memory_space<vmem>>, vector<1x128xf32>
    %c8 = arith.constant 8 : index
    %c0_8 = arith.constant 0 : index
    %8 = vector.load %arg2[%c8, %c0_8] : memref<9x128xf32, #tpu.memory_space<vmem>>, vector<1x128xf32>
    %cst = arith.constant 0.000000e+00 : f32
    %9 = vector.broadcast %cst : f32 to vector<2x128xf32>
    %c0_9 = arith.constant 0 : index
    %c0_10 = arith.constant 0 : index
    %c0_11 = arith.constant 0 : index
    %c0_12 = arith.constant 0 : index
    %c0_13 = arith.constant 0 : index
    %10 = vector.load %arg1[%c0_9, %c0_10, %c0_11, %c0_12, %c0_13] : memref<1x4x3x3x128xf32, #tpu.memory_space<vmem>>, vector<1x1x1x3x128xf32>
    %11 = vector.shape_cast %10 : vector<1x1x1x3x128xf32> to vector<3x128xf32>
    %c0_14 = arith.constant 0 : index
    %c1_15 = arith.constant 1 : index
    %c0_16 = arith.constant 0 : index
    %c0_17 = arith.constant 0 : index
    %c0_18 = arith.constant 0 : index
    %12 = vector.load %arg1[%c0_14, %c1_15, %c0_16, %c0_17, %c0_18] : memref<1x4x3x3x128xf32, #tpu.memory_space<vmem>>, vector<1x1x1x3x128xf32>
    %13 = vector.shape_cast %12 : vector<1x1x1x3x128xf32> to vector<3x128xf32>
    %14 = vector.extract_strided_slice %11 {offsets = [0, 0], sizes = [2, 128], strides = [1, 1]} : vector<3x128xf32> to vector<2x128xf32>
    %15 = vector.broadcast %0 : vector<1x128xf32> to vector<2x128xf32>
    %16 = arith.mulf %14, %15 : vector<2x128xf32>
    %17 = arith.addf %9, %16 : vector<2x128xf32>
    %18 = vector.extract_strided_slice %13 {offsets = [0, 0], sizes = [2, 128], strides = [1, 1]} : vector<3x128xf32> to vector<2x128xf32>
    %19 = vector.broadcast %1 : vector<1x128xf32> to vector<2x128xf32>
    %20 = arith.mulf %18, %19 : vector<2x128xf32>
    %21 = arith.addf %17, %20 : vector<2x128xf32>
    %22 = vector.extract_strided_slice %11 {offsets = [1, 0], sizes = [2, 128], strides = [1, 1]} : vector<3x128xf32> to vector<2x128xf32>
    %23 = vector.broadcast %2 : vector<1x128xf32> to vector<2x128xf32>
    %24 = arith.mulf %22, %23 : vector<2x128xf32>
    %25 = arith.addf %21, %24 : vector<2x128xf32>
    %c0_19 = arith.constant 0 : index
    %c2_20 = arith.constant 2 : index
    %c0_21 = arith.constant 0 : index
    %c0_22 = arith.constant 0 : index
    %c0_23 = arith.constant 0 : index
    %26 = vector.load %arg1[%c0_19, %c2_20, %c0_21, %c0_22, %c0_23] : memref<1x4x3x3x128xf32, #tpu.memory_space<vmem>>, vector<1x1x1x3x128xf32>
    %27 = vector.shape_cast %26 : vector<1x1x1x3x128xf32> to vector<3x128xf32>
    %c0_24 = arith.constant 0 : index
    %c3_25 = arith.constant 3 : index
    %c0_26 = arith.constant 0 : index
    %c0_27 = arith.constant 0 : index
    %c0_28 = arith.constant 0 : index
    %28 = vector.load %arg1[%c0_24, %c3_25, %c0_26, %c0_27, %c0_28] : memref<1x4x3x3x128xf32, #tpu.memory_space<vmem>>, vector<1x1x1x3x128xf32>
    %29 = vector.shape_cast %28 : vector<1x1x1x3x128xf32> to vector<3x128xf32>
    %30 = vector.extract_strided_slice %27 {offsets = [0, 0], sizes = [2, 128], strides = [1, 1]} : vector<3x128xf32> to vector<2x128xf32>
    %31 = vector.broadcast %3 : vector<1x128xf32> to vector<2x128xf32>
    %32 = arith.mulf %30, %31 : vector<2x128xf32>
    %33 = arith.addf %25, %32 : vector<2x128xf32>
    %34 = vector.extract_strided_slice %29 {offsets = [0, 0], sizes = [2, 128], strides = [1, 1]} : vector<3x128xf32> to vector<2x128xf32>
    %35 = vector.broadcast %4 : vector<1x128xf32> to vector<2x128xf32>
    %36 = arith.mulf %34, %35 : vector<2x128xf32>
    %37 = arith.addf %33, %36 : vector<2x128xf32>
    %38 = vector.extract_strided_slice %27 {offsets = [1, 0], sizes = [2, 128], strides = [1, 1]} : vector<3x128xf32> to vector<2x128xf32>
    %39 = vector.broadcast %5 : vector<1x128xf32> to vector<2x128xf32>
    %40 = arith.mulf %38, %39 : vector<2x128xf32>
    %41 = arith.addf %37, %40 : vector<2x128xf32>
    %c0_29 = arith.constant 0 : index
    %c0_30 = arith.constant 0 : index
    %c1_31 = arith.constant 1 : index
    %c0_32 = arith.constant 0 : index
    %c0_33 = arith.constant 0 : index
    %42 = vector.load %arg1[%c0_29, %c0_30, %c1_31, %c0_32, %c0_33] : memref<1x4x3x3x128xf32, #tpu.memory_space<vmem>>, vector<1x1x1x3x128xf32>
    %43 = vector.shape_cast %42 : vector<1x1x1x3x128xf32> to vector<3x128xf32>
    %c0_34 = arith.constant 0 : index
    %c1_35 = arith.constant 1 : index
    %c1_36 = arith.constant 1 : index
    %c0_37 = arith.constant 0 : index
    %c0_38 = arith.constant 0 : index
    %44 = vector.load %arg1[%c0_34, %c1_35, %c1_36, %c0_37, %c0_38] : memref<1x4x3x3x128xf32, #tpu.memory_space<vmem>>, vector<1x1x1x3x128xf32>
    %45 = vector.shape_cast %44 : vector<1x1x1x3x128xf32> to vector<3x128xf32>
    %46 = vector.extract_strided_slice %43 {offsets = [0, 0], sizes = [2, 128], strides = [1, 1]} : vector<3x128xf32> to vector<2x128xf32>
    %47 = vector.broadcast %6 : vector<1x128xf32> to vector<2x128xf32>
    %48 = arith.mulf %46, %47 : vector<2x128xf32>
    %49 = arith.addf %41, %48 : vector<2x128xf32>
    %50 = vector.extract_strided_slice %45 {offsets = [0, 0], sizes = [2, 128], strides = [1, 1]} : vector<3x128xf32> to vector<2x128xf32>
    %51 = vector.broadcast %7 : vector<1x128xf32> to vector<2x128xf32>
    %52 = arith.mulf %50, %51 : vector<2x128xf32>
    %53 = arith.addf %49, %52 : vector<2x128xf32>
    %54 = vector.extract_strided_slice %43 {offsets = [1, 0], sizes = [2, 128], strides = [1, 1]} : vector<3x128xf32> to vector<2x128xf32>
    %55 = vector.broadcast %8 : vector<1x128xf32> to vector<2x128xf32>
    %56 = arith.mulf %54, %55 : vector<2x128xf32>
    %57 = arith.addf %53, %56 : vector<2x128xf32>
    %c0_39 = arith.constant 0 : index
    %c0_40 = arith.constant 0 : index
    %58 = vector.load %arg6[%c0_39, %c0_40] : memref<8x128xf32, #tpu.memory_space<vmem>>, vector<2x128xf32>
    tpu.vector_store %arg6[%c0_39, %c0_40], %57 {strides = array<i32>} : memref<8x128xf32, #tpu.memory_space<vmem>>, vector<2x128xf32>,
    %cst_41 = arith.constant 0.000000e+00 : f32
    %59 = vector.broadcast %cst_41 : f32 to vector<2x128xf32>
    %c0_42 = arith.constant 0 : index
    %c0_43 = arith.constant 0 : index
    %c1_44 = arith.constant 1 : index
    %c0_45 = arith.constant 0 : index
    %c0_46 = arith.constant 0 : index
    %60 = vector.load %arg1[%c0_42, %c0_43, %c1_44, %c0_45, %c0_46] : memref<1x4x3x3x128xf32, #tpu.memory_space<vmem>>, vector<1x1x1x3x128xf32>
    %61 = vector.shape_cast %60 : vector<1x1x1x3x128xf32> to vector<3x128xf32>
    %c0_47 = arith.constant 0 : index
    %c1_48 = arith.constant 1 : index
    %c1_49 = arith.constant 1 : index
    %c0_50 = arith.constant 0 : index
    %c0_51 = arith.constant 0 : index
    %62 = vector.load %arg1[%c0_47, %c1_48, %c1_49, %c0_50, %c0_51] : memref<1x4x3x3x128xf32, #tpu.memory_space<vmem>>, vector<1x1x1x3x128xf32>
    %63 = vector.shape_cast %62 : vector<1x1x1x3x128xf32> to vector<3x128xf32>
    %64 = vector.extract_strided_slice %61 {offsets = [0, 0], sizes = [2, 128], strides = [1, 1]} : vector<3x128xf32> to vector<2x128xf32>
    %65 = vector.broadcast %0 : vector<1x128xf32> to vector<2x128xf32>
    %66 = arith.mulf %64, %65 : vector<2x128xf32>
    %67 = arith.addf %59, %66 : vector<2x128xf32>
    %68 = vector.extract_strided_slice %63 {offsets = [0, 0], sizes = [2, 128], strides = [1, 1]} : vector<3x128xf32> to vector<2x128xf32>
    %69 = vector.broadcast %1 : vector<1x128xf32> to vector<2x128xf32>
    %70 = arith.mulf %68, %69 : vector<2x128xf32>
    %71 = arith.addf %67, %70 : vector<2x128xf32>
    %72 = vector.extract_strided_slice %61 {offsets = [1, 0], sizes = [2, 128], strides = [1, 1]} : vector<3x128xf32> to vector<2x128xf32>
    %73 = vector.broadcast %2 : vector<1x128xf32> to vector<2x128xf32>
    %74 = arith.mulf %72, %73 : vector<2x128xf32>
    %75 = arith.addf %71, %74 : vector<2x128xf32>
    %c0_52 = arith.constant 0 : index
    %c2_53 = arith.constant 2 : index
    %c1_54 = arith.constant 1 : index
    %c0_55 = arith.constant 0 : index
    %c0_56 = arith.constant 0 : index
    %76 = vector.load %arg1[%c0_52, %c2_53, %c1_54, %c0_55, %c0_56] : memref<1x4x3x3x128xf32, #tpu.memory_space<vmem>>, vector<1x1x1x3x128xf32>
    %77 = vector.shape_cast %76 : vector<1x1x1x3x128xf32> to vector<3x128xf32>
    %c0_57 = arith.constant 0 : index
    %c3_58 = arith.constant 3 : index
    %c1_59 = arith.constant 1 : index
    %c0_60 = arith.constant 0 : index
    %c0_61 = arith.constant 0 : index
    %78 = vector.load %arg1[%c0_57, %c3_58, %c1_59, %c0_60, %c0_61] : memref<1x4x3x3x128xf32, #tpu.memory_space<vmem>>, vector<1x1x1x3x128xf32>
    %79 = vector.shape_cast %78 : vector<1x1x1x3x128xf32> to vector<3x128xf32>
    %80 = vector.extract_strided_slice %77 {offsets = [0, 0], sizes = [2, 128], strides = [1, 1]} : vector<3x128xf32> to vector<2x128xf32>
    %81 = vector.broadcast %3 : vector<1x128xf32> to vector<2x128xf32>
    %82 = arith.mulf %80, %81 : vector<2x128xf32>
    %83 = arith.addf %75, %82 : vector<2x128xf32>
    %84 = vector.extract_strided_slice %79 {offsets = [0, 0], sizes = [2, 128], strides = [1, 1]} : vector<3x128xf32> to vector<2x128xf32>
    %85 = vector.broadcast %4 : vector<1x128xf32> to vector<2x128xf32>
    %86 = arith.mulf %84, %85 : vector<2x128xf32>
    %87 = arith.addf %83, %86 : vector<2x128xf32>
    %88 = vector.extract_strided_slice %77 {offsets = [1, 0], sizes = [2, 128], strides = [1, 1]} : vector<3x128xf32> to vector<2x128xf32>
    %89 = vector.broadcast %5 : vector<1x128xf32> to vector<2x128xf32>
    %90 = arith.mulf %88, %89 : vector<2x128xf32>
    %91 = arith.addf %87, %90 : vector<2x128xf32>
    %c0_62 = arith.constant 0 : index
    %c0_63 = arith.constant 0 : index
    %c2_64 = arith.constant 2 : index
    %c0_65 = arith.constant 0 : index
    %c0_66 = arith.constant 0 : index
    %92 = vector.load %arg1[%c0_62, %c0_63, %c2_64, %c0_65, %c0_66] : memref<1x4x3x3x128xf32, #tpu.memory_space<vmem>>, vector<1x1x1x3x128xf32>
    %93 = vector.shape_cast %92 : vector<1x1x1x3x128xf32> to vector<3x128xf32>
    %c0_67 = arith.constant 0 : index
    %c1_68 = arith.constant 1 : index
    %c2_69 = arith.constant 2 : index
    %c0_70 = arith.constant 0 : index
    %c0_71 = arith.constant 0 : index
    %94 = vector.load %arg1[%c0_67, %c1_68, %c2_69, %c0_70, %c0_71] : memref<1x4x3x3x128xf32, #tpu.memory_space<vmem>>, vector<1x1x1x3x128xf32>
    %95 = vector.shape_cast %94 : vector<1x1x1x3x128xf32> to vector<3x128xf32>
    %96 = vector.extract_strided_slice %93 {offsets = [0, 0], sizes = [2, 128], strides = [1, 1]} : vector<3x128xf32> to vector<2x128xf32>
    %97 = vector.broadcast %6 : vector<1x128xf32> to vector<2x128xf32>
    %98 = arith.mulf %96, %97 : vector<2x128xf32>
    %99 = arith.addf %91, %98 : vector<2x128xf32>
    %100 = vector.extract_strided_slice %95 {offsets = [0, 0], sizes = [2, 128], strides = [1, 1]} : vector<3x128xf32> to vector<2x128xf32>
    %101 = vector.broadcast %7 : vector<1x128xf32> to vector<2x128xf32>
    %102 = arith.mulf %100, %101 : vector<2x128xf32>
    %103 = arith.addf %99, %102 : vector<2x128xf32>
    %104 = vector.extract_strided_slice %93 {offsets = [1, 0], sizes = [2, 128], strides = [1, 1]} : vector<3x128xf32> to vector<2x128xf32>
    %105 = vector.broadcast %8 : vector<1x128xf32> to vector<2x128xf32>
    %106 = arith.mulf %104, %105 : vector<2x128xf32>
    %107 = arith.addf %103, %106 : vector<2x128xf32>
    %c2_72 = arith.constant 2 : index
    %c0_73 = arith.constant 0 : index
    %108 = vector.load %arg6[%c2_72, %c0_73] : memref<8x128xf32, #tpu.memory_space<vmem>>, vector<2x128xf32>
    tpu.vector_store %arg6[%c2_72, %c0_73], %107 {strides = array<i32>} : memref<8x128xf32, #tpu.memory_space<vmem>>, vector<2x128xf32>,
    %cst_74 = arith.constant 0.000000e+00 : f32
    %109 = vector.broadcast %cst_74 : f32 to vector<4x128xf32>
    %c4_75 = arith.constant 4 : index
    %c0_76 = arith.constant 0 : index
    %110 = vector.load %arg6[%c4_75, %c0_76] : memref<8x128xf32, #tpu.memory_space<vmem>>, vector<4x128xf32>
    tpu.vector_store %arg6[%c4_75, %c0_76], %109 {strides = array<i32>} : memref<8x128xf32, #tpu.memory_space<vmem>>, vector<4x128xf32>,
    %c0_77 = arith.constant 0 : index
    %c0_78 = arith.constant 0 : index
    %111 = vector.load %arg6[%c0_77, %c0_78] : memref<8x128xf32, #tpu.memory_space<vmem>>, vector<8x128xf32>
    %c0_79 = arith.constant 0 : index
    %c0_80 = arith.constant 0 : index
    %112 = vector.load %arg3[%c0_79, %c0_80] : memref<128x128xf32, #tpu.memory_space<vmem>>, vector<128x128xf32>
    %cst_81 = arith.constant dense<0.000000e+00> : vector<8x128xf32>
    %113 = tpu.matmul %111, %112, %cst_81 {dimension_numbers = #tpu.dot_dimension_numbers<[1], [0], [0], [1], [0, 0, 1, 1], [], []>} : vector<8x128xf32>, vector<128x128xf32>, vector<8x128xf32> -> vector<8x128xf32>
    %c0_82 = arith.constant 0 : index
    %c0_83 = arith.constant 0 : index
    %114 = vector.load %arg4[%c0_82, %c0_83] : memref<1x128xf32, #tpu.memory_space<vmem>>, vector<1x128xf32>
    %115 = vector.broadcast %114 : vector<1x128xf32> to vector<8x128xf32>
    %116 = arith.addf %113, %115 : vector<8x128xf32>
    %cst_84 = arith.constant 0.000000e+00 : f32
    %117 = vector.broadcast %cst_84 : f32 to vector<8x128xf32>
    %118 = arith.maximumf %116, %117 : vector<8x128xf32>
    %119 = vector.extract_strided_slice %118 {offsets = [0, 0], sizes = [4, 128], strides = [1, 1]} : vector<8x128xf32> to vector<4x128xf32>
    %c0_85 = arith.constant 0 : index
    %c0_86 = arith.constant 0 : index
    %c0_87 = arith.constant 0 : index
    %120 = vector.load %arg5[%c0_85, %c0_86, %c0_87] : memref<1x4x128xf32, #tpu.memory_space<vmem>>, vector<1x4x128xf32>
    %121 = vector.shape_cast %120 : vector<1x4x128xf32> to vector<4x128xf32>
    %122 = vector.shape_cast %119 : vector<4x128xf32> to vector<1x4x128xf32>
    tpu.vector_store %arg5[%c0_85, %c0_86, %c0_87], %122 {strides = array<i32>} : memref<1x4x128xf32, #tpu.memory_space<vmem>>, vector<1x4x128xf32>,
    return
  }
  func.func @transform_0(%arg0: i32) -> (i32, i32, i32, i32, i32) {
    %c0_i32 = arith.constant 0 : i32
    %c0_i32_0 = arith.constant 0 : i32
    %c0_i32_1 = arith.constant 0 : i32
    %c0_i32_2 = arith.constant 0 : i32
    %c0_i32_3 = arith.constant 0 : i32
    return %arg0, %c0_i32, %c0_i32_0, %c0_i32_1, %c0_i32_2 : i32, i32, i32, i32, i32
  }
  func.func @transform_1(%arg0: i32) -> (i32, i32) {
    %c0_i32 = arith.constant 0 : i32
    %c0_i32_0 = arith.constant 0 : i32
    %c0_i32_1 = arith.constant 0 : i32
    return %c0_i32, %c0_i32_0 : i32, i32
  }
  func.func @transform_2(%arg0: i32) -> (i32, i32) {
    %c0_i32 = arith.constant 0 : i32
    %c0_i32_0 = arith.constant 0 : i32
    %c0_i32_1 = arith.constant 0 : i32
    return %c0_i32, %c0_i32_0 : i32, i32
  }
  func.func @transform_3(%arg0: i32) -> (i32, i32) {
    %c0_i32 = arith.constant 0 : i32
    %c0_i32_0 = arith.constant 0 : i32
    %c0_i32_1 = arith.constant 0 : i32
    return %c0_i32, %c0_i32_0 : i32, i32
  }
  func.func @transform_4(%arg0: i32) -> (i32, i32, i32) {
    %c0_i32 = arith.constant 0 : i32
    %c0_i32_0 = arith.constant 0 : i32
    %c0_i32_1 = arith.constant 0 : i32
    return %arg0, %c0_i32, %c0_i32_0 : i32, i32, i32
  }
}

</mosaic_0001>

<llo_original>
// kernel: fpem_v1_forward.6
$region0: #{fpem_v1_forward.6}
  #allocation0 [shape = 'u32[]', space=smem, size = 0x4, offset = 0x4, fixed_abs, tag = 'smem constant byte address 0x4 - core index']
  #allocation1 [shape = 'u32[144,128]{1,0:T(1,128)}', space=vmem, size = 0x12000, scoped, tag = 'internal scratch']
  #allocation2 [shape = 'f32[16,128]{1,0:T(8,128)}', space=vmem, size = 0x2000, scoped, tag = 'scratch operand']
  %s0 = inlined_call_operand.vmem [shape: f32[2,6,6,128], index: 0, kind: input, shape index: {}]
  %s1 = inlined_call_operand.vmem [shape: f32[9,128], index: 1, kind: input, shape index: {}]
  %s2 = inlined_call_operand.vmem [shape: f32[128,128], index: 2, kind: input, shape index: {}]
  %s3 = inlined_call_operand.vmem [shape: f32[1,128], index: 3, kind: input, shape index: {}]
  %s4 = inlined_call_operand.vmem [shape: f32[2,16,128], index: 4, kind: output, shape index: {}]
  %s5 = sld [smem:[#allocation0]]
  $region49: #{fpem_v1_forward.6} parent=0
    _
  %s7 = ssub.s32 1, %s5
  %s8 = scalar_select 0, %s7, %s5
  loop: start=0, step=1, limit=4
  $region2: #{fpem_v1_forward.6} parent=0 // loop_pre_header
    _
  $region3: #{fpem_v1_forward.6} parent=0 // loop_header
    %s10 = sphi 0, %s14
    %p11 = scmp.ge.s32.totalorder %s10, 4
    %s20 = sphi 0, %s22
    %s23 = sphi 0, %s20
    %s24 = sphi 0, %s23
    %s40 = sphi 0, %s24
    %s44 = sphi 0, %s44
    %s46 = sphi 0, %s44
    %s47 = sphi 0, %s46
    %s61 = sphi 0, %s47
    %s65 = sphi 0, %s65
    %s67 = sphi 0, %s65
    %s68 = sphi 0, %s67
    %s82 = sphi 0, %s68
    %s86 = sphi 0, %s86
    %s88 = sphi 0, %s86
    %s89 = sphi 0, %s88
    %s103 = sphi 0, %s89
    %s109 = sphi 0, %s111
    %s112 = sphi 0, %s109
    %s113 = sphi 0, %s112
    %s129 = sphi 0, %s113
  $region4: #{fpem_v1_forward.6} parent=0 // loop_header_branch
    %13 = sbr.rel (%p11) target = $region8
  $region5: #{fpem_v1_forward.6} parent=0 // loop_body
    %s15 = ssub.s32 %s10, 1
    %s16 = ssub.s32 %s10, 2
    %s17 = sadd.s32 %s10, 1
    %s18 = ssub.s32 %s10, %s17
    %p19 = scmp.eq.s32.totalorder %s18, 0
    %s21 = sadd.s32 %s20, 1
    %s22 = scalar_select %p19, %s20, %s21
    %p25 = pneg %p19
    %p26 = scmp.eq.s32.totalorder %s10, 1
    %p27 = por %p25, %p26
    %p28 = scmp.ne.s32.totalorder %s20, %s23
    %p29 = scmp.eq.s32.totalorder %s10, 0
    %p30 = por %p28, %p29
    %p31 = scmp.ne.s32.totalorder %s20, %s23
    %p32 = scmp.eq.s32.totalorder %s15, 1
    %p33 = por %p31, %p32
    %p34 = scmp.ne.s32.totalorder %s23, %s24
    %p35 = scmp.eq.s32.totalorder %s15, 0
    %p36 = por %p34, %p35
    %p37 = scmp.ne.s32.totalorder %s23, %s24
    %p38 = scmp.eq.s32.totalorder %s16, 1
    %p39 = por %p37, %p38
    %p41 = scmp.ne.s32.totalorder %s24, %s40
    %p42 = scmp.eq.s32.totalorder %s16, 0
    %p43 = por %p41, %p42
    %s45 = sadd.s32 %s44, 1
    %p48 = scmp.eq.s32.totalorder %s10, 1
    %p49 = scmp.ne.s32.totalorder %s44, %s46
    %p50 = scmp.eq.s32.totalorder %s10, 0
    %p51 = por %p49, %p50
    %p52 = scmp.ne.s32.totalorder %s44, %s46
    %p53 = scmp.eq.s32.totalorder %s15, 1
    %p54 = por %p52, %p53
    %p55 = scmp.ne.s32.totalorder %s46, %s47
    %p56 = scmp.eq.s32.totalorder %s15, 0
    %p57 = por %p55, %p56
    %p58 = scmp.ne.s32.totalorder %s46, %s47
    %p59 = scmp.eq.s32.totalorder %s16, 1
    %p60 = por %p58, %p59
    %p62 = scmp.ne.s32.totalorder %s47, %s61
    %p63 = scmp.eq.s32.totalorder %s16, 0
    %p64 = por %p62, %p63
    %s66 = sadd.s32 %s65, 1
    %p69 = scmp.eq.s32.totalorder %s10, 1
    %p70 = scmp.ne.s32.totalorder %s65, %s67
    %p71 = scmp.eq.s32.totalorder %s10, 0
    %p72 = por %p70, %p71
    %p73 = scmp.ne.s32.totalorder %s65, %s67
    %p74 = scmp.eq.s32.totalorder %s15, 1
    %p75 = por %p73, %p74
    %p76 = scmp.ne.s32.totalorder %s67, %s68
    %p77 = scmp.eq.s32.totalorder %s15, 0
    %p78 = por %p76, %p77
    %p79 = scmp.ne.s32.totalorder %s67, %s68
    %p80 = scmp.eq.s32.totalorder %s16, 1
    %p81 = por %p79, %p80
    %p83 = scmp.ne.s32.totalorder %s68, %s82
    %p84 = scmp.eq.s32.totalorder %s16, 0
    %p85 = por %p83, %p84
    %s87 = sadd.s32 %s86, 1
    %p90 = scmp.eq.s32.totalorder %s10, 1
    %p91 = scmp.ne.s32.totalorder %s86, %s88
    %p92 = scmp.eq.s32.totalorder %s10, 0
    %p93 = por %p91, %p92
    %p94 = scmp.ne.s32.totalorder %s86, %s88
    %p95 = scmp.eq.s32.totalorder %s15, 1
    %p96 = por %p94, %p95
    %p97 = scmp.ne.s32.totalorder %s88, %s89
    %p98 = scmp.eq.s32.totalorder %s15, 0
    %p99 = por %p97, %p98
    %p100 = scmp.ne.s32.totalorder %s88, %s89
    %p101 = scmp.eq.s32.totalorder %s16, 1
    %p102 = por %p100, %p101
    %p104 = scmp.ne.s32.totalorder %s89, %s103
    %p105 = scmp.eq.s32.totalorder %s16, 0
    %p106 = por %p104, %p105
    %s107 = ssub.s32 %s10, %s17
    %p108 = scmp.eq.s32.totalorder %s107, 0
    %s110 = sadd.s32 %s109, 1
    %s111 = scalar_select %p108, %s109, %s110
    %p114 = pneg %p108
    %p115 = scmp.eq.s32.totalorder %s10, 1
    %p116 = por %p114, %p115
    %p117 = scmp.ne.s32.totalorder %s109, %s112
    %p118 = scmp.eq.s32.totalorder %s10, 0
    %p119 = por %p117, %p118
    %p120 = scmp.ne.s32.totalorder %s109, %s112
    %p121 = scmp.eq.s32.totalorder %s15, 1
    %p122 = por %p120, %p121
    %p123 = scmp.ne.s32.totalorder %s112, %s113
    %p124 = scmp.eq.s32.totalorder %s15, 0
    %p125 = por %p123, %p124
    %p126 = scmp.ne.s32.totalorder %s112, %s113
    %p127 = scmp.eq.s32.totalorder %s16, 1
    %p128 = por %p126, %p127
    %p130 = scmp.ne.s32.totalorder %s113, %s129
    %p131 = scmp.eq.s32.totalorder %s16, 0
    %p132 = por %p130, %p131
    %p133 = scmp.le.s32.totalorder 1, %s10
    %p134 = scmp.lt.s32.totalorder %s10, 3
    %p135 = pnand %p133, %p134
    %p136 = pneg %p135
    // Predicated region
    $region9: #{fpem_v1_forward.6} parent=5 // pred_check
      _
    $region10: #{fpem_v1_forward.6} parent=5 // pred_check_branch
      %138 = sbr.rel (%p135) target = $region12
    $region11: #{fpem_v1_forward.6} parent=5 // pred_region
      %s139 = ssub.s32 %s10, 1
      // Predicated region
      $region13: #{fpem_v1_forward.6} parent=11 // pred_check
        %p140 = pneg %p57
      $region14: #{fpem_v1_forward.6} parent=11 // pred_check_branch
        %142 = sbr.rel (%p140) target = $region16
      $region15: #{fpem_v1_forward.6} parent=11 // pred_region
        _
      $region16: #{fpem_v1_forward.6} parent=11 // pred_fallthru
        _
      // Predicated region
      $region17: #{fpem_v1_forward.6} parent=11 // pred_check
        %p143 = pneg %p78
      $region18: #{fpem_v1_forward.6} parent=11 // pred_check_branch
        %145 = sbr.rel (%p143) target = $region20
      $region19: #{fpem_v1_forward.6} parent=11 // pred_region
        _
      $region20: #{fpem_v1_forward.6} parent=11 // pred_fallthru
        _
      // Predicated region
      $region21: #{fpem_v1_forward.6} parent=11 // pred_check
        %p146 = pneg %p99
      $region22: #{fpem_v1_forward.6} parent=11 // pred_check_branch
        %148 = sbr.rel (%p146) target = $region24
      $region23: #{fpem_v1_forward.6} parent=11 // pred_region
        _
      $region24: #{fpem_v1_forward.6} parent=11 // pred_fallthru
        _
    $region12: #{fpem_v1_forward.6} parent=5 // pred_fallthru
      _
    %p149 = scmp.lt.s32.totalorder %s10, 2
    // Predicated region
    $region25: #{fpem_v1_forward.6} parent=5 // pred_check
      %p150 = pneg %p149
    $region26: #{fpem_v1_forward.6} parent=5 // pred_check_branch
      %152 = sbr.rel (%p150) target = $region28
    $region27: #{fpem_v1_forward.6} parent=5 // pred_region
      // Predicated region
      $region29: #{fpem_v1_forward.6} parent=27 // pred_check
        %p153 = pneg %p30
      $region30: #{fpem_v1_forward.6} parent=27 // pred_check_branch
        %155 = sbr.rel (%p153) target = $region32
      $region31: #{fpem_v1_forward.6} parent=27 // pred_region
        %p156 = scmp.lt.s32.totalorder %s10, 1
        %s157 = scalar_select %p156, %s10, 1
        %s158 = smul.addr %s157, 6
        %s159 = smul.addr %s158, 8
        %s160 = scalar_lea.vmem %s0, %s159
      $region32: #{fpem_v1_forward.6} parent=27 // pred_fallthru
        _
    $region28: #{fpem_v1_forward.6} parent=5 // pred_fallthru
      _
    %p161 = scmp.le.s32.totalorder 1, %s10
    %p162 = scmp.lt.s32.totalorder %s10, 3
    %p163 = pnand %p161, %p162
    %p164 = pneg %p163
    // Predicated region
    $region33: #{fpem_v1_forward.6} parent=5 // pred_check
      _
    $region34: #{fpem_v1_forward.6} parent=5 // pred_check_branch
      %166 = sbr.rel (%p163) target = $region36
    $region35: #{fpem_v1_forward.6} parent=5 // pred_region
      %s167 = ssub.s32 %s10, 1
      %p168 = scmp.lt.s32.totalorder %s15, 1
      %s169 = scalar_select %p168, %s15, 1
      %s170 = smul.addr %s169, 6
      %s171 = smul.addr %s170, 8
      %s172 = scalar_lea.vmem %s0, %s171
      %p173 = pneg %p36
      %p174 = pneg %p33
      %p175 = pneg %p57
      %p176 = pneg %p54
      %p177 = pneg %p78
      %p178 = pneg %p75
      %p179 = pneg %p99
      %p180 = pneg %p96
      %p181 = pneg %p125
      %p182 = pneg %p122
      %p183 = scmp.lt.s32.totalorder %s15, 1
      %s184 = scalar_select %p183, %s15, 1
      %s185 = smul.addr %s184, 2
      %s186 = smul.addr %s185, 8
      %s187 = scalar_lea.vmem %s4, %s186
      %p188 = scmp.lt.s32.totalorder %s15, 1
      %s189 = scalar_select %p188, %s15, 1
      %s190 = smul.addr %s189, 6
      %s191 = smul.addr %s190, 8
      %s192 = scalar_lea.vmem %s0, %s191
      %p193 = scmp.lt.s32.totalorder %s15, 1
      %s194 = scalar_select %p193, %s15, 1
      %s195 = smul.addr %s194, 2
      %s196 = smul.addr %s195, 8
      %s197 = scalar_lea.vmem %s4, %s196
      %v198 = vld [vmem:[%s1] sm:$0x1]
      %v199 = vld [vmem:[%s1 + $0x1] sm:$0x1]
      %v200 = vld [vmem:[%s1 + $0x2] sm:$0x1]
      %v201 = vld [vmem:[%s1 + $0x3] sm:$0x1]
      %v202 = vld [vmem:[%s1 + $0x4] sm:$0x1]
      %v203 = vld [vmem:[%s1 + $0x5] sm:$0x1]
      %v204 = vld [vmem:[%s1 + $0x6] sm:$0x1]
      %v205 = vld [vmem:[%s1 + $0x7] sm:$0x1]
      %v206 = vld [vmem:[%s1 + $0x8] sm:$0x1]
      %v207 = vld [vmem:[%s192] sm:$0x3f]
      %v208 = vlaneseq
      %v209 = vshrl.u32 %v208, 7
      %v210 = vsub.s32 0, %v209
      %v211 = vrot.slane %v198, %v210
      %v212 = vmul.f32 %v207, %v211
      %v213 = vadd.f32 %v212, 0.0
      %v214 = vlaneseq
      %v215 = vshrl.u32 %v214, 7
      %v216 = vsub.s32 0, %v215
      %v217 = vrot.slane %v199, %v216
      %v218 = vmul.f32 %v207, %v217
      %v220 = vrot.slane %v218, 1
      %v222 = vadd.f32 %v213, %v220
      %v223 = vlaneseq
      %v224 = vshrl.u32 %v223, 7
      %v225 = vsub.s32 0, %v224
      %v226 = vrot.slane %v200, %v225
      %v227 = vmul.f32 %v207, %v226
      %v229 = vrot.slane %v227, 2
      %v231 = vadd.f32 %v222, %v229
      %s232 = scalar_lea.vmem %s192, 8
      %v233 = vld [vmem:[%s232] sm:$0x3f]
      %v234 = vlaneseq
      %v235 = vshrl.u32 %v234, 7
      %v236 = vsub.s32 0, %v235
      %v237 = vrot.slane %v201, %v236
      %v238 = vmul.f32 %v233, %v237
      %v239 = vadd.f32 %v231, %v238
      %v240 = vlaneseq
      %v241 = vshrl.u32 %v240, 7
      %v242 = vsub.s32 0, %v241
      %v243 = vrot.slane %v202, %v242
      %v244 = vmul.f32 %v233, %v243
      %v246 = vrot.slane %v244, 1
      %v248 = vadd.f32 %v239, %v246
      %v249 = vlaneseq
      %v250 = vshrl.u32 %v249, 7
      %v251 = vsub.s32 0, %v250
      %v252 = vrot.slane %v203, %v251
      %v253 = vmul.f32 %v233, %v252
      %v255 = vrot.slane %v253, 2
      %v257 = vadd.f32 %v248, %v255
      %s258 = scalar_lea.vmem %s192, 16
      %v259 = vld [vmem:[%s258] sm:$0x3f]
      %v260 = vlaneseq
      %v261 = vshrl.u32 %v260, 7
      %v262 = vsub.s32 0, %v261
      %v263 = vrot.slane %v204, %v262
      %v264 = vmul.f32 %v259, %v263
      %v265 = vadd.f32 %v257, %v264
      %v266 = vlaneseq
      %v267 = vshrl.u32 %v266, 7
      %v268 = vsub.s32 0, %v267
      %v269 = vrot.slane %v205, %v268
      %v270 = vmul.f32 %v259, %v269
      %v272 = vrot.slane %v270, 1
      %v274 = vadd.f32 %v265, %v272
      %v275 = vlaneseq
      %v276 = vshrl.u32 %v275, 7
      %v277 = vsub.s32 0, %v276
      %v278 = vrot.slane %v206, %v277
      %v279 = vmul.f32 %v259, %v278
      %v281 = vrot.slane %v279, 2
      %v283 = vadd.f32 %v274, %v281
      %284 = vst [vmem:[#allocation2] sm:$0xf] %v283
      %v285 = vld [vmem:[%s232] sm:$0x3f]
      %v286 = vmul.f32 %v285, %v211
      %v287 = vadd.f32 %v286, 0.0
      %v288 = vmul.f32 %v285, %v217
      %v290 = vrot.slane %v288, 1
      %v292 = vadd.f32 %v287, %v290
      %v293 = vmul.f32 %v285, %v226
      %v295 = vrot.slane %v293, 2
      %v297 = vadd.f32 %v292, %v295
      %v298 = vld [vmem:[%s258] sm:$0x3f]
      %v299 = vmul.f32 %v298, %v237
      %v300 = vadd.f32 %v297, %v299
      %v301 = vmul.f32 %v298, %v243
      %v303 = vrot.slane %v301, 1
      %v305 = vadd.f32 %v300, %v303
      %v306 = vmul.f32 %v298, %v252
      %v308 = vrot.slane %v306, 2
      %v310 = vadd.f32 %v305, %v308
      %s311 = scalar_lea.vmem %s192, 24
      %v312 = vld [vmem:[%s311] sm:$0x3f]
      %v313 = vmul.f32 %v312, %v263
      %v314 = vadd.f32 %v310, %v313
      %v315 = vmul.f32 %v312, %v269
      %v317 = vrot.slane %v315, 1
      %v319 = vadd.f32 %v314, %v317
      %v320 = vmul.f32 %v312, %v278
      %v322 = vrot.slane %v320, 2
      %v324 = vadd.f32 %v319, %v322
      %325 = vst [vmem:[#allocation2 + $0x4] sm:$0xf] %v324
      %v326 = vld [vmem:[%s258] sm:$0x3f]
      %v327 = vmul.f32 %v326, %v211
      %v328 = vadd.f32 %v327, 0.0
      %v329 = vmul.f32 %v326, %v217
      %v331 = vrot.slane %v329, 1
      %v333 = vadd.f32 %v328, %v331
      %v334 = vmul.f32 %v326, %v226
      %v336 = vrot.slane %v334, 2
      %v338 = vadd.f32 %v333, %v336
      %v339 = vld [vmem:[%s311] sm:$0x3f]
      %v340 = vmul.f32 %v339, %v237
      %v341 = vadd.f32 %v338, %v340
      %v342 = vmul.f32 %v339, %v243
      %v344 = vrot.slane %v342, 1
      %v346 = vadd.f32 %v341, %v344
      %v347 = vmul.f32 %v339, %v252
      %v349 = vrot.slane %v347, 2
      %v351 = vadd.f32 %v346, %v349
      %s352 = scalar_lea.vmem %s192, 32
      %v353 = vld [vmem:[%s352] sm:$0x3f]
      %v354 = vmul.f32 %v353, %v263
      %v355 = vadd.f32 %v351, %v354
      %v356 = vmul.f32 %v353, %v269
      %v358 = vrot.slane %v356, 1
      %v360 = vadd.f32 %v355, %v358
      %v361 = vmul.f32 %v353, %v278
      %v363 = vrot.slane %v361, 2
      %v365 = vadd.f32 %v360, %v363
      %366 = vst [vmem:[#allocation2 + $0x8] sm:$0xf] %v365
      %v367 = vld [vmem:[%s311] sm:$0x3f]
      %v368 = vmul.f32 %v367, %v211
      %v369 = vadd.f32 %v368, 0.0
      %v370 = vmul.f32 %v367, %v217
      %v372 = vrot.slane %v370, 1
      %v374 = vadd.f32 %v369, %v372
      %v375 = vmul.f32 %v367, %v226
      %v377 = vrot.slane %v375, 2
      %v379 = vadd.f32 %v374, %v377
      %v380 = vld [vmem:[%s352] sm:$0x3f]
      %v381 = vmul.f32 %v380, %v237
      %v382 = vadd.f32 %v379, %v381
      %v383 = vmul.f32 %v380, %v243
      %v385 = vrot.slane %v383, 1
      %v387 = vadd.f32 %v382, %v385
      %v388 = vmul.f32 %v380, %v252
      %v390 = vrot.slane %v388, 2
      %v392 = vadd.f32 %v387, %v390
      %s393 = scalar_lea.vmem %s192, 40
      %v394 = vld [vmem:[%s393] sm:$0x3f]
      %v395 = vmul.f32 %v394, %v263
      %v396 = vadd.f32 %v392, %v395
      %v397 = vmul.f32 %v394, %v269
      %v399 = vrot.slane %v397, 1
      %v401 = vadd.f32 %v396, %v399
      %v402 = vmul.f32 %v394, %v278
      %v404 = vrot.slane %v402, 2
      %v406 = vadd.f32 %v401, %v404
      %407 = vst [vmem:[#allocation2 + $0xc] sm:$0xf] %v406
      %v408 = vld [vmem:[#allocation2] sm:$0xff]
      %v409 = vld [vmem:[#allocation2 + $0x8] sm:$0xff]
      %v410 = vld [vmem:[%s2] sm:$0xff]
      %v411 = vld [vmem:[%s2 + $0x8] sm:$0xff]
      %v412 = vld [vmem:[%s2 + $0x10] sm:$0xff]
      %v413 = vld [vmem:[%s2 + $0x18] sm:$0xff]
      %v414 = vld [vmem:[%s2 + $0x20] sm:$0xff]
      %v415 = vld [vmem:[%s2 + $0x28] sm:$0xff]
      %v416 = vld [vmem:[%s2 + $0x30] sm:$0xff]
      %v417 = vld [vmem:[%s2 + $0x38] sm:$0xff]
      %v418 = vld [vmem:[%s2 + $0x40] sm:$0xff]
      %v419 = vld [vmem:[%s2 + $0x48] sm:$0xff]
      %v420 = vld [vmem:[%s2 + $0x50] sm:$0xff]
      %v421 = vld [vmem:[%s2 + $0x58] sm:$0xff]
      %v422 = vld [vmem:[%s2 + $0x60] sm:$0xff]
      %v423 = vld [vmem:[%s2 + $0x68] sm:$0xff]
      %v424 = vld [vmem:[%s2 + $0x70] sm:$0xff]
      %v425 = vld [vmem:[%s2 + $0x78] sm:$0xff]
      %v426 = vld [vmem:[%s3] sm:$0x1]
      %v428 = vlaneseq
      %v429 = vshrl.u32 %v428, 7
      %v430 = vsub.s32 0, %v429
      %v431 = vrot.slane %v426, %v430
      %433 = vmatprep.subr.mxu0 0.0
      %434 = vmatpush1.msra.mxu0 %v410
      %435 = vmatprep.subr.mxu0 0.0
      %436 = vmatpush1.msra.mxu0 %v411
      %437 = vmatprep.subr.mxu0 0.0
      %438 = vmatpush1.msra.mxu0 %v412
      %439 = vmatprep.subr.mxu0 0.0
      %440 = vmatpush1.msra.mxu0 %v413
      %441 = vmatprep.subr.mxu0 0.0
      %442 = vmatpush1.msra.mxu0 %v414
      %443 = vmatprep.subr.mxu0 0.0
      %444 = vmatpush1.msra.mxu0 %v415
      %445 = vmatprep.subr.mxu0 0.0
      %446 = vmatpush1.msra.mxu0 %v416
      %447 = vmatprep.subr.mxu0 0.0
      %448 = vmatpush1.msra.mxu0 %v417
      %449 = vmatprep.subr.mxu0 0.0
      %450 = vmatpush1.msra.mxu0 %v418
      %451 = vmatprep.subr.mxu0 0.0
      %452 = vmatpush1.msra.mxu0 %v419
      %453 = vmatprep.subr.mxu0 0.0
      %454 = vmatpush1.msra.mxu0 %v420
      %455 = vmatprep.subr.mxu0 0.0
      %456 = vmatpush1.msra.mxu0 %v421
      %457 = vmatprep.subr.mxu0 0.0
      %458 = vmatpush1.msra.mxu0 %v422
      %459 = vmatprep.subr.mxu0 0.0
      %460 = vmatpush1.msra.mxu0 %v423
      %461 = vmatprep.subr.mxu0 0.0
      %462 = vmatpush1.msra.mxu0 %v424
      %463 = vmatprep.subr.mxu0 0.0
      %464 = vmatpush1.msra.mxu0 %v425
      %465 = vmatprep.subr.mxu0 0.0
      %466 = vmatpush1.msra.mxu0 0.0
      %467 = vmatprep.subr.mxu0 0.0
      %468 = vmatpush1.msra.mxu0 0.0
      %469 = vmatprep.subr.mxu0 0.0
      %470 = vmatpush1.msra.mxu0 0.0
      %471 = vmatprep.subr.mxu0 0.0
      %472 = vmatpush1.msra.mxu0 0.0
      %473 = vmatprep.subr.mxu0 0.0
      %474 = vmatpush1.msra.mxu0 0.0
      %475 = vmatprep.subr.mxu0 0.0
      %476 = vmatpush1.msra.mxu0 0.0
      %477 = vmatprep.subr.mxu0 0.0
      %478 = vmatpush1.msra.mxu0 0.0
      %479 = vmatprep.subr.mxu0 0.0
      %480 = vmatpush1.msra.mxu0 0.0
      %481 = vmatprep.subr.mxu0 0.0
      %482 = vmatpush1.msra.mxu0 0.0
      %483 = vmatprep.subr.mxu0 0.0
      %484 = vmatpush1.msra.mxu0 0.0
      %485 = vmatprep.subr.mxu0 0.0
      %486 = vmatpush1.msra.mxu0 0.0
      %487 = vmatprep.subr.mxu0 0.0
      %488 = vmatpush1.msra.mxu0 0.0
      %489 = vmatprep.subr.mxu0 0.0
      %490 = vmatpush1.msra.mxu0 0.0
      %491 = vmatprep.subr.mxu0 0.0
      %492 = vmatpush1.msra.mxu0 0.0
      %493 = vmatprep.subr.mxu0 0.0
      %494 = vmatpush1.msra.mxu0 0.0
      %495 = vmatprep.subr.mxu0 0.0
      %496 = vmatpush1.msra.mxu0 0.0
      %497 = vmatprep.mubr.f32.mxu0 0.0
      %498 = vmatmul.mubr.f32.gmra.mrb[0].mxu0 %v408
      %v499 = vpop.f32.mrb[0].mxu0
      %v500 = vadd.f32 %v431, %v499
      %v501 = vpop.f32.mrb[0].mxu0
      %502 = vmatprep.mubr.f32.mxu0 0.0
      %503 = vmatmul.mubr.f32.gmra.mrb[0].mxu0 %v409
      %v504 = vpop.f32.mrb[0].mxu0
      %v505 = vadd.f32 %v431, %v504
      %v506 = vpop.f32.mrb[0].mxu0
      %507 = vdwg.mxu0
      %v508 = vmax.f32 %v500, 0.0
      %v509 = vmax.f32 %v505, 0.0
      %510 = vst [vmem:[%s197] sm:$0xff] %v508
      %511 = vst [vmem:[%s197 + $0x8] sm:$0xff] %v509
      %p512 = scmp.lt.s32.totalorder %s15, 1
      %s513 = scalar_select %p512, %s15, 1
      %s514 = smul.addr %s513, 2
      %s515 = smul.addr %s514, 8
      %s516 = scalar_lea.vmem %s4, %s515
      // Predicated region
      $region37: #{fpem_v1_forward.6} parent=35 // pred_check
        %p517 = pneg %p122
      $region38: #{fpem_v1_forward.6} parent=35 // pred_check_branch
        %519 = sbr.rel (%p517) target = $region40
      $region39: #{fpem_v1_forward.6} parent=35 // pred_region
        _
      $region40: #{fpem_v1_forward.6} parent=35 // pred_fallthru
        _
    $region36: #{fpem_v1_forward.6} parent=5 // pred_fallthru
      _
    %p520 = scmp.le.s32.totalorder 2, %s10
    // Predicated region
    $region41: #{fpem_v1_forward.6} parent=5 // pred_check
      %p521 = pneg %p520
    $region42: #{fpem_v1_forward.6} parent=5 // pred_check_branch
      %523 = sbr.rel (%p521) target = $region44
    $region43: #{fpem_v1_forward.6} parent=5 // pred_region
      %s524 = ssub.s32 %s10, 2
      // Predicated region
      $region45: #{fpem_v1_forward.6} parent=43 // pred_check
        %p525 = pneg %p128
      $region46: #{fpem_v1_forward.6} parent=43 // pred_check_branch
        %527 = sbr.rel (%p525) target = $region48
      $region47: #{fpem_v1_forward.6} parent=43 // pred_region
        %p528 = scmp.lt.s32.totalorder %s16, 1
        %s529 = scalar_select %p528, %s16, 1
        %s530 = smul.addr %s529, 2
        %s531 = smul.addr %s530, 8
        %s532 = scalar_lea.vmem %s4, %s531
      $region48: #{fpem_v1_forward.6} parent=43 // pred_fallthru
        _
    $region44: #{fpem_v1_forward.6} parent=5 // pred_fallthru
      _
  $region6: #{fpem_v1_forward.6} parent=0 // loop_footer
    %s14 = sadd.s32 1, %s10
  $region7: #{fpem_v1_forward.6} parent=0 // loop_footer_branch
    %9 = sbr.rel target = $region3
  $region8: #{fpem_v1_forward.6} parent=0 // loop_exit
    _

// kernel: fpem_v1_forward.7
$region0: #{fpem_v1_forward.7}
  #allocation0 [shape = 'u32[]', space=smem, size = 0x4, offset = 0x4, fixed_abs, tag = 'smem constant byte address 0x4 - core index']
  #allocation1 [shape = 'u32[144,128]{1,0:T(1,128)}', space=vmem, size = 0x12000, scoped, tag = 'internal scratch']
  #allocation2 [shape = 'f32[64,128]{1,0:T(8,128)}', space=vmem, size = 0x8000, scoped, tag = 'scratch operand']
  %s0 = inlined_call_operand.vmem [shape: f32[2,10,10,128], index: 0, kind: input, shape index: {}]
  %s1 = inlined_call_operand.vmem [shape: f32[9,128], index: 1, kind: input, shape index: {}]
  %s2 = inlined_call_operand.vmem [shape: f32[128,128], index: 2, kind: input, shape index: {}]
  %s3 = inlined_call_operand.vmem [shape: f32[1,128], index: 3, kind: input, shape index: {}]
  %s4 = inlined_call_operand.vmem [shape: f32[2,64,128], index: 4, kind: output, shape index: {}]
  %s5 = sld [smem:[#allocation0]]
  $region49: #{fpem_v1_forward.7} parent=0
    _
  %s7 = ssub.s32 1, %s5
  %s8 = scalar_select 0, %s7, %s5
  loop: start=0, step=1, limit=4
  $region2: #{fpem_v1_forward.7} parent=0 // loop_pre_header
    _
  $region3: #{fpem_v1_forward.7} parent=0 // loop_header
    %s10 = sphi 0, %s14
    %p11 = scmp.ge.s32.totalorder %s10, 4
    %s20 = sphi 0, %s22
    %s23 = sphi 0, %s20
    %s24 = sphi 0, %s23
    %s40 = sphi 0, %s24
    %s44 = sphi 0, %s44
    %s46 = sphi 0, %s44
    %s47 = sphi 0, %s46
    %s61 = sphi 0, %s47
    %s65 = sphi 0, %s65
    %s67 = sphi 0, %s65
    %s68 = sphi 0, %s67
    %s82 = sphi 0, %s68
    %s86 = sphi 0, %s86
    %s88 = sphi 0, %s86
    %s89 = sphi 0, %s88
    %s103 = sphi 0, %s89
    %s109 = sphi 0, %s111
    %s112 = sphi 0, %s109
    %s113 = sphi 0, %s112
    %s129 = sphi 0, %s113
  $region4: #{fpem_v1_forward.7} parent=0 // loop_header_branch
    %13 = sbr.rel (%p11) target = $region8
  $region5: #{fpem_v1_forward.7} parent=0 // loop_body
    %s15 = ssub.s32 %s10, 1
    %s16 = ssub.s32 %s10, 2
    %s17 = sadd.s32 %s10, 1
    %s18 = ssub.s32 %s10, %s17
    %p19 = scmp.eq.s32.totalorder %s18, 0
    %s21 = sadd.s32 %s20, 1
    %s22 = scalar_select %p19, %s20, %s21
    %p25 = pneg %p19
    %p26 = scmp.eq.s32.totalorder %s10, 1
    %p27 = por %p25, %p26
    %p28 = scmp.ne.s32.totalorder %s20, %s23
    %p29 = scmp.eq.s32.totalorder %s10, 0
    %p30 = por %p28, %p29
    %p31 = scmp.ne.s32.totalorder %s20, %s23
    %p32 = scmp.eq.s32.totalorder %s15, 1
    %p33 = por %p31, %p32
    %p34 = scmp.ne.s32.totalorder %s23, %s24
    %p35 = scmp.eq.s32.totalorder %s15, 0
    %p36 = por %p34, %p35
    %p37 = scmp.ne.s32.totalorder %s23, %s24
    %p38 = scmp.eq.s32.totalorder %s16, 1
    %p39 = por %p37, %p38
    %p41 = scmp.ne.s32.totalorder %s24, %s40
    %p42 = scmp.eq.s32.totalorder %s16, 0
    %p43 = por %p41, %p42
    %s45 = sadd.s32 %s44, 1
    %p48 = scmp.eq.s32.totalorder %s10, 1
    %p49 = scmp.ne.s32.totalorder %s44, %s46
    %p50 = scmp.eq.s32.totalorder %s10, 0
    %p51 = por %p49, %p50
    %p52 = scmp.ne.s32.totalorder %s44, %s46
    %p53 = scmp.eq.s32.totalorder %s15, 1
    %p54 = por %p52, %p53
    %p55 = scmp.ne.s32.totalorder %s46, %s47
    %p56 = scmp.eq.s32.totalorder %s15, 0
    %p57 = por %p55, %p56
    %p58 = scmp.ne.s32.totalorder %s46, %s47
    %p59 = scmp.eq.s32.totalorder %s16, 1
    %p60 = por %p58, %p59
    %p62 = scmp.ne.s32.totalorder %s47, %s61
    %p63 = scmp.eq.s32.totalorder %s16, 0
    %p64 = por %p62, %p63
    %s66 = sadd.s32 %s65, 1
    %p69 = scmp.eq.s32.totalorder %s10, 1
    %p70 = scmp.ne.s32.totalorder %s65, %s67
    %p71 = scmp.eq.s32.totalorder %s10, 0
    %p72 = por %p70, %p71
    %p73 = scmp.ne.s32.totalorder %s65, %s67
    %p74 = scmp.eq.s32.totalorder %s15, 1
    %p75 = por %p73, %p74
    %p76 = scmp.ne.s32.totalorder %s67, %s68
    %p77 = scmp.eq.s32.totalorder %s15, 0
    %p78 = por %p76, %p77
    %p79 = scmp.ne.s32.totalorder %s67, %s68
    %p80 = scmp.eq.s32.totalorder %s16, 1
    %p81 = por %p79, %p80
    %p83 = scmp.ne.s32.totalorder %s68, %s82
    %p84 = scmp.eq.s32.totalorder %s16, 0
    %p85 = por %p83, %p84
    %s87 = sadd.s32 %s86, 1
    %p90 = scmp.eq.s32.totalorder %s10, 1
    %p91 = scmp.ne.s32.totalorder %s86, %s88
    %p92 = scmp.eq.s32.totalorder %s10, 0
    %p93 = por %p91, %p92
    %p94 = scmp.ne.s32.totalorder %s86, %s88
    %p95 = scmp.eq.s32.totalorder %s15, 1
    %p96 = por %p94, %p95
    %p97 = scmp.ne.s32.totalorder %s88, %s89
    %p98 = scmp.eq.s32.totalorder %s15, 0
    %p99 = por %p97, %p98
    %p100 = scmp.ne.s32.totalorder %s88, %s89
    %p101 = scmp.eq.s32.totalorder %s16, 1
    %p102 = por %p100, %p101
    %p104 = scmp.ne.s32.totalorder %s89, %s103
    %p105 = scmp.eq.s32.totalorder %s16, 0
    %p106 = por %p104, %p105
    %s107 = ssub.s32 %s10, %s17
    %p108 = scmp.eq.s32.totalorder %s107, 0
    %s110 = sadd.s32 %s109, 1
    %s111 = scalar_select %p108, %s109, %s110
    %p114 = pneg %p108
    %p115 = scmp.eq.s32.totalorder %s10, 1
    %p116 = por %p114, %p115
    %p117 = scmp.ne.s32.totalorder %s109, %s112
    %p118 = scmp.eq.s32.totalorder %s10, 0
    %p119 = por %p117, %p118
    %p120 = scmp.ne.s32.totalorder %s109, %s112
    %p121 = scmp.eq.s32.totalorder %s15, 1
    %p122 = por %p120, %p121
    %p123 = scmp.ne.s32.totalorder %s112, %s113
    %p124 = scmp.eq.s32.totalorder %s15, 0
    %p125 = por %p123, %p124
    %p126 = scmp.ne.s32.totalorder %s112, %s113
    %p127 = scmp.eq.s32.totalorder %s16, 1
    %p128 = por %p126, %p127
    %p130 = scmp.ne.s32.totalorder %s113, %s129
    %p131 = scmp.eq.s32.totalorder %s16, 0
    %p132 = por %p130, %p131
    %p133 = scmp.le.s32.totalorder 1, %s10
    %p134 = scmp.lt.s32.totalorder %s10, 3
    %p135 = pnand %p133, %p134
    %p136 = pneg %p135
    // Predicated region
    $region9: #{fpem_v1_forward.7} parent=5 // pred_check
      _
    $region10: #{fpem_v1_forward.7} parent=5 // pred_check_branch
      %138 = sbr.rel (%p135) target = $region12
    $region11: #{fpem_v1_forward.7} parent=5 // pred_region
      %s139 = ssub.s32 %s10, 1
      // Predicated region
      $region13: #{fpem_v1_forward.7} parent=11 // pred_check
        %p140 = pneg %p57
      $region14: #{fpem_v1_forward.7} parent=11 // pred_check_branch
        %142 = sbr.rel (%p140) target = $region16
      $region15: #{fpem_v1_forward.7} parent=11 // pred_region
        _
      $region16: #{fpem_v1_forward.7} parent=11 // pred_fallthru
        _
      // Predicated region
      $region17: #{fpem_v1_forward.7} parent=11 // pred_check
        %p143 = pneg %p78
      $region18: #{fpem_v1_forward.7} parent=11 // pred_check_branch
        %145 = sbr.rel (%p143) target = $region20
      $region19: #{fpem_v1_forward.7} parent=11 // pred_region
        _
      $region20: #{fpem_v1_forward.7} parent=11 // pred_fallthru
        _
      // Predicated region
      $region21: #{fpem_v1_forward.7} parent=11 // pred_check
        %p146 = pneg %p99
      $region22: #{fpem_v1_forward.7} parent=11 // pred_check_branch
        %148 = sbr.rel (%p146) target = $region24
      $region23: #{fpem_v1_forward.7} parent=11 // pred_region
        _
      $region24: #{fpem_v1_forward.7} parent=11 // pred_fallthru
        _
    $region12: #{fpem_v1_forward.7} parent=5 // pred_fallthru
      _
    %p149 = scmp.lt.s32.totalorder %s10, 2
    // Predicated region
    $region25: #{fpem_v1_forward.7} parent=5 // pred_check
      %p150 = pneg %p149
    $region26: #{fpem_v1_forward.7} parent=5 // pred_check_branch
      %152 = sbr.rel (%p150) target = $region28
    $region27: #{fpem_v1_forward.7} parent=5 // pred_region
      // Predicated region
      $region29: #{fpem_v1_forward.7} parent=27 // pred_check
        %p153 = pneg %p30
      $region30: #{fpem_v1_forward.7} parent=27 // pred_check_branch
        %155 = sbr.rel (%p153) target = $region32
      $region31: #{fpem_v1_forward.7} parent=27 // pred_region
        %p156 = scmp.lt.s32.totalorder %s10, 1
        %s157 = scalar_select %p156, %s10, 1
        %s158 = smul.addr %s157, 20
        %s159 = smul.addr %s158, 8
        %s160 = scalar_lea.vmem %s0, %s159
      $region32: #{fpem_v1_forward.7} parent=27 // pred_fallthru
        _
    $region28: #{fpem_v1_forward.7} parent=5 // pred_fallthru
      _
    %p161 = scmp.le.s32.totalorder 1, %s10
    %p162 = scmp.lt.s32.totalorder %s10, 3
    %p163 = pnand %p161, %p162
    %p164 = pneg %p163
    // Predicated region
    $region33: #{fpem_v1_forward.7} parent=5 // pred_check
      _
    $region34: #{fpem_v1_forward.7} parent=5 // pred_check_branch
      %166 = sbr.rel (%p163) target = $region36
    $region35: #{fpem_v1_forward.7} parent=5 // pred_region
      %s167 = ssub.s32 %s10, 1
      %p168 = scmp.lt.s32.totalorder %s15, 1
      %s169 = scalar_select %p168, %s15, 1
      %s170 = smul.addr %s169, 20
      %s171 = smul.addr %s170, 8
      %s172 = scalar_lea.vmem %s0, %s171
      %p173 = pneg %p36
      %p174 = pneg %p33
      %p175 = pneg %p57
      %p176 = pneg %p54
      %p177 = pneg %p78
      %p178 = pneg %p75
      %p179 = pneg %p99
      %p180 = pneg %p96
      %p181 = pneg %p125
      %p182 = pneg %p122
      %p183 = scmp.lt.s32.totalorder %s15, 1
      %s184 = scalar_select %p183, %s15, 1
      %s185 = smul.addr %s184, 8
      %s186 = smul.addr %s185, 8
      %s187 = scalar_lea.vmem %s4, %s186
      %p188 = scmp.lt.s32.totalorder %s15, 1
      %s189 = scalar_select %p188, %s15, 1
      %s190 = smul.addr %s189, 20
      %s191 = smul.addr %s190, 8
      %s192 = scalar_lea.vmem %s0, %s191
      %p193 = scmp.lt.s32.totalorder %s15, 1
      %s194 = scalar_select %p193, %s15, 1
      %s195 = smul.addr %s194, 8
      %s196 = smul.addr %s195, 8
      %s197 = scalar_lea.vmem %s4, %s196
      %v198 = vld [vmem:[%s1] sm:$0x1]
      %v199 = vld [vmem:[%s1 + $0x1] sm:$0x1]
      %v200 = vld [vmem:[%s1 + $0x2] sm:$0x1]
      %v201 = vld [vmem:[%s1 + $0x3] sm:$0x1]
      %v202 = vld [vmem:[%s1 + $0x4] sm:$0x1]
      %v203 = vld [vmem:[%s1 + $0x5] sm:$0x1]
      %v204 = vld [vmem:[%s1 + $0x6] sm:$0x1]
      %v205 = vld [vmem:[%s1 + $0x7] sm:$0x1]
      %v206 = vld [vmem:[%s1 + $0x8] sm:$0x1]
      %v207 = vld [vmem:[%s192] sm:$0xff]
      %v208 = vld [vmem:[%s192 + $0x8] sm:$0x3]
      %v209 = vlaneseq
      %v210 = vshrl.u32 %v209, 7
      %v211 = vsub.s32 0, %v210
      %v212 = vrot.slane %v198, %v211
      %v213 = vmul.f32 %v207, %v212
      %v214 = vadd.f32 %v213, 0.0
      %v215 = vlaneseq
      %v216 = vshrl.u32 %v215, 7
      %v217 = vsub.s32 0, %v216
      %v218 = vrot.slane %v199, %v217
      %v219 = vmul.f32 %v207, %v218
      %v220 = vmul.f32 %v208, %v218
      %vm223 = vcmask 1046528
      %v224 = vrot.slane %v219, 1
      %v225 = vrot.slane %v220, 1
      %v226 = vsel %vm223, %v224, %v225
      %v228 = vadd.f32 %v214, %v226
      %v229 = vlaneseq
      %v230 = vshrl.u32 %v229, 7
      %v231 = vsub.s32 0, %v230
      %v232 = vrot.slane %v200, %v231
      %v233 = vmul.f32 %v207, %v232
      %v234 = vmul.f32 %v208, %v232
      %vm237 = vcmask 1045504
      %v238 = vrot.slane %v233, 2
      %v239 = vrot.slane %v234, 2
      %v240 = vsel %vm237, %v238, %v239
      %v242 = vadd.f32 %v228, %v240
      %s243 = scalar_lea.vmem %s192, 16
      %v244 = vld [vmem:[%s243] sm:$0xff]
      %v245 = vld [vmem:[%s243 + $0x8] sm:$0x3]
      %v246 = vlaneseq
      %v247 = vshrl.u32 %v246, 7
      %v248 = vsub.s32 0, %v247
      %v249 = vrot.slane %v201, %v248
      %v250 = vmul.f32 %v244, %v249
      %v251 = vadd.f32 %v242, %v250
      %v252 = vlaneseq
      %v253 = vshrl.u32 %v252, 7
      %v254 = vsub.s32 0, %v253
      %v255 = vrot.slane %v202, %v254
      %v256 = vmul.f32 %v244, %v255
      %v257 = vmul.f32 %v245, %v255
      %v260 = vrot.slane %v256, 1
      %v261 = vrot.slane %v257, 1
      %v262 = vsel %vm223, %v260, %v261
      %v264 = vadd.f32 %v251, %v262
      %v265 = vlaneseq
      %v266 = vshrl.u32 %v265, 7
      %v267 = vsub.s32 0, %v266
      %v268 = vrot.slane %v203, %v267
      %v269 = vmul.f32 %v244, %v268
      %v270 = vmul.f32 %v245, %v268
      %v273 = vrot.slane %v269, 2
      %v274 = vrot.slane %v270, 2
      %v275 = vsel %vm237, %v273, %v274
      %v277 = vadd.f32 %v264, %v275
      %s278 = scalar_lea.vmem %s192, 32
      %v279 = vld [vmem:[%s278] sm:$0xff]
      %v280 = vld [vmem:[%s278 + $0x8] sm:$0x3]
      %v281 = vlaneseq
      %v282 = vshrl.u32 %v281, 7
      %v283 = vsub.s32 0, %v282
      %v284 = vrot.slane %v204, %v283
      %v285 = vmul.f32 %v279, %v284
      %v286 = vadd.f32 %v277, %v285
      %v287 = vlaneseq
      %v288 = vshrl.u32 %v287, 7
      %v289 = vsub.s32 0, %v288
      %v290 = vrot.slane %v205, %v289
      %v291 = vmul.f32 %v279, %v290
      %v292 = vmul.f32 %v280, %v290
      %v295 = vrot.slane %v291, 1
      %v296 = vrot.slane %v292, 1
      %v297 = vsel %vm223, %v295, %v296
      %v299 = vadd.f32 %v286, %v297
      %v300 = vlaneseq
      %v301 = vshrl.u32 %v300, 7
      %v302 = vsub.s32 0, %v301
      %v303 = vrot.slane %v206, %v302
      %v304 = vmul.f32 %v279, %v303
      %v305 = vmul.f32 %v280, %v303
      %v308 = vrot.slane %v304, 2
      %v309 = vrot.slane %v305, 2
      %v310 = vsel %vm237, %v308, %v309
      %v312 = vadd.f32 %v299, %v310
      %313 = vst [vmem:[#allocation2] sm:$0xff] %v312
      %v314 = vld [vmem:[%s243] sm:$0xff]
      %v315 = vld [vmem:[%s243 + $0x8] sm:$0x3]
      %v316 = vmul.f32 %v314, %v212
      %v317 = vadd.f32 %v316, 0.0
      %v318 = vmul.f32 %v314, %v218
      %v319 = vmul.f32 %v315, %v218
      %v322 = vrot.slane %v318, 1
      %v323 = vrot.slane %v319, 1
      %v324 = vsel %vm223, %v322, %v323
      %v326 = vadd.f32 %v317, %v324
      %v327 = vmul.f32 %v314, %v232
      %v328 = vmul.f32 %v315, %v232
      %v331 = vrot.slane %v327, 2
      %v332 = vrot.slane %v328, 2
      %v333 = vsel %vm237, %v331, %v332
      %v335 = vadd.f32 %v326, %v333
      %v336 = vld [vmem:[%s278] sm:$0xff]
      %v337 = vld [vmem:[%s278 + $0x8] sm:$0x3]
      %v338 = vmul.f32 %v336, %v249
      %v339 = vadd.f32 %v335, %v338
      %v340 = vmul.f32 %v336, %v255
      %v341 = vmul.f32 %v337, %v255
      %v344 = vrot.slane %v340, 1
      %v345 = vrot.slane %v341, 1
      %v346 = vsel %vm223, %v344, %v345
      %v348 = vadd.f32 %v339, %v346
      %v349 = vmul.f32 %v336, %v268
      %v350 = vmul.f32 %v337, %v268
      %v353 = vrot.slane %v349, 2
      %v354 = vrot.slane %v350, 2
      %v355 = vsel %vm237, %v353, %v354
      %v357 = vadd.f32 %v348, %v355
      %s358 = scalar_lea.vmem %s192, 48
      %v359 = vld [vmem:[%s358] sm:$0xff]
      %v360 = vld [vmem:[%s358 + $0x8] sm:$0x3]
      %v361 = vmul.f32 %v359, %v284
      %v362 = vadd.f32 %v357, %v361
      %v363 = vmul.f32 %v359, %v290
      %v364 = vmul.f32 %v360, %v290
      %v367 = vrot.slane %v363, 1
      %v368 = vrot.slane %v364, 1
      %v369 = vsel %vm223, %v367, %v368
      %v371 = vadd.f32 %v362, %v369
      %v372 = vmul.f32 %v359, %v303
      %v373 = vmul.f32 %v360, %v303
      %v376 = vrot.slane %v372, 2
      %v377 = vrot.slane %v373, 2
      %v378 = vsel %vm237, %v376, %v377
      %v380 = vadd.f32 %v371, %v378
      %381 = vst [vmem:[#allocation2 + $0x8] sm:$0xff] %v380
      %v382 = vld [vmem:[%s278] sm:$0xff]
      %v383 = vld [vmem:[%s278 + $0x8] sm:$0x3]
      %v384 = vmul.f32 %v382, %v212
      %v385 = vadd.f32 %v384, 0.0
      %v386 = vmul.f32 %v382, %v218
      %v387 = vmul.f32 %v383, %v218
      %v390 = vrot.slane %v386, 1
      %v391 = vrot.slane %v387, 1
      %v392 = vsel %vm223, %v390, %v391
      %v394 = vadd.f32 %v385, %v392
      %v395 = vmul.f32 %v382, %v232
      %v396 = vmul.f32 %v383, %v232
      %v399 = vrot.slane %v395, 2
      %v400 = vrot.slane %v396, 2
      %v401 = vsel %vm237, %v399, %v400
      %v403 = vadd.f32 %v394, %v401
      %v404 = vld [vmem:[%s358] sm:$0xff]
      %v405 = vld [vmem:[%s358 + $0x8] sm:$0x3]
      %v406 = vmul.f32 %v404, %v249
      %v407 = vadd.f32 %v403, %v406
      %v408 = vmul.f32 %v404, %v255
      %v409 = vmul.f32 %v405, %v255
      %v412 = vrot.slane %v408, 1
      %v413 = vrot.slane %v409, 1
      %v414 = vsel %vm223, %v412, %v413
      %v416 = vadd.f32 %v407, %v414
      %v417 = vmul.f32 %v404, %v268
      %v418 = vmul.f32 %v405, %v268
      %v421 = vrot.slane %v417, 2
      %v422 = vrot.slane %v418, 2
      %v423 = vsel %vm237, %v421, %v422
      %v425 = vadd.f32 %v416, %v423
      %s426 = scalar_lea.vmem %s192, 64
      %v427 = vld [vmem:[%s426] sm:$0xff]
      %v428 = vld [vmem:[%s426 + $0x8] sm:$0x3]
      %v429 = vmul.f32 %v427, %v284
      %v430 = vadd.f32 %v425, %v429
      %v431 = vmul.f32 %v427, %v290
      %v432 = vmul.f32 %v428, %v290
      %v435 = vrot.slane %v431, 1
      %v436 = vrot.slane %v432, 1
      %v437 = vsel %vm223, %v435, %v436
      %v439 = vadd.f32 %v430, %v437
      %v440 = vmul.f32 %v427, %v303
      %v441 = vmul.f32 %v428, %v303
      %v444 = vrot.slane %v440, 2
      %v445 = vrot.slane %v441, 2
      %v446 = vsel %vm237, %v444, %v445
      %v448 = vadd.f32 %v439, %v446
      %449 = vst [vmem:[#allocation2 + $0x10] sm:$0xff] %v448
      %v450 = vld [vmem:[%s358] sm:$0xff]
      %v451 = vld [vmem:[%s358 + $0x8] sm:$0x3]
      %v452 = vmul.f32 %v450, %v212
      %v453 = vadd.f32 %v452, 0.0
      %v454 = vmul.f32 %v450, %v218
      %v455 = vmul.f32 %v451, %v218
      %v458 = vrot.slane %v454, 1
      %v459 = vrot.slane %v455, 1
      %v460 = vsel %vm223, %v458, %v459
      %v462 = vadd.f32 %v453, %v460
      %v463 = vmul.f32 %v450, %v232
      %v464 = vmul.f32 %v451, %v232
      %v467 = vrot.slane %v463, 2
      %v468 = vrot.slane %v464, 2
      %v469 = vsel %vm237, %v467, %v468
      %v471 = vadd.f32 %v462, %v469
      %v472 = vld [vmem:[%s426] sm:$0xff]
      %v473 = vld [vmem:[%s426 + $0x8] sm:$0x3]
      %v474 = vmul.f32 %v472, %v249
      %v475 = vadd.f32 %v471, %v474
      %v476 = vmul.f32 %v472, %v255
      %v477 = vmul.f32 %v473, %v255
      %v480 = vrot.slane %v476, 1
      %v481 = vrot.slane %v477, 1
      %v482 = vsel %vm223, %v480, %v481
      %v484 = vadd.f32 %v475, %v482
      %v485 = vmul.f32 %v472, %v268
      %v486 = vmul.f32 %v473, %v268
      %v489 = vrot.slane %v485, 2
      %v490 = vrot.slane %v486, 2
      %v491 = vsel %vm237, %v489, %v490
      %v493 = vadd.f32 %v484, %v491
      %s494 = scalar_lea.vmem %s192, 80
      %v495 = vld [vmem:[%s494] sm:$0xff]
      %v496 = vld [vmem:[%s494 + $0x8] sm:$0x3]
      %v497 = vmul.f32 %v495, %v284
      %v498 = vadd.f32 %v493, %v497
      %v499 = vmul.f32 %v495, %v290
      %v500 = vmul.f32 %v496, %v290
      %v503 = vrot.slane %v499, 1
      %v504 = vrot.slane %v500, 1
      %v505 = vsel %vm223, %v503, %v504
      %v507 = vadd.f32 %v498, %v505
      %v508 = vmul.f32 %v495, %v303
      %v509 = vmul.f32 %v496, %v303
      %v512 = vrot.slane %v508, 2
      %v513 = vrot.slane %v509, 2
      %v514 = vsel %vm237, %v512, %v513
      %v516 = vadd.f32 %v507, %v514
      %517 = vst [vmem:[#allocation2 + $0x18] sm:$0xff] %v516
      %v518 = vld [vmem:[%s426] sm:$0xff]
      %v519 = vld [vmem:[%s426 + $0x8] sm:$0x3]
      %v520 = vmul.f32 %v518, %v212
      %v521 = vadd.f32 %v520, 0.0
      %v522 = vmul.f32 %v518, %v218
      %v523 = vmul.f32 %v519, %v218
      %v526 = vrot.slane %v522, 1
      %v527 = vrot.slane %v523, 1
      %v528 = vsel %vm223, %v526, %v527
      %v530 = vadd.f32 %v521, %v528
      %v531 = vmul.f32 %v518, %v232
      %v532 = vmul.f32 %v519, %v232
      %v535 = vrot.slane %v531, 2
      %v536 = vrot.slane %v532, 2
      %v537 = vsel %vm237, %v535, %v536
      %v539 = vadd.f32 %v530, %v537
      %v540 = vld [vmem:[%s494] sm:$0xff]
      %v541 = vld [vmem:[%s494 + $0x8] sm:$0x3]
      %v542 = vmul.f32 %v540, %v249
      %v543 = vadd.f32 %v539, %v542
      %v544 = vmul.f32 %v540, %v255
      %v545 = vmul.f32 %v541, %v255
      %v548 = vrot.slane %v544, 1
      %v549 = vrot.slane %v545, 1
      %v550 = vsel %vm223, %v548, %v549
      %v552 = vadd.f32 %v543, %v550
      %v553 = vmul.f32 %v540, %v268
      %v554 = vmul.f32 %v541, %v268
      %v557 = vrot.slane %v553, 2
      %v558 = vrot.slane %v554, 2
      %v559 = vsel %vm237, %v557, %v558
      %v561 = vadd.f32 %v552, %v559
      %s562 = scalar_lea.vmem %s192, 96
      %v563 = vld [vmem:[%s562] sm:$0xff]
      %v564 = vld [vmem:[%s562 + $0x8] sm:$0x3]
      %v565 = vmul.f32 %v563, %v284
      %v566 = vadd.f32 %v561, %v565
      %v567 = vmul.f32 %v563, %v290
      %v568 = vmul.f32 %v564, %v290
      %v571 = vrot.slane %v567, 1
      %v572 = vrot.slane %v568, 1
      %v573 = vsel %vm223, %v571, %v572
      %v575 = vadd.f32 %v566, %v573
      %v576 = vmul.f32 %v563, %v303
      %v577 = vmul.f32 %v564, %v303
      %v580 = vrot.slane %v576, 2
      %v581 = vrot.slane %v577, 2
      %v582 = vsel %vm237, %v580, %v581
      %v584 = vadd.f32 %v575, %v582
      %585 = vst [vmem:[#allocation2 + $0x20] sm:$0xff] %v584
      %v586 = vld [vmem:[%s494] sm:$0xff]
      %v587 = vld [vmem:[%s494 + $0x8] sm:$0x3]
      %v588 = vmul.f32 %v586, %v212
      %v589 = vadd.f32 %v588, 0.0
      %v590 = vmul.f32 %v586, %v218
      %v591 = vmul.f32 %v587, %v218
      %v594 = vrot.slane %v590, 1
      %v595 = vrot.slane %v591, 1
      %v596 = vsel %vm223, %v594, %v595
      %v598 = vadd.f32 %v589, %v596
      %v599 = vmul.f32 %v586, %v232
      %v600 = vmul.f32 %v587, %v232
      %v603 = vrot.slane %v599, 2
      %v604 = vrot.slane %v600, 2
      %v605 = vsel %vm237, %v603, %v604
      %v607 = vadd.f32 %v598, %v605
      %v608 = vld [vmem:[%s562] sm:$0xff]
      %v609 = vld [vmem:[%s562 + $0x8] sm:$0x3]
      %v610 = vmul.f32 %v608, %v249
      %v611 = vadd.f32 %v607, %v610
      %v612 = vmul.f32 %v608, %v255
      %v613 = vmul.f32 %v609, %v255
      %v616 = vrot.slane %v612, 1
      %v617 = vrot.slane %v613, 1
      %v618 = vsel %vm223, %v616, %v617
      %v620 = vadd.f32 %v611, %v618
      %v621 = vmul.f32 %v608, %v268
      %v622 = vmul.f32 %v609, %v268
      %v625 = vrot.slane %v621, 2
      %v626 = vrot.slane %v622, 2
      %v627 = vsel %vm237, %v625, %v626
      %v629 = vadd.f32 %v620, %v627
      %s630 = scalar_lea.vmem %s192, 112
      %v631 = vld [vmem:[%s630] sm:$0xff]
      %v632 = vld [vmem:[%s630 + $0x8] sm:$0x3]
      %v633 = vmul.f32 %v631, %v284
      %v634 = vadd.f32 %v629, %v633
      %v635 = vmul.f32 %v631, %v290
      %v636 = vmul.f32 %v632, %v290
      %v639 = vrot.slane %v635, 1
      %v640 = vrot.slane %v636, 1
      %v641 = vsel %vm223, %v639, %v640
      %v643 = vadd.f32 %v634, %v641
      %v644 = vmul.f32 %v631, %v303
      %v645 = vmul.f32 %v632, %v303
      %v648 = vrot.slane %v644, 2
      %v649 = vrot.slane %v645, 2
      %v650 = vsel %vm237, %v648, %v649
      %v652 = vadd.f32 %v643, %v650
      %653 = vst [vmem:[#allocation2 + $0x28] sm:$0xff] %v652
      %v654 = vld [vmem:[%s562] sm:$0xff]
      %v655 = vld [vmem:[%s562 + $0x8] sm:$0x3]
      %v656 = vmul.f32 %v654, %v212
      %v657 = vadd.f32 %v656, 0.0
      %v658 = vmul.f32 %v654, %v218
      %v659 = vmul.f32 %v655, %v218
      %v662 = vrot.slane %v658, 1
      %v663 = vrot.slane %v659, 1
      %v664 = vsel %vm223, %v662, %v663
      %v666 = vadd.f32 %v657, %v664
      %v667 = vmul.f32 %v654, %v232
      %v668 = vmul.f32 %v655, %v232
      %v671 = vrot.slane %v667, 2
      %v672 = vrot.slane %v668, 2
      %v673 = vsel %vm237, %v671, %v672
      %v675 = vadd.f32 %v666, %v673
      %v676 = vld [vmem:[%s630] sm:$0xff]
      %v677 = vld [vmem:[%s630 + $0x8] sm:$0x3]
      %v678 = vmul.f32 %v676, %v249
      %v679 = vadd.f32 %v675, %v678
      %v680 = vmul.f32 %v676, %v255
      %v681 = vmul.f32 %v677, %v255
      %v684 = vrot.slane %v680, 1
      %v685 = vrot.slane %v681, 1
      %v686 = vsel %vm223, %v684, %v685
      %v688 = vadd.f32 %v679, %v686
      %v689 = vmul.f32 %v676, %v268
      %v690 = vmul.f32 %v677, %v268
      %v693 = vrot.slane %v689, 2
      %v694 = vrot.slane %v690, 2
      %v695 = vsel %vm237, %v693, %v694
      %v697 = vadd.f32 %v688, %v695
      %s698 = scalar_lea.vmem %s192, 128
      %v699 = vld [vmem:[%s698] sm:$0xff]
      %v700 = vld [vmem:[%s698 + $0x8] sm:$0x3]
      %v701 = vmul.f32 %v699, %v284
      %v702 = vadd.f32 %v697, %v701
      %v703 = vmul.f32 %v699, %v290
      %v704 = vmul.f32 %v700, %v290
      %v707 = vrot.slane %v703, 1
      %v708 = vrot.slane %v704, 1
      %v709 = vsel %vm223, %v707, %v708
      %v711 = vadd.f32 %v702, %v709
      %v712 = vmul.f32 %v699, %v303
      %v713 = vmul.f32 %v700, %v303
      %v716 = vrot.slane %v712, 2
      %v717 = vrot.slane %v713, 2
      %v718 = vsel %vm237, %v716, %v717
      %v720 = vadd.f32 %v711, %v718
      %721 = vst [vmem:[#allocation2 + $0x30] sm:$0xff] %v720
      %v722 = vld [vmem:[%s630] sm:$0xff]
      %v723 = vld [vmem:[%s630 + $0x8] sm:$0x3]
      %v724 = vmul.f32 %v722, %v212
      %v725 = vadd.f32 %v724, 0.0
      %v726 = vmul.f32 %v722, %v218
      %v727 = vmul.f32 %v723, %v218
      %v730 = vrot.slane %v726, 1
      %v731 = vrot.slane %v727, 1
      %v732 = vsel %vm223, %v730, %v731
      %v734 = vadd.f32 %v725, %v732
      %v735 = vmul.f32 %v722, %v232
      %v736 = vmul.f32 %v723, %v232
      %v739 = vrot.slane %v735, 2
      %v740 = vrot.slane %v736, 2
      %v741 = vsel %vm237, %v739, %v740
      %v743 = vadd.f32 %v734, %v741
      %v744 = vld [vmem:[%s698] sm:$0xff]
      %v745 = vld [vmem:[%s698 + $0x8] sm:$0x3]
      %v746 = vmul.f32 %v744, %v249
      %v747 = vadd.f32 %v743, %v746
      %v748 = vmul.f32 %v744, %v255
      %v749 = vmul.f32 %v745, %v255
      %v752 = vrot.slane %v748, 1
      %v753 = vrot.slane %v749, 1
      %v754 = vsel %vm223, %v752, %v753
      %v756 = vadd.f32 %v747, %v754
      %v757 = vmul.f32 %v744, %v268
      %v758 = vmul.f32 %v745, %v268
      %v761 = vrot.slane %v757, 2
      %v762 = vrot.slane %v758, 2
      %v763 = vsel %vm237, %v761, %v762
      %v765 = vadd.f32 %v756, %v763
      %s766 = scalar_lea.vmem %s192, 144
      %v767 = vld [vmem:[%s766] sm:$0xff]
      %v768 = vld [vmem:[%s766 + $0x8] sm:$0x3]
      %v769 = vmul.f32 %v767, %v284
      %v770 = vadd.f32 %v765, %v769
      %v771 = vmul.f32 %v767, %v290
      %v772 = vmul.f32 %v768, %v290
      %v775 = vrot.slane %v771, 1
      %v776 = vrot.slane %v772, 1
      %v777 = vsel %vm223, %v775, %v776
      %v779 = vadd.f32 %v770, %v777
      %v780 = vmul.f32 %v767, %v303
      %v781 = vmul.f32 %v768, %v303
      %v784 = vrot.slane %v780, 2
      %v785 = vrot.slane %v781, 2
      %v786 = vsel %vm237, %v784, %v785
      %v788 = vadd.f32 %v779, %v786
      %789 = vst [vmem:[#allocation2 + $0x38] sm:$0xff] %v788
      %v790 = vld [vmem:[#allocation2] sm:$0xff]
      %v791 = vld [vmem:[#allocation2 + $0x8] sm:$0xff]
      %v792 = vld [vmem:[#allocation2 + $0x10] sm:$0xff]
      %v793 = vld [vmem:[#allocation2 + $0x18] sm:$0xff]
      %v794 = vld [vmem:[#allocation2 + $0x20] sm:$0xff]
      %v795 = vld [vmem:[#allocation2 + $0x28] sm:$0xff]
      %v796 = vld [vmem:[#allocation2 + $0x30] sm:$0xff]
      %v797 = vld [vmem:[#allocation2 + $0x38] sm:$0xff]
      %v798 = vld [vmem:[%s2] sm:$0xff]
      %v799 = vld [vmem:[%s2 + $0x8] sm:$0xff]
      %v800 = vld [vmem:[%s2 + $0x10] sm:$0xff]
      %v801 = vld [vmem:[%s2 + $0x18] sm:$0xff]
      %v802 = vld [vmem:[%s2 + $0x20] sm:$0xff]
      %v803 = vld [vmem:[%s2 + $0x28] sm:$0xff]
      %v804 = vld [vmem:[%s2 + $0x30] sm:$0xff]
      %v805 = vld [vmem:[%s2 + $0x38] sm:$0xff]
      %v806 = vld [vmem:[%s2 + $0x40] sm:$0xff]
      %v807 = vld [vmem:[%s2 + $0x48] sm:$0xff]
      %v808 = vld [vmem:[%s2 + $0x50] sm:$0xff]
      %v809 = vld [vmem:[%s2 + $0x58] sm:$0xff]
      %v810 = vld [vmem:[%s2 + $0x60] sm:$0xff]
      %v811 = vld [vmem:[%s2 + $0x68] sm:$0xff]
      %v812 = vld [vmem:[%s2 + $0x70] sm:$0xff]
      %v813 = vld [vmem:[%s2 + $0x78] sm:$0xff]
      %v814 = vld [vmem:[%s3] sm:$0x1]
      %v816 = vlaneseq
      %v817 = vshrl.u32 %v816, 7
      %v818 = vsub.s32 0, %v817
      %v819 = vrot.slane %v814, %v818
      %821 = vmatprep.subr.mxu0 0.0
      %822 = vmatpush1.msra.mxu0 %v798
      %823 = vmatprep.subr.mxu0 0.0
      %824 = vmatpush1.msra.mxu0 %v799
      %825 = vmatprep.subr.mxu0 0.0
      %826 = vmatpush1.msra.mxu0 %v800
      %827 = vmatprep.subr.mxu0 0.0
      %828 = vmatpush1.msra.mxu0 %v801
      %829 = vmatprep.subr.mxu0 0.0
      %830 = vmatpush1.msra.mxu0 %v802
      %831 = vmatprep.subr.mxu0 0.0
      %832 = vmatpush1.msra.mxu0 %v803
      %833 = vmatprep.subr.mxu0 0.0
      %834 = vmatpush1.msra.mxu0 %v804
      %835 = vmatprep.subr.mxu0 0.0
      %836 = vmatpush1.msra.mxu0 %v805
      %837 = vmatprep.subr.mxu0 0.0
      %838 = vmatpush1.msra.mxu0 %v806
      %839 = vmatprep.subr.mxu0 0.0
      %840 = vmatpush1.msra.mxu0 %v807
      %841 = vmatprep.subr.mxu0 0.0
      %842 = vmatpush1.msra.mxu0 %v808
      %843 = vmatprep.subr.mxu0 0.0
      %844 = vmatpush1.msra.mxu0 %v809
      %845 = vmatprep.subr.mxu0 0.0
      %846 = vmatpush1.msra.mxu0 %v810
      %847 = vmatprep.subr.mxu0 0.0
      %848 = vmatpush1.msra.mxu0 %v811
      %849 = vmatprep.subr.mxu0 0.0
      %850 = vmatpush1.msra.mxu0 %v812
      %851 = vmatprep.subr.mxu0 0.0
      %852 = vmatpush1.msra.mxu0 %v813
      %853 = vmatprep.subr.mxu0 0.0
      %854 = vmatpush1.msra.mxu0 0.0
      %855 = vmatprep.subr.mxu0 0.0
      %856 = vmatpush1.msra.mxu0 0.0
      %857 = vmatprep.subr.mxu0 0.0
      %858 = vmatpush1.msra.mxu0 0.0
      %859 = vmatprep.subr.mxu0 0.0
      %860 = vmatpush1.msra.mxu0 0.0
      %861 = vmatprep.subr.mxu0 0.0
      %862 = vmatpush1.msra.mxu0 0.0
      %863 = vmatprep.subr.mxu0 0.0
      %864 = vmatpush1.msra.mxu0 0.0
      %865 = vmatprep.subr.mxu0 0.0
      %866 = vmatpush1.msra.mxu0 0.0
      %867 = vmatprep.subr.mxu0 0.0
      %868 = vmatpush1.msra.mxu0 0.0
      %869 = vmatprep.subr.mxu0 0.0
      %870 = vmatpush1.msra.mxu0 0.0
      %871 = vmatprep.subr.mxu0 0.0
      %872 = vmatpush1.msra.mxu0 0.0
      %873 = vmatprep.subr.mxu0 0.0
      %874 = vmatpush1.msra.mxu0 0.0
      %875 = vmatprep.subr.mxu0 0.0
      %876 = vmatpush1.msra.mxu0 0.0
      %877 = vmatprep.subr.mxu0 0.0
      %878 = vmatpush1.msra.mxu0 0.0
      %879 = vmatprep.subr.mxu0 0.0
      %880 = vmatpush1.msra.mxu0 0.0
      %881 = vmatprep.subr.mxu0 0.0
      %882 = vmatpush1.msra.mxu0 0.0
      %883 = vmatprep.subr.mxu0 0.0
      %884 = vmatpush1.msra.mxu0 0.0
      %885 = vmatprep.mubr.f32.mxu0 0.0
      %886 = vmatmul.mubr.f32.gmra.mrb[0].mxu0 %v790
      %v887 = vpop.f32.mrb[0].mxu0
      %v888 = vadd.f32 %v819, %v887
      %v889 = vpop.f32.mrb[0].mxu0
      %890 = vmatprep.mubr.f32.mxu0 0.0
      %891 = vmatmul.mubr.f32.gmra.mrb[0].mxu0 %v791
      %v892 = vpop.f32.mrb[0].mxu0
      %v893 = vadd.f32 %v819, %v892
      %v894 = vpop.f32.mrb[0].mxu0
      %895 = vmatprep.mubr.f32.mxu0 0.0
      %896 = vmatmul.mubr.f32.gmra.mrb[0].mxu0 %v792
      %v897 = vpop.f32.mrb[0].mxu0
      %v898 = vadd.f32 %v819, %v897
      %v899 = vpop.f32.mrb[0].mxu0
      %900 = vmatprep.mubr.f32.mxu0 0.0
      %901 = vmatmul.mubr.f32.gmra.mrb[0].mxu0 %v793
      %v902 = vpop.f32.mrb[0].mxu0
      %v903 = vadd.f32 %v819, %v902
      %v904 = vpop.f32.mrb[0].mxu0
      %905 = vmatprep.mubr.f32.mxu0 0.0
      %906 = vmatmul.mubr.f32.gmra.mrb[0].mxu0 %v794
      %v907 = vpop.f32.mrb[0].mxu0
      %v908 = vadd.f32 %v819, %v907
      %v909 = vpop.f32.mrb[0].mxu0
      %910 = vmatprep.mubr.f32.mxu0 0.0
      %911 = vmatmul.mubr.f32.gmra.mrb[0].mxu0 %v795
      %v912 = vpop.f32.mrb[0].mxu0
      %v913 = vadd.f32 %v819, %v912
      %v914 = vpop.f32.mrb[0].mxu0
      %915 = vmatprep.mubr.f32.mxu0 0.0
      %916 = vmatmul.mubr.f32.gmra.mrb[0].mxu0 %v796
      %v917 = vpop.f32.mrb[0].mxu0
      %v918 = vadd.f32 %v819, %v917
      %v919 = vpop.f32.mrb[0].mxu0
      %920 = vmatprep.mubr.f32.mxu0 0.0
      %921 = vmatmul.mubr.f32.gmra.mrb[0].mxu0 %v797
      %v922 = vpop.f32.mrb[0].mxu0
      %v923 = vadd.f32 %v819, %v922
      %v924 = vpop.f32.mrb[0].mxu0
      %925 = vdwg.mxu0
      %v926 = vmax.f32 %v888, 0.0
      %v927 = vmax.f32 %v893, 0.0
      %v928 = vmax.f32 %v898, 0.0
      %v929 = vmax.f32 %v903, 0.0
      %v930 = vmax.f32 %v908, 0.0
      %v931 = vmax.f32 %v913, 0.0
      %v932 = vmax.f32 %v918, 0.0
      %v933 = vmax.f32 %v923, 0.0
      %934 = vst [vmem:[%s197] sm:$0xff] %v926
      %935 = vst [vmem:[%s197 + $0x8] sm:$0xff] %v927
      %936 = vst [vmem:[%s197 + $0x10] sm:$0xff] %v928
      %937 = vst [vmem:[%s197 + $0x18] sm:$0xff] %v929
      %938 = vst [vmem:[%s197 + $0x20] sm:$0xff] %v930
      %939 = vst [vmem:[%s197 + $0x28] sm:$0xff] %v931
      %940 = vst [vmem:[%s197 + $0x30] sm:$0xff] %v932
      %941 = vst [vmem:[%s197 + $0x38] sm:$0xff] %v933
      %p942 = scmp.lt.s32.totalorder %s15, 1
      %s943 = scalar_select %p942, %s15, 1
      %s944 = smul.addr %s943, 8
      %s945 = smul.addr %s944, 8
      %s946 = scalar_lea.vmem %s4, %s945
      // Predicated region
      $region37: #{fpem_v1_forward.7} parent=35 // pred_check
        %p947 = pneg %p122
      $region38: #{fpem_v1_forward.7} parent=35 // pred_check_branch
        %949 = sbr.rel (%p947) target = $region40
      $region39: #{fpem_v1_forward.7} parent=35 // pred_region
        _
      $region40: #{fpem_v1_forward.7} parent=35 // pred_fallthru
        _
    $region36: #{fpem_v1_forward.7} parent=5 // pred_fallthru
      _
    %p950 = scmp.le.s32.totalorder 2, %s10
    // Predicated region
    $region41: #{fpem_v1_forward.7} parent=5 // pred_check
      %p951 = pneg %p950
    $region42: #{fpem_v1_forward.7} parent=5 // pred_check_branch
      %953 = sbr.rel (%p951) target = $region44
    $region43: #{fpem_v1_forward.7} parent=5 // pred_region
      %s954 = ssub.s32 %s10, 2
      // Predicated region
      $region45: #{fpem_v1_forward.7} parent=43 // pred_check
        %p955 = pneg %p128
      $region46: #{fpem_v1_forward.7} parent=43 // pred_check_branch
        %957 = sbr.rel (%p955) target = $region48
      $region47: #{fpem_v1_forward.7} parent=43 // pred_region
        %p958 = scmp.lt.s32.totalorder %s16, 1
        %s959 = scalar_select %p958, %s16, 1
        %s960 = smul.addr %s959, 8
        %s961 = smul.addr %s960, 8
        %s962 = scalar_lea.vmem %s4, %s961
      $region48: #{fpem_v1_forward.7} parent=43 // pred_fallthru
        _
    $region44: #{fpem_v1_forward.7} parent=5 // pred_fallthru
      _
  $region6: #{fpem_v1_forward.7} parent=0 // loop_footer
    %s14 = sadd.s32 1, %s10
  $region7: #{fpem_v1_forward.7} parent=0 // loop_footer_branch
    %9 = sbr.rel target = $region3
  $region8: #{fpem_v1_forward.7} parent=0 // loop_exit
    _

// kernel: fpem_v1_forward.8
$region0: #{fpem_v1_forward.8}
  #allocation0 [shape = 'u32[]', space=smem, size = 0x4, offset = 0x4, fixed_abs, tag = 'smem constant byte address 0x4 - core index']
  #allocation1 [shape = 'u32[144,128]{1,0:T(1,128)}', space=vmem, size = 0x12000, scoped, tag = 'internal scratch']
  #allocation2 [shape = 'f32[256,128]{1,0:T(8,128)}', space=vmem, size = 0x20000, scoped, tag = 'scratch operand']
  %s0 = inlined_call_operand.vmem [shape: f32[2,18,18,128], index: 0, kind: input, shape index: {}]
  %s1 = inlined_call_operand.vmem [shape: f32[9,128], index: 1, kind: input, shape index: {}]
  %s2 = inlined_call_operand.vmem [shape: f32[128,128], index: 2, kind: input, shape index: {}]
  %s3 = inlined_call_operand.vmem [shape: f32[1,128], index: 3, kind: input, shape index: {}]
  %s4 = inlined_call_operand.vmem [shape: f32[2,256,128], index: 4, kind: output, shape index: {}]
  %s5 = sld [smem:[#allocation0]]
  $region49: #{fpem_v1_forward.8} parent=0
    _
  %s7 = ssub.s32 1, %s5
  %s8 = scalar_select 0, %s7, %s5
  loop: start=0, step=1, limit=4
  $region2: #{fpem_v1_forward.8} parent=0 // loop_pre_header
    _
  $region3: #{fpem_v1_forward.8} parent=0 // loop_header
    %s10 = sphi 0, %s14
    %p11 = scmp.ge.s32.totalorder %s10, 4
    %s20 = sphi 0, %s22
    %s23 = sphi 0, %s20
    %s24 = sphi 0, %s23
    %s40 = sphi 0, %s24
    %s44 = sphi 0, %s44
    %s46 = sphi 0, %s44
    %s47 = sphi 0, %s46
    %s61 = sphi 0, %s47
    %s65 = sphi 0, %s65
    %s67 = sphi 0, %s65
    %s68 = sphi 0, %s67
    %s82 = sphi 0, %s68
    %s86 = sphi 0, %s86
    %s88 = sphi 0, %s86
    %s89 = sphi 0, %s88
    %s103 = sphi 0, %s89
    %s109 = sphi 0, %s111
    %s112 = sphi 0, %s109
    %s113 = sphi 0, %s112
    %s129 = sphi 0, %s113
  $region4: #{fpem_v1_forward.8} parent=0 // loop_header_branch
    %13 = sbr.rel (%p11) target = $region8
  $region5: #{fpem_v1_forward.8} parent=0 // loop_body
    %s15 = ssub.s32 %s10, 1
    %s16 = ssub.s32 %s10, 2
    %s17 = sadd.s32 %s10, 1
    %s18 = ssub.s32 %s10, %s17
    %p19 = scmp.eq.s32.totalorder %s18, 0
    %s21 = sadd.s32 %s20, 1
    %s22 = scalar_select %p19, %s20, %s21
    %p25 = pneg %p19
    %p26 = scmp.eq.s32.totalorder %s10, 1
    %p27 = por %p25, %p26
    %p28 = scmp.ne.s32.totalorder %s20, %s23
    %p29 = scmp.eq.s32.totalorder %s10, 0
    %p30 = por %p28, %p29
    %p31 = scmp.ne.s32.totalorder %s20, %s23
    %p32 = scmp.eq.s32.totalorder %s15, 1
    %p33 = por %p31, %p32
    %p34 = scmp.ne.s32.totalorder %s23, %s24
    %p35 = scmp.eq.s32.totalorder %s15, 0
    %p36 = por %p34, %p35
    %p37 = scmp.ne.s32.totalorder %s23, %s24
    %p38 = scmp.eq.s32.totalorder %s16, 1
    %p39 = por %p37, %p38
    %p41 = scmp.ne.s32.totalorder %s24, %s40
    %p42 = scmp.eq.s32.totalorder %s16, 0
    %p43 = por %p41, %p42
    %s45 = sadd.s32 %s44, 1
    %p48 = scmp.eq.s32.totalorder %s10, 1
    %p49 = scmp.ne.s32.totalorder %s44, %s46
    %p50 = scmp.eq.s32.totalorder %s10, 0
    %p51 = por %p49, %p50
    %p52 = scmp.ne.s32.totalorder %s44, %s46
    %p53 = scmp.eq.s32.totalorder %s15, 1
    %p54 = por %p52, %p53
    %p55 = scmp.ne.s32.totalorder %s46, %s47
    %p56 = scmp.eq.s32.totalorder %s15, 0
    %p57 = por %p55, %p56
    %p58 = scmp.ne.s32.totalorder %s46, %s47
    %p59 = scmp.eq.s32.totalorder %s16, 1
    %p60 = por %p58, %p59
    %p62 = scmp.ne.s32.totalorder %s47, %s61
    %p63 = scmp.eq.s32.totalorder %s16, 0
    %p64 = por %p62, %p63
    %s66 = sadd.s32 %s65, 1
    %p69 = scmp.eq.s32.totalorder %s10, 1
    %p70 = scmp.ne.s32.totalorder %s65, %s67
    %p71 = scmp.eq.s32.totalorder %s10, 0
    %p72 = por %p70, %p71
    %p73 = scmp.ne.s32.totalorder %s65, %s67
    %p74 = scmp.eq.s32.totalorder %s15, 1
    %p75 = por %p73, %p74
    %p76 = scmp.ne.s32.totalorder %s67, %s68
    %p77 = scmp.eq.s32.totalorder %s15, 0
    %p78 = por %p76, %p77
    %p79 = scmp.ne.s32.totalorder %s67, %s68
    %p80 = scmp.eq.s32.totalorder %s16, 1
    %p81 = por %p79, %p80
    %p83 = scmp.ne.s32.totalorder %s68, %s82
    %p84 = scmp.eq.s32.totalorder %s16, 0
    %p85 = por %p83, %p84
    %s87 = sadd.s32 %s86, 1
    %p90 = scmp.eq.s32.totalorder %s10, 1
    %p91 = scmp.ne.s32.totalorder %s86, %s88
    %p92 = scmp.eq.s32.totalorder %s10, 0
    %p93 = por %p91, %p92
    %p94 = scmp.ne.s32.totalorder %s86, %s88
    %p95 = scmp.eq.s32.totalorder %s15, 1
    %p96 = por %p94, %p95
    %p97 = scmp.ne.s32.totalorder %s88, %s89
    %p98 = scmp.eq.s32.totalorder %s15, 0
    %p99 = por %p97, %p98
    %p100 = scmp.ne.s32.totalorder %s88, %s89
    %p101 = scmp.eq.s32.totalorder %s16, 1
    %p102 = por %p100, %p101
    %p104 = scmp.ne.s32.totalorder %s89, %s103
    %p105 = scmp.eq.s32.totalorder %s16, 0
    %p106 = por %p104, %p105
    %s107 = ssub.s32 %s10, %s17
    %p108 = scmp.eq.s32.totalorder %s107, 0
    %s110 = sadd.s32 %s109, 1
    %s111 = scalar_select %p108, %s109, %s110
    %p114 = pneg %p108
    %p115 = scmp.eq.s32.totalorder %s10, 1
    %p116 = por %p114, %p115
    %p117 = scmp.ne.s32.totalorder %s109, %s112
    %p118 = scmp.eq.s32.totalorder %s10, 0
    %p119 = por %p117, %p118
    %p120 = scmp.ne.s32.totalorder %s109, %s112
    %p121 = scmp.eq.s32.totalorder %s15, 1
    %p122 = por %p120, %p121
    %p123 = scmp.ne.s32.totalorder %s112, %s113
    %p124 = scmp.eq.s32.totalorder %s15, 0
    %p125 = por %p123, %p124
    %p126 = scmp.ne.s32.totalorder %s112, %s113
    %p127 = scmp.eq.s32.totalorder %s16, 1
    %p128 = por %p126, %p127
    %p130 = scmp.ne.s32.totalorder %s113, %s129
    %p131 = scmp.eq.s32.totalorder %s16, 0
    %p132 = por %p130, %p131
    %p133 = scmp.le.s32.totalorder 1, %s10
    %p134 = scmp.lt.s32.totalorder %s10, 3
    %p135 = pnand %p133, %p134
    %p136 = pneg %p135
    // Predicated region
    $region9: #{fpem_v1_forward.8} parent=5 // pred_check
      _
    $region10: #{fpem_v1_forward.8} parent=5 // pred_check_branch
      %138 = sbr.rel (%p135) target = $region12
    $region11: #{fpem_v1_forward.8} parent=5 // pred_region
      %s139 = ssub.s32 %s10, 1
      // Predicated region
      $region13: #{fpem_v1_forward.8} parent=11 // pred_check
        %p140 = pneg %p57
      $region14: #{fpem_v1_forward.8} parent=11 // pred_check_branch
        %142 = sbr.rel (%p140) target = $region16
      $region15: #{fpem_v1_forward.8} parent=11 // pred_region
        _
      $region16: #{fpem_v1_forward.8} parent=11 // pred_fallthru
        _
      // Predicated region
      $region17: #{fpem_v1_forward.8} parent=11 // pred_check
        %p143 = pneg %p78
      $region18: #{fpem_v1_forward.8} parent=11 // pred_check_branch
        %145 = sbr.rel (%p143) target = $region20
      $region19: #{fpem_v1_forward.8} parent=11 // pred_region
        _
      $region20: #{fpem_v1_forward.8} parent=11 // pred_fallthru
        _
      // Predicated region
      $region21: #{fpem_v1_forward.8} parent=11 // pred_check
        %p146 = pneg %p99
      $region22: #{fpem_v1_forward.8} parent=11 // pred_check_branch
        %148 = sbr.rel (%p146) target = $region24
      $region23: #{fpem_v1_forward.8} parent=11 // pred_region
        _
      $region24: #{fpem_v1_forward.8} parent=11 // pred_fallthru
        _
    $region12: #{fpem_v1_forward.8} parent=5 // pred_fallthru
      _
    %p149 = scmp.lt.s32.totalorder %s10, 2
    // Predicated region
    $region25: #{fpem_v1_forward.8} parent=5 // pred_check
      %p150 = pneg %p149
    $region26: #{fpem_v1_forward.8} parent=5 // pred_check_branch
      %152 = sbr.rel (%p150) target = $region28
    $region27: #{fpem_v1_forward.8} parent=5 // pred_region
      // Predicated region
      $region29: #{fpem_v1_forward.8} parent=27 // pred_check
        %p153 = pneg %p30
      $region30: #{fpem_v1_forward.8} parent=27 // pred_check_branch
        %155 = sbr.rel (%p153) target = $region32
      $region31: #{fpem_v1_forward.8} parent=27 // pred_region
        %p156 = scmp.lt.s32.totalorder %s10, 1
        %s157 = scalar_select %p156, %s10, 1
        %s158 = smul.addr %s157, 54
        %s159 = smul.addr %s158, 8
        %s160 = scalar_lea.vmem %s0, %s159
      $region32: #{fpem_v1_forward.8} parent=27 // pred_fallthru
        _
    $region28: #{fpem_v1_forward.8} parent=5 // pred_fallthru
      _
    %p161 = scmp.le.s32.totalorder 1, %s10
    %p162 = scmp.lt.s32.totalorder %s10, 3
    %p163 = pnand %p161, %p162
    %p164 = pneg %p163
    // Predicated region
    $region33: #{fpem_v1_forward.8} parent=5 // pred_check
      _
    $region34: #{fpem_v1_forward.8} parent=5 // pred_check_branch
      %166 = sbr.rel (%p163) target = $region36
    $region35: #{fpem_v1_forward.8} parent=5 // pred_region
      %s167 = ssub.s32 %s10, 1
      %p168 = scmp.lt.s32.totalorder %s15, 1
      %s169 = scalar_select %p168, %s15, 1
      %s170 = smul.addr %s169, 54
      %s171 = smul.addr %s170, 8
      %s172 = scalar_lea.vmem %s0, %s171
      %p173 = pneg %p36
      %p174 = pneg %p33
      %p175 = pneg %p57
      %p176 = pneg %p54
      %p177 = pneg %p78
      %p178 = pneg %p75
      %p179 = pneg %p99
      %p180 = pneg %p96
      %p181 = pneg %p125
      %p182 = pneg %p122
      %p183 = scmp.lt.s32.totalorder %s15, 1
      %s184 = scalar_select %p183, %s15, 1
      %s185 = smul.addr %s184, 32
      %s186 = smul.addr %s185, 8
      %s187 = scalar_lea.vmem %s4, %s186
      %p188 = scmp.lt.s32.totalorder %s15, 1
      %s189 = scalar_select %p188, %s15, 1
      %s190 = smul.addr %s189, 54
      %s191 = smul.addr %s190, 8
      %s192 = scalar_lea.vmem %s0, %s191
      %p193 = scmp.lt.s32.totalorder %s15, 1
      %s194 = scalar_select %p193, %s15, 1
      %s195 = smul.addr %s194, 32
      %s196 = smul.addr %s195, 8
      %s197 = scalar_lea.vmem %s4, %s196
      %v198 = vld [vmem:[%s1] sm:$0x1]
      %v199 = vld [vmem:[%s1 + $0x1] sm:$0x1]
      %v200 = vld [vmem:[%s1 + $0x2] sm:$0x1]
      %v201 = vld [vmem:[%s1 + $0x3] sm:$0x1]
      %v202 = vld [vmem:[%s1 + $0x4] sm:$0x1]
      %v203 = vld [vmem:[%s1 + $0x5] sm:$0x1]
      %v204 = vld [vmem:[%s1 + $0x6] sm:$0x1]
      %v205 = vld [vmem:[%s1 + $0x7] sm:$0x1]
      %v206 = vld [vmem:[%s1 + $0x8] sm:$0x1]
      %v207 = vld [vmem:[%s192] sm:$0xff]
      %v208 = vld [vmem:[%s192 + $0x8] sm:$0xff]
      %v209 = vld [vmem:[%s192 + $0x10] sm:$0x3]
      %v210 = vlaneseq
      %v211 = vshrl.u32 %v210, 7
      %v212 = vsub.s32 0, %v211
      %v213 = vrot.slane %v198, %v212
      %v214 = vmul.f32 %v207, %v213
      %v215 = vmul.f32 %v208, %v213
      %v216 = vadd.f32 %v214, 0.0
      %v217 = vadd.f32 %v215, 0.0
      %v218 = vlaneseq
      %v219 = vshrl.u32 %v218, 7
      %v220 = vsub.s32 0, %v219
      %v221 = vrot.slane %v199, %v220
      %v222 = vmul.f32 %v207, %v221
      %v223 = vmul.f32 %v208, %v221
      %v224 = vmul.f32 %v209, %v221
      %vm228 = vcmask 1046528
      %v229 = vrot.slane %v222, 1
      %v230 = vrot.slane %v223, 1
      %v231 = vsel %vm228, %v229, %v230
      %v232 = vrot.slane %v224, 1
      %v233 = vsel %vm228, %v230, %v232
      %v236 = vadd.f32 %v216, %v231
      %v237 = vadd.f32 %v217, %v233
      %v238 = vlaneseq
      %v239 = vshrl.u32 %v238, 7
      %v240 = vsub.s32 0, %v239
      %v241 = vrot.slane %v200, %v240
      %v242 = vmul.f32 %v207, %v241
      %v243 = vmul.f32 %v208, %v241
      %v244 = vmul.f32 %v209, %v241
      %vm248 = vcmask 1045504
      %v249 = vrot.slane %v242, 2
      %v250 = vrot.slane %v243, 2
      %v251 = vsel %vm248, %v249, %v250
      %v252 = vrot.slane %v244, 2
      %v253 = vsel %vm248, %v250, %v252
      %v256 = vadd.f32 %v236, %v251
      %v257 = vadd.f32 %v237, %v253
      %s258 = scalar_lea.vmem %s192, 24
      %v259 = vld [vmem:[%s258] sm:$0xff]
      %v260 = vld [vmem:[%s258 + $0x8] sm:$0xff]
      %v261 = vld [vmem:[%s258 + $0x10] sm:$0x3]
      %v262 = vlaneseq
      %v263 = vshrl.u32 %v262, 7
      %v264 = vsub.s32 0, %v263
      %v265 = vrot.slane %v201, %v264
      %v266 = vmul.f32 %v259, %v265
      %v267 = vmul.f32 %v260, %v265
      %v268 = vadd.f32 %v256, %v266
      %v269 = vadd.f32 %v257, %v267
      %v270 = vlaneseq
      %v271 = vshrl.u32 %v270, 7
      %v272 = vsub.s32 0, %v271
      %v273 = vrot.slane %v202, %v272
      %v274 = vmul.f32 %v259, %v273
      %v275 = vmul.f32 %v260, %v273
      %v276 = vmul.f32 %v261, %v273
      %v280 = vrot.slane %v274, 1
      %v281 = vrot.slane %v275, 1
      %v282 = vsel %vm228, %v280, %v281
      %v283 = vrot.slane %v276, 1
      %v284 = vsel %vm228, %v281, %v283
      %v287 = vadd.f32 %v268, %v282
      %v288 = vadd.f32 %v269, %v284
      %v289 = vlaneseq
      %v290 = vshrl.u32 %v289, 7
      %v291 = vsub.s32 0, %v290
      %v292 = vrot.slane %v203, %v291
      %v293 = vmul.f32 %v259, %v292
      %v294 = vmul.f32 %v260, %v292
      %v295 = vmul.f32 %v261, %v292
      %v299 = vrot.slane %v293, 2
      %v300 = vrot.slane %v294, 2
      %v301 = vsel %vm248, %v299, %v300
      %v302 = vrot.slane %v295, 2
      %v303 = vsel %vm248, %v300, %v302
      %v306 = vadd.f32 %v287, %v301
      %v307 = vadd.f32 %v288, %v303
      %s308 = scalar_lea.vmem %s192, 48
      %v309 = vld [vmem:[%s308] sm:$0xff]
      %v310 = vld [vmem:[%s308 + $0x8] sm:$0xff]
      %v311 = vld [vmem:[%s308 + $0x10] sm:$0x3]
      %v312 = vlaneseq
      %v313 = vshrl.u32 %v312, 7
      %v314 = vsub.s32 0, %v313
      %v315 = vrot.slane %v204, %v314
      %v316 = vmul.f32 %v309, %v315
      %v317 = vmul.f32 %v310, %v315
      %v318 = vadd.f32 %v306, %v316
      %v319 = vadd.f32 %v307, %v317
      %v320 = vlaneseq
      %v321 = vshrl.u32 %v320, 7
      %v322 = vsub.s32 0, %v321
      %v323 = vrot.slane %v205, %v322
      %v324 = vmul.f32 %v309, %v323
      %v325 = vmul.f32 %v310, %v323
      %v326 = vmul.f32 %v311, %v323
      %v330 = vrot.slane %v324, 1
      %v331 = vrot.slane %v325, 1
      %v332 = vsel %vm228, %v330, %v331
      %v333 = vrot.slane %v326, 1
      %v334 = vsel %vm228, %v331, %v333
      %v337 = vadd.f32 %v318, %v332
      %v338 = vadd.f32 %v319, %v334
      %v339 = vlaneseq
      %v340 = vshrl.u32 %v339, 7
      %v341 = vsub.s32 0, %v340
      %v342 = vrot.slane %v206, %v341
      %v343 = vmul.f32 %v309, %v342
      %v344 = vmul.f32 %v310, %v342
      %v345 = vmul.f32 %v311, %v342
      %v349 = vrot.slane %v343, 2
      %v350 = vrot.slane %v344, 2
      %v351 = vsel %vm248, %v349, %v350
      %v352 = vrot.slane %v345, 2
      %v353 = vsel %vm248, %v350, %v352
      %v356 = vadd.f32 %v337, %v351
      %v357 = vadd.f32 %v338, %v353
      %358 = vst [vmem:[#allocation2] sm:$0xff] %v356
      %359 = vst [vmem:[#allocation2 + $0x8] sm:$0xff] %v357
      %v360 = vld [vmem:[%s258] sm:$0xff]
      %v361 = vld [vmem:[%s258 + $0x8] sm:$0xff]
      %v362 = vld [vmem:[%s258 + $0x10] sm:$0x3]
      %v363 = vmul.f32 %v360, %v213
      %v364 = vmul.f32 %v361, %v213
      %v365 = vadd.f32 %v363, 0.0
      %v366 = vadd.f32 %v364, 0.0
      %v367 = vmul.f32 %v360, %v221
      %v368 = vmul.f32 %v361, %v221
      %v369 = vmul.f32 %v362, %v221
      %v373 = vrot.slane %v367, 1
      %v374 = vrot.slane %v368, 1
      %v375 = vsel %vm228, %v373, %v374
      %v376 = vrot.slane %v369, 1
      %v377 = vsel %vm228, %v374, %v376
      %v380 = vadd.f32 %v365, %v375
      %v381 = vadd.f32 %v366, %v377
      %v382 = vmul.f32 %v360, %v241
      %v383 = vmul.f32 %v361, %v241
      %v384 = vmul.f32 %v362, %v241
      %v388 = vrot.slane %v382, 2
      %v389 = vrot.slane %v383, 2
      %v390 = vsel %vm248, %v388, %v389
      %v391 = vrot.slane %v384, 2
      %v392 = vsel %vm248, %v389, %v391
      %v395 = vadd.f32 %v380, %v390
      %v396 = vadd.f32 %v381, %v392
      %v397 = vld [vmem:[%s308] sm:$0xff]
      %v398 = vld [vmem:[%s308 + $0x8] sm:$0xff]
      %v399 = vld [vmem:[%s308 + $0x10] sm:$0x3]
      %v400 = vmul.f32 %v397, %v265
      %v401 = vmul.f32 %v398, %v265
      %v402 = vadd.f32 %v395, %v400
      %v403 = vadd.f32 %v396, %v401
      %v404 = vmul.f32 %v397, %v273
      %v405 = vmul.f32 %v398, %v273
      %v406 = vmul.f32 %v399, %v273
      %v410 = vrot.slane %v404, 1
      %v411 = vrot.slane %v405, 1
      %v412 = vsel %vm228, %v410, %v411
      %v413 = vrot.slane %v406, 1
      %v414 = vsel %vm228, %v411, %v413
      %v417 = vadd.f32 %v402, %v412
      %v418 = vadd.f32 %v403, %v414
      %v419 = vmul.f32 %v397, %v292
      %v420 = vmul.f32 %v398, %v292
      %v421 = vmul.f32 %v399, %v292
      %v425 = vrot.slane %v419, 2
      %v426 = vrot.slane %v420, 2
      %v427 = vsel %vm248, %v425, %v426
      %v428 = vrot.slane %v421, 2
      %v429 = vsel %vm248, %v426, %v428
      %v432 = vadd.f32 %v417, %v427
      %v433 = vadd.f32 %v418, %v429
      %s434 = scalar_lea.vmem %s192, 72
      %v435 = vld [vmem:[%s434] sm:$0xff]
      %v436 = vld [vmem:[%s434 + $0x8] sm:$0xff]
      %v437 = vld [vmem:[%s434 + $0x10] sm:$0x3]
      %v438 = vmul.f32 %v435, %v315
      %v439 = vmul.f32 %v436, %v315
      %v440 = vadd.f32 %v432, %v438
      %v441 = vadd.f32 %v433, %v439
      %v442 = vmul.f32 %v435, %v323
      %v443 = vmul.f32 %v436, %v323
      %v444 = vmul.f32 %v437, %v323
      %v448 = vrot.slane %v442, 1
      %v449 = vrot.slane %v443, 1
      %v450 = vsel %vm228, %v448, %v449
      %v451 = vrot.slane %v444, 1
      %v452 = vsel %vm228, %v449, %v451
      %v455 = vadd.f32 %v440, %v450
      %v456 = vadd.f32 %v441, %v452
      %v457 = vmul.f32 %v435, %v342
      %v458 = vmul.f32 %v436, %v342
      %v459 = vmul.f32 %v437, %v342
      %v463 = vrot.slane %v457, 2
      %v464 = vrot.slane %v458, 2
      %v465 = vsel %vm248, %v463, %v464
      %v466 = vrot.slane %v459, 2
      %v467 = vsel %vm248, %v464, %v466
      %v470 = vadd.f32 %v455, %v465
      %v471 = vadd.f32 %v456, %v467
      %472 = vst [vmem:[#allocation2 + $0x10] sm:$0xff] %v470
      %473 = vst [vmem:[#allocation2 + $0x18] sm:$0xff] %v471
      %v474 = vld [vmem:[%s308] sm:$0xff]
      %v475 = vld [vmem:[%s308 + $0x8] sm:$0xff]
      %v476 = vld [vmem:[%s308 + $0x10] sm:$0x3]
      %v477 = vmul.f32 %v474, %v213
      %v478 = vmul.f32 %v475, %v213
      %v479 = vadd.f32 %v477, 0.0
      %v480 = vadd.f32 %v478, 0.0
      %v481 = vmul.f32 %v474, %v221
      %v482 = vmul.f32 %v475, %v221
      %v483 = vmul.f32 %v476, %v221
      %v487 = vrot.slane %v481, 1
      %v488 = vrot.slane %v482, 1
      %v489 = vsel %vm228, %v487, %v488
      %v490 = vrot.slane %v483, 1
      %v491 = vsel %vm228, %v488, %v490
      %v494 = vadd.f32 %v479, %v489
      %v495 = vadd.f32 %v480, %v491
      %v496 = vmul.f32 %v474, %v241
      %v497 = vmul.f32 %v475, %v241
      %v498 = vmul.f32 %v476, %v241
      %v502 = vrot.slane %v496, 2
      %v503 = vrot.slane %v497, 2
      %v504 = vsel %vm248, %v502, %v503
      %v505 = vrot.slane %v498, 2
      %v506 = vsel %vm248, %v503, %v505
      %v509 = vadd.f32 %v494, %v504
      %v510 = vadd.f32 %v495, %v506
      %v511 = vld [vmem:[%s434] sm:$0xff]
      %v512 = vld [vmem:[%s434 + $0x8] sm:$0xff]
      %v513 = vld [vmem:[%s434 + $0x10] sm:$0x3]
      %v514 = vmul.f32 %v511, %v265
      %v515 = vmul.f32 %v512, %v265
      %v516 = vadd.f32 %v509, %v514
      %v517 = vadd.f32 %v510, %v515
      %v518 = vmul.f32 %v511, %v273
      %v519 = vmul.f32 %v512, %v273
      %v520 = vmul.f32 %v513, %v273
      %v524 = vrot.slane %v518, 1
      %v525 = vrot.slane %v519, 1
      %v526 = vsel %vm228, %v524, %v525
      %v527 = vrot.slane %v520, 1
      %v528 = vsel %vm228, %v525, %v527
      %v531 = vadd.f32 %v516, %v526
      %v532 = vadd.f32 %v517, %v528
      %v533 = vmul.f32 %v511, %v292
      %v534 = vmul.f32 %v512, %v292
      %v535 = vmul.f32 %v513, %v292
      %v539 = vrot.slane %v533, 2
      %v540 = vrot.slane %v534, 2
      %v541 = vsel %vm248, %v539, %v540
      %v542 = vrot.slane %v535, 2
      %v543 = vsel %vm248, %v540, %v542
      %v546 = vadd.f32 %v531, %v541
      %v547 = vadd.f32 %v532, %v543
      %s548 = scalar_lea.vmem %s192, 96
      %v549 = vld [vmem:[%s548] sm:$0xff]
      %v550 = vld [vmem:[%s548 + $0x8] sm:$0xff]
      %v551 = vld [vmem:[%s548 + $0x10] sm:$0x3]
      %v552 = vmul.f32 %v549, %v315
      %v553 = vmul.f32 %v550, %v315
      %v554 = vadd.f32 %v546, %v552
      %v555 = vadd.f32 %v547, %v553
      %v556 = vmul.f32 %v549, %v323
      %v557 = vmul.f32 %v550, %v323
      %v558 = vmul.f32 %v551, %v323
      %v562 = vrot.slane %v556, 1
      %v563 = vrot.slane %v557, 1
      %v564 = vsel %vm228, %v562, %v563
      %v565 = vrot.slane %v558, 1
      %v566 = vsel %vm228, %v563, %v565
      %v569 = vadd.f32 %v554, %v564
      %v570 = vadd.f32 %v555, %v566
      %v571 = vmul.f32 %v549, %v342
      %v572 = vmul.f32 %v550, %v342
      %v573 = vmul.f32 %v551, %v342
      %v577 = vrot.slane %v571, 2
      %v578 = vrot.slane %v572, 2
      %v579 = vsel %vm248, %v577, %v578
      %v580 = vrot.slane %v573, 2
      %v581 = vsel %vm248, %v578, %v580
      %v584 = vadd.f32 %v569, %v579
      %v585 = vadd.f32 %v570, %v581
      %586 = vst [vmem:[#allocation2 + $0x20] sm:$0xff] %v584
      %587 = vst [vmem:[#allocation2 + $0x28] sm:$0xff] %v585
      %v588 = vld [vmem:[%s434] sm:$0xff]
      %v589 = vld [vmem:[%s434 + $0x8] sm:$0xff]
      %v590 = vld [vmem:[%s434 + $0x10] sm:$0x3]
      %v591 = vmul.f32 %v588, %v213
      %v592 = vmul.f32 %v589, %v213
      %v593 = vadd.f32 %v591, 0.0
      %v594 = vadd.f32 %v592, 0.0
      %v595 = vmul.f32 %v588, %v221
      %v596 = vmul.f32 %v589, %v221
      %v597 = vmul.f32 %v590, %v221
      %v601 = vrot.slane %v595, 1
      %v602 = vrot.slane %v596, 1
      %v603 = vsel %vm228, %v601, %v602
      %v604 = vrot.slane %v597, 1
      %v605 = vsel %vm228, %v602, %v604
      %v608 = vadd.f32 %v593, %v603
      %v609 = vadd.f32 %v594, %v605
      %v610 = vmul.f32 %v588, %v241
      %v611 = vmul.f32 %v589, %v241
      %v612 = vmul.f32 %v590, %v241
      %v616 = vrot.slane %v610, 2
      %v617 = vrot.slane %v611, 2
      %v618 = vsel %vm248, %v616, %v617
      %v619 = vrot.slane %v612, 2
      %v620 = vsel %vm248, %v617, %v619
      %v623 = vadd.f32 %v608, %v618
      %v624 = vadd.f32 %v609, %v620
      %v625 = vld [vmem:[%s548] sm:$0xff]
      %v626 = vld [vmem:[%s548 + $0x8] sm:$0xff]
      %v627 = vld [vmem:[%s548 + $0x10] sm:$0x3]
      %v628 = vmul.f32 %v625, %v265
      %v629 = vmul.f32 %v626, %v265
      %v630 = vadd.f32 %v623, %v628
      %v631 = vadd.f32 %v624, %v629
      %v632 = vmul.f32 %v625, %v273
      %v633 = vmul.f32 %v626, %v273
      %v634 = vmul.f32 %v627, %v273
      %v638 = vrot.slane %v632, 1
      %v639 = vrot.slane %v633, 1
      %v640 = vsel %vm228, %v638, %v639
      %v641 = vrot.slane %v634, 1
      %v642 = vsel %vm228, %v639, %v641
      %v645 = vadd.f32 %v630, %v640
      %v646 = vadd.f32 %v631, %v642
      %v647 = vmul.f32 %v625, %v292
      %v648 = vmul.f32 %v626, %v292
      %v649 = vmul.f32 %v627, %v292
      %v653 = vrot.slane %v647, 2
      %v654 = vrot.slane %v648, 2
      %v655 = vsel %vm248, %v653, %v654
      %v656 = vrot.slane %v649, 2
      %v657 = vsel %vm248, %v654, %v656
      %v660 = vadd.f32 %v645, %v655
      %v661 = vadd.f32 %v646, %v657
      %s662 = scalar_lea.vmem %s192, 120
      %v663 = vld [vmem:[%s662] sm:$0xff]
      %v664 = vld [vmem:[%s662 + $0x8] sm:$0xff]
      %v665 = vld [vmem:[%s662 + $0x10] sm:$0x3]
      %v666 = vmul.f32 %v663, %v315
      %v667 = vmul.f32 %v664, %v315
      %v668 = vadd.f32 %v660, %v666
      %v669 = vadd.f32 %v661, %v667
      %v670 = vmul.f32 %v663, %v323
      %v671 = vmul.f32 %v664, %v323
      %v672 = vmul.f32 %v665, %v323
      %v676 = vrot.slane %v670, 1
      %v677 = vrot.slane %v671, 1
      %v678 = vsel %vm228, %v676, %v677
      %v679 = vrot.slane %v672, 1
      %v680 = vsel %vm228, %v677, %v679
      %v683 = vadd.f32 %v668, %v678
      %v684 = vadd.f32 %v669, %v680
      %v685 = vmul.f32 %v663, %v342
      %v686 = vmul.f32 %v664, %v342
      %v687 = vmul.f32 %v665, %v342
      %v691 = vrot.slane %v685, 2
      %v692 = vrot.slane %v686, 2
      %v693 = vsel %vm248, %v691, %v692
      %v694 = vrot.slane %v687, 2
      %v695 = vsel %vm248, %v692, %v694
      %v698 = vadd.f32 %v683, %v693
      %v699 = vadd.f32 %v684, %v695
      %700 = vst [vmem:[#allocation2 + $0x30] sm:$0xff] %v698
      %701 = vst [vmem:[#allocation2 + $0x38] sm:$0xff] %v699
      %v702 = vld [vmem:[%s548] sm:$0xff]
      %v703 = vld [vmem:[%s548 + $0x8] sm:$0xff]
      %v704 = vld [vmem:[%s548 + $0x10] sm:$0x3]
      %v705 = vmul.f32 %v702, %v213
      %v706 = vmul.f32 %v703, %v213
      %v707 = vadd.f32 %v705, 0.0
      %v708 = vadd.f32 %v706, 0.0
      %v709 = vmul.f32 %v702, %v221
      %v710 = vmul.f32 %v703, %v221
      %v711 = vmul.f32 %v704, %v221
      %v715 = vrot.slane %v709, 1
      %v716 = vrot.slane %v710, 1
      %v717 = vsel %vm228, %v715, %v716
      %v718 = vrot.slane %v711, 1
      %v719 = vsel %vm228, %v716, %v718
      %v722 = vadd.f32 %v707, %v717
      %v723 = vadd.f32 %v708, %v719
      %v724 = vmul.f32 %v702, %v241
      %v725 = vmul.f32 %v703, %v241
      %v726 = vmul.f32 %v704, %v241
      %v730 = vrot.slane %v724, 2
      %v731 = vrot.slane %v725, 2
      %v732 = vsel %vm248, %v730, %v731
      %v733 = vrot.slane %v726, 2
      %v734 = vsel %vm248, %v731, %v733
      %v737 = vadd.f32 %v722, %v732
      %v738 = vadd.f32 %v723, %v734
      %v739 = vld [vmem:[%s662] sm:$0xff]
      %v740 = vld [vmem:[%s662 + $0x8] sm:$0xff]
      %v741 = vld [vmem:[%s662 + $0x10] sm:$0x3]
      %v742 = vmul.f32 %v739, %v265
      %v743 = vmul.f32 %v740, %v265
      %v744 = vadd.f32 %v737, %v742
      %v745 = vadd.f32 %v738, %v743
      %v746 = vmul.f32 %v739, %v273
      %v747 = vmul.f32 %v740, %v273
      %v748 = vmul.f32 %v741, %v273
      %v752 = vrot.slane %v746, 1
      %v753 = vrot.slane %v747, 1
      %v754 = vsel %vm228, %v752, %v753
      %v755 = vrot.slane %v748, 1
      %v756 = vsel %vm228, %v753, %v755
      %v759 = vadd.f32 %v744, %v754
      %v760 = vadd.f32 %v745, %v756
      %v761 = vmul.f32 %v739, %v292
      %v762 = vmul.f32 %v740, %v292
      %v763 = vmul.f32 %v741, %v292
      %v767 = vrot.slane %v761, 2
      %v768 = vrot.slane %v762, 2
      %v769 = vsel %vm248, %v767, %v768
      %v770 = vrot.slane %v763, 2
      %v771 = vsel %vm248, %v768, %v770
      %v774 = vadd.f32 %v759, %v769
      %v775 = vadd.f32 %v760, %v771
      %s776 = scalar_lea.vmem %s192, 144
      %v777 = vld [vmem:[%s776] sm:$0xff]
      %v778 = vld [vmem:[%s776 + $0x8] sm:$0xff]
      %v779 = vld [vmem:[%s776 + $0x10] sm:$0x3]
      %v780 = vmul.f32 %v777, %v315
      %v781 = vmul.f32 %v778, %v315
      %v782 = vadd.f32 %v774, %v780
      %v783 = vadd.f32 %v775, %v781
      %v784 = vmul.f32 %v777, %v323
      %v785 = vmul.f32 %v778, %v323
      %v786 = vmul.f32 %v779, %v323
      %v790 = vrot.slane %v784, 1
      %v791 = vrot.slane %v785, 1
      %v792 = vsel %vm228, %v790, %v791
      %v793 = vrot.slane %v786, 1
      %v794 = vsel %vm228, %v791, %v793
      %v797 = vadd.f32 %v782, %v792
      %v798 = vadd.f32 %v783, %v794
      %v799 = vmul.f32 %v777, %v342
      %v800 = vmul.f32 %v778, %v342
      %v801 = vmul.f32 %v779, %v342
      %v805 = vrot.slane %v799, 2
      %v806 = vrot.slane %v800, 2
      %v807 = vsel %vm248, %v805, %v806
      %v808 = vrot.slane %v801, 2
      %v809 = vsel %vm248, %v806, %v808
      %v812 = vadd.f32 %v797, %v807
      %v813 = vadd.f32 %v798, %v809
      %814 = vst [vmem:[#allocation2 + $0x40] sm:$0xff] %v812
      %815 = vst [vmem:[#allocation2 + $0x48] sm:$0xff] %v813
      %v816 = vld [vmem:[%s662] sm:$0xff]
      %v817 = vld [vmem:[%s662 + $0x8] sm:$0xff]
      %v818 = vld [vmem:[%s662 + $0x10] sm:$0x3]
      %v819 = vmul.f32 %v816, %v213
      %v820 = vmul.f32 %v817, %v213
      %v821 = vadd.f32 %v819, 0.0
      %v822 = vadd.f32 %v820, 0.0
      %v823 = vmul.f32 %v816, %v221
      %v824 = vmul.f32 %v817, %v221
      %v825 = vmul.f32 %v818, %v221
      %v829 = vrot.slane %v823, 1
      %v830 = vrot.slane %v824, 1
      %v831 = vsel %vm228, %v829, %v830
      %v832 = vrot.slane %v825, 1
      %v833 = vsel %vm228, %v830, %v832
      %v836 = vadd.f32 %v821, %v831
      %v837 = vadd.f32 %v822, %v833
      %v838 = vmul.f32 %v816, %v241
      %v839 = vmul.f32 %v817, %v241
      %v840 = vmul.f32 %v818, %v241
      %v844 = vrot.slane %v838, 2
      %v845 = vrot.slane %v839, 2
      %v846 = vsel %vm248, %v844, %v845
      %v847 = vrot.slane %v840, 2
      %v848 = vsel %vm248, %v845, %v847
      %v851 = vadd.f32 %v836, %v846
      %v852 = vadd.f32 %v837, %v848
      %v853 = vld [vmem:[%s776] sm:$0xff]
      %v854 = vld [vmem:[%s776 + $0x8] sm:$0xff]
      %v855 = vld [vmem:[%s776 + $0x10] sm:$0x3]
      %v856 = vmul.f32 %v853, %v265
      %v857 = vmul.f32 %v854, %v265
      %v858 = vadd.f32 %v851, %v856
      %v859 = vadd.f32 %v852, %v857
      %v860 = vmul.f32 %v853, %v273
      %v861 = vmul.f32 %v854, %v273
      %v862 = vmul.f32 %v855, %v273
      %v866 = vrot.slane %v860, 1
      %v867 = vrot.slane %v861, 1
      %v868 = vsel %vm228, %v866, %v867
      %v869 = vrot.slane %v862, 1
      %v870 = vsel %vm228, %v867, %v869
      %v873 = vadd.f32 %v858, %v868
      %v874 = vadd.f32 %v859, %v870
      %v875 = vmul.f32 %v853, %v292
      %v876 = vmul.f32 %v854, %v292
      %v877 = vmul.f32 %v855, %v292
      %v881 = vrot.slane %v875, 2
      %v882 = vrot.slane %v876, 2
      %v883 = vsel %vm248, %v881, %v882
      %v884 = vrot.slane %v877, 2
      %v885 = vsel %vm248, %v882, %v884
      %v888 = vadd.f32 %v873, %v883
      %v889 = vadd.f32 %v874, %v885
      %s890 = scalar_lea.vmem %s192, 168
      %v891 = vld [vmem:[%s890] sm:$0xff]
      %v892 = vld [vmem:[%s890 + $0x8] sm:$0xff]
      %v893 = vld [vmem:[%s890 + $0x10] sm:$0x3]
      %v894 = vmul.f32 %v891, %v315
      %v895 = vmul.f32 %v892, %v315
      %v896 = vadd.f32 %v888, %v894
      %v897 = vadd.f32 %v889, %v895
      %v898 = vmul.f32 %v891, %v323
      %v899 = vmul.f32 %v892, %v323
      %v900 = vmul.f32 %v893, %v323
      %v904 = vrot.slane %v898, 1
      %v905 = vrot.slane %v899, 1
      %v906 = vsel %vm228, %v904, %v905
      %v907 = vrot.slane %v900, 1
      %v908 = vsel %vm228, %v905, %v907
      %v911 = vadd.f32 %v896, %v906
      %v912 = vadd.f32 %v897, %v908
      %v913 = vmul.f32 %v891, %v342
      %v914 = vmul.f32 %v892, %v342
      %v915 = vmul.f32 %v893, %v342
      %v919 = vrot.slane %v913, 2
      %v920 = vrot.slane %v914, 2
      %v921 = vsel %vm248, %v919, %v920
      %v922 = vrot.slane %v915, 2
      %v923 = vsel %vm248, %v920, %v922
      %v926 = vadd.f32 %v911, %v921
      %v927 = vadd.f32 %v912, %v923
      %928 = vst [vmem:[#allocation2 + $0x50] sm:$0xff] %v926
      %929 = vst [vmem:[#allocation2 + $0x58] sm:$0xff] %v927
      %v930 = vld [vmem:[%s776] sm:$0xff]
      %v931 = vld [vmem:[%s776 + $0x8] sm:$0xff]
      %v932 = vld [vmem:[%s776 + $0x10] sm:$0x3]
      %v933 = vmul.f32 %v930, %v213
      %v934 = vmul.f32 %v931, %v213
      %v935 = vadd.f32 %v933, 0.0
      %v936 = vadd.f32 %v934, 0.0
      %v937 = vmul.f32 %v930, %v221
      %v938 = vmul.f32 %v931, %v221
      %v939 = vmul.f32 %v932, %v221
      %v943 = vrot.slane %v937, 1
      %v944 = vrot.slane %v938, 1
      %v945 = vsel %vm228, %v943, %v944
      %v946 = vrot.slane %v939, 1
      %v947 = vsel %vm228, %v944, %v946
      %v950 = vadd.f32 %v935, %v945
      %v951 = vadd.f32 %v936, %v947
      %v952 = vmul.f32 %v930, %v241
      %v953 = vmul.f32 %v931, %v241
      %v954 = vmul.f32 %v932, %v241
      %v958 = vrot.slane %v952, 2
      %v959 = vrot.slane %v953, 2
      %v960 = vsel %vm248, %v958, %v959
      %v961 = vrot.slane %v954, 2
      %v962 = vsel %vm248, %v959, %v961
      %v965 = vadd.f32 %v950, %v960
      %v966 = vadd.f32 %v951, %v962
      %v967 = vld [vmem:[%s890] sm:$0xff]
      %v968 = vld [vmem:[%s890 + $0x8] sm:$0xff]
      %v969 = vld [vmem:[%s890 + $0x10] sm:$0x3]
      %v970 = vmul.f32 %v967, %v265
      %v971 = vmul.f32 %v968, %v265
      %v972 = vadd.f32 %v965, %v970
      %v973 = vadd.f32 %v966, %v971
      %v974 = vmul.f32 %v967, %v273
      %v975 = vmul.f32 %v968, %v273
      %v976 = vmul.f32 %v969, %v273
      %v980 = vrot.slane %v974, 1
      %v981 = vrot.slane %v975, 1
      %v982 = vsel %vm228, %v980, %v981
      %v983 = vrot.slane %v976, 1
      %v984 = vsel %vm228, %v981, %v983
      %v987 = vadd.f32 %v972, %v982
      %v988 = vadd.f32 %v973, %v984
      %v989 = vmul.f32 %v967, %v292
      %v990 = vmul.f32 %v968, %v292
      %v991 = vmul.f32 %v969, %v292
      %v995 = vrot.slane %v989, 2
      %v996 = vrot.slane %v990, 2
      %v997 = vsel %vm248, %v995, %v996
      %v998 = vrot.slane %v991, 2
      %v999 = vsel %vm248, %v996, %v998
      %v1002 = vadd.f32 %v987, %v997
      %v1003 = vadd.f32 %v988, %v999
      %s1004 = scalar_lea.vmem %s192, 192
      %v1005 = vld [vmem:[%s1004] sm:$0xff]
      %v1006 = vld [vmem:[%s1004 + $0x8] sm:$0xff]
      %v1007 = vld [vmem:[%s1004 + $0x10] sm:$0x3]
      %v1008 = vmul.f32 %v1005, %v315
      %v1009 = vmul.f32 %v1006, %v315
      %v1010 = vadd.f32 %v1002, %v1008
      %v1011 = vadd.f32 %v1003, %v1009
      %v1012 = vmul.f32 %v1005, %v323
      %v1013 = vmul.f32 %v1006, %v323
      %v1014 = vmul.f32 %v1007, %v323
      %v1018 = vrot.slane %v1012, 1
      %v1019 = vrot.slane %v1013, 1
      %v1020 = vsel %vm228, %v1018, %v1019
      %v1021 = vrot.slane %v1014, 1
      %v1022 = vsel %vm228, %v1019, %v1021
      %v1025 = vadd.f32 %v1010, %v1020
      %v1026 = vadd.f32 %v1011, %v1022
      %v1027 = vmul.f32 %v1005, %v342
      %v1028 = vmul.f32 %v1006, %v342
      %v1029 = vmul.f32 %v1007, %v342
      %v1033 = vrot.slane %v1027, 2
      %v1034 = vrot.slane %v1028, 2
      %v1035 = vsel %vm248, %v1033, %v1034
      %v1036 = vrot.slane %v1029, 2
      %v1037 = vsel %vm248, %v1034, %v1036
      %v1040 = vadd.f32 %v1025, %v1035
      %v1041 = vadd.f32 %v1026, %v1037
      %1042 = vst [vmem:[#allocation2 + $0x60] sm:$0xff] %v1040
      %1043 = vst [vmem:[#allocation2 + $0x68] sm:$0xff] %v1041
      %v1044 = vld [vmem:[%s890] sm:$0xff]
      %v1045 = vld [vmem:[%s890 + $0x8] sm:$0xff]
      %v1046 = vld [vmem:[%s890 + $0x10] sm:$0x3]
      %v1047 = vmul.f32 %v1044, %v213
      %v1048 = vmul.f32 %v1045, %v213
      %v1049 = vadd.f32 %v1047, 0.0
      %v1050 = vadd.f32 %v1048, 0.0
      %v1051 = vmul.f32 %v1044, %v221
      %v1052 = vmul.f32 %v1045, %v221
      %v1053 = vmul.f32 %v1046, %v221
      %v1057 = vrot.slane %v1051, 1
      %v1058 = vrot.slane %v1052, 1
      %v1059 = vsel %vm228, %v1057, %v1058
      %v1060 = vrot.slane %v1053, 1
      %v1061 = vsel %vm228, %v1058, %v1060
      %v1064 = vadd.f32 %v1049, %v1059
      %v1065 = vadd.f32 %v1050, %v1061
      %v1066 = vmul.f32 %v1044, %v241
      %v1067 = vmul.f32 %v1045, %v241
      %v1068 = vmul.f32 %v1046, %v241
      %v1072 = vrot.slane %v1066, 2
      %v1073 = vrot.slane %v1067, 2
      %v1074 = vsel %vm248, %v1072, %v1073
      %v1075 = vrot.slane %v1068, 2
      %v1076 = vsel %vm248, %v1073, %v1075
      %v1079 = vadd.f32 %v1064, %v1074
      %v1080 = vadd.f32 %v1065, %v1076
      %v1081 = vld [vmem:[%s1004] sm:$0xff]
      %v1082 = vld [vmem:[%s1004 + $0x8] sm:$0xff]
      %v1083 = vld [vmem:[%s1004 + $0x10] sm:$0x3]
      %v1084 = vmul.f32 %v1081, %v265
      %v1085 = vmul.f32 %v1082, %v265
      %v1086 = vadd.f32 %v1079, %v1084
      %v1087 = vadd.f32 %v1080, %v1085
      %v1088 = vmul.f32 %v1081, %v273
      %v1089 = vmul.f32 %v1082, %v273
      %v1090 = vmul.f32 %v1083, %v273
      %v1094 = vrot.slane %v1088, 1
      %v1095 = vrot.slane %v1089, 1
      %v1096 = vsel %vm228, %v1094, %v1095
      %v1097 = vrot.slane %v1090, 1
      %v1098 = vsel %vm228, %v1095, %v1097
      %v1101 = vadd.f32 %v1086, %v1096
      %v1102 = vadd.f32 %v1087, %v1098
      %v1103 = vmul.f32 %v1081, %v292
      %v1104 = vmul.f32 %v1082, %v292
      %v1105 = vmul.f32 %v1083, %v292
      %v1109 = vrot.slane %v1103, 2
      %v1110 = vrot.slane %v1104, 2
      %v1111 = vsel %vm248, %v1109, %v1110
      %v1112 = vrot.slane %v1105, 2
      %v1113 = vsel %vm248, %v1110, %v1112
      %v1116 = vadd.f32 %v1101, %v1111
      %v1117 = vadd.f32 %v1102, %v1113
      %s1118 = scalar_lea.vmem %s192, 216
      %v1119 = vld [vmem:[%s1118] sm:$0xff]
      %v1120 = vld [vmem:[%s1118 + $0x8] sm:$0xff]
      %v1121 = vld [vmem:[%s1118 + $0x10] sm:$0x3]
      %v1122 = vmul.f32 %v1119, %v315
      %v1123 = vmul.f32 %v1120, %v315
      %v1124 = vadd.f32 %v1116, %v1122
      %v1125 = vadd.f32 %v1117, %v1123
      %v1126 = vmul.f32 %v1119, %v323
      %v1127 = vmul.f32 %v1120, %v323
      %v1128 = vmul.f32 %v1121, %v323
      %v1132 = vrot.slane %v1126, 1
      %v1133 = vrot.slane %v1127, 1
      %v1134 = vsel %vm228, %v1132, %v1133
      %v1135 = vrot.slane %v1128, 1
      %v1136 = vsel %vm228, %v1133, %v1135
      %v1139 = vadd.f32 %v1124, %v1134
      %v1140 = vadd.f32 %v1125, %v1136
      %v1141 = vmul.f32 %v1119, %v342
      %v1142 = vmul.f32 %v1120, %v342
      %v1143 = vmul.f32 %v1121, %v342
      %v1147 = vrot.slane %v1141, 2
      %v1148 = vrot.slane %v1142, 2
      %v1149 = vsel %vm248, %v1147, %v1148
      %v1150 = vrot.slane %v1143, 2
      %v1151 = vsel %vm248, %v1148, %v1150
      %v1154 = vadd.f32 %v1139, %v1149
      %v1155 = vadd.f32 %v1140, %v1151
      %1156 = vst [vmem:[#allocation2 + $0x70] sm:$0xff] %v1154
      %1157 = vst [vmem:[#allocation2 + $0x78] sm:$0xff] %v1155
      %v1158 = vld [vmem:[%s1004] sm:$0xff]
      %v1159 = vld [vmem:[%s1004 + $0x8] sm:$0xff]
      %v1160 = vld [vmem:[%s1004 + $0x10] sm:$0x3]
      %v1161 = vmul.f32 %v1158, %v213
      %v1162 = vmul.f32 %v1159, %v213
      %v1163 = vadd.f32 %v1161, 0.0
      %v1164 = vadd.f32 %v1162, 0.0
      %v1165 = vmul.f32 %v1158, %v221
      %v1166 = vmul.f32 %v1159, %v221
      %v1167 = vmul.f32 %v1160, %v221
      %v1171 = vrot.slane %v1165, 1
      %v1172 = vrot.slane %v1166, 1
      %v1173 = vsel %vm228, %v1171, %v1172
      %v1174 = vrot.slane %v1167, 1
      %v1175 = vsel %vm228, %v1172, %v1174
      %v1178 = vadd.f32 %v1163, %v1173
      %v1179 = vadd.f32 %v1164, %v1175
      %v1180 = vmul.f32 %v1158, %v241
      %v1181 = vmul.f32 %v1159, %v241
      %v1182 = vmul.f32 %v1160, %v241
      %v1186 = vrot.slane %v1180, 2
      %v1187 = vrot.slane %v1181, 2
      %v1188 = vsel %vm248, %v1186, %v1187
      %v1189 = vrot.slane %v1182, 2
      %v1190 = vsel %vm248, %v1187, %v1189
      %v1193 = vadd.f32 %v1178, %v1188
      %v1194 = vadd.f32 %v1179, %v1190
      %v1195 = vld [vmem:[%s1118] sm:$0xff]
      %v1196 = vld [vmem:[%s1118 + $0x8] sm:$0xff]
      %v1197 = vld [vmem:[%s1118 + $0x10] sm:$0x3]
      %v1198 = vmul.f32 %v1195, %v265
      %v1199 = vmul.f32 %v1196, %v265
      %v1200 = vadd.f32 %v1193, %v1198
      %v1201 = vadd.f32 %v1194, %v1199
      %v1202 = vmul.f32 %v1195, %v273
      %v1203 = vmul.f32 %v1196, %v273
      %v1204 = vmul.f32 %v1197, %v273
      %v1208 = vrot.slane %v1202, 1
      %v1209 = vrot.slane %v1203, 1
      %v1210 = vsel %vm228, %v1208, %v1209
      %v1211 = vrot.slane %v1204, 1
      %v1212 = vsel %vm228, %v1209, %v1211
      %v1215 = vadd.f32 %v1200, %v1210
      %v1216 = vadd.f32 %v1201, %v1212
      %v1217 = vmul.f32 %v1195, %v292
      %v1218 = vmul.f32 %v1196, %v292
      %v1219 = vmul.f32 %v1197, %v292
      %v1223 = vrot.slane %v1217, 2
      %v1224 = vrot.slane %v1218, 2
      %v1225 = vsel %vm248, %v1223, %v1224
      %v1226 = vrot.slane %v1219, 2
      %v1227 = vsel %vm248, %v1224, %v1226
      %v1230 = vadd.f32 %v1215, %v1225
      %v1231 = vadd.f32 %v1216, %v1227
      %s1232 = scalar_lea.vmem %s192, 240
      %v1233 = vld [vmem:[%s1232] sm:$0xff]
      %v1234 = vld [vmem:[%s1232 + $0x8] sm:$0xff]
      %v1235 = vld [vmem:[%s1232 + $0x10] sm:$0x3]
      %v1236 = vmul.f32 %v1233, %v315
      %v1237 = vmul.f32 %v1234, %v315
      %v1238 = vadd.f32 %v1230, %v1236
      %v1239 = vadd.f32 %v1231, %v1237
      %v1240 = vmul.f32 %v1233, %v323
      %v1241 = vmul.f32 %v1234, %v323
      %v1242 = vmul.f32 %v1235, %v323
      %v1246 = vrot.slane %v1240, 1
      %v1247 = vrot.slane %v1241, 1
      %v1248 = vsel %vm228, %v1246, %v1247
      %v1249 = vrot.slane %v1242, 1
      %v1250 = vsel %vm228, %v1247, %v1249
      %v1253 = vadd.f32 %v1238, %v1248
      %v1254 = vadd.f32 %v1239, %v1250
      %v1255 = vmul.f32 %v1233, %v342
      %v1256 = vmul.f32 %v1234, %v342
      %v1257 = vmul.f32 %v1235, %v342
      %v1261 = vrot.slane %v1255, 2
      %v1262 = vrot.slane %v1256, 2
      %v1263 = vsel %vm248, %v1261, %v1262
      %v1264 = vrot.slane %v1257, 2
      %v1265 = vsel %vm248, %v1262, %v1264
      %v1268 = vadd.f32 %v1253, %v1263
      %v1269 = vadd.f32 %v1254, %v1265
      %1270 = vst [vmem:[#allocation2 + $0x80] sm:$0xff] %v1268
      %1271 = vst [vmem:[#allocation2 + $0x88] sm:$0xff] %v1269
      %v1272 = vld [vmem:[%s1118] sm:$0xff]
      %v1273 = vld [vmem:[%s1118 + $0x8] sm:$0xff]
      %v1274 = vld [vmem:[%s1118 + $0x10] sm:$0x3]
      %v1275 = vmul.f32 %v1272, %v213
      %v1276 = vmul.f32 %v1273, %v213
      %v1277 = vadd.f32 %v1275, 0.0
      %v1278 = vadd.f32 %v1276, 0.0
      %v1279 = vmul.f32 %v1272, %v221
      %v1280 = vmul.f32 %v1273, %v221
      %v1281 = vmul.f32 %v1274, %v221
      %v1285 = vrot.slane %v1279, 1
      %v1286 = vrot.slane %v1280, 1
      %v1287 = vsel %vm228, %v1285, %v1286
      %v1288 = vrot.slane %v1281, 1
      %v1289 = vsel %vm228, %v1286, %v1288
      %v1292 = vadd.f32 %v1277, %v1287
      %v1293 = vadd.f32 %v1278, %v1289
      %v1294 = vmul.f32 %v1272, %v241
      %v1295 = vmul.f32 %v1273, %v241
      %v1296 = vmul.f32 %v1274, %v241
      %v1300 = vrot.slane %v1294, 2
      %v1301 = vrot.slane %v1295, 2
      %v1302 = vsel %vm248, %v1300, %v1301
      %v1303 = vrot.slane %v1296, 2
      %v1304 = vsel %vm248, %v1301, %v1303
      %v1307 = vadd.f32 %v1292, %v1302
      %v1308 = vadd.f32 %v1293, %v1304
      %v1309 = vld [vmem:[%s1232] sm:$0xff]
      %v1310 = vld [vmem:[%s1232 + $0x8] sm:$0xff]
      %v1311 = vld [vmem:[%s1232 + $0x10] sm:$0x3]
      %v1312 = vmul.f32 %v1309, %v265
      %v1313 = vmul.f32 %v1310, %v265
      %v1314 = vadd.f32 %v1307, %v1312
      %v1315 = vadd.f32 %v1308, %v1313
      %v1316 = vmul.f32 %v1309, %v273
      %v1317 = vmul.f32 %v1310, %v273
      %v1318 = vmul.f32 %v1311, %v273
      %v1322 = vrot.slane %v1316, 1
      %v1323 = vrot.slane %v1317, 1
      %v1324 = vsel %vm228, %v1322, %v1323
      %v1325 = vrot.slane %v1318, 1
      %v1326 = vsel %vm228, %v1323, %v1325
      %v1329 = vadd.f32 %v1314, %v1324
      %v1330 = vadd.f32 %v1315, %v1326
      %v1331 = vmul.f32 %v1309, %v292
      %v1332 = vmul.f32 %v1310, %v292
      %v1333 = vmul.f32 %v1311, %v292
      %v1337 = vrot.slane %v1331, 2
      %v1338 = vrot.slane %v1332, 2
      %v1339 = vsel %vm248, %v1337, %v1338
      %v1340 = vrot.slane %v1333, 2
      %v1341 = vsel %vm248, %v1338, %v1340
      %v1344 = vadd.f32 %v1329, %v1339
      %v1345 = vadd.f32 %v1330, %v1341
      %s1346 = scalar_lea.vmem %s192, 264
      %v1347 = vld [vmem:[%s1346] sm:$0xff]
      %v1348 = vld [vmem:[%s1346 + $0x8] sm:$0xff]
      %v1349 = vld [vmem:[%s1346 + $0x10] sm:$0x3]
      %v1350 = vmul.f32 %v1347, %v315
      %v1351 = vmul.f32 %v1348, %v315
      %v1352 = vadd.f32 %v1344, %v1350
      %v1353 = vadd.f32 %v1345, %v1351
      %v1354 = vmul.f32 %v1347, %v323
      %v1355 = vmul.f32 %v1348, %v323
      %v1356 = vmul.f32 %v1349, %v323
      %v1360 = vrot.slane %v1354, 1
      %v1361 = vrot.slane %v1355, 1
      %v1362 = vsel %vm228, %v1360, %v1361
      %v1363 = vrot.slane %v1356, 1
      %v1364 = vsel %vm228, %v1361, %v1363
      %v1367 = vadd.f32 %v1352, %v1362
      %v1368 = vadd.f32 %v1353, %v1364
      %v1369 = vmul.f32 %v1347, %v342
      %v1370 = vmul.f32 %v1348, %v342
      %v1371 = vmul.f32 %v1349, %v342
      %v1375 = vrot.slane %v1369, 2
      %v1376 = vrot.slane %v1370, 2
      %v1377 = vsel %vm248, %v1375, %v1376
      %v1378 = vrot.slane %v1371, 2
      %v1379 = vsel %vm248, %v1376, %v1378
      %v1382 = vadd.f32 %v1367, %v1377
      %v1383 = vadd.f32 %v1368, %v1379
      %1384 = vst [vmem:[#allocation2 + $0x90] sm:$0xff] %v1382
      %1385 = vst [vmem:[#allocation2 + $0x98] sm:$0xff] %v1383
      %v1386 = vld [vmem:[%s1232] sm:$0xff]
      %v1387 = vld [vmem:[%s1232 + $0x8] sm:$0xff]
      %v1388 = vld [vmem:[%s1232 + $0x10] sm:$0x3]
      %v1389 = vmul.f32 %v1386, %v213
      %v1390 = vmul.f32 %v1387, %v213
      %v1391 = vadd.f32 %v1389, 0.0
      %v1392 = vadd.f32 %v1390, 0.0
      %v1393 = vmul.f32 %v1386, %v221
      %v1394 = vmul.f32 %v1387, %v221
      %v1395 = vmul.f32 %v1388, %v221
      %v1399 = vrot.slane %v1393, 1
      %v1400 = vrot.slane %v1394, 1
      %v1401 = vsel %vm228, %v1399, %v1400
      %v1402 = vrot.slane %v1395, 1
      %v1403 = vsel %vm228, %v1400, %v1402
      %v1406 = vadd.f32 %v1391, %v1401
      %v1407 = vadd.f32 %v1392, %v1403
      %v1408 = vmul.f32 %v1386, %v241
      %v1409 = vmul.f32 %v1387, %v241
      %v1410 = vmul.f32 %v1388, %v241
      %v1414 = vrot.slane %v1408, 2
      %v1415 = vrot.slane %v1409, 2
      %v1416 = vsel %vm248, %v1414, %v1415
      %v1417 = vrot.slane %v1410, 2
      %v1418 = vsel %vm248, %v1415, %v1417
      %v1421 = vadd.f32 %v1406, %v1416
      %v1422 = vadd.f32 %v1407, %v1418
      %v1423 = vld [vmem:[%s1346] sm:$0xff]
      %v1424 = vld [vmem:[%s1346 + $0x8] sm:$0xff]
      %v1425 = vld [vmem:[%s1346 + $0x10] sm:$0x3]
      %v1426 = vmul.f32 %v1423, %v265
      %v1427 = vmul.f32 %v1424, %v265
      %v1428 = vadd.f32 %v1421, %v1426
      %v1429 = vadd.f32 %v1422, %v1427
      %v1430 = vmul.f32 %v1423, %v273
      %v1431 = vmul.f32 %v1424, %v273
      %v1432 = vmul.f32 %v1425, %v273
      %v1436 = vrot.slane %v1430, 1
      %v1437 = vrot.slane %v1431, 1
      %v1438 = vsel %vm228, %v1436, %v1437
      %v1439 = vrot.slane %v1432, 1
      %v1440 = vsel %vm228, %v1437, %v1439
      %v1443 = vadd.f32 %v1428, %v1438
      %v1444 = vadd.f32 %v1429, %v1440
      %v1445 = vmul.f32 %v1423, %v292
      %v1446 = vmul.f32 %v1424, %v292
      %v1447 = vmul.f32 %v1425, %v292
      %v1451 = vrot.slane %v1445, 2
      %v1452 = vrot.slane %v1446, 2
      %v1453 = vsel %vm248, %v1451, %v1452
      %v1454 = vrot.slane %v1447, 2
      %v1455 = vsel %vm248, %v1452, %v1454
      %v1458 = vadd.f32 %v1443, %v1453
      %v1459 = vadd.f32 %v1444, %v1455
      %s1460 = scalar_lea.vmem %s192, 288
      %v1461 = vld [vmem:[%s1460] sm:$0xff]
      %v1462 = vld [vmem:[%s1460 + $0x8] sm:$0xff]
      %v1463 = vld [vmem:[%s1460 + $0x10] sm:$0x3]
      %v1464 = vmul.f32 %v1461, %v315
      %v1465 = vmul.f32 %v1462, %v315
      %v1466 = vadd.f32 %v1458, %v1464
      %v1467 = vadd.f32 %v1459, %v1465
      %v1468 = vmul.f32 %v1461, %v323
      %v1469 = vmul.f32 %v1462, %v323
      %v1470 = vmul.f32 %v1463, %v323
      %v1474 = vrot.slane %v1468, 1
      %v1475 = vrot.slane %v1469, 1
      %v1476 = vsel %vm228, %v1474, %v1475
      %v1477 = vrot.slane %v1470, 1
      %v1478 = vsel %vm228, %v1475, %v1477
      %v1481 = vadd.f32 %v1466, %v1476
      %v1482 = vadd.f32 %v1467, %v1478
      %v1483 = vmul.f32 %v1461, %v342
      %v1484 = vmul.f32 %v1462, %v342
      %v1485 = vmul.f32 %v1463, %v342
      %v1489 = vrot.slane %v1483, 2
      %v1490 = vrot.slane %v1484, 2
      %v1491 = vsel %vm248, %v1489, %v1490
      %v1492 = vrot.slane %v1485, 2
      %v1493 = vsel %vm248, %v1490, %v1492
      %v1496 = vadd.f32 %v1481, %v1491
      %v1497 = vadd.f32 %v1482, %v1493
      %1498 = vst [vmem:[#allocation2 + $0xa0] sm:$0xff] %v1496
      %1499 = vst [vmem:[#allocation2 + $0xa8] sm:$0xff] %v1497
      %v1500 = vld [vmem:[%s1346] sm:$0xff]
      %v1501 = vld [vmem:[%s1346 + $0x8] sm:$0xff]
      %v1502 = vld [vmem:[%s1346 + $0x10] sm:$0x3]
      %v1503 = vmul.f32 %v1500, %v213
      %v1504 = vmul.f32 %v1501, %v213
      %v1505 = vadd.f32 %v1503, 0.0
      %v1506 = vadd.f32 %v1504, 0.0
      %v1507 = vmul.f32 %v1500, %v221
      %v1508 = vmul.f32 %v1501, %v221
      %v1509 = vmul.f32 %v1502, %v221
      %v1513 = vrot.slane %v1507, 1
      %v1514 = vrot.slane %v1508, 1
      %v1515 = vsel %vm228, %v1513, %v1514
      %v1516 = vrot.slane %v1509, 1
      %v1517 = vsel %vm228, %v1514, %v1516
      %v1520 = vadd.f32 %v1505, %v1515
      %v1521 = vadd.f32 %v1506, %v1517
      %v1522 = vmul.f32 %v1500, %v241
      %v1523 = vmul.f32 %v1501, %v241
      %v1524 = vmul.f32 %v1502, %v241
      %v1528 = vrot.slane %v1522, 2
      %v1529 = vrot.slane %v1523, 2
      %v1530 = vsel %vm248, %v1528, %v1529
      %v1531 = vrot.slane %v1524, 2
      %v1532 = vsel %vm248, %v1529, %v1531
      %v1535 = vadd.f32 %v1520, %v1530
      %v1536 = vadd.f32 %v1521, %v1532
      %v1537 = vld [vmem:[%s1460] sm:$0xff]
      %v1538 = vld [vmem:[%s1460 + $0x8] sm:$0xff]
      %v1539 = vld [vmem:[%s1460 + $0x10] sm:$0x3]
      %v1540 = vmul.f32 %v1537, %v265
      %v1541 = vmul.f32 %v1538, %v265
      %v1542 = vadd.f32 %v1535, %v1540
      %v1543 = vadd.f32 %v1536, %v1541
      %v1544 = vmul.f32 %v1537, %v273
      %v1545 = vmul.f32 %v1538, %v273
      %v1546 = vmul.f32 %v1539, %v273
      %v1550 = vrot.slane %v1544, 1
      %v1551 = vrot.slane %v1545, 1
      %v1552 = vsel %vm228, %v1550, %v1551
      %v1553 = vrot.slane %v1546, 1
      %v1554 = vsel %vm228, %v1551, %v1553
      %v1557 = vadd.f32 %v1542, %v1552
      %v1558 = vadd.f32 %v1543, %v1554
      %v1559 = vmul.f32 %v1537, %v292
      %v1560 = vmul.f32 %v1538, %v292
      %v1561 = vmul.f32 %v1539, %v292
      %v1565 = vrot.slane %v1559, 2
      %v1566 = vrot.slane %v1560, 2
      %v1567 = vsel %vm248, %v1565, %v1566
      %v1568 = vrot.slane %v1561, 2
      %v1569 = vsel %vm248, %v1566, %v1568
      %v1572 = vadd.f32 %v1557, %v1567
      %v1573 = vadd.f32 %v1558, %v1569
      %s1574 = scalar_lea.vmem %s192, 312
      %v1575 = vld [vmem:[%s1574] sm:$0xff]
      %v1576 = vld [vmem:[%s1574 + $0x8] sm:$0xff]
      %v1577 = vld [vmem:[%s1574 + $0x10] sm:$0x3]
      %v1578 = vmul.f32 %v1575, %v315
      %v1579 = vmul.f32 %v1576, %v315
      %v1580 = vadd.f32 %v1572, %v1578
      %v1581 = vadd.f32 %v1573, %v1579
      %v1582 = vmul.f32 %v1575, %v323
      %v1583 = vmul.f32 %v1576, %v323
      %v1584 = vmul.f32 %v1577, %v323
      %v1588 = vrot.slane %v1582, 1
      %v1589 = vrot.slane %v1583, 1
      %v1590 = vsel %vm228, %v1588, %v1589
      %v1591 = vrot.slane %v1584, 1
      %v1592 = vsel %vm228, %v1589, %v1591
      %v1595 = vadd.f32 %v1580, %v1590
      %v1596 = vadd.f32 %v1581, %v1592
      %v1597 = vmul.f32 %v1575, %v342
      %v1598 = vmul.f32 %v1576, %v342
      %v1599 = vmul.f32 %v1577, %v342
      %v1603 = vrot.slane %v1597, 2
      %v1604 = vrot.slane %v1598, 2
      %v1605 = vsel %vm248, %v1603, %v1604
      %v1606 = vrot.slane %v1599, 2
      %v1607 = vsel %vm248, %v1604, %v1606
      %v1610 = vadd.f32 %v1595, %v1605
      %v1611 = vadd.f32 %v1596, %v1607
      %1612 = vst [vmem:[#allocation2 + $0xb0] sm:$0xff] %v1610
      %1613 = vst [vmem:[#allocation2 + $0xb8] sm:$0xff] %v1611
      %v1614 = vld [vmem:[%s1460] sm:$0xff]
      %v1615 = vld [vmem:[%s1460 + $0x8] sm:$0xff]
      %v1616 = vld [vmem:[%s1460 + $0x10] sm:$0x3]
      %v1617 = vmul.f32 %v1614, %v213
      %v1618 = vmul.f32 %v1615, %v213
      %v1619 = vadd.f32 %v1617, 0.0
      %v1620 = vadd.f32 %v1618, 0.0
      %v1621 = vmul.f32 %v1614, %v221
      %v1622 = vmul.f32 %v1615, %v221
      %v1623 = vmul.f32 %v1616, %v221
      %v1627 = vrot.slane %v1621, 1
      %v1628 = vrot.slane %v1622, 1
      %v1629 = vsel %vm228, %v1627, %v1628
      %v1630 = vrot.slane %v1623, 1
      %v1631 = vsel %vm228, %v1628, %v1630
      %v1634 = vadd.f32 %v1619, %v1629
      %v1635 = vadd.f32 %v1620, %v1631
      %v1636 = vmul.f32 %v1614, %v241
      %v1637 = vmul.f32 %v1615, %v241
      %v1638 = vmul.f32 %v1616, %v241
      %v1642 = vrot.slane %v1636, 2
      %v1643 = vrot.slane %v1637, 2
      %v1644 = vsel %vm248, %v1642, %v1643
      %v1645 = vrot.slane %v1638, 2
      %v1646 = vsel %vm248, %v1643, %v1645
      %v1649 = vadd.f32 %v1634, %v1644
      %v1650 = vadd.f32 %v1635, %v1646
      %v1651 = vld [vmem:[%s1574] sm:$0xff]
      %v1652 = vld [vmem:[%s1574 + $0x8] sm:$0xff]
      %v1653 = vld [vmem:[%s1574 + $0x10] sm:$0x3]
      %v1654 = vmul.f32 %v1651, %v265
      %v1655 = vmul.f32 %v1652, %v265
      %v1656 = vadd.f32 %v1649, %v1654
      %v1657 = vadd.f32 %v1650, %v1655
      %v1658 = vmul.f32 %v1651, %v273
      %v1659 = vmul.f32 %v1652, %v273
      %v1660 = vmul.f32 %v1653, %v273
      %v1664 = vrot.slane %v1658, 1
      %v1665 = vrot.slane %v1659, 1
      %v1666 = vsel %vm228, %v1664, %v1665
      %v1667 = vrot.slane %v1660, 1
      %v1668 = vsel %vm228, %v1665, %v1667
      %v1671 = vadd.f32 %v1656, %v1666
      %v1672 = vadd.f32 %v1657, %v1668
      %v1673 = vmul.f32 %v1651, %v292
      %v1674 = vmul.f32 %v1652, %v292
      %v1675 = vmul.f32 %v1653, %v292
      %v1679 = vrot.slane %v1673, 2
      %v1680 = vrot.slane %v1674, 2
      %v1681 = vsel %vm248, %v1679, %v1680
      %v1682 = vrot.slane %v1675, 2
      %v1683 = vsel %vm248, %v1680, %v1682
      %v1686 = vadd.f32 %v1671, %v1681
      %v1687 = vadd.f32 %v1672, %v1683
      %s1688 = scalar_lea.vmem %s192, 336
      %v1689 = vld [vmem:[%s1688] sm:$0xff]
      %v1690 = vld [vmem:[%s1688 + $0x8] sm:$0xff]
      %v1691 = vld [vmem:[%s1688 + $0x10] sm:$0x3]
      %v1692 = vmul.f32 %v1689, %v315
      %v1693 = vmul.f32 %v1690, %v315
      %v1694 = vadd.f32 %v1686, %v1692
      %v1695 = vadd.f32 %v1687, %v1693
      %v1696 = vmul.f32 %v1689, %v323
      %v1697 = vmul.f32 %v1690, %v323
      %v1698 = vmul.f32 %v1691, %v323
      %v1702 = vrot.slane %v1696, 1
      %v1703 = vrot.slane %v1697, 1
      %v1704 = vsel %vm228, %v1702, %v1703
      %v1705 = vrot.slane %v1698, 1
      %v1706 = vsel %vm228, %v1703, %v1705
      %v1709 = vadd.f32 %v1694, %v1704
      %v1710 = vadd.f32 %v1695, %v1706
      %v1711 = vmul.f32 %v1689, %v342
      %v1712 = vmul.f32 %v1690, %v342
      %v1713 = vmul.f32 %v1691, %v342
      %v1717 = vrot.slane %v1711, 2
      %v1718 = vrot.slane %v1712, 2
      %v1719 = vsel %vm248, %v1717, %v1718
      %v1720 = vrot.slane %v1713, 2
      %v1721 = vsel %vm248, %v1718, %v1720
      %v1724 = vadd.f32 %v1709, %v1719
      %v1725 = vadd.f32 %v1710, %v1721
      %1726 = vst [vmem:[#allocation2 + $0xc0] sm:$0xff] %v1724
      %1727 = vst [vmem:[#allocation2 + $0xc8] sm:$0xff] %v1725
      %v1728 = vld [vmem:[%s1574] sm:$0xff]
      %v1729 = vld [vmem:[%s1574 + $0x8] sm:$0xff]
      %v1730 = vld [vmem:[%s1574 + $0x10] sm:$0x3]
      %v1731 = vmul.f32 %v1728, %v213
      %v1732 = vmul.f32 %v1729, %v213
      %v1733 = vadd.f32 %v1731, 0.0
      %v1734 = vadd.f32 %v1732, 0.0
      %v1735 = vmul.f32 %v1728, %v221
      %v1736 = vmul.f32 %v1729, %v221
      %v1737 = vmul.f32 %v1730, %v221
      %v1741 = vrot.slane %v1735, 1
      %v1742 = vrot.slane %v1736, 1
      %v1743 = vsel %vm228, %v1741, %v1742
      %v1744 = vrot.slane %v1737, 1
      %v1745 = vsel %vm228, %v1742, %v1744
      %v1748 = vadd.f32 %v1733, %v1743
      %v1749 = vadd.f32 %v1734, %v1745
      %v1750 = vmul.f32 %v1728, %v241
      %v1751 = vmul.f32 %v1729, %v241
      %v1752 = vmul.f32 %v1730, %v241
      %v1756 = vrot.slane %v1750, 2
      %v1757 = vrot.slane %v1751, 2
      %v1758 = vsel %vm248, %v1756, %v1757
      %v1759 = vrot.slane %v1752, 2
      %v1760 = vsel %vm248, %v1757, %v1759
      %v1763 = vadd.f32 %v1748, %v1758
      %v1764 = vadd.f32 %v1749, %v1760
      %v1765 = vld [vmem:[%s1688] sm:$0xff]
      %v1766 = vld [vmem:[%s1688 + $0x8] sm:$0xff]
      %v1767 = vld [vmem:[%s1688 + $0x10] sm:$0x3]
      %v1768 = vmul.f32 %v1765, %v265
      %v1769 = vmul.f32 %v1766, %v265
      %v1770 = vadd.f32 %v1763, %v1768
      %v1771 = vadd.f32 %v1764, %v1769
      %v1772 = vmul.f32 %v1765, %v273
      %v1773 = vmul.f32 %v1766, %v273
      %v1774 = vmul.f32 %v1767, %v273
      %v1778 = vrot.slane %v1772, 1
      %v1779 = vrot.slane %v1773, 1
      %v1780 = vsel %vm228, %v1778, %v1779
      %v1781 = vrot.slane %v1774, 1
      %v1782 = vsel %vm228, %v1779, %v1781
      %v1785 = vadd.f32 %v1770, %v1780
      %v1786 = vadd.f32 %v1771, %v1782
      %v1787 = vmul.f32 %v1765, %v292
      %v1788 = vmul.f32 %v1766, %v292
      %v1789 = vmul.f32 %v1767, %v292
      %v1793 = vrot.slane %v1787, 2
      %v1794 = vrot.slane %v1788, 2
      %v1795 = vsel %vm248, %v1793, %v1794
      %v1796 = vrot.slane %v1789, 2
      %v1797 = vsel %vm248, %v1794, %v1796
      %v1800 = vadd.f32 %v1785, %v1795
      %v1801 = vadd.f32 %v1786, %v1797
      %s1802 = scalar_lea.vmem %s192, 360
      %v1803 = vld [vmem:[%s1802] sm:$0xff]
      %v1804 = vld [vmem:[%s1802 + $0x8] sm:$0xff]
      %v1805 = vld [vmem:[%s1802 + $0x10] sm:$0x3]
      %v1806 = vmul.f32 %v1803, %v315
      %v1807 = vmul.f32 %v1804, %v315
      %v1808 = vadd.f32 %v1800, %v1806
      %v1809 = vadd.f32 %v1801, %v1807
      %v1810 = vmul.f32 %v1803, %v323
      %v1811 = vmul.f32 %v1804, %v323
      %v1812 = vmul.f32 %v1805, %v323
      %v1816 = vrot.slane %v1810, 1
      %v1817 = vrot.slane %v1811, 1
      %v1818 = vsel %vm228, %v1816, %v1817
      %v1819 = vrot.slane %v1812, 1
      %v1820 = vsel %vm228, %v1817, %v1819
      %v1823 = vadd.f32 %v1808, %v1818
      %v1824 = vadd.f32 %v1809, %v1820
      %v1825 = vmul.f32 %v1803, %v342
      %v1826 = vmul.f32 %v1804, %v342
      %v1827 = vmul.f32 %v1805, %v342
      %v1831 = vrot.slane %v1825, 2
      %v1832 = vrot.slane %v1826, 2
      %v1833 = vsel %vm248, %v1831, %v1832
      %v1834 = vrot.slane %v1827, 2
      %v1835 = vsel %vm248, %v1832, %v1834
      %v1838 = vadd.f32 %v1823, %v1833
      %v1839 = vadd.f32 %v1824, %v1835
      %1840 = vst [vmem:[#allocation2 + $0xd0] sm:$0xff] %v1838
      %1841 = vst [vmem:[#allocation2 + $0xd8] sm:$0xff] %v1839
      %v1842 = vld [vmem:[%s1688] sm:$0xff]
      %v1843 = vld [vmem:[%s1688 + $0x8] sm:$0xff]
      %v1844 = vld [vmem:[%s1688 + $0x10] sm:$0x3]
      %v1845 = vmul.f32 %v1842, %v213
      %v1846 = vmul.f32 %v1843, %v213
      %v1847 = vadd.f32 %v1845, 0.0
      %v1848 = vadd.f32 %v1846, 0.0
      %v1849 = vmul.f32 %v1842, %v221
      %v1850 = vmul.f32 %v1843, %v221
      %v1851 = vmul.f32 %v1844, %v221
      %v1855 = vrot.slane %v1849, 1
      %v1856 = vrot.slane %v1850, 1
      %v1857 = vsel %vm228, %v1855, %v1856
      %v1858 = vrot.slane %v1851, 1
      %v1859 = vsel %vm228, %v1856, %v1858
      %v1862 = vadd.f32 %v1847, %v1857
      %v1863 = vadd.f32 %v1848, %v1859
      %v1864 = vmul.f32 %v1842, %v241
      %v1865 = vmul.f32 %v1843, %v241
      %v1866 = vmul.f32 %v1844, %v241
      %v1870 = vrot.slane %v1864, 2
      %v1871 = vrot.slane %v1865, 2
      %v1872 = vsel %vm248, %v1870, %v1871
      %v1873 = vrot.slane %v1866, 2
      %v1874 = vsel %vm248, %v1871, %v1873
      %v1877 = vadd.f32 %v1862, %v1872
      %v1878 = vadd.f32 %v1863, %v1874
      %v1879 = vld [vmem:[%s1802] sm:$0xff]
      %v1880 = vld [vmem:[%s1802 + $0x8] sm:$0xff]
      %v1881 = vld [vmem:[%s1802 + $0x10] sm:$0x3]
      %v1882 = vmul.f32 %v1879, %v265
      %v1883 = vmul.f32 %v1880, %v265
      %v1884 = vadd.f32 %v1877, %v1882
      %v1885 = vadd.f32 %v1878, %v1883
      %v1886 = vmul.f32 %v1879, %v273
      %v1887 = vmul.f32 %v1880, %v273
      %v1888 = vmul.f32 %v1881, %v273
      %v1892 = vrot.slane %v1886, 1
      %v1893 = vrot.slane %v1887, 1
      %v1894 = vsel %vm228, %v1892, %v1893
      %v1895 = vrot.slane %v1888, 1
      %v1896 = vsel %vm228, %v1893, %v1895
      %v1899 = vadd.f32 %v1884, %v1894
      %v1900 = vadd.f32 %v1885, %v1896
      %v1901 = vmul.f32 %v1879, %v292
      %v1902 = vmul.f32 %v1880, %v292
      %v1903 = vmul.f32 %v1881, %v292
      %v1907 = vrot.slane %v1901, 2
      %v1908 = vrot.slane %v1902, 2
      %v1909 = vsel %vm248, %v1907, %v1908
      %v1910 = vrot.slane %v1903, 2
      %v1911 = vsel %vm248, %v1908, %v1910
      %v1914 = vadd.f32 %v1899, %v1909
      %v1915 = vadd.f32 %v1900, %v1911
      %s1916 = scalar_lea.vmem %s192, 384
      %v1917 = vld [vmem:[%s1916] sm:$0xff]
      %v1918 = vld [vmem:[%s1916 + $0x8] sm:$0xff]
      %v1919 = vld [vmem:[%s1916 + $0x10] sm:$0x3]
      %v1920 = vmul.f32 %v1917, %v315
      %v1921 = vmul.f32 %v1918, %v315
      %v1922 = vadd.f32 %v1914, %v1920
      %v1923 = vadd.f32 %v1915, %v1921
      %v1924 = vmul.f32 %v1917, %v323
      %v1925 = vmul.f32 %v1918, %v323
      %v1926 = vmul.f32 %v1919, %v323
      %v1930 = vrot.slane %v1924, 1
      %v1931 = vrot.slane %v1925, 1
      %v1932 = vsel %vm228, %v1930, %v1931
      %v1933 = vrot.slane %v1926, 1
      %v1934 = vsel %vm228, %v1931, %v1933
      %v1937 = vadd.f32 %v1922, %v1932
      %v1938 = vadd.f32 %v1923, %v1934
      %v1939 = vmul.f32 %v1917, %v342
      %v1940 = vmul.f32 %v1918, %v342
      %v1941 = vmul.f32 %v1919, %v342
      %v1945 = vrot.slane %v1939, 2
      %v1946 = vrot.slane %v1940, 2
      %v1947 = vsel %vm248, %v1945, %v1946
      %v1948 = vrot.slane %v1941, 2
      %v1949 = vsel %vm248, %v1946, %v1948
      %v1952 = vadd.f32 %v1937, %v1947
      %v1953 = vadd.f32 %v1938, %v1949
      %1954 = vst [vmem:[#allocation2 + $0xe0] sm:$0xff] %v1952
      %1955 = vst [vmem:[#allocation2 + $0xe8] sm:$0xff] %v1953
      %v1956 = vld [vmem:[%s1802] sm:$0xff]
      %v1957 = vld [vmem:[%s1802 + $0x8] sm:$0xff]
      %v1958 = vld [vmem:[%s1802 + $0x10] sm:$0x3]
      %v1959 = vmul.f32 %v1956, %v213
      %v1960 = vmul.f32 %v1957, %v213
      %v1961 = vadd.f32 %v1959, 0.0
      %v1962 = vadd.f32 %v1960, 0.0
      %v1963 = vmul.f32 %v1956, %v221
      %v1964 = vmul.f32 %v1957, %v221
      %v1965 = vmul.f32 %v1958, %v221
      %v1969 = vrot.slane %v1963, 1
      %v1970 = vrot.slane %v1964, 1
      %v1971 = vsel %vm228, %v1969, %v1970
      %v1972 = vrot.slane %v1965, 1
      %v1973 = vsel %vm228, %v1970, %v1972
      %v1976 = vadd.f32 %v1961, %v1971
      %v1977 = vadd.f32 %v1962, %v1973
      %v1978 = vmul.f32 %v1956, %v241
      %v1979 = vmul.f32 %v1957, %v241
      %v1980 = vmul.f32 %v1958, %v241
      %v1984 = vrot.slane %v1978, 2
      %v1985 = vrot.slane %v1979, 2
      %v1986 = vsel %vm248, %v1984, %v1985
      %v1987 = vrot.slane %v1980, 2
      %v1988 = vsel %vm248, %v1985, %v1987
      %v1991 = vadd.f32 %v1976, %v1986
      %v1992 = vadd.f32 %v1977, %v1988
      %v1993 = vld [vmem:[%s1916] sm:$0xff]
      %v1994 = vld [vmem:[%s1916 + $0x8] sm:$0xff]
      %v1995 = vld [vmem:[%s1916 + $0x10] sm:$0x3]
      %v1996 = vmul.f32 %v1993, %v265
      %v1997 = vmul.f32 %v1994, %v265
      %v1998 = vadd.f32 %v1991, %v1996
      %v1999 = vadd.f32 %v1992, %v1997
      %v2000 = vmul.f32 %v1993, %v273
      %v2001 = vmul.f32 %v1994, %v273
      %v2002 = vmul.f32 %v1995, %v273
      %v2006 = vrot.slane %v2000, 1
      %v2007 = vrot.slane %v2001, 1
      %v2008 = vsel %vm228, %v2006, %v2007
      %v2009 = vrot.slane %v2002, 1
      %v2010 = vsel %vm228, %v2007, %v2009
      %v2013 = vadd.f32 %v1998, %v2008
      %v2014 = vadd.f32 %v1999, %v2010
      %v2015 = vmul.f32 %v1993, %v292
      %v2016 = vmul.f32 %v1994, %v292
      %v2017 = vmul.f32 %v1995, %v292
      %v2021 = vrot.slane %v2015, 2
      %v2022 = vrot.slane %v2016, 2
      %v2023 = vsel %vm248, %v2021, %v2022
      %v2024 = vrot.slane %v2017, 2
      %v2025 = vsel %vm248, %v2022, %v2024
      %v2028 = vadd.f32 %v2013, %v2023
      %v2029 = vadd.f32 %v2014, %v2025
      %s2030 = scalar_lea.vmem %s192, 408
      %v2031 = vld [vmem:[%s2030] sm:$0xff]
      %v2032 = vld [vmem:[%s2030 + $0x8] sm:$0xff]
      %v2033 = vld [vmem:[%s2030 + $0x10] sm:$0x3]
      %v2034 = vmul.f32 %v2031, %v315
      %v2035 = vmul.f32 %v2032, %v315
      %v2036 = vadd.f32 %v2028, %v2034
      %v2037 = vadd.f32 %v2029, %v2035
      %v2038 = vmul.f32 %v2031, %v323
      %v2039 = vmul.f32 %v2032, %v323
      %v2040 = vmul.f32 %v2033, %v323
      %v2044 = vrot.slane %v2038, 1
      %v2045 = vrot.slane %v2039, 1
      %v2046 = vsel %vm228, %v2044, %v2045
      %v2047 = vrot.slane %v2040, 1
      %v2048 = vsel %vm228, %v2045, %v2047
      %v2051 = vadd.f32 %v2036, %v2046
      %v2052 = vadd.f32 %v2037, %v2048
      %v2053 = vmul.f32 %v2031, %v342
      %v2054 = vmul.f32 %v2032, %v342
      %v2055 = vmul.f32 %v2033, %v342
      %v2059 = vrot.slane %v2053, 2
      %v2060 = vrot.slane %v2054, 2
      %v2061 = vsel %vm248, %v2059, %v2060
      %v2062 = vrot.slane %v2055, 2
      %v2063 = vsel %vm248, %v2060, %v2062
      %v2066 = vadd.f32 %v2051, %v2061
      %v2067 = vadd.f32 %v2052, %v2063
      %2068 = vst [vmem:[#allocation2 + $0xf0] sm:$0xff] %v2066
      %2069 = vst [vmem:[#allocation2 + $0xf8] sm:$0xff] %v2067
      %v2070 = vld [vmem:[#allocation2] sm:$0xff]
      %v2071 = vld [vmem:[#allocation2 + $0x8] sm:$0xff]
      %v2072 = vld [vmem:[#allocation2 + $0x10] sm:$0xff]
      %v2073 = vld [vmem:[#allocation2 + $0x18] sm:$0xff]
      %v2074 = vld [vmem:[#allocation2 + $0x20] sm:$0xff]
      %v2075 = vld [vmem:[#allocation2 + $0x28] sm:$0xff]
      %v2076 = vld [vmem:[#allocation2 + $0x30] sm:$0xff]
      %v2077 = vld [vmem:[#allocation2 + $0x38] sm:$0xff]
      %v2078 = vld [vmem:[#allocation2 + $0x40] sm:$0xff]
      %v2079 = vld [vmem:[#allocation2 + $0x48] sm:$0xff]
      %v2080 = vld [vmem:[#allocation2 + $0x50] sm:$0xff]
      %v2081 = vld [vmem:[#allocation2 + $0x58] sm:$0xff]
      %v2082 = vld [vmem:[#allocation2 + $0x60] sm:$0xff]
      %v2083 = vld [vmem:[#allocation2 + $0x68] sm:$0xff]
      %v2084 = vld [vmem:[#allocation2 + $0x70] sm:$0xff]
      %v2085 = vld [vmem:[#allocation2 + $0x78] sm:$0xff]
      %v2086 = vld [vmem:[#allocation2 + $0x80] sm:$0xff]
      %v2087 = vld [vmem:[#allocation2 + $0x88] sm:$0xff]
      %v2088 = vld [vmem:[#allocation2 + $0x90] sm:$0xff]
      %v2089 = vld [vmem:[#allocation2 + $0x98] sm:$0xff]
      %v2090 = vld [vmem:[#allocation2 + $0xa0] sm:$0xff]
      %v2091 = vld [vmem:[#allocation2 + $0xa8] sm:$0xff]
      %v2092 = vld [vmem:[#allocation2 + $0xb0] sm:$0xff]
      %v2093 = vld [vmem:[#allocation2 + $0xb8] sm:$0xff]
      %v2094 = vld [vmem:[#allocation2 + $0xc0] sm:$0xff]
      %v2095 = vld [vmem:[#allocation2 + $0xc8] sm:$0xff]
      %v2096 = vld [vmem:[#allocation2 + $0xd0] sm:$0xff]
      %v2097 = vld [vmem:[#allocation2 + $0xd8] sm:$0xff]
      %v2098 = vld [vmem:[#allocation2 + $0xe0] sm:$0xff]
      %v2099 = vld [vmem:[#allocation2 + $0xe8] sm:$0xff]
      %v2100 = vld [vmem:[#allocation2 + $0xf0] sm:$0xff]
      %v2101 = vld [vmem:[#allocation2 + $0xf8] sm:$0xff]
      %v2102 = vld [vmem:[%s2] sm:$0xff]
      %v2103 = vld [vmem:[%s2 + $0x8] sm:$0xff]
      %v2104 = vld [vmem:[%s2 + $0x10] sm:$0xff]
      %v2105 = vld [vmem:[%s2 + $0x18] sm:$0xff]
      %v2106 = vld [vmem:[%s2 + $0x20] sm:$0xff]
      %v2107 = vld [vmem:[%s2 + $0x28] sm:$0xff]
      %v2108 = vld [vmem:[%s2 + $0x30] sm:$0xff]
      %v2109 = vld [vmem:[%s2 + $0x38] sm:$0xff]
      %v2110 = vld [vmem:[%s2 + $0x40] sm:$0xff]
      %v2111 = vld [vmem:[%s2 + $0x48] sm:$0xff]
      %v2112 = vld [vmem:[%s2 + $0x50] sm:$0xff]
      %v2113 = vld [vmem:[%s2 + $0x58] sm:$0xff]
      %v2114 = vld [vmem:[%s2 + $0x60] sm:$0xff]
      %v2115 = vld [vmem:[%s2 + $0x68] sm:$0xff]
      %v2116 = vld [vmem:[%s2 + $0x70] sm:$0xff]
      %v2117 = vld [vmem:[%s2 + $0x78] sm:$0xff]
      %v2118 = vld [vmem:[%s3] sm:$0x1]
      %v2120 = vlaneseq
      %v2121 = vshrl.u32 %v2120, 7
      %v2122 = vsub.s32 0, %v2121
      %v2123 = vrot.slane %v2118, %v2122
      %2125 = vmatprep.subr.mxu0 0.0
      %2126 = vmatpush1.msra.mxu0 %v2102
      %2127 = vmatprep.subr.mxu0 0.0
      %2128 = vmatpush1.msra.mxu0 %v2103
      %2129 = vmatprep.subr.mxu0 0.0
      %2130 = vmatpush1.msra.mxu0 %v2104
      %2131 = vmatprep.subr.mxu0 0.0
      %2132 = vmatpush1.msra.mxu0 %v2105
      %2133 = vmatprep.subr.mxu0 0.0
      %2134 = vmatpush1.msra.mxu0 %v2106
      %2135 = vmatprep.subr.mxu0 0.0
      %2136 = vmatpush1.msra.mxu0 %v2107
      %2137 = vmatprep.subr.mxu0 0.0
      %2138 = vmatpush1.msra.mxu0 %v2108
      %2139 = vmatprep.subr.mxu0 0.0
      %2140 = vmatpush1.msra.mxu0 %v2109
      %2141 = vmatprep.subr.mxu0 0.0
      %2142 = vmatpush1.msra.mxu0 %v2110
      %2143 = vmatprep.subr.mxu0 0.0
      %2144 = vmatpush1.msra.mxu0 %v2111
      %2145 = vmatprep.subr.mxu0 0.0
      %2146 = vmatpush1.msra.mxu0 %v2112
      %2147 = vmatprep.subr.mxu0 0.0
      %2148 = vmatpush1.msra.mxu0 %v2113
      %2149 = vmatprep.subr.mxu0 0.0
      %2150 = vmatpush1.msra.mxu0 %v2114
      %2151 = vmatprep.subr.mxu0 0.0
      %2152 = vmatpush1.msra.mxu0 %v2115
      %2153 = vmatprep.subr.mxu0 0.0
      %2154 = vmatpush1.msra.mxu0 %v2116
      %2155 = vmatprep.subr.mxu0 0.0
      %2156 = vmatpush1.msra.mxu0 %v2117
      %2157 = vmatprep.subr.mxu0 0.0
      %2158 = vmatpush1.msra.mxu0 0.0
      %2159 = vmatprep.subr.mxu0 0.0
      %2160 = vmatpush1.msra.mxu0 0.0
      %2161 = vmatprep.subr.mxu0 0.0
      %2162 = vmatpush1.msra.mxu0 0.0
      %2163 = vmatprep.subr.mxu0 0.0
      %2164 = vmatpush1.msra.mxu0 0.0
      %2165 = vmatprep.subr.mxu0 0.0
      %2166 = vmatpush1.msra.mxu0 0.0
      %2167 = vmatprep.subr.mxu0 0.0
      %2168 = vmatpush1.msra.mxu0 0.0
      %2169 = vmatprep.subr.mxu0 0.0
      %2170 = vmatpush1.msra.mxu0 0.0
      %2171 = vmatprep.subr.mxu0 0.0
      %2172 = vmatpush1.msra.mxu0 0.0
      %2173 = vmatprep.subr.mxu0 0.0
      %2174 = vmatpush1.msra.mxu0 0.0
      %2175 = vmatprep.subr.mxu0 0.0
      %2176 = vmatpush1.msra.mxu0 0.0
      %2177 = vmatprep.subr.mxu0 0.0
      %2178 = vmatpush1.msra.mxu0 0.0
      %2179 = vmatprep.subr.mxu0 0.0
      %2180 = vmatpush1.msra.mxu0 0.0
      %2181 = vmatprep.subr.mxu0 0.0
      %2182 = vmatpush1.msra.mxu0 0.0
      %2183 = vmatprep.subr.mxu0 0.0
      %2184 = vmatpush1.msra.mxu0 0.0
      %2185 = vmatprep.subr.mxu0 0.0
      %2186 = vmatpush1.msra.mxu0 0.0
      %2187 = vmatprep.subr.mxu0 0.0
      %2188 = vmatpush1.msra.mxu0 0.0
      %2189 = vmatprep.mubr.f32.mxu0 0.0
      %2190 = vmatmul.mubr.f32.gmra.mrb[0].mxu0 %v2070
      %v2191 = vpop.f32.mrb[0].mxu0
      %v2192 = vadd.f32 %v2123, %v2191
      %v2193 = vpop.f32.mrb[0].mxu0
      %2194 = vmatprep.mubr.f32.mxu0 0.0
      %2195 = vmatmul.mubr.f32.gmra.mrb[0].mxu0 %v2071
      %v2196 = vpop.f32.mrb[0].mxu0
      %v2197 = vadd.f32 %v2123, %v2196
      %v2198 = vpop.f32.mrb[0].mxu0
      %2199 = vmatprep.mubr.f32.mxu0 0.0
      %2200 = vmatmul.mubr.f32.gmra.mrb[0].mxu0 %v2072
      %v2201 = vpop.f32.mrb[0].mxu0
      %v2202 = vadd.f32 %v2123, %v2201
      %v2203 = vpop.f32.mrb[0].mxu0
      %2204 = vmatprep.mubr.f32.mxu0 0.0
      %2205 = vmatmul.mubr.f32.gmra.mrb[0].mxu0 %v2073
      %v2206 = vpop.f32.mrb[0].mxu0
      %v2207 = vadd.f32 %v2123, %v2206
      %v2208 = vpop.f32.mrb[0].mxu0
      %2209 = vmatprep.mubr.f32.mxu0 0.0
      %2210 = vmatmul.mubr.f32.gmra.mrb[0].mxu0 %v2074
      %v2211 = vpop.f32.mrb[0].mxu0
      %v2212 = vadd.f32 %v2123, %v2211
      %v2213 = vpop.f32.mrb[0].mxu0
      %2214 = vmatprep.mubr.f32.mxu0 0.0
      %2215 = vmatmul.mubr.f32.gmra.mrb[0].mxu0 %v2075
      %v2216 = vpop.f32.mrb[0].mxu0
      %v2217 = vadd.f32 %v2123, %v2216
      %v2218 = vpop.f32.mrb[0].mxu0
      %2219 = vmatprep.mubr.f32.mxu0 0.0
      %2220 = vmatmul.mubr.f32.gmra.mrb[0].mxu0 %v2076
      %v2221 = vpop.f32.mrb[0].mxu0
      %v2222 = vadd.f32 %v2123, %v2221
      %v2223 = vpop.f32.mrb[0].mxu0
      %2224 = vmatprep.mubr.f32.mxu0 0.0
      %2225 = vmatmul.mubr.f32.gmra.mrb[0].mxu0 %v2077
      %v2226 = vpop.f32.mrb[0].mxu0
      %v2227 = vadd.f32 %v2123, %v2226
      %v2228 = vpop.f32.mrb[0].mxu0
      %2229 = vmatprep.mubr.f32.mxu0 0.0
      %2230 = vmatmul.mubr.f32.gmra.mrb[0].mxu0 %v2078
      %v2231 = vpop.f32.mrb[0].mxu0
      %v2232 = vadd.f32 %v2123, %v2231
      %v2233 = vpop.f32.mrb[0].mxu0
      %2234 = vmatprep.mubr.f32.mxu0 0.0
      %2235 = vmatmul.mubr.f32.gmra.mrb[0].mxu0 %v2079
      %v2236 = vpop.f32.mrb[0].mxu0
      %v2237 = vadd.f32 %v2123, %v2236
      %v2238 = vpop.f32.mrb[0].mxu0
      %2239 = vmatprep.mubr.f32.mxu0 0.0
      %2240 = vmatmul.mubr.f32.gmra.mrb[0].mxu0 %v2080
      %v2241 = vpop.f32.mrb[0].mxu0
      %v2242 = vadd.f32 %v2123, %v2241
      %v2243 = vpop.f32.mrb[0].mxu0
      %2244 = vmatprep.mubr.f32.mxu0 0.0
      %2245 = vmatmul.mubr.f32.gmra.mrb[0].mxu0 %v2081
      %v2246 = vpop.f32.mrb[0].mxu0
      %v2247 = vadd.f32 %v2123, %v2246
      %v2248 = vpop.f32.mrb[0].mxu0
      %2249 = vmatprep.mubr.f32.mxu0 0.0
      %2250 = vmatmul.mubr.f32.gmra.mrb[0].mxu0 %v2082
      %v2251 = vpop.f32.mrb[0].mxu0
      %v2252 = vadd.f32 %v2123, %v2251
      %v2253 = vpop.f32.mrb[0].mxu0
      %2254 = vmatprep.mubr.f32.mxu0 0.0
      %2255 = vmatmul.mubr.f32.gmra.mrb[0].mxu0 %v2083
      %v2256 = vpop.f32.mrb[0].mxu0
      %v2257 = vadd.f32 %v2123, %v2256
      %v2258 = vpop.f32.mrb[0].mxu0
      %2259 = vmatprep.mubr.f32.mxu0 0.0
      %2260 = vmatmul.mubr.f32.gmra.mrb[0].mxu0 %v2084
      %v2261 = vpop.f32.mrb[0].mxu0
      %v2262 = vadd.f32 %v2123, %v2261
      %v2263 = vpop.f32.mrb[0].mxu0
      %2264 = vmatprep.mubr.f32.mxu0 0.0
      %2265 = vmatmul.mubr.f32.gmra.mrb[0].mxu0 %v2085
      %v2266 = vpop.f32.mrb[0].mxu0
      %v2267 = vadd.f32 %v2123, %v2266
      %v2268 = vpop.f32.mrb[0].mxu0
      %2269 = vmatprep.mubr.f32.mxu0 0.0
      %2270 = vmatmul.mubr.f32.gmra.mrb[0].mxu0 %v2086
      %v2271 = vpop.f32.mrb[0].mxu0
      %v2272 = vadd.f32 %v2123, %v2271
      %v2273 = vpop.f32.mrb[0].mxu0
      %2274 = vmatprep.mubr.f32.mxu0 0.0
      %2275 = vmatmul.mubr.f32.gmra.mrb[0].mxu0 %v2087
      %v2276 = vpop.f32.mrb[0].mxu0
      %v2277 = vadd.f32 %v2123, %v2276
      %v2278 = vpop.f32.mrb[0].mxu0
      %2279 = vmatprep.mubr.f32.mxu0 0.0
      %2280 = vmatmul.mubr.f32.gmra.mrb[0].mxu0 %v2088
      %v2281 = vpop.f32.mrb[0].mxu0
      %v2282 = vadd.f32 %v2123, %v2281
      %v2283 = vpop.f32.mrb[0].mxu0
      %2284 = vmatprep.mubr.f32.mxu0 0.0
      %2285 = vmatmul.mubr.f32.gmra.mrb[0].mxu0 %v2089
      %v2286 = vpop.f32.mrb[0].mxu0
      %v2287 = vadd.f32 %v2123, %v2286
      %v2288 = vpop.f32.mrb[0].mxu0
      %2289 = vmatprep.mubr.f32.mxu0 0.0
      %2290 = vmatmul.mubr.f32.gmra.mrb[0].mxu0 %v2090
      %v2291 = vpop.f32.mrb[0].mxu0
      %v2292 = vadd.f32 %v2123, %v2291
      %v2293 = vpop.f32.mrb[0].mxu0
      %2294 = vmatprep.mubr.f32.mxu0 0.0
      %2295 = vmatmul.mubr.f32.gmra.mrb[0].mxu0 %v2091
      %v2296 = vpop.f32.mrb[0].mxu0
      %v2297 = vadd.f32 %v2123, %v2296
      %v2298 = vpop.f32.mrb[0].mxu0
      %2299 = vmatprep.mubr.f32.mxu0 0.0
      %2300 = vmatmul.mubr.f32.gmra.mrb[0].mxu0 %v2092
      %v2301 = vpop.f32.mrb[0].mxu0
      %v2302 = vadd.f32 %v2123, %v2301
      %v2303 = vpop.f32.mrb[0].mxu0
      %2304 = vmatprep.mubr.f32.mxu0 0.0
      %2305 = vmatmul.mubr.f32.gmra.mrb[0].mxu0 %v2093
      %v2306 = vpop.f32.mrb[0].mxu0
      %v2307 = vadd.f32 %v2123, %v2306
      %v2308 = vpop.f32.mrb[0].mxu0
      %2309 = vmatprep.mubr.f32.mxu0 0.0
      %2310 = vmatmul.mubr.f32.gmra.mrb[0].mxu0 %v2094
      %v2311 = vpop.f32.mrb[0].mxu0
      %v2312 = vadd.f32 %v2123, %v2311
      %v2313 = vpop.f32.mrb[0].mxu0
      %2314 = vmatprep.mubr.f32.mxu0 0.0
      %2315 = vmatmul.mubr.f32.gmra.mrb[0].mxu0 %v2095
      %v2316 = vpop.f32.mrb[0].mxu0
      %v2317 = vadd.f32 %v2123, %v2316
      %v2318 = vpop.f32.mrb[0].mxu0
      %2319 = vmatprep.mubr.f32.mxu0 0.0
      %2320 = vmatmul.mubr.f32.gmra.mrb[0].mxu0 %v2096
      %v2321 = vpop.f32.mrb[0].mxu0
      %v2322 = vadd.f32 %v2123, %v2321
      %v2323 = vpop.f32.mrb[0].mxu0
      %2324 = vmatprep.mubr.f32.mxu0 0.0
      %2325 = vmatmul.mubr.f32.gmra.mrb[0].mxu0 %v2097
      %v2326 = vpop.f32.mrb[0].mxu0
      %v2327 = vadd.f32 %v2123, %v2326
      %v2328 = vpop.f32.mrb[0].mxu0
      %2329 = vmatprep.mubr.f32.mxu0 0.0
      %2330 = vmatmul.mubr.f32.gmra.mrb[0].mxu0 %v2098
      %v2331 = vpop.f32.mrb[0].mxu0
      %v2332 = vadd.f32 %v2123, %v2331
      %v2333 = vpop.f32.mrb[0].mxu0
      %2334 = vmatprep.mubr.f32.mxu0 0.0
      %2335 = vmatmul.mubr.f32.gmra.mrb[0].mxu0 %v2099
      %v2336 = vpop.f32.mrb[0].mxu0
      %v2337 = vadd.f32 %v2123, %v2336
      %v2338 = vpop.f32.mrb[0].mxu0
      %2339 = vmatprep.mubr.f32.mxu0 0.0
      %2340 = vmatmul.mubr.f32.gmra.mrb[0].mxu0 %v2100
      %v2341 = vpop.f32.mrb[0].mxu0
      %v2342 = vadd.f32 %v2123, %v2341
      %v2343 = vpop.f32.mrb[0].mxu0
      %2344 = vmatprep.mubr.f32.mxu0 0.0
      %2345 = vmatmul.mubr.f32.gmra.mrb[0].mxu0 %v2101
      %v2346 = vpop.f32.mrb[0].mxu0
      %v2347 = vadd.f32 %v2123, %v2346
      %v2348 = vpop.f32.mrb[0].mxu0
      %2349 = vdwg.mxu0
      %v2350 = vmax.f32 %v2192, 0.0
      %v2351 = vmax.f32 %v2197, 0.0
      %v2352 = vmax.f32 %v2202, 0.0
      %v2353 = vmax.f32 %v2207, 0.0
      %v2354 = vmax.f32 %v2212, 0.0
      %v2355 = vmax.f32 %v2217, 0.0
      %v2356 = vmax.f32 %v2222, 0.0
      %v2357 = vmax.f32 %v2227, 0.0
      %v2358 = vmax.f32 %v2232, 0.0
      %v2359 = vmax.f32 %v2237, 0.0
      %v2360 = vmax.f32 %v2242, 0.0
      %v2361 = vmax.f32 %v2247, 0.0
      %v2362 = vmax.f32 %v2252, 0.0
      %v2363 = vmax.f32 %v2257, 0.0
      %v2364 = vmax.f32 %v2262, 0.0
      %v2365 = vmax.f32 %v2267, 0.0
      %v2366 = vmax.f32 %v2272, 0.0
      %v2367 = vmax.f32 %v2277, 0.0
      %v2368 = vmax.f32 %v2282, 0.0
      %v2369 = vmax.f32 %v2287, 0.0
      %v2370 = vmax.f32 %v2292, 0.0
      %v2371 = vmax.f32 %v2297, 0.0
      %v2372 = vmax.f32 %v2302, 0.0
      %v2373 = vmax.f32 %v2307, 0.0
      %v2374 = vmax.f32 %v2312, 0.0
      %v2375 = vmax.f32 %v2317, 0.0
      %v2376 = vmax.f32 %v2322, 0.0
      %v2377 = vmax.f32 %v2327, 0.0
      %v2378 = vmax.f32 %v2332, 0.0
      %v2379 = vmax.f32 %v2337, 0.0
      %v2380 = vmax.f32 %v2342, 0.0
      %v2381 = vmax.f32 %v2347, 0.0
      %2382 = vst [vmem:[%s197] sm:$0xff] %v2350
      %2383 = vst [vmem:[%s197 + $0x8] sm:$0xff] %v2351
      %2384 = vst [vmem:[%s197 + $0x10] sm:$0xff] %v2352
      %2385 = vst [vmem:[%s197 + $0x18] sm:$0xff] %v2353
      %2386 = vst [vmem:[%s197 + $0x20] sm:$0xff] %v2354
      %2387 = vst [vmem:[%s197 + $0x28] sm:$0xff] %v2355
      %2388 = vst [vmem:[%s197 + $0x30] sm:$0xff] %v2356
      %2389 = vst [vmem:[%s197 + $0x38] sm:$0xff] %v2357
      %2390 = vst [vmem:[%s197 + $0x40] sm:$0xff] %v2358
      %2391 = vst [vmem:[%s197 + $0x48] sm:$0xff] %v2359
      %2392 = vst [vmem:[%s197 + $0x50] sm:$0xff] %v2360
      %2393 = vst [vmem:[%s197 + $0x58] sm:$0xff] %v2361
      %2394 = vst [vmem:[%s197 + $0x60] sm:$0xff] %v2362
      %2395 = vst [vmem:[%s197 + $0x68] sm:$0xff] %v2363
      %2396 = vst [vmem:[%s197 + $0x70] sm:$0xff] %v2364
      %2397 = vst [vmem:[%s197 + $0x78] sm:$0xff] %v2365
      %2398 = vst [vmem:[%s197 + $0x80] sm:$0xff] %v2366
      %2399 = vst [vmem:[%s197 + $0x88] sm:$0xff] %v2367
      %2400 = vst [vmem:[%s197 + $0x90] sm:$0xff] %v2368
      %2401 = vst [vmem:[%s197 + $0x98] sm:$0xff] %v2369
      %2402 = vst [vmem:[%s197 + $0xa0] sm:$0xff] %v2370
      %2403 = vst [vmem:[%s197 + $0xa8] sm:$0xff] %v2371
      %2404 = vst [vmem:[%s197 + $0xb0] sm:$0xff] %v2372
      %2405 = vst [vmem:[%s197 + $0xb8] sm:$0xff] %v2373
      %2406 = vst [vmem:[%s197 + $0xc0] sm:$0xff] %v2374
      %2407 = vst [vmem:[%s197 + $0xc8] sm:$0xff] %v2375
      %2408 = vst [vmem:[%s197 + $0xd0] sm:$0xff] %v2376
      %2409 = vst [vmem:[%s197 + $0xd8] sm:$0xff] %v2377
      %2410 = vst [vmem:[%s197 + $0xe0] sm:$0xff] %v2378
      %2411 = vst [vmem:[%s197 + $0xe8] sm:$0xff] %v2379
      %2412 = vst [vmem:[%s197 + $0xf0] sm:$0xff] %v2380
      %2413 = vst [vmem:[%s197 + $0xf8] sm:$0xff] %v2381
      %p2414 = scmp.lt.s32.totalorder %s15, 1
      %s2415 = scalar_select %p2414, %s15, 1
      %s2416 = smul.addr %s2415, 32
      %s2417 = smul.addr %s2416, 8
      %s2418 = scalar_lea.vmem %s4, %s2417
      // Predicated region
      $region37: #{fpem_v1_forward.8} parent=35 // pred_check
        %p2419 = pneg %p122
      $region38: #{fpem_v1_forward.8} parent=35 // pred_check_branch
        %2421 = sbr.rel (%p2419) target = $region40
      $region39: #{fpem_v1_forward.8} parent=35 // pred_region
        _
      $region40: #{fpem_v1_forward.8} parent=35 // pred_fallthru
        _
    $region36: #{fpem_v1_forward.8} parent=5 // pred_fallthru
      _
    %p2422 = scmp.le.s32.totalorder 2, %s10
    // Predicated region
    $region41: #{fpem_v1_forward.8} parent=5 // pred_check
      %p2423 = pneg %p2422
    $region42: #{fpem_v1_forward.8} parent=5 // pred_check_branch
      %2425 = sbr.rel (%p2423) target = $region44
    $region43: #{fpem_v1_forward.8} parent=5 // pred_region
      %s2426 = ssub.s32 %s10, 2
      // Predicated region
      $region45: #{fpem_v1_forward.8} parent=43 // pred_check
        %p2427 = pneg %p128
      $region46: #{fpem_v1_forward.8} parent=43 // pred_check_branch
        %2429 = sbr.rel (%p2427) target = $region48
      $region47: #{fpem_v1_forward.8} parent=43 // pred_region
        %p2430 = scmp.lt.s32.totalorder %s16, 1
        %s2431 = scalar_select %p2430, %s16, 1
        %s2432 = smul.addr %s2431, 32
        %s2433 = smul.addr %s2432, 8
        %s2434 = scalar_lea.vmem %s4, %s2433
      $region48: #{fpem_v1_forward.8} parent=43 // pred_fallthru
        _
    $region44: #{fpem_v1_forward.8} parent=5 // pred_fallthru
      _
  $region6: #{fpem_v1_forward.8} parent=0 // loop_footer
    %s14 = sadd.s32 1, %s10
  $region7: #{fpem_v1_forward.8} parent=0 // loop_footer_branch
    %9 = sbr.rel target = $region3
  $region8: #{fpem_v1_forward.8} parent=0 // loop_exit
    _

// kernel: fpem_v1_forward.9
$region0: #{fpem_v1_forward.9}
  #allocation0 [shape = 'u32[]', space=smem, size = 0x4, offset = 0x4, fixed_abs, tag = 'smem constant byte address 0x4 - core index']
  #allocation1 [shape = 'u32[144,128]{1,0:T(1,128)}', space=vmem, size = 0x12000, scoped, tag = 'internal scratch']
  #allocation2 [shape = 'f32[64,128]{1,0:T(8,128)}', space=vmem, size = 0x8000, scoped, tag = 'scratch operand']
  %s0 = inlined_call_operand.vmem [shape: f32[2,4,9,9,128], index: 0, kind: input, shape index: {}]
  %s1 = inlined_call_operand.vmem [shape: f32[9,128], index: 1, kind: input, shape index: {}]
  %s2 = inlined_call_operand.vmem [shape: f32[128,128], index: 2, kind: input, shape index: {}]
  %s3 = inlined_call_operand.vmem [shape: f32[1,128], index: 3, kind: input, shape index: {}]
  %s4 = inlined_call_operand.vmem [shape: f32[2,64,128], index: 4, kind: output, shape index: {}]
  %s5 = sld [smem:[#allocation0]]
  $region49: #{fpem_v1_forward.9} parent=0
    _
  %s7 = ssub.s32 1, %s5
  %s8 = scalar_select 0, %s7, %s5
  loop: start=0, step=1, limit=4
  $region2: #{fpem_v1_forward.9} parent=0 // loop_pre_header
    _
  $region3: #{fpem_v1_forward.9} parent=0 // loop_header
    %s10 = sphi 0, %s14
    %p11 = scmp.ge.s32.totalorder %s10, 4
    %s20 = sphi 0, %s22
    %s23 = sphi 0, %s20
    %s24 = sphi 0, %s23
    %s40 = sphi 0, %s24
    %s44 = sphi 0, %s44
    %s46 = sphi 0, %s44
    %s47 = sphi 0, %s46
    %s61 = sphi 0, %s47
    %s65 = sphi 0, %s65
    %s67 = sphi 0, %s65
    %s68 = sphi 0, %s67
    %s82 = sphi 0, %s68
    %s86 = sphi 0, %s86
    %s88 = sphi 0, %s86
    %s89 = sphi 0, %s88
    %s103 = sphi 0, %s89
    %s109 = sphi 0, %s111
    %s112 = sphi 0, %s109
    %s113 = sphi 0, %s112
    %s129 = sphi 0, %s113
  $region4: #{fpem_v1_forward.9} parent=0 // loop_header_branch
    %13 = sbr.rel (%p11) target = $region8
  $region5: #{fpem_v1_forward.9} parent=0 // loop_body
    %s15 = ssub.s32 %s10, 1
    %s16 = ssub.s32 %s10, 2
    %s17 = sadd.s32 %s10, 1
    %s18 = ssub.s32 %s10, %s17
    %p19 = scmp.eq.s32.totalorder %s18, 0
    %s21 = sadd.s32 %s20, 1
    %s22 = scalar_select %p19, %s20, %s21
    %p25 = pneg %p19
    %p26 = scmp.eq.s32.totalorder %s10, 1
    %p27 = por %p25, %p26
    %p28 = scmp.ne.s32.totalorder %s20, %s23
    %p29 = scmp.eq.s32.totalorder %s10, 0
    %p30 = por %p28, %p29
    %p31 = scmp.ne.s32.totalorder %s20, %s23
    %p32 = scmp.eq.s32.totalorder %s15, 1
    %p33 = por %p31, %p32
    %p34 = scmp.ne.s32.totalorder %s23, %s24
    %p35 = scmp.eq.s32.totalorder %s15, 0
    %p36 = por %p34, %p35
    %p37 = scmp.ne.s32.totalorder %s23, %s24
    %p38 = scmp.eq.s32.totalorder %s16, 1
    %p39 = por %p37, %p38
    %p41 = scmp.ne.s32.totalorder %s24, %s40
    %p42 = scmp.eq.s32.totalorder %s16, 0
    %p43 = por %p41, %p42
    %s45 = sadd.s32 %s44, 1
    %p48 = scmp.eq.s32.totalorder %s10, 1
    %p49 = scmp.ne.s32.totalorder %s44, %s46
    %p50 = scmp.eq.s32.totalorder %s10, 0
    %p51 = por %p49, %p50
    %p52 = scmp.ne.s32.totalorder %s44, %s46
    %p53 = scmp.eq.s32.totalorder %s15, 1
    %p54 = por %p52, %p53
    %p55 = scmp.ne.s32.totalorder %s46, %s47
    %p56 = scmp.eq.s32.totalorder %s15, 0
    %p57 = por %p55, %p56
    %p58 = scmp.ne.s32.totalorder %s46, %s47
    %p59 = scmp.eq.s32.totalorder %s16, 1
    %p60 = por %p58, %p59
    %p62 = scmp.ne.s32.totalorder %s47, %s61
    %p63 = scmp.eq.s32.totalorder %s16, 0
    %p64 = por %p62, %p63
    %s66 = sadd.s32 %s65, 1
    %p69 = scmp.eq.s32.totalorder %s10, 1
    %p70 = scmp.ne.s32.totalorder %s65, %s67
    %p71 = scmp.eq.s32.totalorder %s10, 0
    %p72 = por %p70, %p71
    %p73 = scmp.ne.s32.totalorder %s65, %s67
    %p74 = scmp.eq.s32.totalorder %s15, 1
    %p75 = por %p73, %p74
    %p76 = scmp.ne.s32.totalorder %s67, %s68
    %p77 = scmp.eq.s32.totalorder %s15, 0
    %p78 = por %p76, %p77
    %p79 = scmp.ne.s32.totalorder %s67, %s68
    %p80 = scmp.eq.s32.totalorder %s16, 1
    %p81 = por %p79, %p80
    %p83 = scmp.ne.s32.totalorder %s68, %s82
    %p84 = scmp.eq.s32.totalorder %s16, 0
    %p85 = por %p83, %p84
    %s87 = sadd.s32 %s86, 1
    %p90 = scmp.eq.s32.totalorder %s10, 1
    %p91 = scmp.ne.s32.totalorder %s86, %s88
    %p92 = scmp.eq.s32.totalorder %s10, 0
    %p93 = por %p91, %p92
    %p94 = scmp.ne.s32.totalorder %s86, %s88
    %p95 = scmp.eq.s32.totalorder %s15, 1
    %p96 = por %p94, %p95
    %p97 = scmp.ne.s32.totalorder %s88, %s89
    %p98 = scmp.eq.s32.totalorder %s15, 0
    %p99 = por %p97, %p98
    %p100 = scmp.ne.s32.totalorder %s88, %s89
    %p101 = scmp.eq.s32.totalorder %s16, 1
    %p102 = por %p100, %p101
    %p104 = scmp.ne.s32.totalorder %s89, %s103
    %p105 = scmp.eq.s32.totalorder %s16, 0
    %p106 = por %p104, %p105
    %s107 = ssub.s32 %s10, %s17
    %p108 = scmp.eq.s32.totalorder %s107, 0
    %s110 = sadd.s32 %s109, 1
    %s111 = scalar_select %p108, %s109, %s110
    %p114 = pneg %p108
    %p115 = scmp.eq.s32.totalorder %s10, 1
    %p116 = por %p114, %p115
    %p117 = scmp.ne.s32.totalorder %s109, %s112
    %p118 = scmp.eq.s32.totalorder %s10, 0
    %p119 = por %p117, %p118
    %p120 = scmp.ne.s32.totalorder %s109, %s112
    %p121 = scmp.eq.s32.totalorder %s15, 1
    %p122 = por %p120, %p121
    %p123 = scmp.ne.s32.totalorder %s112, %s113
    %p124 = scmp.eq.s32.totalorder %s15, 0
    %p125 = por %p123, %p124
    %p126 = scmp.ne.s32.totalorder %s112, %s113
    %p127 = scmp.eq.s32.totalorder %s16, 1
    %p128 = por %p126, %p127
    %p130 = scmp.ne.s32.totalorder %s113, %s129
    %p131 = scmp.eq.s32.totalorder %s16, 0
    %p132 = por %p130, %p131
    %p133 = scmp.le.s32.totalorder 1, %s10
    %p134 = scmp.lt.s32.totalorder %s10, 3
    %p135 = pnand %p133, %p134
    %p136 = pneg %p135
    // Predicated region
    $region9: #{fpem_v1_forward.9} parent=5 // pred_check
      _
    $region10: #{fpem_v1_forward.9} parent=5 // pred_check_branch
      %138 = sbr.rel (%p135) target = $region12
    $region11: #{fpem_v1_forward.9} parent=5 // pred_region
      %s139 = ssub.s32 %s10, 1
      // Predicated region
      $region13: #{fpem_v1_forward.9} parent=11 // pred_check
        %p140 = pneg %p57
      $region14: #{fpem_v1_forward.9} parent=11 // pred_check_branch
        %142 = sbr.rel (%p140) target = $region16
      $region15: #{fpem_v1_forward.9} parent=11 // pred_region
        _
      $region16: #{fpem_v1_forward.9} parent=11 // pred_fallthru
        _
      // Predicated region
      $region17: #{fpem_v1_forward.9} parent=11 // pred_check
        %p143 = pneg %p78
      $region18: #{fpem_v1_forward.9} parent=11 // pred_check_branch
        %145 = sbr.rel (%p143) target = $region20
      $region19: #{fpem_v1_forward.9} parent=11 // pred_region
        _
      $region20: #{fpem_v1_forward.9} parent=11 // pred_fallthru
        _
      // Predicated region
      $region21: #{fpem_v1_forward.9} parent=11 // pred_check
        %p146 = pneg %p99
      $region22: #{fpem_v1_forward.9} parent=11 // pred_check_branch
        %148 = sbr.rel (%p146) target = $region24
      $region23: #{fpem_v1_forward.9} parent=11 // pred_region
        _
      $region24: #{fpem_v1_forward.9} parent=11 // pred_fallthru
        _
    $region12: #{fpem_v1_forward.9} parent=5 // pred_fallthru
      _
    %p149 = scmp.lt.s32.totalorder %s10, 2
    // Predicated region
    $region25: #{fpem_v1_forward.9} parent=5 // pred_check
      %p150 = pneg %p149
    $region26: #{fpem_v1_forward.9} parent=5 // pred_check_branch
      %152 = sbr.rel (%p150) target = $region28
    $region27: #{fpem_v1_forward.9} parent=5 // pred_region
      // Predicated region
      $region29: #{fpem_v1_forward.9} parent=27 // pred_check
        %p153 = pneg %p30
      $region30: #{fpem_v1_forward.9} parent=27 // pred_check_branch
        %155 = sbr.rel (%p153) target = $region32
      $region31: #{fpem_v1_forward.9} parent=27 // pred_region
        %p156 = scmp.lt.s32.totalorder %s10, 1
        %s157 = scalar_select %p156, %s10, 1
        %s158 = smul.addr %s157, 72
        %s159 = smul.addr %s158, 8
        %s160 = scalar_lea.vmem %s0, %s159
      $region32: #{fpem_v1_forward.9} parent=27 // pred_fallthru
        _
    $region28: #{fpem_v1_forward.9} parent=5 // pred_fallthru
      _
    %p161 = scmp.le.s32.totalorder 1, %s10
    %p162 = scmp.lt.s32.totalorder %s10, 3
    %p163 = pnand %p161, %p162
    %p164 = pneg %p163
    // Predicated region
    $region33: #{fpem_v1_forward.9} parent=5 // pred_check
      _
    $region34: #{fpem_v1_forward.9} parent=5 // pred_check_branch
      %166 = sbr.rel (%p163) target = $region36
    $region35: #{fpem_v1_forward.9} parent=5 // pred_region
      %s167 = ssub.s32 %s10, 1
      %p168 = scmp.lt.s32.totalorder %s15, 1
      %s169 = scalar_select %p168, %s15, 1
      %s170 = smul.addr %s169, 72
      %s171 = smul.addr %s170, 8
      %s172 = scalar_lea.vmem %s0, %s171
      %p173 = pneg %p36
      %p174 = pneg %p33
      %p175 = pneg %p57
      %p176 = pneg %p54
      %p177 = pneg %p78
      %p178 = pneg %p75
      %p179 = pneg %p99
      %p180 = pneg %p96
      %p181 = pneg %p125
      %p182 = pneg %p122
      %p183 = scmp.lt.s32.totalorder %s15, 1
      %s184 = scalar_select %p183, %s15, 1
      %s185 = smul.addr %s184, 8
      %s186 = smul.addr %s185, 8
      %s187 = scalar_lea.vmem %s4, %s186
      %p188 = scmp.lt.s32.totalorder %s15, 1
      %s189 = scalar_select %p188, %s15, 1
      %s190 = smul.addr %s189, 72
      %s191 = smul.addr %s190, 8
      %s192 = scalar_lea.vmem %s0, %s191
      %p193 = scmp.lt.s32.totalorder %s15, 1
      %s194 = scalar_select %p193, %s15, 1
      %s195 = smul.addr %s194, 8
      %s196 = smul.addr %s195, 8
      %s197 = scalar_lea.vmem %s4, %s196
      %v198 = vld [vmem:[%s1] sm:$0x1]
      %v199 = vld [vmem:[%s1 + $0x1] sm:$0x1]
      %v200 = vld [vmem:[%s1 + $0x2] sm:$0x1]
      %v201 = vld [vmem:[%s1 + $0x3] sm:$0x1]
      %v202 = vld [vmem:[%s1 + $0x4] sm:$0x1]
      %v203 = vld [vmem:[%s1 + $0x5] sm:$0x1]
      %v204 = vld [vmem:[%s1 + $0x6] sm:$0x1]
      %v205 = vld [vmem:[%s1 + $0x7] sm:$0x1]
      %v206 = vld [vmem:[%s1 + $0x8] sm:$0x1]
      %v207 = vld [vmem:[%s192] sm:$0xff]
      %v208 = vld [vmem:[%s192 + $0x8] sm:$0x1]
      %s209 = scalar_lea.vmem %s192, 144
      %v210 = vld [vmem:[%s209] sm:$0xff]
      %v211 = vlaneseq
      %v212 = vshrl.u32 %v211, 7
      %v213 = vsub.s32 0, %v212
      %v214 = vrot.slane %v198, %v213
      %v215 = vmul.f32 %v207, %v214
      %v216 = vadd.f32 %v215, 0.0
      %v217 = vlaneseq
      %v218 = vshrl.u32 %v217, 7
      %v219 = vsub.s32 0, %v218
      %v220 = vrot.slane %v199, %v219
      %v221 = vmul.f32 %v210, %v220
      %v222 = vadd.f32 %v216, %v221
      %v223 = vlaneseq
      %v224 = vshrl.u32 %v223, 7
      %v225 = vsub.s32 0, %v224
      %v226 = vrot.slane %v200, %v225
      %v227 = vmul.f32 %v207, %v226
      %v228 = vmul.f32 %v208, %v226
      %vm231 = vcmask 1046528
      %v232 = vrot.slane %v227, 1
      %v233 = vrot.slane %v228, 1
      %v234 = vsel %vm231, %v232, %v233
      %v236 = vadd.f32 %v222, %v234
      %s237 = scalar_lea.vmem %s192, 288
      %v238 = vld [vmem:[%s237] sm:$0xff]
      %v239 = vld [vmem:[%s237 + $0x8] sm:$0x1]
      %s240 = scalar_lea.vmem %s192, 432
      %v241 = vld [vmem:[%s240] sm:$0xff]
      %v242 = vlaneseq
      %v243 = vshrl.u32 %v242, 7
      %v244 = vsub.s32 0, %v243
      %v245 = vrot.slane %v201, %v244
      %v246 = vmul.f32 %v238, %v245
      %v247 = vadd.f32 %v236, %v246
      %v248 = vlaneseq
      %v249 = vshrl.u32 %v248, 7
      %v250 = vsub.s32 0, %v249
      %v251 = vrot.slane %v202, %v250
      %v252 = vmul.f32 %v241, %v251
      %v253 = vadd.f32 %v247, %v252
      %v254 = vlaneseq
      %v255 = vshrl.u32 %v254, 7
      %v256 = vsub.s32 0, %v255
      %v257 = vrot.slane %v203, %v256
      %v258 = vmul.f32 %v238, %v257
      %v259 = vmul.f32 %v239, %v257
      %v262 = vrot.slane %v258, 1
      %v263 = vrot.slane %v259, 1
      %v264 = vsel %vm231, %v262, %v263
      %v266 = vadd.f32 %v253, %v264
      %s267 = scalar_lea.vmem %s192, 16
      %v268 = vld [vmem:[%s267] sm:$0xff]
      %v269 = vld [vmem:[%s267 + $0x8] sm:$0x1]
      %s270 = scalar_lea.vmem %s192, 160
      %v271 = vld [vmem:[%s270] sm:$0xff]
      %v272 = vlaneseq
      %v273 = vshrl.u32 %v272, 7
      %v274 = vsub.s32 0, %v273
      %v275 = vrot.slane %v204, %v274
      %v276 = vmul.f32 %v268, %v275
      %v277 = vadd.f32 %v266, %v276
      %v278 = vlaneseq
      %v279 = vshrl.u32 %v278, 7
      %v280 = vsub.s32 0, %v279
      %v281 = vrot.slane %v205, %v280
      %v282 = vmul.f32 %v271, %v281
      %v283 = vadd.f32 %v277, %v282
      %v284 = vlaneseq
      %v285 = vshrl.u32 %v284, 7
      %v286 = vsub.s32 0, %v285
      %v287 = vrot.slane %v206, %v286
      %v288 = vmul.f32 %v268, %v287
      %v289 = vmul.f32 %v269, %v287
      %v292 = vrot.slane %v288, 1
      %v293 = vrot.slane %v289, 1
      %v294 = vsel %vm231, %v292, %v293
      %v296 = vadd.f32 %v283, %v294
      %297 = vst [vmem:[#allocation2] sm:$0xff] %v296
      %v298 = vld [vmem:[%s267] sm:$0xff]
      %v299 = vld [vmem:[%s267 + $0x8] sm:$0x1]
      %v300 = vld [vmem:[%s270] sm:$0xff]
      %v301 = vmul.f32 %v298, %v214
      %v302 = vadd.f32 %v301, 0.0
      %v303 = vmul.f32 %v300, %v220
      %v304 = vadd.f32 %v302, %v303
      %v305 = vmul.f32 %v298, %v226
      %v306 = vmul.f32 %v299, %v226
      %v309 = vrot.slane %v305, 1
      %v310 = vrot.slane %v306, 1
      %v311 = vsel %vm231, %v309, %v310
      %v313 = vadd.f32 %v304, %v311
      %s314 = scalar_lea.vmem %s192, 304
      %v315 = vld [vmem:[%s314] sm:$0xff]
      %v316 = vld [vmem:[%s314 + $0x8] sm:$0x1]
      %s317 = scalar_lea.vmem %s192, 448
      %v318 = vld [vmem:[%s317] sm:$0xff]
      %v319 = vmul.f32 %v315, %v245
      %v320 = vadd.f32 %v313, %v319
      %v321 = vmul.f32 %v318, %v251
      %v322 = vadd.f32 %v320, %v321
      %v323 = vmul.f32 %v315, %v257
      %v324 = vmul.f32 %v316, %v257
      %v327 = vrot.slane %v323, 1
      %v328 = vrot.slane %v324, 1
      %v329 = vsel %vm231, %v327, %v328
      %v331 = vadd.f32 %v322, %v329
      %s332 = scalar_lea.vmem %s192, 32
      %v333 = vld [vmem:[%s332] sm:$0xff]
      %v334 = vld [vmem:[%s332 + $0x8] sm:$0x1]
      %s335 = scalar_lea.vmem %s192, 176
      %v336 = vld [vmem:[%s335] sm:$0xff]
      %v337 = vmul.f32 %v333, %v275
      %v338 = vadd.f32 %v331, %v337
      %v339 = vmul.f32 %v336, %v281
      %v340 = vadd.f32 %v338, %v339
      %v341 = vmul.f32 %v333, %v287
      %v342 = vmul.f32 %v334, %v287
      %v345 = vrot.slane %v341, 1
      %v346 = vrot.slane %v342, 1
      %v347 = vsel %vm231, %v345, %v346
      %v349 = vadd.f32 %v340, %v347
      %350 = vst [vmem:[#allocation2 + $0x8] sm:$0xff] %v349
      %v351 = vld [vmem:[%s332] sm:$0xff]
      %v352 = vld [vmem:[%s332 + $0x8] sm:$0x1]
      %v353 = vld [vmem:[%s335] sm:$0xff]
      %v354 = vmul.f32 %v351, %v214
      %v355 = vadd.f32 %v354, 0.0
      %v356 = vmul.f32 %v353, %v220
      %v357 = vadd.f32 %v355, %v356
      %v358 = vmul.f32 %v351, %v226
      %v359 = vmul.f32 %v352, %v226
      %v362 = vrot.slane %v358, 1
      %v363 = vrot.slane %v359, 1
      %v364 = vsel %vm231, %v362, %v363
      %v366 = vadd.f32 %v357, %v364
      %s367 = scalar_lea.vmem %s192, 320
      %v368 = vld [vmem:[%s367] sm:$0xff]
      %v369 = vld [vmem:[%s367 + $0x8] sm:$0x1]
      %s370 = scalar_lea.vmem %s192, 464
      %v371 = vld [vmem:[%s370] sm:$0xff]
      %v372 = vmul.f32 %v368, %v245
      %v373 = vadd.f32 %v366, %v372
      %v374 = vmul.f32 %v371, %v251
      %v375 = vadd.f32 %v373, %v374
      %v376 = vmul.f32 %v368, %v257
      %v377 = vmul.f32 %v369, %v257
      %v380 = vrot.slane %v376, 1
      %v381 = vrot.slane %v377, 1
      %v382 = vsel %vm231, %v380, %v381
      %v384 = vadd.f32 %v375, %v382
      %s385 = scalar_lea.vmem %s192, 48
      %v386 = vld [vmem:[%s385] sm:$0xff]
      %v387 = vld [vmem:[%s385 + $0x8] sm:$0x1]
      %s388 = scalar_lea.vmem %s192, 192
      %v389 = vld [vmem:[%s388] sm:$0xff]
      %v390 = vmul.f32 %v386, %v275
      %v391 = vadd.f32 %v384, %v390
      %v392 = vmul.f32 %v389, %v281
      %v393 = vadd.f32 %v391, %v392
      %v394 = vmul.f32 %v386, %v287
      %v395 = vmul.f32 %v387, %v287
      %v398 = vrot.slane %v394, 1
      %v399 = vrot.slane %v395, 1
      %v400 = vsel %vm231, %v398, %v399
      %v402 = vadd.f32 %v393, %v400
      %403 = vst [vmem:[#allocation2 + $0x10] sm:$0xff] %v402
      %v404 = vld [vmem:[%s385] sm:$0xff]
      %v405 = vld [vmem:[%s385 + $0x8] sm:$0x1]
      %v406 = vld [vmem:[%s388] sm:$0xff]
      %v407 = vmul.f32 %v404, %v214
      %v408 = vadd.f32 %v407, 0.0
      %v409 = vmul.f32 %v406, %v220
      %v410 = vadd.f32 %v408, %v409
      %v411 = vmul.f32 %v404, %v226
      %v412 = vmul.f32 %v405, %v226
      %v415 = vrot.slane %v411, 1
      %v416 = vrot.slane %v412, 1
      %v417 = vsel %vm231, %v415, %v416
      %v419 = vadd.f32 %v410, %v417
      %s420 = scalar_lea.vmem %s192, 336
      %v421 = vld [vmem:[%s420] sm:$0xff]
      %v422 = vld [vmem:[%s420 + $0x8] sm:$0x1]
      %s423 = scalar_lea.vmem %s192, 480
      %v424 = vld [vmem:[%s423] sm:$0xff]
      %v425 = vmul.f32 %v421, %v245
      %v426 = vadd.f32 %v419, %v425
      %v427 = vmul.f32 %v424, %v251
      %v428 = vadd.f32 %v426, %v427
      %v429 = vmul.f32 %v421, %v257
      %v430 = vmul.f32 %v422, %v257
      %v433 = vrot.slane %v429, 1
      %v434 = vrot.slane %v430, 1
      %v435 = vsel %vm231, %v433, %v434
      %v437 = vadd.f32 %v428, %v435
      %s438 = scalar_lea.vmem %s192, 64
      %v439 = vld [vmem:[%s438] sm:$0xff]
      %v440 = vld [vmem:[%s438 + $0x8] sm:$0x1]
      %s441 = scalar_lea.vmem %s192, 208
      %v442 = vld [vmem:[%s441] sm:$0xff]
      %v443 = vmul.f32 %v439, %v275
      %v444 = vadd.f32 %v437, %v443
      %v445 = vmul.f32 %v442, %v281
      %v446 = vadd.f32 %v444, %v445
      %v447 = vmul.f32 %v439, %v287
      %v448 = vmul.f32 %v440, %v287
      %v451 = vrot.slane %v447, 1
      %v452 = vrot.slane %v448, 1
      %v453 = vsel %vm231, %v451, %v452
      %v455 = vadd.f32 %v446, %v453
      %456 = vst [vmem:[#allocation2 + $0x18] sm:$0xff] %v455
      %v457 = vld [vmem:[%s438] sm:$0xff]
      %v458 = vld [vmem:[%s438 + $0x8] sm:$0x1]
      %v459 = vld [vmem:[%s441] sm:$0xff]
      %v460 = vmul.f32 %v457, %v214
      %v461 = vadd.f32 %v460, 0.0
      %v462 = vmul.f32 %v459, %v220
      %v463 = vadd.f32 %v461, %v462
      %v464 = vmul.f32 %v457, %v226
      %v465 = vmul.f32 %v458, %v226
      %v468 = vrot.slane %v464, 1
      %v469 = vrot.slane %v465, 1
      %v470 = vsel %vm231, %v468, %v469
      %v472 = vadd.f32 %v463, %v470
      %s473 = scalar_lea.vmem %s192, 352
      %v474 = vld [vmem:[%s473] sm:$0xff]
      %v475 = vld [vmem:[%s473 + $0x8] sm:$0x1]
      %s476 = scalar_lea.vmem %s192, 496
      %v477 = vld [vmem:[%s476] sm:$0xff]
      %v478 = vmul.f32 %v474, %v245
      %v479 = vadd.f32 %v472, %v478
      %v480 = vmul.f32 %v477, %v251
      %v481 = vadd.f32 %v479, %v480
      %v482 = vmul.f32 %v474, %v257
      %v483 = vmul.f32 %v475, %v257
      %v486 = vrot.slane %v482, 1
      %v487 = vrot.slane %v483, 1
      %v488 = vsel %vm231, %v486, %v487
      %v490 = vadd.f32 %v481, %v488
      %s491 = scalar_lea.vmem %s192, 80
      %v492 = vld [vmem:[%s491] sm:$0xff]
      %v493 = vld [vmem:[%s491 + $0x8] sm:$0x1]
      %s494 = scalar_lea.vmem %s192, 224
      %v495 = vld [vmem:[%s494] sm:$0xff]
      %v496 = vmul.f32 %v492, %v275
      %v497 = vadd.f32 %v490, %v496
      %v498 = vmul.f32 %v495, %v281
      %v499 = vadd.f32 %v497, %v498
      %v500 = vmul.f32 %v492, %v287
      %v501 = vmul.f32 %v493, %v287
      %v504 = vrot.slane %v500, 1
      %v505 = vrot.slane %v501, 1
      %v506 = vsel %vm231, %v504, %v505
      %v508 = vadd.f32 %v499, %v506
      %509 = vst [vmem:[#allocation2 + $0x20] sm:$0xff] %v508
      %v510 = vld [vmem:[%s491] sm:$0xff]
      %v511 = vld [vmem:[%s491 + $0x8] sm:$0x1]
      %v512 = vld [vmem:[%s494] sm:$0xff]
      %v513 = vmul.f32 %v510, %v214
      %v514 = vadd.f32 %v513, 0.0
      %v515 = vmul.f32 %v512, %v220
      %v516 = vadd.f32 %v514, %v515
      %v517 = vmul.f32 %v510, %v226
      %v518 = vmul.f32 %v511, %v226
      %v521 = vrot.slane %v517, 1
      %v522 = vrot.slane %v518, 1
      %v523 = vsel %vm231, %v521, %v522
      %v525 = vadd.f32 %v516, %v523
      %s526 = scalar_lea.vmem %s192, 368
      %v527 = vld [vmem:[%s526] sm:$0xff]
      %v528 = vld [vmem:[%s526 + $0x8] sm:$0x1]
      %s529 = scalar_lea.vmem %s192, 512
      %v530 = vld [vmem:[%s529] sm:$0xff]
      %v531 = vmul.f32 %v527, %v245
      %v532 = vadd.f32 %v525, %v531
      %v533 = vmul.f32 %v530, %v251
      %v534 = vadd.f32 %v532, %v533
      %v535 = vmul.f32 %v527, %v257
      %v536 = vmul.f32 %v528, %v257
      %v539 = vrot.slane %v535, 1
      %v540 = vrot.slane %v536, 1
      %v541 = vsel %vm231, %v539, %v540
      %v543 = vadd.f32 %v534, %v541
      %s544 = scalar_lea.vmem %s192, 96
      %v545 = vld [vmem:[%s544] sm:$0xff]
      %v546 = vld [vmem:[%s544 + $0x8] sm:$0x1]
      %s547 = scalar_lea.vmem %s192, 240
      %v548 = vld [vmem:[%s547] sm:$0xff]
      %v549 = vmul.f32 %v545, %v275
      %v550 = vadd.f32 %v543, %v549
      %v551 = vmul.f32 %v548, %v281
      %v552 = vadd.f32 %v550, %v551
      %v553 = vmul.f32 %v545, %v287
      %v554 = vmul.f32 %v546, %v287
      %v557 = vrot.slane %v553, 1
      %v558 = vrot.slane %v554, 1
      %v559 = vsel %vm231, %v557, %v558
      %v561 = vadd.f32 %v552, %v559
      %562 = vst [vmem:[#allocation2 + $0x28] sm:$0xff] %v561
      %v563 = vld [vmem:[%s544] sm:$0xff]
      %v564 = vld [vmem:[%s544 + $0x8] sm:$0x1]
      %v565 = vld [vmem:[%s547] sm:$0xff]
      %v566 = vmul.f32 %v563, %v214
      %v567 = vadd.f32 %v566, 0.0
      %v568 = vmul.f32 %v565, %v220
      %v569 = vadd.f32 %v567, %v568
      %v570 = vmul.f32 %v563, %v226
      %v571 = vmul.f32 %v564, %v226
      %v574 = vrot.slane %v570, 1
      %v575 = vrot.slane %v571, 1
      %v576 = vsel %vm231, %v574, %v575
      %v578 = vadd.f32 %v569, %v576
      %s579 = scalar_lea.vmem %s192, 384
      %v580 = vld [vmem:[%s579] sm:$0xff]
      %v581 = vld [vmem:[%s579 + $0x8] sm:$0x1]
      %s582 = scalar_lea.vmem %s192, 528
      %v583 = vld [vmem:[%s582] sm:$0xff]
      %v584 = vmul.f32 %v580, %v245
      %v585 = vadd.f32 %v578, %v584
      %v586 = vmul.f32 %v583, %v251
      %v587 = vadd.f32 %v585, %v586
      %v588 = vmul.f32 %v580, %v257
      %v589 = vmul.f32 %v581, %v257
      %v592 = vrot.slane %v588, 1
      %v593 = vrot.slane %v589, 1
      %v594 = vsel %vm231, %v592, %v593
      %v596 = vadd.f32 %v587, %v594
      %s597 = scalar_lea.vmem %s192, 112
      %v598 = vld [vmem:[%s597] sm:$0xff]
      %v599 = vld [vmem:[%s597 + $0x8] sm:$0x1]
      %s600 = scalar_lea.vmem %s192, 256
      %v601 = vld [vmem:[%s600] sm:$0xff]
      %v602 = vmul.f32 %v598, %v275
      %v603 = vadd.f32 %v596, %v602
      %v604 = vmul.f32 %v601, %v281
      %v605 = vadd.f32 %v603, %v604
      %v606 = vmul.f32 %v598, %v287
      %v607 = vmul.f32 %v599, %v287
      %v610 = vrot.slane %v606, 1
      %v611 = vrot.slane %v607, 1
      %v612 = vsel %vm231, %v610, %v611
      %v614 = vadd.f32 %v605, %v612
      %615 = vst [vmem:[#allocation2 + $0x30] sm:$0xff] %v614
      %v616 = vld [vmem:[%s597] sm:$0xff]
      %v617 = vld [vmem:[%s597 + $0x8] sm:$0x1]
      %v618 = vld [vmem:[%s600] sm:$0xff]
      %v619 = vmul.f32 %v616, %v214
      %v620 = vadd.f32 %v619, 0.0
      %v621 = vmul.f32 %v618, %v220
      %v622 = vadd.f32 %v620, %v621
      %v623 = vmul.f32 %v616, %v226
      %v624 = vmul.f32 %v617, %v226
      %v627 = vrot.slane %v623, 1
      %v628 = vrot.slane %v624, 1
      %v629 = vsel %vm231, %v627, %v628
      %v631 = vadd.f32 %v622, %v629
      %s632 = scalar_lea.vmem %s192, 400
      %v633 = vld [vmem:[%s632] sm:$0xff]
      %v634 = vld [vmem:[%s632 + $0x8] sm:$0x1]
      %s635 = scalar_lea.vmem %s192, 544
      %v636 = vld [vmem:[%s635] sm:$0xff]
      %v637 = vmul.f32 %v633, %v245
      %v638 = vadd.f32 %v631, %v637
      %v639 = vmul.f32 %v636, %v251
      %v640 = vadd.f32 %v638, %v639
      %v641 = vmul.f32 %v633, %v257
      %v642 = vmul.f32 %v634, %v257
      %v645 = vrot.slane %v641, 1
      %v646 = vrot.slane %v642, 1
      %v647 = vsel %vm231, %v645, %v646
      %v649 = vadd.f32 %v640, %v647
      %s650 = scalar_lea.vmem %s192, 128
      %v651 = vld [vmem:[%s650] sm:$0xff]
      %v652 = vld [vmem:[%s650 + $0x8] sm:$0x1]
      %s653 = scalar_lea.vmem %s192, 272
      %v654 = vld [vmem:[%s653] sm:$0xff]
      %v655 = vmul.f32 %v651, %v275
      %v656 = vadd.f32 %v649, %v655
      %v657 = vmul.f32 %v654, %v281
      %v658 = vadd.f32 %v656, %v657
      %v659 = vmul.f32 %v651, %v287
      %v660 = vmul.f32 %v652, %v287
      %v663 = vrot.slane %v659, 1
      %v664 = vrot.slane %v660, 1
      %v665 = vsel %vm231, %v663, %v664
      %v667 = vadd.f32 %v658, %v665
      %668 = vst [vmem:[#allocation2 + $0x38] sm:$0xff] %v667
      %v669 = vld [vmem:[#allocation2] sm:$0xff]
      %v670 = vld [vmem:[#allocation2 + $0x8] sm:$0xff]
      %v671 = vld [vmem:[#allocation2 + $0x10] sm:$0xff]
      %v672 = vld [vmem:[#allocation2 + $0x18] sm:$0xff]
      %v673 = vld [vmem:[#allocation2 + $0x20] sm:$0xff]
      %v674 = vld [vmem:[#allocation2 + $0x28] sm:$0xff]
      %v675 = vld [vmem:[#allocation2 + $0x30] sm:$0xff]
      %v676 = vld [vmem:[#allocation2 + $0x38] sm:$0xff]
      %v677 = vld [vmem:[%s2] sm:$0xff]
      %v678 = vld [vmem:[%s2 + $0x8] sm:$0xff]
      %v679 = vld [vmem:[%s2 + $0x10] sm:$0xff]
      %v680 = vld [vmem:[%s2 + $0x18] sm:$0xff]
      %v681 = vld [vmem:[%s2 + $0x20] sm:$0xff]
      %v682 = vld [vmem:[%s2 + $0x28] sm:$0xff]
      %v683 = vld [vmem:[%s2 + $0x30] sm:$0xff]
      %v684 = vld [vmem:[%s2 + $0x38] sm:$0xff]
      %v685 = vld [vmem:[%s2 + $0x40] sm:$0xff]
      %v686 = vld [vmem:[%s2 + $0x48] sm:$0xff]
      %v687 = vld [vmem:[%s2 + $0x50] sm:$0xff]
      %v688 = vld [vmem:[%s2 + $0x58] sm:$0xff]
      %v689 = vld [vmem:[%s2 + $0x60] sm:$0xff]
      %v690 = vld [vmem:[%s2 + $0x68] sm:$0xff]
      %v691 = vld [vmem:[%s2 + $0x70] sm:$0xff]
      %v692 = vld [vmem:[%s2 + $0x78] sm:$0xff]
      %v693 = vld [vmem:[%s3] sm:$0x1]
      %v695 = vlaneseq
      %v696 = vshrl.u32 %v695, 7
      %v697 = vsub.s32 0, %v696
      %v698 = vrot.slane %v693, %v697
      %700 = vmatprep.subr.mxu0 0.0
      %701 = vmatpush1.msra.mxu0 %v677
      %702 = vmatprep.subr.mxu0 0.0
      %703 = vmatpush1.msra.mxu0 %v678
      %704 = vmatprep.subr.mxu0 0.0
      %705 = vmatpush1.msra.mxu0 %v679
      %706 = vmatprep.subr.mxu0 0.0
      %707 = vmatpush1.msra.mxu0 %v680
      %708 = vmatprep.subr.mxu0 0.0
      %709 = vmatpush1.msra.mxu0 %v681
      %710 = vmatprep.subr.mxu0 0.0
      %711 = vmatpush1.msra.mxu0 %v682
      %712 = vmatprep.subr.mxu0 0.0
      %713 = vmatpush1.msra.mxu0 %v683
      %714 = vmatprep.subr.mxu0 0.0
      %715 = vmatpush1.msra.mxu0 %v684
      %716 = vmatprep.subr.mxu0 0.0
      %717 = vmatpush1.msra.mxu0 %v685
      %718 = vmatprep.subr.mxu0 0.0
      %719 = vmatpush1.msra.mxu0 %v686
      %720 = vmatprep.subr.mxu0 0.0
      %721 = vmatpush1.msra.mxu0 %v687
      %722 = vmatprep.subr.mxu0 0.0
      %723 = vmatpush1.msra.mxu0 %v688
      %724 = vmatprep.subr.mxu0 0.0
      %725 = vmatpush1.msra.mxu0 %v689
      %726 = vmatprep.subr.mxu0 0.0
      %727 = vmatpush1.msra.mxu0 %v690
      %728 = vmatprep.subr.mxu0 0.0
      %729 = vmatpush1.msra.mxu0 %v691
      %730 = vmatprep.subr.mxu0 0.0
      %731 = vmatpush1.msra.mxu0 %v692
      %732 = vmatprep.subr.mxu0 0.0
      %733 = vmatpush1.msra.mxu0 0.0
      %734 = vmatprep.subr.mxu0 0.0
      %735 = vmatpush1.msra.mxu0 0.0
      %736 = vmatprep.subr.mxu0 0.0
      %737 = vmatpush1.msra.mxu0 0.0
      %738 = vmatprep.subr.mxu0 0.0
      %739 = vmatpush1.msra.mxu0 0.0
      %740 = vmatprep.subr.mxu0 0.0
      %741 = vmatpush1.msra.mxu0 0.0
      %742 = vmatprep.subr.mxu0 0.0
      %743 = vmatpush1.msra.mxu0 0.0
      %744 = vmatprep.subr.mxu0 0.0
      %745 = vmatpush1.msra.mxu0 0.0
      %746 = vmatprep.subr.mxu0 0.0
      %747 = vmatpush1.msra.mxu0 0.0
      %748 = vmatprep.subr.mxu0 0.0
      %749 = vmatpush1.msra.mxu0 0.0
      %750 = vmatprep.subr.mxu0 0.0
      %751 = vmatpush1.msra.mxu0 0.0
      %752 = vmatprep.subr.mxu0 0.0
      %753 = vmatpush1.msra.mxu0 0.0
      %754 = vmatprep.subr.mxu0 0.0
      %755 = vmatpush1.msra.mxu0 0.0
      %756 = vmatprep.subr.mxu0 0.0
      %757 = vmatpush1.msra.mxu0 0.0
      %758 = vmatprep.subr.mxu0 0.0
      %759 = vmatpush1.msra.mxu0 0.0
      %760 = vmatprep.subr.mxu0 0.0
      %761 = vmatpush1.msra.mxu0 0.0
      %762 = vmatprep.subr.mxu0 0.0
      %763 = vmatpush1.msra.mxu0 0.0
      %764 = vmatprep.mubr.f32.mxu0 0.0
      %765 = vmatmul.mubr.f32.gmra.mrb[0].mxu0 %v669
      %v766 = vpop.f32.mrb[0].mxu0
      %v767 = vadd.f32 %v698, %v766
      %v768 = vpop.f32.mrb[0].mxu0
      %769 = vmatprep.mubr.f32.mxu0 0.0
      %770 = vmatmul.mubr.f32.gmra.mrb[0].mxu0 %v670
      %v771 = vpop.f32.mrb[0].mxu0
      %v772 = vadd.f32 %v698, %v771
      %v773 = vpop.f32.mrb[0].mxu0
      %774 = vmatprep.mubr.f32.mxu0 0.0
      %775 = vmatmul.mubr.f32.gmra.mrb[0].mxu0 %v671
      %v776 = vpop.f32.mrb[0].mxu0
      %v777 = vadd.f32 %v698, %v776
      %v778 = vpop.f32.mrb[0].mxu0
      %779 = vmatprep.mubr.f32.mxu0 0.0
      %780 = vmatmul.mubr.f32.gmra.mrb[0].mxu0 %v672
      %v781 = vpop.f32.mrb[0].mxu0
      %v782 = vadd.f32 %v698, %v781
      %v783 = vpop.f32.mrb[0].mxu0
      %784 = vmatprep.mubr.f32.mxu0 0.0
      %785 = vmatmul.mubr.f32.gmra.mrb[0].mxu0 %v673
      %v786 = vpop.f32.mrb[0].mxu0
      %v787 = vadd.f32 %v698, %v786
      %v788 = vpop.f32.mrb[0].mxu0
      %789 = vmatprep.mubr.f32.mxu0 0.0
      %790 = vmatmul.mubr.f32.gmra.mrb[0].mxu0 %v674
      %v791 = vpop.f32.mrb[0].mxu0
      %v792 = vadd.f32 %v698, %v791
      %v793 = vpop.f32.mrb[0].mxu0
      %794 = vmatprep.mubr.f32.mxu0 0.0
      %795 = vmatmul.mubr.f32.gmra.mrb[0].mxu0 %v675
      %v796 = vpop.f32.mrb[0].mxu0
      %v797 = vadd.f32 %v698, %v796
      %v798 = vpop.f32.mrb[0].mxu0
      %799 = vmatprep.mubr.f32.mxu0 0.0
      %800 = vmatmul.mubr.f32.gmra.mrb[0].mxu0 %v676
      %v801 = vpop.f32.mrb[0].mxu0
      %v802 = vadd.f32 %v698, %v801
      %v803 = vpop.f32.mrb[0].mxu0
      %804 = vdwg.mxu0
      %v805 = vmax.f32 %v767, 0.0
      %v806 = vmax.f32 %v772, 0.0
      %v807 = vmax.f32 %v777, 0.0
      %v808 = vmax.f32 %v782, 0.0
      %v809 = vmax.f32 %v787, 0.0
      %v810 = vmax.f32 %v792, 0.0
      %v811 = vmax.f32 %v797, 0.0
      %v812 = vmax.f32 %v802, 0.0
      %813 = vst [vmem:[%s197] sm:$0xff] %v805
      %814 = vst [vmem:[%s197 + $0x8] sm:$0xff] %v806
      %815 = vst [vmem:[%s197 + $0x10] sm:$0xff] %v807
      %816 = vst [vmem:[%s197 + $0x18] sm:$0xff] %v808
      %817 = vst [vmem:[%s197 + $0x20] sm:$0xff] %v809
      %818 = vst [vmem:[%s197 + $0x28] sm:$0xff] %v810
      %819 = vst [vmem:[%s197 + $0x30] sm:$0xff] %v811
      %820 = vst [vmem:[%s197 + $0x38] sm:$0xff] %v812
      %p821 = scmp.lt.s32.totalorder %s15, 1
      %s822 = scalar_select %p821, %s15, 1
      %s823 = smul.addr %s822, 8
      %s824 = smul.addr %s823, 8
      %s825 = scalar_lea.vmem %s4, %s824
      // Predicated region
      $region37: #{fpem_v1_forward.9} parent=35 // pred_check
        %p826 = pneg %p122
      $region38: #{fpem_v1_forward.9} parent=35 // pred_check_branch
        %828 = sbr.rel (%p826) target = $region40
      $region39: #{fpem_v1_forward.9} parent=35 // pred_region
        _
      $region40: #{fpem_v1_forward.9} parent=35 // pred_fallthru
        _
    $region36: #{fpem_v1_forward.9} parent=5 // pred_fallthru
      _
    %p829 = scmp.le.s32.totalorder 2, %s10
    // Predicated region
    $region41: #{fpem_v1_forward.9} parent=5 // pred_check
      %p830 = pneg %p829
    $region42: #{fpem_v1_forward.9} parent=5 // pred_check_branch
      %832 = sbr.rel (%p830) target = $region44
    $region43: #{fpem_v1_forward.9} parent=5 // pred_region
      %s833 = ssub.s32 %s10, 2
      // Predicated region
      $region45: #{fpem_v1_forward.9} parent=43 // pred_check
        %p834 = pneg %p128
      $region46: #{fpem_v1_forward.9} parent=43 // pred_check_branch
        %836 = sbr.rel (%p834) target = $region48
      $region47: #{fpem_v1_forward.9} parent=43 // pred_region
        %p837 = scmp.lt.s32.totalorder %s16, 1
        %s838 = scalar_select %p837, %s16, 1
        %s839 = smul.addr %s838, 8
        %s840 = smul.addr %s839, 8
        %s841 = scalar_lea.vmem %s4, %s840
      $region48: #{fpem_v1_forward.9} parent=43 // pred_fallthru
        _
    $region44: #{fpem_v1_forward.9} parent=5 // pred_fallthru
      _
  $region6: #{fpem_v1_forward.9} parent=0 // loop_footer
    %s14 = sadd.s32 1, %s10
  $region7: #{fpem_v1_forward.9} parent=0 // loop_footer_branch
    %9 = sbr.rel target = $region3
  $region8: #{fpem_v1_forward.9} parent=0 // loop_exit
    _

// kernel: fpem_v1_forward.10
$region0: #{fpem_v1_forward.10}
  #allocation0 [shape = 'u32[]', space=smem, size = 0x4, offset = 0x4, fixed_abs, tag = 'smem constant byte address 0x4 - core index']
  #allocation1 [shape = 'u32[144,128]{1,0:T(1,128)}', space=vmem, size = 0x12000, scoped, tag = 'internal scratch']
  #allocation2 [shape = 'f32[16,128]{1,0:T(8,128)}', space=vmem, size = 0x2000, scoped, tag = 'scratch operand']
  %s0 = inlined_call_operand.vmem [shape: f32[2,4,5,5,128], index: 0, kind: input, shape index: {}]
  %s1 = inlined_call_operand.vmem [shape: f32[9,128], index: 1, kind: input, shape index: {}]
  %s2 = inlined_call_operand.vmem [shape: f32[128,128], index: 2, kind: input, shape index: {}]
  %s3 = inlined_call_operand.vmem [shape: f32[1,128], index: 3, kind: input, shape index: {}]
  %s4 = inlined_call_operand.vmem [shape: f32[2,16,128], index: 4, kind: output, shape index: {}]
  %s5 = sld [smem:[#allocation0]]
  $region49: #{fpem_v1_forward.10} parent=0
    _
  %s7 = ssub.s32 1, %s5
  %s8 = scalar_select 0, %s7, %s5
  loop: start=0, step=1, limit=4
  $region2: #{fpem_v1_forward.10} parent=0 // loop_pre_header
    _
  $region3: #{fpem_v1_forward.10} parent=0 // loop_header
    %s10 = sphi 0, %s14
    %p11 = scmp.ge.s32.totalorder %s10, 4
    %s20 = sphi 0, %s22
    %s23 = sphi 0, %s20
    %s24 = sphi 0, %s23
    %s40 = sphi 0, %s24
    %s44 = sphi 0, %s44
    %s46 = sphi 0, %s44
    %s47 = sphi 0, %s46
    %s61 = sphi 0, %s47
    %s65 = sphi 0, %s65
    %s67 = sphi 0, %s65
    %s68 = sphi 0, %s67
    %s82 = sphi 0, %s68
    %s86 = sphi 0, %s86
    %s88 = sphi 0, %s86
    %s89 = sphi 0, %s88
    %s103 = sphi 0, %s89
    %s109 = sphi 0, %s111
    %s112 = sphi 0, %s109
    %s113 = sphi 0, %s112
    %s129 = sphi 0, %s113
  $region4: #{fpem_v1_forward.10} parent=0 // loop_header_branch
    %13 = sbr.rel (%p11) target = $region8
  $region5: #{fpem_v1_forward.10} parent=0 // loop_body
    %s15 = ssub.s32 %s10, 1
    %s16 = ssub.s32 %s10, 2
    %s17 = sadd.s32 %s10, 1
    %s18 = ssub.s32 %s10, %s17
    %p19 = scmp.eq.s32.totalorder %s18, 0
    %s21 = sadd.s32 %s20, 1
    %s22 = scalar_select %p19, %s20, %s21
    %p25 = pneg %p19
    %p26 = scmp.eq.s32.totalorder %s10, 1
    %p27 = por %p25, %p26
    %p28 = scmp.ne.s32.totalorder %s20, %s23
    %p29 = scmp.eq.s32.totalorder %s10, 0
    %p30 = por %p28, %p29
    %p31 = scmp.ne.s32.totalorder %s20, %s23
    %p32 = scmp.eq.s32.totalorder %s15, 1
    %p33 = por %p31, %p32
    %p34 = scmp.ne.s32.totalorder %s23, %s24
    %p35 = scmp.eq.s32.totalorder %s15, 0
    %p36 = por %p34, %p35
    %p37 = scmp.ne.s32.totalorder %s23, %s24
    %p38 = scmp.eq.s32.totalorder %s16, 1
    %p39 = por %p37, %p38
    %p41 = scmp.ne.s32.totalorder %s24, %s40
    %p42 = scmp.eq.s32.totalorder %s16, 0
    %p43 = por %p41, %p42
    %s45 = sadd.s32 %s44, 1
    %p48 = scmp.eq.s32.totalorder %s10, 1
    %p49 = scmp.ne.s32.totalorder %s44, %s46
    %p50 = scmp.eq.s32.totalorder %s10, 0
    %p51 = por %p49, %p50
    %p52 = scmp.ne.s32.totalorder %s44, %s46
    %p53 = scmp.eq.s32.totalorder %s15, 1
    %p54 = por %p52, %p53
    %p55 = scmp.ne.s32.totalorder %s46, %s47
    %p56 = scmp.eq.s32.totalorder %s15, 0
    %p57 = por %p55, %p56
    %p58 = scmp.ne.s32.totalorder %s46, %s47
    %p59 = scmp.eq.s32.totalorder %s16, 1
    %p60 = por %p58, %p59
    %p62 = scmp.ne.s32.totalorder %s47, %s61
    %p63 = scmp.eq.s32.totalorder %s16, 0
    %p64 = por %p62, %p63
    %s66 = sadd.s32 %s65, 1
    %p69 = scmp.eq.s32.totalorder %s10, 1
    %p70 = scmp.ne.s32.totalorder %s65, %s67
    %p71 = scmp.eq.s32.totalorder %s10, 0
    %p72 = por %p70, %p71
    %p73 = scmp.ne.s32.totalorder %s65, %s67
    %p74 = scmp.eq.s32.totalorder %s15, 1
    %p75 = por %p73, %p74
    %p76 = scmp.ne.s32.totalorder %s67, %s68
    %p77 = scmp.eq.s32.totalorder %s15, 0
    %p78 = por %p76, %p77
    %p79 = scmp.ne.s32.totalorder %s67, %s68
    %p80 = scmp.eq.s32.totalorder %s16, 1
    %p81 = por %p79, %p80
    %p83 = scmp.ne.s32.totalorder %s68, %s82
    %p84 = scmp.eq.s32.totalorder %s16, 0
    %p85 = por %p83, %p84
    %s87 = sadd.s32 %s86, 1
    %p90 = scmp.eq.s32.totalorder %s10, 1
    %p91 = scmp.ne.s32.totalorder %s86, %s88
    %p92 = scmp.eq.s32.totalorder %s10, 0
    %p93 = por %p91, %p92
    %p94 = scmp.ne.s32.totalorder %s86, %s88
    %p95 = scmp.eq.s32.totalorder %s15, 1
    %p96 = por %p94, %p95
    %p97 = scmp.ne.s32.totalorder %s88, %s89
    %p98 = scmp.eq.s32.totalorder %s15, 0
    %p99 = por %p97, %p98
    %p100 = scmp.ne.s32.totalorder %s88, %s89
    %p101 = scmp.eq.s32.totalorder %s16, 1
    %p102 = por %p100, %p101
    %p104 = scmp.ne.s32.totalorder %s89, %s103
    %p105 = scmp.eq.s32.totalorder %s16, 0
    %p106 = por %p104, %p105
    %s107 = ssub.s32 %s10, %s17
    %p108 = scmp.eq.s32.totalorder %s107, 0
    %s110 = sadd.s32 %s109, 1
    %s111 = scalar_select %p108, %s109, %s110
    %p114 = pneg %p108
    %p115 = scmp.eq.s32.totalorder %s10, 1
    %p116 = por %p114, %p115
    %p117 = scmp.ne.s32.totalorder %s109, %s112
    %p118 = scmp.eq.s32.totalorder %s10, 0
    %p119 = por %p117, %p118
    %p120 = scmp.ne.s32.totalorder %s109, %s112
    %p121 = scmp.eq.s32.totalorder %s15, 1
    %p122 = por %p120, %p121
    %p123 = scmp.ne.s32.totalorder %s112, %s113
    %p124 = scmp.eq.s32.totalorder %s15, 0
    %p125 = por %p123, %p124
    %p126 = scmp.ne.s32.totalorder %s112, %s113
    %p127 = scmp.eq.s32.totalorder %s16, 1
    %p128 = por %p126, %p127
    %p130 = scmp.ne.s32.totalorder %s113, %s129
    %p131 = scmp.eq.s32.totalorder %s16, 0
    %p132 = por %p130, %p131
    %p133 = scmp.le.s32.totalorder 1, %s10
    %p134 = scmp.lt.s32.totalorder %s10, 3
    %p135 = pnand %p133, %p134
    %p136 = pneg %p135
    // Predicated region
    $region9: #{fpem_v1_forward.10} parent=5 // pred_check
      _
    $region10: #{fpem_v1_forward.10} parent=5 // pred_check_branch
      %138 = sbr.rel (%p135) target = $region12
    $region11: #{fpem_v1_forward.10} parent=5 // pred_region
      %s139 = ssub.s32 %s10, 1
      // Predicated region
      $region13: #{fpem_v1_forward.10} parent=11 // pred_check
        %p140 = pneg %p57
      $region14: #{fpem_v1_forward.10} parent=11 // pred_check_branch
        %142 = sbr.rel (%p140) target = $region16
      $region15: #{fpem_v1_forward.10} parent=11 // pred_region
        _
      $region16: #{fpem_v1_forward.10} parent=11 // pred_fallthru
        _
      // Predicated region
      $region17: #{fpem_v1_forward.10} parent=11 // pred_check
        %p143 = pneg %p78
      $region18: #{fpem_v1_forward.10} parent=11 // pred_check_branch
        %145 = sbr.rel (%p143) target = $region20
      $region19: #{fpem_v1_forward.10} parent=11 // pred_region
        _
      $region20: #{fpem_v1_forward.10} parent=11 // pred_fallthru
        _
      // Predicated region
      $region21: #{fpem_v1_forward.10} parent=11 // pred_check
        %p146 = pneg %p99
      $region22: #{fpem_v1_forward.10} parent=11 // pred_check_branch
        %148 = sbr.rel (%p146) target = $region24
      $region23: #{fpem_v1_forward.10} parent=11 // pred_region
        _
      $region24: #{fpem_v1_forward.10} parent=11 // pred_fallthru
        _
    $region12: #{fpem_v1_forward.10} parent=5 // pred_fallthru
      _
    %p149 = scmp.lt.s32.totalorder %s10, 2
    // Predicated region
    $region25: #{fpem_v1_forward.10} parent=5 // pred_check
      %p150 = pneg %p149
    $region26: #{fpem_v1_forward.10} parent=5 // pred_check_branch
      %152 = sbr.rel (%p150) target = $region28
    $region27: #{fpem_v1_forward.10} parent=5 // pred_region
      // Predicated region
      $region29: #{fpem_v1_forward.10} parent=27 // pred_check
        %p153 = pneg %p30
      $region30: #{fpem_v1_forward.10} parent=27 // pred_check_branch
        %155 = sbr.rel (%p153) target = $region32
      $region31: #{fpem_v1_forward.10} parent=27 // pred_region
        %p156 = scmp.lt.s32.totalorder %s10, 1
        %s157 = scalar_select %p156, %s10, 1
        %s158 = smul.addr %s157, 20
        %s159 = smul.addr %s158, 8
        %s160 = scalar_lea.vmem %s0, %s159
      $region32: #{fpem_v1_forward.10} parent=27 // pred_fallthru
        _
    $region28: #{fpem_v1_forward.10} parent=5 // pred_fallthru
      _
    %p161 = scmp.le.s32.totalorder 1, %s10
    %p162 = scmp.lt.s32.totalorder %s10, 3
    %p163 = pnand %p161, %p162
    %p164 = pneg %p163
    // Predicated region
    $region33: #{fpem_v1_forward.10} parent=5 // pred_check
      _
    $region34: #{fpem_v1_forward.10} parent=5 // pred_check_branch
      %166 = sbr.rel (%p163) target = $region36
    $region35: #{fpem_v1_forward.10} parent=5 // pred_region
      %s167 = ssub.s32 %s10, 1
      %p168 = scmp.lt.s32.totalorder %s15, 1
      %s169 = scalar_select %p168, %s15, 1
      %s170 = smul.addr %s169, 20
      %s171 = smul.addr %s170, 8
      %s172 = scalar_lea.vmem %s0, %s171
      %p173 = pneg %p36
      %p174 = pneg %p33
      %p175 = pneg %p57
      %p176 = pneg %p54
      %p177 = pneg %p78
      %p178 = pneg %p75
      %p179 = pneg %p99
      %p180 = pneg %p96
      %p181 = pneg %p125
      %p182 = pneg %p122
      %p183 = scmp.lt.s32.totalorder %s15, 1
      %s184 = scalar_select %p183, %s15, 1
      %s185 = smul.addr %s184, 2
      %s186 = smul.addr %s185, 8
      %s187 = scalar_lea.vmem %s4, %s186
      %p188 = scmp.lt.s32.totalorder %s15, 1
      %s189 = scalar_select %p188, %s15, 1
      %s190 = smul.addr %s189, 20
      %s191 = smul.addr %s190, 8
      %s192 = scalar_lea.vmem %s0, %s191
      %p193 = scmp.lt.s32.totalorder %s15, 1
      %s194 = scalar_select %p193, %s15, 1
      %s195 = smul.addr %s194, 2
      %s196 = smul.addr %s195, 8
      %s197 = scalar_lea.vmem %s4, %s196
      %v198 = vld [vmem:[%s1] sm:$0x1]
      %v199 = vld [vmem:[%s1 + $0x1] sm:$0x1]
      %v200 = vld [vmem:[%s1 + $0x2] sm:$0x1]
      %v201 = vld [vmem:[%s1 + $0x3] sm:$0x1]
      %v202 = vld [vmem:[%s1 + $0x4] sm:$0x1]
      %v203 = vld [vmem:[%s1 + $0x5] sm:$0x1]
      %v204 = vld [vmem:[%s1 + $0x6] sm:$0x1]
      %v205 = vld [vmem:[%s1 + $0x7] sm:$0x1]
      %v206 = vld [vmem:[%s1 + $0x8] sm:$0x1]
      %v207 = vld [vmem:[%s192] sm:$0x1f]
      %s208 = scalar_lea.vmem %s192, 40
      %v209 = vld [vmem:[%s208] sm:$0x1f]
      %v210 = vlaneseq
      %v211 = vshrl.u32 %v210, 7
      %v212 = vsub.s32 0, %v211
      %v213 = vrot.slane %v198, %v212
      %v214 = vmul.f32 %v207, %v213
      %v215 = vadd.f32 %v214, 0.0
      %v216 = vlaneseq
      %v217 = vshrl.u32 %v216, 7
      %v218 = vsub.s32 0, %v217
      %v219 = vrot.slane %v199, %v218
      %v220 = vmul.f32 %v209, %v219
      %v221 = vadd.f32 %v215, %v220
      %v222 = vlaneseq
      %v223 = vshrl.u32 %v222, 7
      %v224 = vsub.s32 0, %v223
      %v225 = vrot.slane %v200, %v224
      %v226 = vmul.f32 %v207, %v225
      %v228 = vrot.slane %v226, 1
      %v230 = vadd.f32 %v221, %v228
      %s231 = scalar_lea.vmem %s192, 80
      %v232 = vld [vmem:[%s231] sm:$0x1f]
      %s233 = scalar_lea.vmem %s192, 120
      %v234 = vld [vmem:[%s233] sm:$0x1f]
      %v235 = vlaneseq
      %v236 = vshrl.u32 %v235, 7
      %v237 = vsub.s32 0, %v236
      %v238 = vrot.slane %v201, %v237
      %v239 = vmul.f32 %v232, %v238
      %v240 = vadd.f32 %v230, %v239
      %v241 = vlaneseq
      %v242 = vshrl.u32 %v241, 7
      %v243 = vsub.s32 0, %v242
      %v244 = vrot.slane %v202, %v243
      %v245 = vmul.f32 %v234, %v244
      %v246 = vadd.f32 %v240, %v245
      %v247 = vlaneseq
      %v248 = vshrl.u32 %v247, 7
      %v249 = vsub.s32 0, %v248
      %v250 = vrot.slane %v203, %v249
      %v251 = vmul.f32 %v232, %v250
      %v253 = vrot.slane %v251, 1
      %v255 = vadd.f32 %v246, %v253
      %s256 = scalar_lea.vmem %s192, 8
      %v257 = vld [vmem:[%s256] sm:$0x1f]
      %s258 = scalar_lea.vmem %s192, 48
      %v259 = vld [vmem:[%s258] sm:$0x1f]
      %v260 = vlaneseq
      %v261 = vshrl.u32 %v260, 7
      %v262 = vsub.s32 0, %v261
      %v263 = vrot.slane %v204, %v262
      %v264 = vmul.f32 %v257, %v263
      %v265 = vadd.f32 %v255, %v264
      %v266 = vlaneseq
      %v267 = vshrl.u32 %v266, 7
      %v268 = vsub.s32 0, %v267
      %v269 = vrot.slane %v205, %v268
      %v270 = vmul.f32 %v259, %v269
      %v271 = vadd.f32 %v265, %v270
      %v272 = vlaneseq
      %v273 = vshrl.u32 %v272, 7
      %v274 = vsub.s32 0, %v273
      %v275 = vrot.slane %v206, %v274
      %v276 = vmul.f32 %v257, %v275
      %v278 = vrot.slane %v276, 1
      %v280 = vadd.f32 %v271, %v278
      %281 = vst [vmem:[#allocation2] sm:$0xf] %v280
      %v282 = vld [vmem:[%s256] sm:$0x1f]
      %v283 = vld [vmem:[%s258] sm:$0x1f]
      %v284 = vmul.f32 %v282, %v213
      %v285 = vadd.f32 %v284, 0.0
      %v286 = vmul.f32 %v283, %v219
      %v287 = vadd.f32 %v285, %v286
      %v288 = vmul.f32 %v282, %v225
      %v290 = vrot.slane %v288, 1
      %v292 = vadd.f32 %v287, %v290
      %s293 = scalar_lea.vmem %s192, 88
      %v294 = vld [vmem:[%s293] sm:$0x1f]
      %s295 = scalar_lea.vmem %s192, 128
      %v296 = vld [vmem:[%s295] sm:$0x1f]
      %v297 = vmul.f32 %v294, %v238
      %v298 = vadd.f32 %v292, %v297
      %v299 = vmul.f32 %v296, %v244
      %v300 = vadd.f32 %v298, %v299
      %v301 = vmul.f32 %v294, %v250
      %v303 = vrot.slane %v301, 1
      %v305 = vadd.f32 %v300, %v303
      %s306 = scalar_lea.vmem %s192, 16
      %v307 = vld [vmem:[%s306] sm:$0x1f]
      %s308 = scalar_lea.vmem %s192, 56
      %v309 = vld [vmem:[%s308] sm:$0x1f]
      %v310 = vmul.f32 %v307, %v263
      %v311 = vadd.f32 %v305, %v310
      %v312 = vmul.f32 %v309, %v269
      %v313 = vadd.f32 %v311, %v312
      %v314 = vmul.f32 %v307, %v275
      %v316 = vrot.slane %v314, 1
      %v318 = vadd.f32 %v313, %v316
      %319 = vst [vmem:[#allocation2 + $0x4] sm:$0xf] %v318
      %v320 = vld [vmem:[%s306] sm:$0x1f]
      %v321 = vld [vmem:[%s308] sm:$0x1f]
      %v322 = vmul.f32 %v320, %v213
      %v323 = vadd.f32 %v322, 0.0
      %v324 = vmul.f32 %v321, %v219
      %v325 = vadd.f32 %v323, %v324
      %v326 = vmul.f32 %v320, %v225
      %v328 = vrot.slane %v326, 1
      %v330 = vadd.f32 %v325, %v328
      %s331 = scalar_lea.vmem %s192, 96
      %v332 = vld [vmem:[%s331] sm:$0x1f]
      %s333 = scalar_lea.vmem %s192, 136
      %v334 = vld [vmem:[%s333] sm:$0x1f]
      %v335 = vmul.f32 %v332, %v238
      %v336 = vadd.f32 %v330, %v335
      %v337 = vmul.f32 %v334, %v244
      %v338 = vadd.f32 %v336, %v337
      %v339 = vmul.f32 %v332, %v250
      %v341 = vrot.slane %v339, 1
      %v343 = vadd.f32 %v338, %v341
      %s344 = scalar_lea.vmem %s192, 24
      %v345 = vld [vmem:[%s344] sm:$0x1f]
      %s346 = scalar_lea.vmem %s192, 64
      %v347 = vld [vmem:[%s346] sm:$0x1f]
      %v348 = vmul.f32 %v345, %v263
      %v349 = vadd.f32 %v343, %v348
      %v350 = vmul.f32 %v347, %v269
      %v351 = vadd.f32 %v349, %v350
      %v352 = vmul.f32 %v345, %v275
      %v354 = vrot.slane %v352, 1
      %v356 = vadd.f32 %v351, %v354
      %357 = vst [vmem:[#allocation2 + $0x8] sm:$0xf] %v356
      %v358 = vld [vmem:[%s344] sm:$0x1f]
      %v359 = vld [vmem:[%s346] sm:$0x1f]
      %v360 = vmul.f32 %v358, %v213
      %v361 = vadd.f32 %v360, 0.0
      %v362 = vmul.f32 %v359, %v219
      %v363 = vadd.f32 %v361, %v362
      %v364 = vmul.f32 %v358, %v225
      %v366 = vrot.slane %v364, 1
      %v368 = vadd.f32 %v363, %v366
      %s369 = scalar_lea.vmem %s192, 104
      %v370 = vld [vmem:[%s369] sm:$0x1f]
      %s371 = scalar_lea.vmem %s192, 144
      %v372 = vld [vmem:[%s371] sm:$0x1f]
      %v373 = vmul.f32 %v370, %v238
      %v374 = vadd.f32 %v368, %v373
      %v375 = vmul.f32 %v372, %v244
      %v376 = vadd.f32 %v374, %v375
      %v377 = vmul.f32 %v370, %v250
      %v379 = vrot.slane %v377, 1
      %v381 = vadd.f32 %v376, %v379
      %s382 = scalar_lea.vmem %s192, 32
      %v383 = vld [vmem:[%s382] sm:$0x1f]
      %s384 = scalar_lea.vmem %s192, 72
      %v385 = vld [vmem:[%s384] sm:$0x1f]
      %v386 = vmul.f32 %v383, %v263
      %v387 = vadd.f32 %v381, %v386
      %v388 = vmul.f32 %v385, %v269
      %v389 = vadd.f32 %v387, %v388
      %v390 = vmul.f32 %v383, %v275
      %v392 = vrot.slane %v390, 1
      %v394 = vadd.f32 %v389, %v392
      %395 = vst [vmem:[#allocation2 + $0xc] sm:$0xf] %v394
      %v396 = vld [vmem:[#allocation2] sm:$0xff]
      %v397 = vld [vmem:[#allocation2 + $0x8] sm:$0xff]
      %v398 = vld [vmem:[%s2] sm:$0xff]
      %v399 = vld [vmem:[%s2 + $0x8] sm:$0xff]
      %v400 = vld [vmem:[%s2 + $0x10] sm:$0xff]
      %v401 = vld [vmem:[%s2 + $0x18] sm:$0xff]
      %v402 = vld [vmem:[%s2 + $0x20] sm:$0xff]
      %v403 = vld [vmem:[%s2 + $0x28] sm:$0xff]
      %v404 = vld [vmem:[%s2 + $0x30] sm:$0xff]
      %v405 = vld [vmem:[%s2 + $0x38] sm:$0xff]
      %v406 = vld [vmem:[%s2 + $0x40] sm:$0xff]
      %v407 = vld [vmem:[%s2 + $0x48] sm:$0xff]
      %v408 = vld [vmem:[%s2 + $0x50] sm:$0xff]
      %v409 = vld [vmem:[%s2 + $0x58] sm:$0xff]
      %v410 = vld [vmem:[%s2 + $0x60] sm:$0xff]
      %v411 = vld [vmem:[%s2 + $0x68] sm:$0xff]
      %v412 = vld [vmem:[%s2 + $0x70] sm:$0xff]
      %v413 = vld [vmem:[%s2 + $0x78] sm:$0xff]
      %v414 = vld [vmem:[%s3] sm:$0x1]
      %v416 = vlaneseq
      %v417 = vshrl.u32 %v416, 7
      %v418 = vsub.s32 0, %v417
      %v419 = vrot.slane %v414, %v418
      %421 = vmatprep.subr.mxu0 0.0
      %422 = vmatpush1.msra.mxu0 %v398
      %423 = vmatprep.subr.mxu0 0.0
      %424 = vmatpush1.msra.mxu0 %v399
      %425 = vmatprep.subr.mxu0 0.0
      %426 = vmatpush1.msra.mxu0 %v400
      %427 = vmatprep.subr.mxu0 0.0
      %428 = vmatpush1.msra.mxu0 %v401
      %429 = vmatprep.subr.mxu0 0.0
      %430 = vmatpush1.msra.mxu0 %v402
      %431 = vmatprep.subr.mxu0 0.0
      %432 = vmatpush1.msra.mxu0 %v403
      %433 = vmatprep.subr.mxu0 0.0
      %434 = vmatpush1.msra.mxu0 %v404
      %435 = vmatprep.subr.mxu0 0.0
      %436 = vmatpush1.msra.mxu0 %v405
      %437 = vmatprep.subr.mxu0 0.0
      %438 = vmatpush1.msra.mxu0 %v406
      %439 = vmatprep.subr.mxu0 0.0
      %440 = vmatpush1.msra.mxu0 %v407
      %441 = vmatprep.subr.mxu0 0.0
      %442 = vmatpush1.msra.mxu0 %v408
      %443 = vmatprep.subr.mxu0 0.0
      %444 = vmatpush1.msra.mxu0 %v409
      %445 = vmatprep.subr.mxu0 0.0
      %446 = vmatpush1.msra.mxu0 %v410
      %447 = vmatprep.subr.mxu0 0.0
      %448 = vmatpush1.msra.mxu0 %v411
      %449 = vmatprep.subr.mxu0 0.0
      %450 = vmatpush1.msra.mxu0 %v412
      %451 = vmatprep.subr.mxu0 0.0
      %452 = vmatpush1.msra.mxu0 %v413
      %453 = vmatprep.subr.mxu0 0.0
      %454 = vmatpush1.msra.mxu0 0.0
      %455 = vmatprep.subr.mxu0 0.0
      %456 = vmatpush1.msra.mxu0 0.0
      %457 = vmatprep.subr.mxu0 0.0
      %458 = vmatpush1.msra.mxu0 0.0
      %459 = vmatprep.subr.mxu0 0.0
      %460 = vmatpush1.msra.mxu0 0.0
      %461 = vmatprep.subr.mxu0 0.0
      %462 = vmatpush1.msra.mxu0 0.0
      %463 = vmatprep.subr.mxu0 0.0
      %464 = vmatpush1.msra.mxu0 0.0
      %465 = vmatprep.subr.mxu0 0.0
      %466 = vmatpush1.msra.mxu0 0.0
      %467 = vmatprep.subr.mxu0 0.0
      %468 = vmatpush1.msra.mxu0 0.0
      %469 = vmatprep.subr.mxu0 0.0
      %470 = vmatpush1.msra.mxu0 0.0
      %471 = vmatprep.subr.mxu0 0.0
      %472 = vmatpush1.msra.mxu0 0.0
      %473 = vmatprep.subr.mxu0 0.0
      %474 = vmatpush1.msra.mxu0 0.0
      %475 = vmatprep.subr.mxu0 0.0
      %476 = vmatpush1.msra.mxu0 0.0
      %477 = vmatprep.subr.mxu0 0.0
      %478 = vmatpush1.msra.mxu0 0.0
      %479 = vmatprep.subr.mxu0 0.0
      %480 = vmatpush1.msra.mxu0 0.0
      %481 = vmatprep.subr.mxu0 0.0
      %482 = vmatpush1.msra.mxu0 0.0
      %483 = vmatprep.subr.mxu0 0.0
      %484 = vmatpush1.msra.mxu0 0.0
      %485 = vmatprep.mubr.f32.mxu0 0.0
      %486 = vmatmul.mubr.f32.gmra.mrb[0].mxu0 %v396
      %v487 = vpop.f32.mrb[0].mxu0
      %v488 = vadd.f32 %v419, %v487
      %v489 = vpop.f32.mrb[0].mxu0
      %490 = vmatprep.mubr.f32.mxu0 0.0
      %491 = vmatmul.mubr.f32.gmra.mrb[0].mxu0 %v397
      %v492 = vpop.f32.mrb[0].mxu0
      %v493 = vadd.f32 %v419, %v492
      %v494 = vpop.f32.mrb[0].mxu0
      %495 = vdwg.mxu0
      %v496 = vmax.f32 %v488, 0.0
      %v497 = vmax.f32 %v493, 0.0
      %498 = vst [vmem:[%s197] sm:$0xff] %v496
      %499 = vst [vmem:[%s197 + $0x8] sm:$0xff] %v497
      %p500 = scmp.lt.s32.totalorder %s15, 1
      %s501 = scalar_select %p500, %s15, 1
      %s502 = smul.addr %s501, 2
      %s503 = smul.addr %s502, 8
      %s504 = scalar_lea.vmem %s4, %s503
      // Predicated region
      $region37: #{fpem_v1_forward.10} parent=35 // pred_check
        %p505 = pneg %p122
      $region38: #{fpem_v1_forward.10} parent=35 // pred_check_branch
        %507 = sbr.rel (%p505) target = $region40
      $region39: #{fpem_v1_forward.10} parent=35 // pred_region
        _
      $region40: #{fpem_v1_forward.10} parent=35 // pred_fallthru
        _
    $region36: #{fpem_v1_forward.10} parent=5 // pred_fallthru
      _
    %p508 = scmp.le.s32.totalorder 2, %s10
    // Predicated region
    $region41: #{fpem_v1_forward.10} parent=5 // pred_check
      %p509 = pneg %p508
    $region42: #{fpem_v1_forward.10} parent=5 // pred_check_branch
      %511 = sbr.rel (%p509) target = $region44
    $region43: #{fpem_v1_forward.10} parent=5 // pred_region
      %s512 = ssub.s32 %s10, 2
      // Predicated region
      $region45: #{fpem_v1_forward.10} parent=43 // pred_check
        %p513 = pneg %p128
      $region46: #{fpem_v1_forward.10} parent=43 // pred_check_branch
        %515 = sbr.rel (%p513) target = $region48
      $region47: #{fpem_v1_forward.10} parent=43 // pred_region
        %p516 = scmp.lt.s32.totalorder %s16, 1
        %s517 = scalar_select %p516, %s16, 1
        %s518 = smul.addr %s517, 2
        %s519 = smul.addr %s518, 8
        %s520 = scalar_lea.vmem %s4, %s519
      $region48: #{fpem_v1_forward.10} parent=43 // pred_fallthru
        _
    $region44: #{fpem_v1_forward.10} parent=5 // pred_fallthru
      _
  $region6: #{fpem_v1_forward.10} parent=0 // loop_footer
    %s14 = sadd.s32 1, %s10
  $region7: #{fpem_v1_forward.10} parent=0 // loop_footer_branch
    %9 = sbr.rel target = $region3
  $region8: #{fpem_v1_forward.10} parent=0 // loop_exit
    _

// kernel: fpem_v1_forward.11
$region0: #{fpem_v1_forward.11}
  #allocation0 [shape = 'u32[]', space=smem, size = 0x4, offset = 0x4, fixed_abs, tag = 'smem constant byte address 0x4 - core index']
  #allocation1 [shape = 'u32[144,128]{1,0:T(1,128)}', space=vmem, size = 0x12000, scoped, tag = 'internal scratch']
  #allocation2 [shape = 'f32[8,128]{1,0:T(8,128)}', space=vmem, size = 0x1000, scoped, tag = 'scratch operand']
  %s0 = inlined_call_operand.vmem [shape: f32[2,4,3,3,128], index: 0, kind: input, shape index: {}]
  %s1 = inlined_call_operand.vmem [shape: f32[9,128], index: 1, kind: input, shape index: {}]
  %s2 = inlined_call_operand.vmem [shape: f32[128,128], index: 2, kind: input, shape index: {}]
  %s3 = inlined_call_operand.vmem [shape: f32[1,128], index: 3, kind: input, shape index: {}]
  %s4 = inlined_call_operand.hbm [shape: f32[2,4,128], index: 4, kind: output, shape index: {}]
  %s5 = sld [smem:[#allocation0]]
  $region49: #{fpem_v1_forward.11} parent=0
    _
  %s7 = ssub.s32 1, %s5
  %s8 = scalar_select 0, %s7, %s5
  $region1: #{fpem_v1_forward.11} parent=0
    #allocation3 [shape = 'u8[4096]{0}', space=vmem, size = 0x1000, scoped, tag = 'output window, operand 0']
    #allocation4 [shape = 's32[2]{0}', space=sflag, size = 0x8, scoped, tag = 'scoped memory for fpem_v1_forward.11']
    %9 = vsyncpa [#allocation4], 0
    %s10 = scalar_lea.sflag [#allocation4], 1
    %11 = vsyncpa %s10, 0
    loop: start=0, step=1, limit=4
    $region2: #{fpem_v1_forward.11} parent=1 // loop_pre_header
      _
    $region3: #{fpem_v1_forward.11} parent=1 // loop_header
      %s13 = sphi 0, %s17
      %p14 = scmp.ge.s32.totalorder %s13, 4
      %s23 = sphi 0, %s25
      %s26 = sphi 0, %s23
      %s27 = sphi 0, %s26
      %s43 = sphi 0, %s27
      %s47 = sphi 0, %s47
      %s49 = sphi 0, %s47
      %s50 = sphi 0, %s49
      %s64 = sphi 0, %s50
      %s68 = sphi 0, %s68
      %s70 = sphi 0, %s68
      %s71 = sphi 0, %s70
      %s85 = sphi 0, %s71
      %s89 = sphi 0, %s89
      %s91 = sphi 0, %s89
      %s92 = sphi 0, %s91
      %s106 = sphi 0, %s92
      %s112 = sphi 0, %s114
      %s115 = sphi 0, %s112
      %s116 = sphi 0, %s115
      %s132 = sphi 0, %s116
    $region4: #{fpem_v1_forward.11} parent=1 // loop_header_branch
      %16 = sbr.rel (%p14) target = $region8
    $region5: #{fpem_v1_forward.11} parent=1 // loop_body
      %s18 = ssub.s32 %s13, 1
      %s19 = ssub.s32 %s13, 2
      %s20 = sadd.s32 %s13, 1
      %s21 = ssub.s32 %s13, %s20
      %p22 = scmp.eq.s32.totalorder %s21, 0
      %s24 = sadd.s32 %s23, 1
      %s25 = scalar_select %p22, %s23, %s24
      %p28 = pneg %p22
      %p29 = scmp.eq.s32.totalorder %s13, 1
      %p30 = por %p28, %p29
      %p31 = scmp.ne.s32.totalorder %s23, %s26
      %p32 = scmp.eq.s32.totalorder %s13, 0
      %p33 = por %p31, %p32
      %p34 = scmp.ne.s32.totalorder %s23, %s26
      %p35 = scmp.eq.s32.totalorder %s18, 1
      %p36 = por %p34, %p35
      %p37 = scmp.ne.s32.totalorder %s26, %s27
      %p38 = scmp.eq.s32.totalorder %s18, 0
      %p39 = por %p37, %p38
      %p40 = scmp.ne.s32.totalorder %s26, %s27
      %p41 = scmp.eq.s32.totalorder %s19, 1
      %p42 = por %p40, %p41
      %p44 = scmp.ne.s32.totalorder %s27, %s43
      %p45 = scmp.eq.s32.totalorder %s19, 0
      %p46 = por %p44, %p45
      %s48 = sadd.s32 %s47, 1
      %p51 = scmp.eq.s32.totalorder %s13, 1
      %p52 = scmp.ne.s32.totalorder %s47, %s49
      %p53 = scmp.eq.s32.totalorder %s13, 0
      %p54 = por %p52, %p53
      %p55 = scmp.ne.s32.totalorder %s47, %s49
      %p56 = scmp.eq.s32.totalorder %s18, 1
      %p57 = por %p55, %p56
      %p58 = scmp.ne.s32.totalorder %s49, %s50
      %p59 = scmp.eq.s32.totalorder %s18, 0
      %p60 = por %p58, %p59
      %p61 = scmp.ne.s32.totalorder %s49, %s50
      %p62 = scmp.eq.s32.totalorder %s19, 1
      %p63 = por %p61, %p62
      %p65 = scmp.ne.s32.totalorder %s50, %s64
      %p66 = scmp.eq.s32.totalorder %s19, 0
      %p67 = por %p65, %p66
      %s69 = sadd.s32 %s68, 1
      %p72 = scmp.eq.s32.totalorder %s13, 1
      %p73 = scmp.ne.s32.totalorder %s68, %s70
      %p74 = scmp.eq.s32.totalorder %s13, 0
      %p75 = por %p73, %p74
      %p76 = scmp.ne.s32.totalorder %s68, %s70
      %p77 = scmp.eq.s32.totalorder %s18, 1
      %p78 = por %p76, %p77
      %p79 = scmp.ne.s32.totalorder %s70, %s71
      %p80 = scmp.eq.s32.totalorder %s18, 0
      %p81 = por %p79, %p80
      %p82 = scmp.ne.s32.totalorder %s70, %s71
      %p83 = scmp.eq.s32.totalorder %s19, 1
      %p84 = por %p82, %p83
      %p86 = scmp.ne.s32.totalorder %s71, %s85
      %p87 = scmp.eq.s32.totalorder %s19, 0
      %p88 = por %p86, %p87
      %s90 = sadd.s32 %s89, 1
      %p93 = scmp.eq.s32.totalorder %s13, 1
      %p94 = scmp.ne.s32.totalorder %s89, %s91
      %p95 = scmp.eq.s32.totalorder %s13, 0
      %p96 = por %p94, %p95
      %p97 = scmp.ne.s32.totalorder %s89, %s91
      %p98 = scmp.eq.s32.totalorder %s18, 1
      %p99 = por %p97, %p98
      %p100 = scmp.ne.s32.totalorder %s91, %s92
      %p101 = scmp.eq.s32.totalorder %s18, 0
      %p102 = por %p100, %p101
      %p103 = scmp.ne.s32.totalorder %s91, %s92
      %p104 = scmp.eq.s32.totalorder %s19, 1
      %p105 = por %p103, %p104
      %p107 = scmp.ne.s32.totalorder %s92, %s106
      %p108 = scmp.eq.s32.totalorder %s19, 0
      %p109 = por %p107, %p108
      %s110 = ssub.s32 %s13, %s20
      %p111 = scmp.eq.s32.totalorder %s110, 0
      %s113 = sadd.s32 %s112, 1
      %s114 = scalar_select %p111, %s112, %s113
      %p117 = pneg %p111
      %p118 = scmp.eq.s32.totalorder %s13, 1
      %p119 = por %p117, %p118
      %p120 = scmp.ne.s32.totalorder %s112, %s115
      %p121 = scmp.eq.s32.totalorder %s13, 0
      %p122 = por %p120, %p121
      %p123 = scmp.ne.s32.totalorder %s112, %s115
      %p124 = scmp.eq.s32.totalorder %s18, 1
      %p125 = por %p123, %p124
      %p126 = scmp.ne.s32.totalorder %s115, %s116
      %p127 = scmp.eq.s32.totalorder %s18, 0
      %p128 = por %p126, %p127
      %p129 = scmp.ne.s32.totalorder %s115, %s116
      %p130 = scmp.eq.s32.totalorder %s19, 1
      %p131 = por %p129, %p130
      %p133 = scmp.ne.s32.totalorder %s116, %s132
      %p134 = scmp.eq.s32.totalorder %s19, 0
      %p135 = por %p133, %p134
      %p136 = scmp.le.s32.totalorder 1, %s13
      %p137 = scmp.lt.s32.totalorder %s13, 3
      %p138 = pnand %p136, %p137
      %p139 = pneg %p138
      // Predicated region
      $region9: #{fpem_v1_forward.11} parent=5 // pred_check
        _
      $region10: #{fpem_v1_forward.11} parent=5 // pred_check_branch
        %141 = sbr.rel (%p138) target = $region12
      $region11: #{fpem_v1_forward.11} parent=5 // pred_region
        %s142 = ssub.s32 %s13, 1
        // Predicated region
        $region13: #{fpem_v1_forward.11} parent=11 // pred_check
          %p143 = pneg %p60
        $region14: #{fpem_v1_forward.11} parent=11 // pred_check_branch
          %145 = sbr.rel (%p143) target = $region16
        $region15: #{fpem_v1_forward.11} parent=11 // pred_region
          _
        $region16: #{fpem_v1_forward.11} parent=11 // pred_fallthru
          _
        // Predicated region
        $region17: #{fpem_v1_forward.11} parent=11 // pred_check
          %p146 = pneg %p81
        $region18: #{fpem_v1_forward.11} parent=11 // pred_check_branch
          %148 = sbr.rel (%p146) target = $region20
        $region19: #{fpem_v1_forward.11} parent=11 // pred_region
          _
        $region20: #{fpem_v1_forward.11} parent=11 // pred_fallthru
          _
        // Predicated region
        $region21: #{fpem_v1_forward.11} parent=11 // pred_check
          %p149 = pneg %p102
        $region22: #{fpem_v1_forward.11} parent=11 // pred_check_branch
          %151 = sbr.rel (%p149) target = $region24
        $region23: #{fpem_v1_forward.11} parent=11 // pred_region
          _
        $region24: #{fpem_v1_forward.11} parent=11 // pred_fallthru
          _
      $region12: #{fpem_v1_forward.11} parent=5 // pred_fallthru
        _
      %p152 = scmp.lt.s32.totalorder %s13, 2
      // Predicated region
      $region25: #{fpem_v1_forward.11} parent=5 // pred_check
        %p153 = pneg %p152
      $region26: #{fpem_v1_forward.11} parent=5 // pred_check_branch
        %155 = sbr.rel (%p153) target = $region28
      $region27: #{fpem_v1_forward.11} parent=5 // pred_region
        // Predicated region
        $region29: #{fpem_v1_forward.11} parent=27 // pred_check
          %p156 = pneg %p33
        $region30: #{fpem_v1_forward.11} parent=27 // pred_check_branch
          %158 = sbr.rel (%p156) target = $region32
        $region31: #{fpem_v1_forward.11} parent=27 // pred_region
          %p159 = scmp.lt.s32.totalorder %s13, 1
          %s160 = scalar_select %p159, %s13, 1
          %s161 = smul.addr %s160, 12
          %s162 = smul.addr %s161, 4
          %s163 = scalar_lea.vmem %s0, %s162
        $region32: #{fpem_v1_forward.11} parent=27 // pred_fallthru
          _
      $region28: #{fpem_v1_forward.11} parent=5 // pred_fallthru
        _
      %p164 = scmp.le.s32.totalorder 1, %s13
      %p165 = scmp.lt.s32.totalorder %s13, 3
      %p166 = pnand %p164, %p165
      %p167 = pneg %p166
      // Predicated region
      $region33: #{fpem_v1_forward.11} parent=5 // pred_check
        _
      $region34: #{fpem_v1_forward.11} parent=5 // pred_check_branch
        %169 = sbr.rel (%p166) target = $region36
      $region35: #{fpem_v1_forward.11} parent=5 // pred_region
        %s170 = ssub.s32 %s13, 1
        %p171 = scmp.lt.s32.totalorder %s18, 1
        %s172 = scalar_select %p171, %s18, 1
        %s173 = smul.addr %s172, 12
        %s174 = smul.addr %s173, 4
        %s175 = scalar_lea.vmem %s0, %s174
        %p176 = pneg %p39
        %p177 = pneg %p36
        %p178 = pneg %p60
        %p179 = pneg %p57
        %p180 = pneg %p81
        %p181 = pneg %p78
        %p182 = pneg %p102
        %p183 = pneg %p99
        %p184 = pneg %p128
        %p185 = pneg %p125
        %s186 = sand.u32 %s115, 1
        %s187 = scalar_lea.sflag [#allocation4], %s186
        %s188 = sand.u32 %s115, 1
        %s189 = smul.addr %s188, 4
        %s190 = scalar_lea.vmem [#allocation3], %s189
        %p191 = scmp.lt.s32.totalorder %s18, 1
        %s192 = scalar_select %p191, %s18, 1
        %s193 = smul.addr %s192, 12
        %s194 = smul.addr %s193, 4
        %s195 = scalar_lea.vmem %s0, %s194
        %v196 = vld [vmem:[%s1] sm:$0x1]
        %v197 = vld [vmem:[%s1 + $0x1] sm:$0x1]
        %v198 = vld [vmem:[%s1 + $0x2] sm:$0x1]
        %v199 = vld [vmem:[%s1 + $0x3] sm:$0x1]
        %v200 = vld [vmem:[%s1 + $0x4] sm:$0x1]
        %v201 = vld [vmem:[%s1 + $0x5] sm:$0x1]
        %v202 = vld [vmem:[%s1 + $0x6] sm:$0x1]
        %v203 = vld [vmem:[%s1 + $0x7] sm:$0x1]
        %v204 = vld [vmem:[%s1 + $0x8] sm:$0x1]
        %v205 = vld [vmem:[%s195] sm:$0x7]
        %s206 = scalar_lea.vmem %s195, 12
        %v207 = vld [vmem:[%s206] sm:$0x7]
        %v208 = vlaneseq
        %v209 = vshrl.u32 %v208, 7
        %v210 = vsub.s32 0, %v209
        %v211 = vrot.slane %v196, %v210
        %v212 = vmul.f32 %v205, %v211
        %v213 = vadd.f32 %v212, 0.0
        %v214 = vlaneseq
        %v215 = vshrl.u32 %v214, 7
        %v216 = vsub.s32 0, %v215
        %v217 = vrot.slane %v197, %v216
        %v218 = vmul.f32 %v207, %v217
        %v219 = vadd.f32 %v213, %v218
        %v220 = vlaneseq
        %v221 = vshrl.u32 %v220, 7
        %v222 = vsub.s32 0, %v221
        %v223 = vrot.slane %v198, %v222
        %v224 = vmul.f32 %v205, %v223
        %v226 = vrot.slane %v224, 1
        %v228 = vadd.f32 %v219, %v226
        %s229 = scalar_lea.vmem %s195, 24
        %v230 = vld [vmem:[%s229] sm:$0x7]
        %s231 = scalar_lea.vmem %s195, 36
        %v232 = vld [vmem:[%s231] sm:$0x7]
        %v233 = vlaneseq
        %v234 = vshrl.u32 %v233, 7
        %v235 = vsub.s32 0, %v234
        %v236 = vrot.slane %v199, %v235
        %v237 = vmul.f32 %v230, %v236
        %v238 = vadd.f32 %v228, %v237
        %v239 = vlaneseq
        %v240 = vshrl.u32 %v239, 7
        %v241 = vsub.s32 0, %v240
        %v242 = vrot.slane %v200, %v241
        %v243 = vmul.f32 %v232, %v242
        %v244 = vadd.f32 %v238, %v243
        %v245 = vlaneseq
        %v246 = vshrl.u32 %v245, 7
        %v247 = vsub.s32 0, %v246
        %v248 = vrot.slane %v201, %v247
        %v249 = vmul.f32 %v230, %v248
        %v251 = vrot.slane %v249, 1
        %v253 = vadd.f32 %v244, %v251
        %s254 = scalar_lea.vmem %s195, 4
        %v255 = vld [vmem:[%s254] sm:$0x7]
        %s256 = scalar_lea.vmem %s195, 16
        %v257 = vld [vmem:[%s256] sm:$0x7]
        %v258 = vlaneseq
        %v259 = vshrl.u32 %v258, 7
        %v260 = vsub.s32 0, %v259
        %v261 = vrot.slane %v202, %v260
        %v262 = vmul.f32 %v255, %v261
        %v263 = vadd.f32 %v253, %v262
        %v264 = vlaneseq
        %v265 = vshrl.u32 %v264, 7
        %v266 = vsub.s32 0, %v265
        %v267 = vrot.slane %v203, %v266
        %v268 = vmul.f32 %v257, %v267
        %v269 = vadd.f32 %v263, %v268
        %v270 = vlaneseq
        %v271 = vshrl.u32 %v270, 7
        %v272 = vsub.s32 0, %v271
        %v273 = vrot.slane %v204, %v272
        %v274 = vmul.f32 %v255, %v273
        %v276 = vrot.slane %v274, 1
        %v278 = vadd.f32 %v269, %v276
        %279 = vst [vmem:[#allocation2] sm:$0x3] %v278
        %v280 = vld [vmem:[%s254] sm:$0x7]
        %v281 = vld [vmem:[%s256] sm:$0x7]
        %v282 = vmul.f32 %v280, %v211
        %v283 = vadd.f32 %v282, 0.0
        %v284 = vmul.f32 %v281, %v217
        %v285 = vadd.f32 %v283, %v284
        %v286 = vmul.f32 %v280, %v223
        %v288 = vrot.slane %v286, 1
        %v290 = vadd.f32 %v285, %v288
        %s291 = scalar_lea.vmem %s195, 28
        %v292 = vld [vmem:[%s291] sm:$0x7]
        %s293 = scalar_lea.vmem %s195, 40
        %v294 = vld [vmem:[%s293] sm:$0x7]
        %v295 = vmul.f32 %v292, %v236
        %v296 = vadd.f32 %v290, %v295
        %v297 = vmul.f32 %v294, %v242
        %v298 = vadd.f32 %v296, %v297
        %v299 = vmul.f32 %v292, %v248
        %v301 = vrot.slane %v299, 1
        %v303 = vadd.f32 %v298, %v301
        %s304 = scalar_lea.vmem %s195, 8
        %v305 = vld [vmem:[%s304] sm:$0x7]
        %s306 = scalar_lea.vmem %s195, 20
        %v307 = vld [vmem:[%s306] sm:$0x7]
        %v308 = vmul.f32 %v305, %v261
        %v309 = vadd.f32 %v303, %v308
        %v310 = vmul.f32 %v307, %v267
        %v311 = vadd.f32 %v309, %v310
        %v312 = vmul.f32 %v305, %v273
        %v314 = vrot.slane %v312, 1
        %v316 = vadd.f32 %v311, %v314
        %317 = vst [vmem:[#allocation2 + $0x2] sm:$0x3] %v316
        %318 = vst [vmem:[#allocation2 + $0x4] sm:$0xf] 0.0
        %v319 = vld [vmem:[#allocation2] sm:$0xff]
        %v320 = vld [vmem:[%s2] sm:$0xff]
        %v321 = vld [vmem:[%s2 + $0x8] sm:$0xff]
        %v322 = vld [vmem:[%s2 + $0x10] sm:$0xff]
        %v323 = vld [vmem:[%s2 + $0x18] sm:$0xff]
        %v324 = vld [vmem:[%s2 + $0x20] sm:$0xff]
        %v325 = vld [vmem:[%s2 + $0x28] sm:$0xff]
        %v326 = vld [vmem:[%s2 + $0x30] sm:$0xff]
        %v327 = vld [vmem:[%s2 + $0x38] sm:$0xff]
        %v328 = vld [vmem:[%s2 + $0x40] sm:$0xff]
        %v329 = vld [vmem:[%s2 + $0x48] sm:$0xff]
        %v330 = vld [vmem:[%s2 + $0x50] sm:$0xff]
        %v331 = vld [vmem:[%s2 + $0x58] sm:$0xff]
        %v332 = vld [vmem:[%s2 + $0x60] sm:$0xff]
        %v333 = vld [vmem:[%s2 + $0x68] sm:$0xff]
        %v334 = vld [vmem:[%s2 + $0x70] sm:$0xff]
        %v335 = vld [vmem:[%s2 + $0x78] sm:$0xff]
        %v336 = vld [vmem:[%s3] sm:$0x1]
        %v338 = vlaneseq
        %v339 = vshrl.u32 %v338, 7
        %v340 = vsub.s32 0, %v339
        %v341 = vrot.slane %v336, %v340
        %343 = vmatprep.subr.mxu0 0.0
        %344 = vmatpush1.msra.mxu0 %v320
        %345 = vmatprep.subr.mxu0 0.0
        %346 = vmatpush1.msra.mxu0 %v321
        %347 = vmatprep.subr.mxu0 0.0
        %348 = vmatpush1.msra.mxu0 %v322
        %349 = vmatprep.subr.mxu0 0.0
        %350 = vmatpush1.msra.mxu0 %v323
        %351 = vmatprep.subr.mxu0 0.0
        %352 = vmatpush1.msra.mxu0 %v324
        %353 = vmatprep.subr.mxu0 0.0
        %354 = vmatpush1.msra.mxu0 %v325
        %355 = vmatprep.subr.mxu0 0.0
        %356 = vmatpush1.msra.mxu0 %v326
        %357 = vmatprep.subr.mxu0 0.0
        %358 = vmatpush1.msra.mxu0 %v327
        %359 = vmatprep.subr.mxu0 0.0
        %360 = vmatpush1.msra.mxu0 %v328
        %361 = vmatprep.subr.mxu0 0.0
        %362 = vmatpush1.msra.mxu0 %v329
        %363 = vmatprep.subr.mxu0 0.0
        %364 = vmatpush1.msra.mxu0 %v330
        %365 = vmatprep.subr.mxu0 0.0
        %366 = vmatpush1.msra.mxu0 %v331
        %367 = vmatprep.subr.mxu0 0.0
        %368 = vmatpush1.msra.mxu0 %v332
        %369 = vmatprep.subr.mxu0 0.0
        %370 = vmatpush1.msra.mxu0 %v333
        %371 = vmatprep.subr.mxu0 0.0
        %372 = vmatpush1.msra.mxu0 %v334
        %373 = vmatprep.subr.mxu0 0.0
        %374 = vmatpush1.msra.mxu0 %v335
        %375 = vmatprep.subr.mxu0 0.0
        %376 = vmatpush1.msra.mxu0 0.0
        %377 = vmatprep.subr.mxu0 0.0
        %378 = vmatpush1.msra.mxu0 0.0
        %379 = vmatprep.subr.mxu0 0.0
        %380 = vmatpush1.msra.mxu0 0.0
        %381 = vmatprep.subr.mxu0 0.0
        %382 = vmatpush1.msra.mxu0 0.0
        %383 = vmatprep.subr.mxu0 0.0
        %384 = vmatpush1.msra.mxu0 0.0
        %385 = vmatprep.subr.mxu0 0.0
        %386 = vmatpush1.msra.mxu0 0.0
        %387 = vmatprep.subr.mxu0 0.0
        %388 = vmatpush1.msra.mxu0 0.0
        %389 = vmatprep.subr.mxu0 0.0
        %390 = vmatpush1.msra.mxu0 0.0
        %391 = vmatprep.subr.mxu0 0.0
        %392 = vmatpush1.msra.mxu0 0.0
        %393 = vmatprep.subr.mxu0 0.0
        %394 = vmatpush1.msra.mxu0 0.0
        %395 = vmatprep.subr.mxu0 0.0
        %396 = vmatpush1.msra.mxu0 0.0
        %397 = vmatprep.subr.mxu0 0.0
        %398 = vmatpush1.msra.mxu0 0.0
        %399 = vmatprep.subr.mxu0 0.0
        %400 = vmatpush1.msra.mxu0 0.0
        %401 = vmatprep.subr.mxu0 0.0
        %402 = vmatpush1.msra.mxu0 0.0
        %403 = vmatprep.subr.mxu0 0.0
        %404 = vmatpush1.msra.mxu0 0.0
        %405 = vmatprep.subr.mxu0 0.0
        %406 = vmatpush1.msra.mxu0 0.0
        %407 = vmatprep.mubr.f32.mxu0 0.0
        %408 = vmatmul.mubr.f32.gmra.mrb[0].mxu0 %v319
        %v409 = vpop.f32.mrb[0].mxu0
        %v410 = vadd.f32 %v341, %v409
        %v411 = vpop.f32.mrb[0].mxu0
        %412 = vdwg.mxu0
        %v413 = vmax.f32 %v410, 0.0
        %414 = vst [vmem:[%s190] sm:$0xf] %v413
        %s415 = sand.u32 %s115, 1
        %s416 = scalar_lea.sflag [#allocation4], %s415
        %s417 = sand.u32 %s115, 1
        %s418 = smul.addr %s417, 4
        %s419 = scalar_lea.vmem [#allocation3], %s418
        // Predicated region
        $region37: #{fpem_v1_forward.11} parent=35 // pred_check
          %p420 = pneg %p125
        $region38: #{fpem_v1_forward.11} parent=35 // pred_check_branch
          %422 = sbr.rel (%p420) target = $region40
        $region39: #{fpem_v1_forward.11} parent=35 // pred_region
          %s424 = ssub.s32 64, 64
          %425 = vsyncadd %s416, %s424
          %s426 = smul.addr %s18, 64
          %s427 = scalar_lea.hbm %s4, %s426
          %s429 = sshll.u32 %s419, 4
          %s430 = int_to_ptr.vmem [resolvable:$true] %s429
          %432 = dma.vmem_to_hbm [thread:$0]  %s430, 64, %s427, %s416
        $region40: #{fpem_v1_forward.11} parent=35 // pred_fallthru
          _
      $region36: #{fpem_v1_forward.11} parent=5 // pred_fallthru
        _
      %p433 = scmp.le.s32.totalorder 2, %s13
      // Predicated region
      $region41: #{fpem_v1_forward.11} parent=5 // pred_check
        %p434 = pneg %p433
      $region42: #{fpem_v1_forward.11} parent=5 // pred_check_branch
        %436 = sbr.rel (%p434) target = $region44
      $region43: #{fpem_v1_forward.11} parent=5 // pred_region
        %s437 = ssub.s32 %s13, 2
        // Predicated region
        $region45: #{fpem_v1_forward.11} parent=43 // pred_check
          %p438 = pneg %p131
        $region46: #{fpem_v1_forward.11} parent=43 // pred_check_branch
          %440 = sbr.rel (%p438) target = $region48
        $region47: #{fpem_v1_forward.11} parent=43 // pred_region
          %s441 = sand.u32 %s116, 1
          %s442 = scalar_lea.sflag [#allocation4], %s441
          %s443 = sand.u32 %s116, 1
          %s444 = smul.addr %s443, 4
          %s445 = scalar_lea.vmem [#allocation3], %s444
          %446 = dma.done %s442, 64
        $region48: #{fpem_v1_forward.11} parent=43 // pred_fallthru
          _
      $region44: #{fpem_v1_forward.11} parent=5 // pred_fallthru
        _
    $region6: #{fpem_v1_forward.11} parent=1 // loop_footer
      %s17 = sadd.s32 1, %s13
    $region7: #{fpem_v1_forward.11} parent=1 // loop_footer_branch
      %12 = sbr.rel target = $region3
    $region8: #{fpem_v1_forward.11} parent=1 // loop_exit
      _
    %447 = vsyncpa [#allocation4], 1
    %s448 = scalar_lea.sflag [#allocation4], 1
    %449 = vsyncpa %s448, 1

</llo_original>
